<compile_context>
chip_gen: v7x
topology: tpu7x:2x2x1
jax: 0.10.0
libtpu: 0.0.40
codegen_flags: <defaults>
</compile_context>

<pallas_src>
import math

import jax
import jax.numpy as jnp
from jax import lax
from jax.experimental import pallas as pl
from jax.experimental.pallas import tpu as pltpu

K = 10                 # kernel size of both convs (stride 1, valid padding)
C_IN, C_MID, C_OUT = 3, 20, 3


# ---------------------------------------------------------------------------
# Pallas kernel (one grid step == one image)
# ---------------------------------------------------------------------------
def _make_kernel(H, W):
    HW = H * W

    def kernel(x_ref, w1_ref, b1_ref, w2f_ref, b2_ref, o_ref, r1_ref, r2_ref):
        # x_ref   : (1, C_IN, HW)              image, channel rows, flattened (y*W + x) lanes
        # w1_ref  : (K, C_MID, K*C_IN)         conv1 per-ki slabs, columns ordered (kj, c_in)
        # b1_ref  : (C_MID, 1)
        # w2f_ref : (K*C_OUT, K*C_MID)         conv2 FUSED LHS, rows (ki, oc), cols (kj, c_mid)
        # b2_ref  : (C_OUT, 1)
        # o_ref   : (1, C_OUT, HW)
        # scratch : r1 (K*C_IN, HW), r2 (K*C_MID, HW)  -- MXU RHS matrices, rebuilt each step
        #
        # Shift convention: pltpu.roll(v, HW - s, axis=1)[m] == v[(m + s) mod HW], i.e. a
        # left-roll by s.  Wrapped lanes only ever land on output positions with y >= OH or
        # x >= OW (invalid, discarded by the host slice), and are always finite.

        # ======================= conv1: 3 -> 20, 10x10, valid =======================
        # R1[kj*C_IN + c, m] = x[c, (m + kj) mod HW]   (full-width, lane-dense stores)
        xv = x_ref[0]                                                   # (C_IN, HW)
        for kj in range(K):
            blk = xv if kj == 0 else pltpu.roll(xv, HW - kj, axis=1)
            r1_ref[kj * C_IN:(kj + 1) * C_IN, :] = blk

        # 10 per-ki matmuls; partials rolled by ki*W and summed entirely in registers
        # (the 20x1024 accumulator never touches VMEM).
        h1 = None
        for ki in range(K):
            part = jnp.dot(w1_ref[ki], r1_ref[...],
                           preferred_element_type=jnp.float32)          # (C_MID, HW)
            if ki:
                part = pltpu.roll(part, HW - ki * W, axis=1)
            h1 = part if h1 is None else h1 + part
        h1 = jnp.maximum(h1 + b1_ref[...], 0.0)                         # bias + ReLU

        # ======================= conv2: 20 -> 3, 10x10, valid =======================
        # R2[kj*C_MID + c, m] = h1[c, (m + kj) mod HW], built straight from the in-register h1.
        for kj in range(K):
            blk = h1 if kj == 0 else pltpu.roll(h1, HW - kj, axis=1)
            r2_ref[kj * C_MID:(kj + 1) * C_MID, :] = blk

        # ONE fused matmul: (K*C_OUT, K*C_MID) @ (K*C_MID, HW) -> (K*C_OUT, HW).
        # R2 streams through the MXU exactly once.
        res = jnp.dot(w2f_ref[...], r2_ref[...],
                      preferred_element_type=jnp.float32)               # (30, HW)

        # ki-shift accumulation of the 10 row-blocks, again entirely in registers.
        acc = res[0:C_OUT, :]
        for ki in range(1, K):
            blk = res[ki * C_OUT:(ki + 1) * C_OUT, :]
            acc = acc + pltpu.roll(blk, HW - ki * W, axis=1)

        # ============ exact channel softmax over the 3 sublane rows ============
        z = acc + b2_ref[...]                                           # (C_OUT, HW) logits
        m = jnp.maximum(jnp.maximum(z[0:1, :], z[1:2, :]), z[2:3, :])
        e = jnp.exp(z - m)
        denom = e[0:1, :] + e[1:2, :] + e[2:3, :]
        o_ref[0] = e / denom                                            # exact normalization

    return kernel


# ---------------------------------------------------------------------------
# Host wrapper (NCHW in / NCHW out, matching the PyTorch module)
# ---------------------------------------------------------------------------
def neuralnet_forward(image_nchw, params):
    n, c, h, w = image_nchw.shape
    assert c == C_IN and h >= 2 * K - 1 and w >= 2 * K - 1
    hw = h * w
    oh, ow = h - 2 * (K - 1), w - 2 * (K - 1)

    x_flat = image_nchw.reshape(n, C_IN, hw).astype(jnp.float32)

    # conv1 weights as per-ki slabs: w1s[ki, oc, kj*C_IN + c] == torch_w1[oc, c, ki, kj]
    w1s = jnp.transpose(params["w1"], (2, 0, 3, 1)).reshape(K, C_MID, K * C_IN)
    # conv2 weights as ONE fused LHS: w2f[ki*C_OUT + oc, kj*C_MID + c] == torch_w2[oc, c, ki, kj]
    w2f = jnp.transpose(params["w2"], (2, 0, 3, 1)).reshape(K * C_OUT, K * C_MID)
    b1 = params["b1"].reshape(C_MID, 1).astype(jnp.float32)
    b2 = params["b2"].reshape(C_OUT, 1).astype(jnp.float32)

    out_flat = pl.pallas_call(
        _make_kernel(h, w),
        out_shape=jax.ShapeDtypeStruct((n, C_OUT, hw), jnp.float32),
        grid_spec=pltpu.PrefetchScalarGridSpec(
            num_scalar_prefetch=0,
            grid=(n,),
            in_specs=[
                pl.BlockSpec((1, C_IN, hw), lambda b: (b, 0, 0)),
                pl.BlockSpec((K, C_MID, K * C_IN), lambda b: (0, 0, 0)),
                pl.BlockSpec((C_MID, 1), lambda b: (0, 0)),
                pl.BlockSpec((K * C_OUT, K * C_MID), lambda b: (0, 0)),
                pl.BlockSpec((C_OUT, 1), lambda b: (0, 0)),
            ],
            out_specs=pl.BlockSpec((1, C_OUT, hw), lambda b: (b, 0, 0)),
            scratch_shapes=[
                pltpu.VMEM((K * C_IN, hw), jnp.float32),    # r1 (conv1 RHS)
                pltpu.VMEM((K * C_MID, hw), jnp.float32),   # r2 (conv2 RHS)
            ],
        ),
        compiler_params=pltpu.CompilerParams(
            dimension_semantics=("parallel",)),
    )(x_flat, w1s, b1, w2f, b2)

    # Valid conv outputs live at flat index y*w + x for y < oh, x < ow.
    return out_flat.reshape(n, C_OUT, h, w)[:, :, :oh, :ow]


# ---------------------------------------------------------------------------
# Params (PyTorch default Conv2d init bounds) + pure-JAX reference
# ---------------------------------------------------------------------------
def init_params(key):
    k1, k2, k3, k4 = jax.random.split(key, 4)
    bound1 = 1.0 / math.sqrt(C_IN * K * K)
    bound2 = 1.0 / math.sqrt(C_MID * K * K)
    w1 = jax.random.uniform(k1, (C_MID, C_IN, K, K), jnp.float32, -bound1, bound1)
    b1 = jax.random.uniform(k2, (C_MID,), jnp.float32, -bound1, bound1)
    w2 = jax.random.uniform(k3, (C_OUT, C_MID, K, K), jnp.float32, -bound2, bound2)
    b2 = jax.random.uniform(k4, (C_OUT,), jnp.float32, -bound2, bound2)
    return {"w1": w1, "b1": b1, "w2": w2, "b2": b2}


def reference_forward(image, params):
    dn = ("NCHW", "OIHW", "NCHW")
    y = lax.conv_general_dilated(image, params["w1"], (1, 1), "VALID",
                                 dimension_numbers=dn,
                                 precision=lax.Precision.HIGHEST)
    y = jnp.maximum(y + params["b1"][None, :, None, None], 0.0)
    z = lax.conv_general_dilated(y, params["w2"], (1, 1), "VALID",
                                 dimension_numbers=dn,
                                 precision=lax.Precision.HIGHEST)
    z = z + params["b2"][None, :, None, None]
    return jax.nn.softmax(z, axis=1)


if __name__ == "__main__":
    key = jax.random.PRNGKey(0)
    pkey, xkey = jax.random.split(key)
    params = init_params(pkey)

    # Input must be at least 19x19 spatially for two valid 10x10 convs.
    image = jax.random.normal(xkey, (2, 3, 32, 32), dtype=jnp.float32)

    out = jax.jit(neuralnet_forward)(image, params)
    out = jax.block_until_ready(out)

    assert out.shape == (2, 3, 14, 14), out.shape

    ref = reference_forward(image, params)
    max_err = float(jnp.max(jnp.abs(out - ref)))
    assert bool(jnp.allclose(out, ref, atol=1e-3, rtol=1e-3)), max_err
    sums = jnp.sum(out, axis=1)
    assert bool(jnp.allclose(sums, 1.0, atol=1e-4)), "softmax over channels must sum to 1"
    print("KERNEL_OK")
</pallas_src>

<mosaic_0001>
module attributes {stable_mosaic.version = 11 : i64} {
  func.func @kernel(%arg0: i32, %arg1: memref<1x3x1024xf32, #tpu.memory_space<vmem>>, %arg2: memref<10x20x30xf32, #tpu.memory_space<vmem>>, %arg3: memref<20x1xf32, #tpu.memory_space<vmem>>, %arg4: memref<30x200xf32, #tpu.memory_space<vmem>>, %arg5: memref<3x1xf32, #tpu.memory_space<vmem>>, %arg6: memref<1x3x1024xf32, #tpu.memory_space<vmem>>, %arg7: memref<30x1024xf32, #tpu.memory_space<vmem>>, %arg8: memref<200x1024xf32, #tpu.memory_space<vmem>>) attributes {dimension_semantics = [#tpu.dimension_semantics<parallel>], iteration_bounds = array<i64: 2>, scalar_prefetch = 0 : i64, scratch_operands = 2 : i64, tpu.core_type = #tpu.core_type<tc>, window_params = [{transform_indices = @transform_0, window_bounds = array<i64: 1, 3, 1024>}, {pipeline_mode = #tpu.pipeline_mode<synchronous>, transform_indices = @transform_1, window_bounds = array<i64: 10, 20, 30>}, {pipeline_mode = #tpu.pipeline_mode<synchronous>, transform_indices = @transform_2, window_bounds = array<i64: 20, 1>}, {pipeline_mode = #tpu.pipeline_mode<synchronous>, transform_indices = @transform_3, window_bounds = array<i64: 30, 200>}, {pipeline_mode = #tpu.pipeline_mode<synchronous>, transform_indices = @transform_4, window_bounds = array<i64: 3, 1>}, {transform_indices = @transform_5, window_bounds = array<i64: 1, 3, 1024>}]} {
    %c0 = arith.constant 0 : index
    %c0_0 = arith.constant 0 : index
    %c0_1 = arith.constant 0 : index
    %0 = vector.load %arg1[%c0, %c0_0, %c0_1] : memref<1x3x1024xf32, #tpu.memory_space<vmem>>, vector<1x3x1024xf32>
    %1 = vector.shape_cast %0 : vector<1x3x1024xf32> to vector<3x1024xf32>
    %c0_2 = arith.constant 0 : index
    %c0_3 = arith.constant 0 : index
    %2 = vector.load %arg7[%c0_2, %c0_3] : memref<30x1024xf32, #tpu.memory_space<vmem>>, vector<3x1024xf32>
    tpu.vector_store %arg7[%c0_2, %c0_3], %1 {strides = array<i32>} : memref<30x1024xf32, #tpu.memory_space<vmem>>, vector<3x1024xf32>,
    %c1023_i32 = arith.constant 1023 : i32
    %3 = tpu.dynamic_rotate %1 by %c1023_i32 dim 1 : vector<3x1024xf32>, i32 -> vector<3x1024xf32>
    %c3 = arith.constant 3 : index
    %c0_4 = arith.constant 0 : index
    %4 = vector.load %arg7[%c3, %c0_4] : memref<30x1024xf32, #tpu.memory_space<vmem>>, vector<3x1024xf32>
    tpu.vector_store %arg7[%c3, %c0_4], %3 {strides = array<i32>} : memref<30x1024xf32, #tpu.memory_space<vmem>>, vector<3x1024xf32>,
    %c1022_i32 = arith.constant 1022 : i32
    %5 = tpu.dynamic_rotate %1 by %c1022_i32 dim 1 : vector<3x1024xf32>, i32 -> vector<3x1024xf32>
    %c6 = arith.constant 6 : index
    %c0_5 = arith.constant 0 : index
    %6 = vector.load %arg7[%c6, %c0_5] : memref<30x1024xf32, #tpu.memory_space<vmem>>, vector<3x1024xf32>
    tpu.vector_store %arg7[%c6, %c0_5], %5 {strides = array<i32>} : memref<30x1024xf32, #tpu.memory_space<vmem>>, vector<3x1024xf32>,
    %c1021_i32 = arith.constant 1021 : i32
    %7 = tpu.dynamic_rotate %1 by %c1021_i32 dim 1 : vector<3x1024xf32>, i32 -> vector<3x1024xf32>
    %c9 = arith.constant 9 : index
    %c0_6 = arith.constant 0 : index
    %8 = vector.load %arg7[%c9, %c0_6] : memref<30x1024xf32, #tpu.memory_space<vmem>>, vector<3x1024xf32>
    tpu.vector_store %arg7[%c9, %c0_6], %7 {strides = array<i32>} : memref<30x1024xf32, #tpu.memory_space<vmem>>, vector<3x1024xf32>,
    %c1020_i32 = arith.constant 1020 : i32
    %9 = tpu.dynamic_rotate %1 by %c1020_i32 dim 1 : vector<3x1024xf32>, i32 -> vector<3x1024xf32>
    %c12 = arith.constant 12 : index
    %c0_7 = arith.constant 0 : index
    %10 = vector.load %arg7[%c12, %c0_7] : memref<30x1024xf32, #tpu.memory_space<vmem>>, vector<3x1024xf32>
    tpu.vector_store %arg7[%c12, %c0_7], %9 {strides = array<i32>} : memref<30x1024xf32, #tpu.memory_space<vmem>>, vector<3x1024xf32>,
    %c1019_i32 = arith.constant 1019 : i32
    %11 = tpu.dynamic_rotate %1 by %c1019_i32 dim 1 : vector<3x1024xf32>, i32 -> vector<3x1024xf32>
    %c15 = arith.constant 15 : index
    %c0_8 = arith.constant 0 : index
    %12 = vector.load %arg7[%c15, %c0_8] : memref<30x1024xf32, #tpu.memory_space<vmem>>, vector<3x1024xf32>
    tpu.vector_store %arg7[%c15, %c0_8], %11 {strides = array<i32>} : memref<30x1024xf32, #tpu.memory_space<vmem>>, vector<3x1024xf32>,
    %c1018_i32 = arith.constant 1018 : i32
    %13 = tpu.dynamic_rotate %1 by %c1018_i32 dim 1 : vector<3x1024xf32>, i32 -> vector<3x1024xf32>
    %c18 = arith.constant 18 : index
    %c0_9 = arith.constant 0 : index
    %14 = vector.load %arg7[%c18, %c0_9] : memref<30x1024xf32, #tpu.memory_space<vmem>>, vector<3x1024xf32>
    tpu.vector_store %arg7[%c18, %c0_9], %13 {strides = array<i32>} : memref<30x1024xf32, #tpu.memory_space<vmem>>, vector<3x1024xf32>,
    %c1017_i32 = arith.constant 1017 : i32
    %15 = tpu.dynamic_rotate %1 by %c1017_i32 dim 1 : vector<3x1024xf32>, i32 -> vector<3x1024xf32>
    %c21 = arith.constant 21 : index
    %c0_10 = arith.constant 0 : index
    %16 = vector.load %arg7[%c21, %c0_10] : memref<30x1024xf32, #tpu.memory_space<vmem>>, vector<3x1024xf32>
    tpu.vector_store %arg7[%c21, %c0_10], %15 {strides = array<i32>} : memref<30x1024xf32, #tpu.memory_space<vmem>>, vector<3x1024xf32>,
    %c1016_i32 = arith.constant 1016 : i32
    %17 = tpu.dynamic_rotate %1 by %c1016_i32 dim 1 : vector<3x1024xf32>, i32 -> vector<3x1024xf32>
    %c24 = arith.constant 24 : index
    %c0_11 = arith.constant 0 : index
    %18 = vector.load %arg7[%c24, %c0_11] : memref<30x1024xf32, #tpu.memory_space<vmem>>, vector<3x1024xf32>
    tpu.vector_store %arg7[%c24, %c0_11], %17 {strides = array<i32>} : memref<30x1024xf32, #tpu.memory_space<vmem>>, vector<3x1024xf32>,
    %c1015_i32 = arith.constant 1015 : i32
    %19 = tpu.dynamic_rotate %1 by %c1015_i32 dim 1 : vector<3x1024xf32>, i32 -> vector<3x1024xf32>
    %c27 = arith.constant 27 : index
    %c0_12 = arith.constant 0 : index
    %20 = vector.load %arg7[%c27, %c0_12] : memref<30x1024xf32, #tpu.memory_space<vmem>>, vector<3x1024xf32>
    tpu.vector_store %arg7[%c27, %c0_12], %19 {strides = array<i32>} : memref<30x1024xf32, #tpu.memory_space<vmem>>, vector<3x1024xf32>,
    %c0_13 = arith.constant 0 : index
    %c0_14 = arith.constant 0 : index
    %c0_15 = arith.constant 0 : index
    %21 = vector.load %arg2[%c0_13, %c0_14, %c0_15] : memref<10x20x30xf32, #tpu.memory_space<vmem>>, vector<1x20x30xf32>
    %22 = vector.shape_cast %21 : vector<1x20x30xf32> to vector<20x30xf32>
    %c0_16 = arith.constant 0 : index
    %c0_17 = arith.constant 0 : index
    %23 = vector.load %arg7[%c0_16, %c0_17] : memref<30x1024xf32, #tpu.memory_space<vmem>>, vector<30x1024xf32>
    %cst = arith.constant dense<0.000000e+00> : vector<20x1024xf32>
    %24 = tpu.matmul %22, %23, %cst {dimension_numbers = #tpu.dot_dimension_numbers<[1], [0], [0], [1], [0, 0, 1, 1], [], []>} : vector<20x30xf32>, vector<30x1024xf32>, vector<20x1024xf32> -> vector<20x1024xf32>
    %c1 = arith.constant 1 : index
    %c0_18 = arith.constant 0 : index
    %c0_19 = arith.constant 0 : index
    %25 = vector.load %arg2[%c1, %c0_18, %c0_19] : memref<10x20x30xf32, #tpu.memory_space<vmem>>, vector<1x20x30xf32>
    %26 = vector.shape_cast %25 : vector<1x20x30xf32> to vector<20x30xf32>
    %c0_20 = arith.constant 0 : index
    %c0_21 = arith.constant 0 : index
    %27 = vector.load %arg7[%c0_20, %c0_21] : memref<30x1024xf32, #tpu.memory_space<vmem>>, vector<30x1024xf32>
    %cst_22 = arith.constant dense<0.000000e+00> : vector<20x1024xf32>
    %28 = tpu.matmul %26, %27, %cst_22 {dimension_numbers = #tpu.dot_dimension_numbers<[1], [0], [0], [1], [0, 0, 1, 1], [], []>} : vector<20x30xf32>, vector<30x1024xf32>, vector<20x1024xf32> -> vector<20x1024xf32>
    %c992_i32 = arith.constant 992 : i32
    %29 = tpu.dynamic_rotate %28 by %c992_i32 dim 1 : vector<20x1024xf32>, i32 -> vector<20x1024xf32>
    %30 = arith.addf %24, %29 : vector<20x1024xf32>
    %c2 = arith.constant 2 : index
    %c0_23 = arith.constant 0 : index
    %c0_24 = arith.constant 0 : index
    %31 = vector.load %arg2[%c2, %c0_23, %c0_24] : memref<10x20x30xf32, #tpu.memory_space<vmem>>, vector<1x20x30xf32>
    %32 = vector.shape_cast %31 : vector<1x20x30xf32> to vector<20x30xf32>
    %c0_25 = arith.constant 0 : index
    %c0_26 = arith.constant 0 : index
    %33 = vector.load %arg7[%c0_25, %c0_26] : memref<30x1024xf32, #tpu.memory_space<vmem>>, vector<30x1024xf32>
    %cst_27 = arith.constant dense<0.000000e+00> : vector<20x1024xf32>
    %34 = tpu.matmul %32, %33, %cst_27 {dimension_numbers = #tpu.dot_dimension_numbers<[1], [0], [0], [1], [0, 0, 1, 1], [], []>} : vector<20x30xf32>, vector<30x1024xf32>, vector<20x1024xf32> -> vector<20x1024xf32>
    %c960_i32 = arith.constant 960 : i32
    %35 = tpu.dynamic_rotate %34 by %c960_i32 dim 1 : vector<20x1024xf32>, i32 -> vector<20x1024xf32>
    %36 = arith.addf %30, %35 : vector<20x1024xf32>
    %c3_28 = arith.constant 3 : index
    %c0_29 = arith.constant 0 : index
    %c0_30 = arith.constant 0 : index
    %37 = vector.load %arg2[%c3_28, %c0_29, %c0_30] : memref<10x20x30xf32, #tpu.memory_space<vmem>>, vector<1x20x30xf32>
    %38 = vector.shape_cast %37 : vector<1x20x30xf32> to vector<20x30xf32>
    %c0_31 = arith.constant 0 : index
    %c0_32 = arith.constant 0 : index
    %39 = vector.load %arg7[%c0_31, %c0_32] : memref<30x1024xf32, #tpu.memory_space<vmem>>, vector<30x1024xf32>
    %cst_33 = arith.constant dense<0.000000e+00> : vector<20x1024xf32>
    %40 = tpu.matmul %38, %39, %cst_33 {dimension_numbers = #tpu.dot_dimension_numbers<[1], [0], [0], [1], [0, 0, 1, 1], [], []>} : vector<20x30xf32>, vector<30x1024xf32>, vector<20x1024xf32> -> vector<20x1024xf32>
    %c928_i32 = arith.constant 928 : i32
    %41 = tpu.dynamic_rotate %40 by %c928_i32 dim 1 : vector<20x1024xf32>, i32 -> vector<20x1024xf32>
    %42 = arith.addf %36, %41 : vector<20x1024xf32>
    %c4 = arith.constant 4 : index
    %c0_34 = arith.constant 0 : index
    %c0_35 = arith.constant 0 : index
    %43 = vector.load %arg2[%c4, %c0_34, %c0_35] : memref<10x20x30xf32, #tpu.memory_space<vmem>>, vector<1x20x30xf32>
    %44 = vector.shape_cast %43 : vector<1x20x30xf32> to vector<20x30xf32>
    %c0_36 = arith.constant 0 : index
    %c0_37 = arith.constant 0 : index
    %45 = vector.load %arg7[%c0_36, %c0_37] : memref<30x1024xf32, #tpu.memory_space<vmem>>, vector<30x1024xf32>
    %cst_38 = arith.constant dense<0.000000e+00> : vector<20x1024xf32>
    %46 = tpu.matmul %44, %45, %cst_38 {dimension_numbers = #tpu.dot_dimension_numbers<[1], [0], [0], [1], [0, 0, 1, 1], [], []>} : vector<20x30xf32>, vector<30x1024xf32>, vector<20x1024xf32> -> vector<20x1024xf32>
    %c896_i32 = arith.constant 896 : i32
    %47 = tpu.dynamic_rotate %46 by %c896_i32 dim 1 : vector<20x1024xf32>, i32 -> vector<20x1024xf32>
    %48 = arith.addf %42, %47 : vector<20x1024xf32>
    %c5 = arith.constant 5 : index
    %c0_39 = arith.constant 0 : index
    %c0_40 = arith.constant 0 : index
    %49 = vector.load %arg2[%c5, %c0_39, %c0_40] : memref<10x20x30xf32, #tpu.memory_space<vmem>>, vector<1x20x30xf32>
    %50 = vector.shape_cast %49 : vector<1x20x30xf32> to vector<20x30xf32>
    %c0_41 = arith.constant 0 : index
    %c0_42 = arith.constant 0 : index
    %51 = vector.load %arg7[%c0_41, %c0_42] : memref<30x1024xf32, #tpu.memory_space<vmem>>, vector<30x1024xf32>
    %cst_43 = arith.constant dense<0.000000e+00> : vector<20x1024xf32>
    %52 = tpu.matmul %50, %51, %cst_43 {dimension_numbers = #tpu.dot_dimension_numbers<[1], [0], [0], [1], [0, 0, 1, 1], [], []>} : vector<20x30xf32>, vector<30x1024xf32>, vector<20x1024xf32> -> vector<20x1024xf32>
    %c864_i32 = arith.constant 864 : i32
    %53 = tpu.dynamic_rotate %52 by %c864_i32 dim 1 : vector<20x1024xf32>, i32 -> vector<20x1024xf32>
    %54 = arith.addf %48, %53 : vector<20x1024xf32>
    %c6_44 = arith.constant 6 : index
    %c0_45 = arith.constant 0 : index
    %c0_46 = arith.constant 0 : index
    %55 = vector.load %arg2[%c6_44, %c0_45, %c0_46] : memref<10x20x30xf32, #tpu.memory_space<vmem>>, vector<1x20x30xf32>
    %56 = vector.shape_cast %55 : vector<1x20x30xf32> to vector<20x30xf32>
    %c0_47 = arith.constant 0 : index
    %c0_48 = arith.constant 0 : index
    %57 = vector.load %arg7[%c0_47, %c0_48] : memref<30x1024xf32, #tpu.memory_space<vmem>>, vector<30x1024xf32>
    %cst_49 = arith.constant dense<0.000000e+00> : vector<20x1024xf32>
    %58 = tpu.matmul %56, %57, %cst_49 {dimension_numbers = #tpu.dot_dimension_numbers<[1], [0], [0], [1], [0, 0, 1, 1], [], []>} : vector<20x30xf32>, vector<30x1024xf32>, vector<20x1024xf32> -> vector<20x1024xf32>
    %c832_i32 = arith.constant 832 : i32
    %59 = tpu.dynamic_rotate %58 by %c832_i32 dim 1 : vector<20x1024xf32>, i32 -> vector<20x1024xf32>
    %60 = arith.addf %54, %59 : vector<20x1024xf32>
    %c7 = arith.constant 7 : index
    %c0_50 = arith.constant 0 : index
    %c0_51 = arith.constant 0 : index
    %61 = vector.load %arg2[%c7, %c0_50, %c0_51] : memref<10x20x30xf32, #tpu.memory_space<vmem>>, vector<1x20x30xf32>
    %62 = vector.shape_cast %61 : vector<1x20x30xf32> to vector<20x30xf32>
    %c0_52 = arith.constant 0 : index
    %c0_53 = arith.constant 0 : index
    %63 = vector.load %arg7[%c0_52, %c0_53] : memref<30x1024xf32, #tpu.memory_space<vmem>>, vector<30x1024xf32>
    %cst_54 = arith.constant dense<0.000000e+00> : vector<20x1024xf32>
    %64 = tpu.matmul %62, %63, %cst_54 {dimension_numbers = #tpu.dot_dimension_numbers<[1], [0], [0], [1], [0, 0, 1, 1], [], []>} : vector<20x30xf32>, vector<30x1024xf32>, vector<20x1024xf32> -> vector<20x1024xf32>
    %c800_i32 = arith.constant 800 : i32
    %65 = tpu.dynamic_rotate %64 by %c800_i32 dim 1 : vector<20x1024xf32>, i32 -> vector<20x1024xf32>
    %66 = arith.addf %60, %65 : vector<20x1024xf32>
    %c8 = arith.constant 8 : index
    %c0_55 = arith.constant 0 : index
    %c0_56 = arith.constant 0 : index
    %67 = vector.load %arg2[%c8, %c0_55, %c0_56] : memref<10x20x30xf32, #tpu.memory_space<vmem>>, vector<1x20x30xf32>
    %68 = vector.shape_cast %67 : vector<1x20x30xf32> to vector<20x30xf32>
    %c0_57 = arith.constant 0 : index
    %c0_58 = arith.constant 0 : index
    %69 = vector.load %arg7[%c0_57, %c0_58] : memref<30x1024xf32, #tpu.memory_space<vmem>>, vector<30x1024xf32>
    %cst_59 = arith.constant dense<0.000000e+00> : vector<20x1024xf32>
    %70 = tpu.matmul %68, %69, %cst_59 {dimension_numbers = #tpu.dot_dimension_numbers<[1], [0], [0], [1], [0, 0, 1, 1], [], []>} : vector<20x30xf32>, vector<30x1024xf32>, vector<20x1024xf32> -> vector<20x1024xf32>
    %c768_i32 = arith.constant 768 : i32
    %71 = tpu.dynamic_rotate %70 by %c768_i32 dim 1 : vector<20x1024xf32>, i32 -> vector<20x1024xf32>
    %72 = arith.addf %66, %71 : vector<20x1024xf32>
    %c9_60 = arith.constant 9 : index
    %c0_61 = arith.constant 0 : index
    %c0_62 = arith.constant 0 : index
    %73 = vector.load %arg2[%c9_60, %c0_61, %c0_62] : memref<10x20x30xf32, #tpu.memory_space<vmem>>, vector<1x20x30xf32>
    %74 = vector.shape_cast %73 : vector<1x20x30xf32> to vector<20x30xf32>
    %c0_63 = arith.constant 0 : index
    %c0_64 = arith.constant 0 : index
    %75 = vector.load %arg7[%c0_63, %c0_64] : memref<30x1024xf32, #tpu.memory_space<vmem>>, vector<30x1024xf32>
    %cst_65 = arith.constant dense<0.000000e+00> : vector<20x1024xf32>
    %76 = tpu.matmul %74, %75, %cst_65 {dimension_numbers = #tpu.dot_dimension_numbers<[1], [0], [0], [1], [0, 0, 1, 1], [], []>} : vector<20x30xf32>, vector<30x1024xf32>, vector<20x1024xf32> -> vector<20x1024xf32>
    %c736_i32 = arith.constant 736 : i32
    %77 = tpu.dynamic_rotate %76 by %c736_i32 dim 1 : vector<20x1024xf32>, i32 -> vector<20x1024xf32>
    %78 = arith.addf %72, %77 : vector<20x1024xf32>
    %c0_66 = arith.constant 0 : index
    %c0_67 = arith.constant 0 : index
    %79 = vector.load %arg3[%c0_66, %c0_67] : memref<20x1xf32, #tpu.memory_space<vmem>>, vector<20x1xf32>
    %80 = vector.broadcast %79 : vector<20x1xf32> to vector<20x1024xf32>
    %81 = arith.addf %78, %80 : vector<20x1024xf32>
    %cst_68 = arith.constant 0.000000e+00 : f32
    %82 = vector.broadcast %cst_68 : f32 to vector<20x1024xf32>
    %83 = arith.maximumf %81, %82 : vector<20x1024xf32>
    %c0_69 = arith.constant 0 : index
    %c0_70 = arith.constant 0 : index
    %84 = vector.load %arg8[%c0_69, %c0_70] : memref<200x1024xf32, #tpu.memory_space<vmem>>, vector<20x1024xf32>
    tpu.vector_store %arg8[%c0_69, %c0_70], %83 {strides = array<i32>} : memref<200x1024xf32, #tpu.memory_space<vmem>>, vector<20x1024xf32>,
    %c1023_i32_71 = arith.constant 1023 : i32
    %85 = tpu.dynamic_rotate %83 by %c1023_i32_71 dim 1 : vector<20x1024xf32>, i32 -> vector<20x1024xf32>
    %c20 = arith.constant 20 : index
    %c0_72 = arith.constant 0 : index
    %86 = vector.load %arg8[%c20, %c0_72] : memref<200x1024xf32, #tpu.memory_space<vmem>>, vector<20x1024xf32>
    tpu.vector_store %arg8[%c20, %c0_72], %85 {strides = array<i32>} : memref<200x1024xf32, #tpu.memory_space<vmem>>, vector<20x1024xf32>,
    %c1022_i32_73 = arith.constant 1022 : i32
    %87 = tpu.dynamic_rotate %83 by %c1022_i32_73 dim 1 : vector<20x1024xf32>, i32 -> vector<20x1024xf32>
    %c40 = arith.constant 40 : index
    %c0_74 = arith.constant 0 : index
    %88 = vector.load %arg8[%c40, %c0_74] : memref<200x1024xf32, #tpu.memory_space<vmem>>, vector<20x1024xf32>
    tpu.vector_store %arg8[%c40, %c0_74], %87 {strides = array<i32>} : memref<200x1024xf32, #tpu.memory_space<vmem>>, vector<20x1024xf32>,
    %c1021_i32_75 = arith.constant 1021 : i32
    %89 = tpu.dynamic_rotate %83 by %c1021_i32_75 dim 1 : vector<20x1024xf32>, i32 -> vector<20x1024xf32>
    %c60 = arith.constant 60 : index
    %c0_76 = arith.constant 0 : index
    %90 = vector.load %arg8[%c60, %c0_76] : memref<200x1024xf32, #tpu.memory_space<vmem>>, vector<20x1024xf32>
    tpu.vector_store %arg8[%c60, %c0_76], %89 {strides = array<i32>} : memref<200x1024xf32, #tpu.memory_space<vmem>>, vector<20x1024xf32>,
    %c1020_i32_77 = arith.constant 1020 : i32
    %91 = tpu.dynamic_rotate %83 by %c1020_i32_77 dim 1 : vector<20x1024xf32>, i32 -> vector<20x1024xf32>
    %c80 = arith.constant 80 : index
    %c0_78 = arith.constant 0 : index
    %92 = vector.load %arg8[%c80, %c0_78] : memref<200x1024xf32, #tpu.memory_space<vmem>>, vector<20x1024xf32>
    tpu.vector_store %arg8[%c80, %c0_78], %91 {strides = array<i32>} : memref<200x1024xf32, #tpu.memory_space<vmem>>, vector<20x1024xf32>,
    %c1019_i32_79 = arith.constant 1019 : i32
    %93 = tpu.dynamic_rotate %83 by %c1019_i32_79 dim 1 : vector<20x1024xf32>, i32 -> vector<20x1024xf32>
    %c100 = arith.constant 100 : index
    %c0_80 = arith.constant 0 : index
    %94 = vector.load %arg8[%c100, %c0_80] : memref<200x1024xf32, #tpu.memory_space<vmem>>, vector<20x1024xf32>
    tpu.vector_store %arg8[%c100, %c0_80], %93 {strides = array<i32>} : memref<200x1024xf32, #tpu.memory_space<vmem>>, vector<20x1024xf32>,
    %c1018_i32_81 = arith.constant 1018 : i32
    %95 = tpu.dynamic_rotate %83 by %c1018_i32_81 dim 1 : vector<20x1024xf32>, i32 -> vector<20x1024xf32>
    %c120 = arith.constant 120 : index
    %c0_82 = arith.constant 0 : index
    %96 = vector.load %arg8[%c120, %c0_82] : memref<200x1024xf32, #tpu.memory_space<vmem>>, vector<20x1024xf32>
    tpu.vector_store %arg8[%c120, %c0_82], %95 {strides = array<i32>} : memref<200x1024xf32, #tpu.memory_space<vmem>>, vector<20x1024xf32>,
    %c1017_i32_83 = arith.constant 1017 : i32
    %97 = tpu.dynamic_rotate %83 by %c1017_i32_83 dim 1 : vector<20x1024xf32>, i32 -> vector<20x1024xf32>
    %c140 = arith.constant 140 : index
    %c0_84 = arith.constant 0 : index
    %98 = vector.load %arg8[%c140, %c0_84] : memref<200x1024xf32, #tpu.memory_space<vmem>>, vector<20x1024xf32>
    tpu.vector_store %arg8[%c140, %c0_84], %97 {strides = array<i32>} : memref<200x1024xf32, #tpu.memory_space<vmem>>, vector<20x1024xf32>,
    %c1016_i32_85 = arith.constant 1016 : i32
    %99 = tpu.dynamic_rotate %83 by %c1016_i32_85 dim 1 : vector<20x1024xf32>, i32 -> vector<20x1024xf32>
    %c160 = arith.constant 160 : index
    %c0_86 = arith.constant 0 : index
    %100 = vector.load %arg8[%c160, %c0_86] : memref<200x1024xf32, #tpu.memory_space<vmem>>, vector<20x1024xf32>
    tpu.vector_store %arg8[%c160, %c0_86], %99 {strides = array<i32>} : memref<200x1024xf32, #tpu.memory_space<vmem>>, vector<20x1024xf32>,
    %c1015_i32_87 = arith.constant 1015 : i32
    %101 = tpu.dynamic_rotate %83 by %c1015_i32_87 dim 1 : vector<20x1024xf32>, i32 -> vector<20x1024xf32>
    %c180 = arith.constant 180 : index
    %c0_88 = arith.constant 0 : index
    %102 = vector.load %arg8[%c180, %c0_88] : memref<200x1024xf32, #tpu.memory_space<vmem>>, vector<20x1024xf32>
    tpu.vector_store %arg8[%c180, %c0_88], %101 {strides = array<i32>} : memref<200x1024xf32, #tpu.memory_space<vmem>>, vector<20x1024xf32>,
    %c0_89 = arith.constant 0 : index
    %c0_90 = arith.constant 0 : index
    %103 = vector.load %arg4[%c0_89, %c0_90] : memref<30x200xf32, #tpu.memory_space<vmem>>, vector<30x200xf32>
    %c0_91 = arith.constant 0 : index
    %c0_92 = arith.constant 0 : index
    %104 = vector.load %arg8[%c0_91, %c0_92] : memref<200x1024xf32, #tpu.memory_space<vmem>>, vector<200x1024xf32>
    %cst_93 = arith.constant dense<0.000000e+00> : vector<30x1024xf32>
    %105 = tpu.matmul %103, %104, %cst_93 {dimension_numbers = #tpu.dot_dimension_numbers<[1], [0], [0], [1], [0, 0, 1, 1], [], []>} : vector<30x200xf32>, vector<200x1024xf32>, vector<30x1024xf32> -> vector<30x1024xf32>
    %106 = vector.extract_strided_slice %105 {offsets = [0, 0], sizes = [3, 1024], strides = [1, 1]} : vector<30x1024xf32> to vector<3x1024xf32>
    %107 = vector.extract_strided_slice %105 {offsets = [3, 0], sizes = [3, 1024], strides = [1, 1]} : vector<30x1024xf32> to vector<3x1024xf32>
    %c992_i32_94 = arith.constant 992 : i32
    %108 = tpu.dynamic_rotate %107 by %c992_i32_94 dim 1 : vector<3x1024xf32>, i32 -> vector<3x1024xf32>
    %109 = arith.addf %106, %108 : vector<3x1024xf32>
    %110 = vector.extract_strided_slice %105 {offsets = [6, 0], sizes = [3, 1024], strides = [1, 1]} : vector<30x1024xf32> to vector<3x1024xf32>
    %c960_i32_95 = arith.constant 960 : i32
    %111 = tpu.dynamic_rotate %110 by %c960_i32_95 dim 1 : vector<3x1024xf32>, i32 -> vector<3x1024xf32>
    %112 = arith.addf %109, %111 : vector<3x1024xf32>
    %113 = vector.extract_strided_slice %105 {offsets = [9, 0], sizes = [3, 1024], strides = [1, 1]} : vector<30x1024xf32> to vector<3x1024xf32>
    %c928_i32_96 = arith.constant 928 : i32
    %114 = tpu.dynamic_rotate %113 by %c928_i32_96 dim 1 : vector<3x1024xf32>, i32 -> vector<3x1024xf32>
    %115 = arith.addf %112, %114 : vector<3x1024xf32>
    %116 = vector.extract_strided_slice %105 {offsets = [12, 0], sizes = [3, 1024], strides = [1, 1]} : vector<30x1024xf32> to vector<3x1024xf32>
    %c896_i32_97 = arith.constant 896 : i32
    %117 = tpu.dynamic_rotate %116 by %c896_i32_97 dim 1 : vector<3x1024xf32>, i32 -> vector<3x1024xf32>
    %118 = arith.addf %115, %117 : vector<3x1024xf32>
    %119 = vector.extract_strided_slice %105 {offsets = [15, 0], sizes = [3, 1024], strides = [1, 1]} : vector<30x1024xf32> to vector<3x1024xf32>
    %c864_i32_98 = arith.constant 864 : i32
    %120 = tpu.dynamic_rotate %119 by %c864_i32_98 dim 1 : vector<3x1024xf32>, i32 -> vector<3x1024xf32>
    %121 = arith.addf %118, %120 : vector<3x1024xf32>
    %122 = vector.extract_strided_slice %105 {offsets = [18, 0], sizes = [3, 1024], strides = [1, 1]} : vector<30x1024xf32> to vector<3x1024xf32>
    %c832_i32_99 = arith.constant 832 : i32
    %123 = tpu.dynamic_rotate %122 by %c832_i32_99 dim 1 : vector<3x1024xf32>, i32 -> vector<3x1024xf32>
    %124 = arith.addf %121, %123 : vector<3x1024xf32>
    %125 = vector.extract_strided_slice %105 {offsets = [21, 0], sizes = [3, 1024], strides = [1, 1]} : vector<30x1024xf32> to vector<3x1024xf32>
    %c800_i32_100 = arith.constant 800 : i32
    %126 = tpu.dynamic_rotate %125 by %c800_i32_100 dim 1 : vector<3x1024xf32>, i32 -> vector<3x1024xf32>
    %127 = arith.addf %124, %126 : vector<3x1024xf32>
    %128 = vector.extract_strided_slice %105 {offsets = [24, 0], sizes = [3, 1024], strides = [1, 1]} : vector<30x1024xf32> to vector<3x1024xf32>
    %c768_i32_101 = arith.constant 768 : i32
    %129 = tpu.dynamic_rotate %128 by %c768_i32_101 dim 1 : vector<3x1024xf32>, i32 -> vector<3x1024xf32>
    %130 = arith.addf %127, %129 : vector<3x1024xf32>
    %131 = vector.extract_strided_slice %105 {offsets = [27, 0], sizes = [3, 1024], strides = [1, 1]} : vector<30x1024xf32> to vector<3x1024xf32>
    %c736_i32_102 = arith.constant 736 : i32
    %132 = tpu.dynamic_rotate %131 by %c736_i32_102 dim 1 : vector<3x1024xf32>, i32 -> vector<3x1024xf32>
    %133 = arith.addf %130, %132 : vector<3x1024xf32>
    %c0_103 = arith.constant 0 : index
    %c0_104 = arith.constant 0 : index
    %134 = vector.load %arg5[%c0_103, %c0_104] : memref<3x1xf32, #tpu.memory_space<vmem>>, vector<3x1xf32>
    %135 = vector.broadcast %134 : vector<3x1xf32> to vector<3x1024xf32>
    %136 = arith.addf %133, %135 : vector<3x1024xf32>
    %137 = vector.extract_strided_slice %136 {offsets = [0, 0], sizes = [1, 1024], strides = [1, 1]} : vector<3x1024xf32> to vector<1x1024xf32>
    %138 = vector.extract_strided_slice %136 {offsets = [1, 0], sizes = [1, 1024], strides = [1, 1]} : vector<3x1024xf32> to vector<1x1024xf32>
    %139 = arith.maximumf %137, %138 : vector<1x1024xf32>
    %140 = vector.extract_strided_slice %136 {offsets = [2, 0], sizes = [1, 1024], strides = [1, 1]} : vector<3x1024xf32> to vector<1x1024xf32>
    %141 = arith.maximumf %139, %140 : vector<1x1024xf32>
    %142 = vector.broadcast %141 : vector<1x1024xf32> to vector<3x1024xf32>
    %143 = arith.subf %136, %142 : vector<3x1024xf32>
    %144 = math.exp %143 : vector<3x1024xf32>
    %145 = vector.extract_strided_slice %144 {offsets = [0, 0], sizes = [1, 1024], strides = [1, 1]} : vector<3x1024xf32> to vector<1x1024xf32>
    %146 = vector.extract_strided_slice %144 {offsets = [1, 0], sizes = [1, 1024], strides = [1, 1]} : vector<3x1024xf32> to vector<1x1024xf32>
    %147 = arith.addf %145, %146 : vector<1x1024xf32>
    %148 = vector.extract_strided_slice %144 {offsets = [2, 0], sizes = [1, 1024], strides = [1, 1]} : vector<3x1024xf32> to vector<1x1024xf32>
    %149 = arith.addf %147, %148 : vector<1x1024xf32>
    %150 = vector.broadcast %149 : vector<1x1024xf32> to vector<3x1024xf32>
    %151 = arith.divf %144, %150 : vector<3x1024xf32>
    %c0_105 = arith.constant 0 : index
    %c0_106 = arith.constant 0 : index
    %c0_107 = arith.constant 0 : index
    %152 = vector.load %arg6[%c0_105, %c0_106, %c0_107] : memref<1x3x1024xf32, #tpu.memory_space<vmem>>, vector<1x3x1024xf32>
    %153 = vector.shape_cast %152 : vector<1x3x1024xf32> to vector<3x1024xf32>
    %154 = vector.shape_cast %151 : vector<3x1024xf32> to vector<1x3x1024xf32>
    tpu.vector_store %arg6[%c0_105, %c0_106, %c0_107], %154 {strides = array<i32>} : memref<1x3x1024xf32, #tpu.memory_space<vmem>>, vector<1x3x1024xf32>,
    return
  }
  func.func @transform_0(%arg0: i32) -> (i32, i32, i32) {
    %c0_i32 = arith.constant 0 : i32
    %c0_i32_0 = arith.constant 0 : i32
    %c0_i32_1 = arith.constant 0 : i32
    return %arg0, %c0_i32, %c0_i32_0 : i32, i32, i32
  }
  func.func @transform_1(%arg0: i32) -> (i32, i32, i32) {
    %c0_i32 = arith.constant 0 : i32
    %c0_i32_0 = arith.constant 0 : i32
    %c0_i32_1 = arith.constant 0 : i32
    %c0_i32_2 = arith.constant 0 : i32
    return %c0_i32, %c0_i32_0, %c0_i32_1 : i32, i32, i32
  }
  func.func @transform_2(%arg0: i32) -> (i32, i32) {
    %c0_i32 = arith.constant 0 : i32
    %c0_i32_0 = arith.constant 0 : i32
    %c0_i32_1 = arith.constant 0 : i32
    return %c0_i32, %c0_i32_0 : i32, i32
  }
  func.func @transform_3(%arg0: i32) -> (i32, i32) {
    %c0_i32 = arith.constant 0 : i32
    %c0_i32_0 = arith.constant 0 : i32
    %c0_i32_1 = arith.constant 0 : i32
    return %c0_i32, %c0_i32_0 : i32, i32
  }
  func.func @transform_4(%arg0: i32) -> (i32, i32) {
    %c0_i32 = arith.constant 0 : i32
    %c0_i32_0 = arith.constant 0 : i32
    %c0_i32_1 = arith.constant 0 : i32
    return %c0_i32, %c0_i32_0 : i32, i32
  }
  func.func @transform_5(%arg0: i32) -> (i32, i32, i32) {
    %c0_i32 = arith.constant 0 : i32
    %c0_i32_0 = arith.constant 0 : i32
    %c0_i32_1 = arith.constant 0 : i32
    return %arg0, %c0_i32, %c0_i32_0 : i32, i32, i32
  }
}

</mosaic_0001>

<llo_original>
// kernel: neuralnet_forward.1
$region0: #{neuralnet_forward.1}
  #allocation0 [shape = 'u32[]', space=smem, size = 0x4, offset = 0x4, fixed_abs, tag = 'smem constant byte address 0x4 - core index']
  #allocation1 [shape = 'u32[144,128]{1,0:T(1,128)}', space=vmem, size = 0x12000, scoped, tag = 'internal scratch']
  #allocation2 [shape = 'f32[30,1024]{1,0:T(8,128)}', space=vmem, size = 0x20000, scoped, tag = 'scratch operand']
  #allocation3 [shape = 'f32[200,1024]{1,0:T(8,128)}', space=vmem, size = 0xc8000, scoped, tag = 'scratch operand']
  %s0 = inlined_call_operand.vmem [shape: f32[2,3,1024], index: 0, kind: input, shape index: {}]
  %s1 = inlined_call_operand.vmem [shape: f32[10,20,30], index: 1, kind: input, shape index: {}]
  %s2 = inlined_call_operand.vmem [shape: f32[20,1], index: 2, kind: input, shape index: {}]
  %s3 = inlined_call_operand.vmem [shape: f32[30,200], index: 3, kind: input, shape index: {}]
  %s4 = inlined_call_operand.vmem [shape: f32[3,1], index: 4, kind: input, shape index: {}]
  %s5 = inlined_call_operand.vmem [shape: f32[2,3,1024], index: 5, kind: output, shape index: {}]
  %s6 = sld [smem:[#allocation0]]
  $region53: #{neuralnet_forward.1} parent=0
    _
  %s8 = ssub.s32 1, %s6
  %s9 = scalar_select 0, %s8, %s6
  loop: start=0, step=1, limit=4
  $region2: #{neuralnet_forward.1} parent=0 // loop_pre_header
    _
  $region3: #{neuralnet_forward.1} parent=0 // loop_header
    %s11 = sphi 0, %s15
    %p12 = scmp.ge.s32.totalorder %s11, 4
    %s21 = sphi 0, %s23
    %s24 = sphi 0, %s21
    %s25 = sphi 0, %s24
    %s41 = sphi 0, %s25
    %s45 = sphi 0, %s45
    %s47 = sphi 0, %s45
    %s48 = sphi 0, %s47
    %s62 = sphi 0, %s48
    %s66 = sphi 0, %s66
    %s68 = sphi 0, %s66
    %s69 = sphi 0, %s68
    %s83 = sphi 0, %s69
    %s87 = sphi 0, %s87
    %s89 = sphi 0, %s87
    %s90 = sphi 0, %s89
    %s104 = sphi 0, %s90
    %s108 = sphi 0, %s108
    %s110 = sphi 0, %s108
    %s111 = sphi 0, %s110
    %s125 = sphi 0, %s111
    %s131 = sphi 0, %s133
    %s134 = sphi 0, %s131
    %s135 = sphi 0, %s134
    %s151 = sphi 0, %s135
  $region4: #{neuralnet_forward.1} parent=0 // loop_header_branch
    %14 = sbr.rel (%p12) target = $region8
  $region5: #{neuralnet_forward.1} parent=0 // loop_body
    %s16 = ssub.s32 %s11, 1
    %s17 = ssub.s32 %s11, 2
    %s18 = sadd.s32 %s11, 1
    %s19 = ssub.s32 %s11, %s18
    %p20 = scmp.eq.s32.totalorder %s19, 0
    %s22 = sadd.s32 %s21, 1
    %s23 = scalar_select %p20, %s21, %s22
    %p26 = pneg %p20
    %p27 = scmp.eq.s32.totalorder %s11, 1
    %p28 = por %p26, %p27
    %p29 = scmp.ne.s32.totalorder %s21, %s24
    %p30 = scmp.eq.s32.totalorder %s11, 0
    %p31 = por %p29, %p30
    %p32 = scmp.ne.s32.totalorder %s21, %s24
    %p33 = scmp.eq.s32.totalorder %s16, 1
    %p34 = por %p32, %p33
    %p35 = scmp.ne.s32.totalorder %s24, %s25
    %p36 = scmp.eq.s32.totalorder %s16, 0
    %p37 = por %p35, %p36
    %p38 = scmp.ne.s32.totalorder %s24, %s25
    %p39 = scmp.eq.s32.totalorder %s17, 1
    %p40 = por %p38, %p39
    %p42 = scmp.ne.s32.totalorder %s25, %s41
    %p43 = scmp.eq.s32.totalorder %s17, 0
    %p44 = por %p42, %p43
    %s46 = sadd.s32 %s45, 1
    %p49 = scmp.eq.s32.totalorder %s11, 1
    %p50 = scmp.ne.s32.totalorder %s45, %s47
    %p51 = scmp.eq.s32.totalorder %s11, 0
    %p52 = por %p50, %p51
    %p53 = scmp.ne.s32.totalorder %s45, %s47
    %p54 = scmp.eq.s32.totalorder %s16, 1
    %p55 = por %p53, %p54
    %p56 = scmp.ne.s32.totalorder %s47, %s48
    %p57 = scmp.eq.s32.totalorder %s16, 0
    %p58 = por %p56, %p57
    %p59 = scmp.ne.s32.totalorder %s47, %s48
    %p60 = scmp.eq.s32.totalorder %s17, 1
    %p61 = por %p59, %p60
    %p63 = scmp.ne.s32.totalorder %s48, %s62
    %p64 = scmp.eq.s32.totalorder %s17, 0
    %p65 = por %p63, %p64
    %s67 = sadd.s32 %s66, 1
    %p70 = scmp.eq.s32.totalorder %s11, 1
    %p71 = scmp.ne.s32.totalorder %s66, %s68
    %p72 = scmp.eq.s32.totalorder %s11, 0
    %p73 = por %p71, %p72
    %p74 = scmp.ne.s32.totalorder %s66, %s68
    %p75 = scmp.eq.s32.totalorder %s16, 1
    %p76 = por %p74, %p75
    %p77 = scmp.ne.s32.totalorder %s68, %s69
    %p78 = scmp.eq.s32.totalorder %s16, 0
    %p79 = por %p77, %p78
    %p80 = scmp.ne.s32.totalorder %s68, %s69
    %p81 = scmp.eq.s32.totalorder %s17, 1
    %p82 = por %p80, %p81
    %p84 = scmp.ne.s32.totalorder %s69, %s83
    %p85 = scmp.eq.s32.totalorder %s17, 0
    %p86 = por %p84, %p85
    %s88 = sadd.s32 %s87, 1
    %p91 = scmp.eq.s32.totalorder %s11, 1
    %p92 = scmp.ne.s32.totalorder %s87, %s89
    %p93 = scmp.eq.s32.totalorder %s11, 0
    %p94 = por %p92, %p93
    %p95 = scmp.ne.s32.totalorder %s87, %s89
    %p96 = scmp.eq.s32.totalorder %s16, 1
    %p97 = por %p95, %p96
    %p98 = scmp.ne.s32.totalorder %s89, %s90
    %p99 = scmp.eq.s32.totalorder %s16, 0
    %p100 = por %p98, %p99
    %p101 = scmp.ne.s32.totalorder %s89, %s90
    %p102 = scmp.eq.s32.totalorder %s17, 1
    %p103 = por %p101, %p102
    %p105 = scmp.ne.s32.totalorder %s90, %s104
    %p106 = scmp.eq.s32.totalorder %s17, 0
    %p107 = por %p105, %p106
    %s109 = sadd.s32 %s108, 1
    %p112 = scmp.eq.s32.totalorder %s11, 1
    %p113 = scmp.ne.s32.totalorder %s108, %s110
    %p114 = scmp.eq.s32.totalorder %s11, 0
    %p115 = por %p113, %p114
    %p116 = scmp.ne.s32.totalorder %s108, %s110
    %p117 = scmp.eq.s32.totalorder %s16, 1
    %p118 = por %p116, %p117
    %p119 = scmp.ne.s32.totalorder %s110, %s111
    %p120 = scmp.eq.s32.totalorder %s16, 0
    %p121 = por %p119, %p120
    %p122 = scmp.ne.s32.totalorder %s110, %s111
    %p123 = scmp.eq.s32.totalorder %s17, 1
    %p124 = por %p122, %p123
    %p126 = scmp.ne.s32.totalorder %s111, %s125
    %p127 = scmp.eq.s32.totalorder %s17, 0
    %p128 = por %p126, %p127
    %s129 = ssub.s32 %s11, %s18
    %p130 = scmp.eq.s32.totalorder %s129, 0
    %s132 = sadd.s32 %s131, 1
    %s133 = scalar_select %p130, %s131, %s132
    %p136 = pneg %p130
    %p137 = scmp.eq.s32.totalorder %s11, 1
    %p138 = por %p136, %p137
    %p139 = scmp.ne.s32.totalorder %s131, %s134
    %p140 = scmp.eq.s32.totalorder %s11, 0
    %p141 = por %p139, %p140
    %p142 = scmp.ne.s32.totalorder %s131, %s134
    %p143 = scmp.eq.s32.totalorder %s16, 1
    %p144 = por %p142, %p143
    %p145 = scmp.ne.s32.totalorder %s134, %s135
    %p146 = scmp.eq.s32.totalorder %s16, 0
    %p147 = por %p145, %p146
    %p148 = scmp.ne.s32.totalorder %s134, %s135
    %p149 = scmp.eq.s32.totalorder %s17, 1
    %p150 = por %p148, %p149
    %p152 = scmp.ne.s32.totalorder %s135, %s151
    %p153 = scmp.eq.s32.totalorder %s17, 0
    %p154 = por %p152, %p153
    %p155 = scmp.le.s32.totalorder 1, %s11
    %p156 = scmp.lt.s32.totalorder %s11, 3
    %p157 = pnand %p155, %p156
    %p158 = pneg %p157
    // Predicated region
    $region9: #{neuralnet_forward.1} parent=5 // pred_check
      _
    $region10: #{neuralnet_forward.1} parent=5 // pred_check_branch
      %160 = sbr.rel (%p157) target = $region12
    $region11: #{neuralnet_forward.1} parent=5 // pred_region
      %s161 = ssub.s32 %s11, 1
      // Predicated region
      $region13: #{neuralnet_forward.1} parent=11 // pred_check
        %p162 = pneg %p58
      $region14: #{neuralnet_forward.1} parent=11 // pred_check_branch
        %164 = sbr.rel (%p162) target = $region16
      $region15: #{neuralnet_forward.1} parent=11 // pred_region
        _
      $region16: #{neuralnet_forward.1} parent=11 // pred_fallthru
        _
      // Predicated region
      $region17: #{neuralnet_forward.1} parent=11 // pred_check
        %p165 = pneg %p79
      $region18: #{neuralnet_forward.1} parent=11 // pred_check_branch
        %167 = sbr.rel (%p165) target = $region20
      $region19: #{neuralnet_forward.1} parent=11 // pred_region
        _
      $region20: #{neuralnet_forward.1} parent=11 // pred_fallthru
        _
      // Predicated region
      $region21: #{neuralnet_forward.1} parent=11 // pred_check
        %p168 = pneg %p100
      $region22: #{neuralnet_forward.1} parent=11 // pred_check_branch
        %170 = sbr.rel (%p168) target = $region24
      $region23: #{neuralnet_forward.1} parent=11 // pred_region
        _
      $region24: #{neuralnet_forward.1} parent=11 // pred_fallthru
        _
      // Predicated region
      $region25: #{neuralnet_forward.1} parent=11 // pred_check
        %p171 = pneg %p121
      $region26: #{neuralnet_forward.1} parent=11 // pred_check_branch
        %173 = sbr.rel (%p171) target = $region28
      $region27: #{neuralnet_forward.1} parent=11 // pred_region
        _
      $region28: #{neuralnet_forward.1} parent=11 // pred_fallthru
        _
    $region12: #{neuralnet_forward.1} parent=5 // pred_fallthru
      _
    %p174 = scmp.lt.s32.totalorder %s11, 2
    // Predicated region
    $region29: #{neuralnet_forward.1} parent=5 // pred_check
      %p175 = pneg %p174
    $region30: #{neuralnet_forward.1} parent=5 // pred_check_branch
      %177 = sbr.rel (%p175) target = $region32
    $region31: #{neuralnet_forward.1} parent=5 // pred_region
      // Predicated region
      $region33: #{neuralnet_forward.1} parent=31 // pred_check
        %p178 = pneg %p31
      $region34: #{neuralnet_forward.1} parent=31 // pred_check_branch
        %180 = sbr.rel (%p178) target = $region36
      $region35: #{neuralnet_forward.1} parent=31 // pred_region
        %p181 = scmp.lt.s32.totalorder %s11, 1
        %s182 = scalar_select %p181, %s11, 1
        %s183 = smul.addr %s182, 8
        %s184 = smul.addr %s183, 4
        %s185 = scalar_lea.vmem %s0, %s184
      $region36: #{neuralnet_forward.1} parent=31 // pred_fallthru
        _
    $region32: #{neuralnet_forward.1} parent=5 // pred_fallthru
      _
    %p186 = scmp.le.s32.totalorder 1, %s11
    %p187 = scmp.lt.s32.totalorder %s11, 3
    %p188 = pnand %p186, %p187
    %p189 = pneg %p188
    // Predicated region
    $region37: #{neuralnet_forward.1} parent=5 // pred_check
      _
    $region38: #{neuralnet_forward.1} parent=5 // pred_check_branch
      %191 = sbr.rel (%p188) target = $region40
    $region39: #{neuralnet_forward.1} parent=5 // pred_region
      %s192 = ssub.s32 %s11, 1
      %p193 = scmp.lt.s32.totalorder %s16, 1
      %s194 = scalar_select %p193, %s16, 1
      %s195 = smul.addr %s194, 8
      %s196 = smul.addr %s195, 4
      %s197 = scalar_lea.vmem %s0, %s196
      %p198 = pneg %p37
      %p199 = pneg %p34
      %p200 = pneg %p58
      %p201 = pneg %p55
      %p202 = pneg %p79
      %p203 = pneg %p76
      %p204 = pneg %p100
      %p205 = pneg %p97
      %p206 = pneg %p121
      %p207 = pneg %p118
      %p208 = pneg %p147
      %p209 = pneg %p144
      %p210 = scmp.lt.s32.totalorder %s16, 1
      %s211 = scalar_select %p210, %s16, 1
      %s212 = smul.addr %s211, 8
      %s213 = smul.addr %s212, 4
      %s214 = scalar_lea.vmem %s5, %s213
      %p215 = scmp.lt.s32.totalorder %s16, 1
      %s216 = scalar_select %p215, %s16, 1
      %s217 = smul.addr %s216, 8
      %s218 = smul.addr %s217, 4
      %s219 = scalar_lea.vmem %s0, %s218
      %p220 = scmp.lt.s32.totalorder %s16, 1
      %s221 = scalar_select %p220, %s16, 1
      %s222 = smul.addr %s221, 8
      %s223 = smul.addr %s222, 4
      %s224 = scalar_lea.vmem %s5, %s223
      %v225 = vld [vmem:[%s219] sm:$0x77]
      %v226 = vld [vmem:[%s219 + $0x8] sm:$0x77]
      %v227 = vld [vmem:[%s219 + $0x10] sm:$0x77]
      %v228 = vld [vmem:[%s219 + $0x18] sm:$0x77]
      %v233 = vcombine.high %v225, %v225
      %v234 = vcombine.high %v226, %v226
      %v235 = vcombine.high %v227, %v227
      %v236 = vcombine.high %v228, %v228
      %241 = vst [vmem:[#allocation2] sm:$0x7] %v225
      %242 = vst [vmem:[#allocation2 + $0x8] sm:$0x7] %v233
      %243 = vst [vmem:[#allocation2 + $0x10] sm:$0x7] %v226
      %244 = vst [vmem:[#allocation2 + $0x18] sm:$0x7] %v234
      %245 = vst [vmem:[#allocation2 + $0x20] sm:$0x7] %v227
      %246 = vst [vmem:[#allocation2 + $0x28] sm:$0x7] %v235
      %247 = vst [vmem:[#allocation2 + $0x30] sm:$0x7] %v228
      %248 = vst [vmem:[#allocation2 + $0x38] sm:$0x7] %v236
      %249 = vrot.lane.b32.xlu0 %v225, 127
      %v250 = vpop.permute.xlu0 %249
      %251 = vrot.lane.b32.xlu0 %v233, 127
      %v252 = vpop.permute.xlu0 %251
      %253 = vrot.lane.b32.xlu0 %v226, 127
      %v254 = vpop.permute.xlu0 %253
      %255 = vrot.lane.b32.xlu0 %v234, 127
      %v256 = vpop.permute.xlu0 %255
      %257 = vrot.lane.b32.xlu0 %v227, 127
      %v258 = vpop.permute.xlu0 %257
      %259 = vrot.lane.b32.xlu0 %v235, 127
      %v260 = vpop.permute.xlu0 %259
      %261 = vrot.lane.b32.xlu0 %v228, 127
      %v262 = vpop.permute.xlu0 %261
      %263 = vrot.lane.b32.xlu0 %v236, 127
      %v264 = vpop.permute.xlu0 %263
      %v265 = vlaneseq
      %v266 = vand.u32 %v265, 127
      %vm267 = vcmp.lt.s32.totalorder %v266, 127
      %v268 = vsel %vm267, %v262, %v264
      %v269 = vsel %vm267, %v260, %v262
      %v270 = vsel %vm267, %v258, %v260
      %v271 = vsel %vm267, %v256, %v258
      %v272 = vsel %vm267, %v254, %v256
      %v273 = vsel %vm267, %v252, %v254
      %v274 = vsel %vm267, %v250, %v252
      %v275 = vsel %vm267, %v264, %v250
      %v284 = vrot.slane %v274, 5
      %v285 = vrot.slane %v273, 5
      %v286 = vrot.slane %v272, 5
      %v287 = vrot.slane %v271, 5
      %v288 = vrot.slane %v270, 5
      %v289 = vrot.slane %v269, 5
      %v290 = vrot.slane %v268, 5
      %v291 = vrot.slane %v275, 5
      %300 = vst [vmem:[#allocation2] sm:$0x38] %v284
      %301 = vst [vmem:[#allocation2 + $0x8] sm:$0x38] %v285
      %302 = vst [vmem:[#allocation2 + $0x10] sm:$0x38] %v286
      %303 = vst [vmem:[#allocation2 + $0x18] sm:$0x38] %v287
      %304 = vst [vmem:[#allocation2 + $0x20] sm:$0x38] %v288
      %305 = vst [vmem:[#allocation2 + $0x28] sm:$0x38] %v289
      %306 = vst [vmem:[#allocation2 + $0x30] sm:$0x38] %v290
      %307 = vst [vmem:[#allocation2 + $0x38] sm:$0x38] %v291
      %308 = vrot.lane.b32.xlu0 %v225, 126
      %v309 = vpop.permute.xlu0 %308
      %310 = vrot.lane.b32.xlu0 %v233, 126
      %v311 = vpop.permute.xlu0 %310
      %312 = vrot.lane.b32.xlu0 %v226, 126
      %v313 = vpop.permute.xlu0 %312
      %314 = vrot.lane.b32.xlu0 %v234, 126
      %v315 = vpop.permute.xlu0 %314
      %316 = vrot.lane.b32.xlu0 %v227, 126
      %v317 = vpop.permute.xlu0 %316
      %318 = vrot.lane.b32.xlu0 %v235, 126
      %v319 = vpop.permute.xlu0 %318
      %320 = vrot.lane.b32.xlu0 %v228, 126
      %v321 = vpop.permute.xlu0 %320
      %322 = vrot.lane.b32.xlu0 %v236, 126
      %v323 = vpop.permute.xlu0 %322
      %vm324 = vcmp.lt.s32.totalorder %v266, 126
      %v325 = vsel %vm324, %v321, %v323
      %v326 = vsel %vm324, %v319, %v321
      %v327 = vsel %vm324, %v317, %v319
      %v328 = vsel %vm324, %v315, %v317
      %v329 = vsel %vm324, %v313, %v315
      %v330 = vsel %vm324, %v311, %v313
      %v331 = vsel %vm324, %v309, %v311
      %v332 = vsel %vm324, %v323, %v309
      %v341 = vrot.slane %v331, 2
      %v342 = vrot.slane %v330, 2
      %v343 = vrot.slane %v329, 2
      %v344 = vrot.slane %v328, 2
      %v345 = vrot.slane %v327, 2
      %v346 = vrot.slane %v326, 2
      %v347 = vrot.slane %v325, 2
      %v348 = vrot.slane %v332, 2
      %357 = vst [vmem:[#allocation2] sm:$0xc0] %v341
      %358 = vst [vmem:[#allocation2 + $0x8] sm:$0xc0] %v342
      %359 = vst [vmem:[#allocation2 + $0x10] sm:$0xc0] %v343
      %360 = vst [vmem:[#allocation2 + $0x18] sm:$0xc0] %v344
      %361 = vst [vmem:[#allocation2 + $0x20] sm:$0xc0] %v345
      %362 = vst [vmem:[#allocation2 + $0x28] sm:$0xc0] %v346
      %363 = vst [vmem:[#allocation2 + $0x30] sm:$0xc0] %v347
      %364 = vst [vmem:[#allocation2 + $0x38] sm:$0xc0] %v348
      %365 = vst [vmem:[#allocation2 + $0x40] sm:$0x1] %v341
      %366 = vst [vmem:[#allocation2 + $0x48] sm:$0x1] %v342
      %367 = vst [vmem:[#allocation2 + $0x50] sm:$0x1] %v343
      %368 = vst [vmem:[#allocation2 + $0x58] sm:$0x1] %v344
      %369 = vst [vmem:[#allocation2 + $0x60] sm:$0x1] %v345
      %370 = vst [vmem:[#allocation2 + $0x68] sm:$0x1] %v346
      %371 = vst [vmem:[#allocation2 + $0x70] sm:$0x1] %v347
      %372 = vst [vmem:[#allocation2 + $0x78] sm:$0x1] %v348
      %373 = vrot.lane.b32.xlu0 %v225, 125
      %v374 = vpop.permute.xlu0 %373
      %375 = vrot.lane.b32.xlu0 %v233, 125
      %v376 = vpop.permute.xlu0 %375
      %377 = vrot.lane.b32.xlu0 %v226, 125
      %v378 = vpop.permute.xlu0 %377
      %379 = vrot.lane.b32.xlu0 %v234, 125
      %v380 = vpop.permute.xlu0 %379
      %381 = vrot.lane.b32.xlu0 %v227, 125
      %v382 = vpop.permute.xlu0 %381
      %383 = vrot.lane.b32.xlu0 %v235, 125
      %v384 = vpop.permute.xlu0 %383
      %385 = vrot.lane.b32.xlu0 %v228, 125
      %v386 = vpop.permute.xlu0 %385
      %387 = vrot.lane.b32.xlu0 %v236, 125
      %v388 = vpop.permute.xlu0 %387
      %vm389 = vcmp.lt.s32.totalorder %v266, 125
      %v390 = vsel %vm389, %v386, %v388
      %v391 = vsel %vm389, %v384, %v386
      %v392 = vsel %vm389, %v382, %v384
      %v393 = vsel %vm389, %v380, %v382
      %v394 = vsel %vm389, %v378, %v380
      %v395 = vsel %vm389, %v376, %v378
      %v396 = vsel %vm389, %v374, %v376
      %v397 = vsel %vm389, %v388, %v374
      %v406 = vrot.slane %v396, 7
      %v407 = vrot.slane %v395, 7
      %v408 = vrot.slane %v394, 7
      %v409 = vrot.slane %v393, 7
      %v410 = vrot.slane %v392, 7
      %v411 = vrot.slane %v391, 7
      %v412 = vrot.slane %v390, 7
      %v413 = vrot.slane %v397, 7
      %422 = vst [vmem:[#allocation2 + $0x40] sm:$0xe] %v406
      %423 = vst [vmem:[#allocation2 + $0x48] sm:$0xe] %v407
      %424 = vst [vmem:[#allocation2 + $0x50] sm:$0xe] %v408
      %425 = vst [vmem:[#allocation2 + $0x58] sm:$0xe] %v409
      %426 = vst [vmem:[#allocation2 + $0x60] sm:$0xe] %v410
      %427 = vst [vmem:[#allocation2 + $0x68] sm:$0xe] %v411
      %428 = vst [vmem:[#allocation2 + $0x70] sm:$0xe] %v412
      %429 = vst [vmem:[#allocation2 + $0x78] sm:$0xe] %v413
      %430 = vrot.lane.b32.xlu0 %v225, 124
      %v431 = vpop.permute.xlu0 %430
      %432 = vrot.lane.b32.xlu0 %v233, 124
      %v433 = vpop.permute.xlu0 %432
      %434 = vrot.lane.b32.xlu0 %v226, 124
      %v435 = vpop.permute.xlu0 %434
      %436 = vrot.lane.b32.xlu0 %v234, 124
      %v437 = vpop.permute.xlu0 %436
      %438 = vrot.lane.b32.xlu0 %v227, 124
      %v439 = vpop.permute.xlu0 %438
      %440 = vrot.lane.b32.xlu0 %v235, 124
      %v441 = vpop.permute.xlu0 %440
      %442 = vrot.lane.b32.xlu0 %v228, 124
      %v443 = vpop.permute.xlu0 %442
      %444 = vrot.lane.b32.xlu0 %v236, 124
      %v445 = vpop.permute.xlu0 %444
      %vm446 = vcmp.lt.s32.totalorder %v266, 124
      %v447 = vsel %vm446, %v443, %v445
      %v448 = vsel %vm446, %v441, %v443
      %v449 = vsel %vm446, %v439, %v441
      %v450 = vsel %vm446, %v437, %v439
      %v451 = vsel %vm446, %v435, %v437
      %v452 = vsel %vm446, %v433, %v435
      %v453 = vsel %vm446, %v431, %v433
      %v454 = vsel %vm446, %v445, %v431
      %v463 = vrot.slane %v453, 4
      %v464 = vrot.slane %v452, 4
      %v465 = vrot.slane %v451, 4
      %v466 = vrot.slane %v450, 4
      %v467 = vrot.slane %v449, 4
      %v468 = vrot.slane %v448, 4
      %v469 = vrot.slane %v447, 4
      %v470 = vrot.slane %v454, 4
      %479 = vst [vmem:[#allocation2 + $0x40] sm:$0x70] %v463
      %480 = vst [vmem:[#allocation2 + $0x48] sm:$0x70] %v464
      %481 = vst [vmem:[#allocation2 + $0x50] sm:$0x70] %v465
      %482 = vst [vmem:[#allocation2 + $0x58] sm:$0x70] %v466
      %483 = vst [vmem:[#allocation2 + $0x60] sm:$0x70] %v467
      %484 = vst [vmem:[#allocation2 + $0x68] sm:$0x70] %v468
      %485 = vst [vmem:[#allocation2 + $0x70] sm:$0x70] %v469
      %486 = vst [vmem:[#allocation2 + $0x78] sm:$0x70] %v470
      %487 = vrot.lane.b32.xlu0 %v225, 123
      %v488 = vpop.permute.xlu0 %487
      %489 = vrot.lane.b32.xlu0 %v233, 123
      %v490 = vpop.permute.xlu0 %489
      %491 = vrot.lane.b32.xlu0 %v226, 123
      %v492 = vpop.permute.xlu0 %491
      %493 = vrot.lane.b32.xlu0 %v234, 123
      %v494 = vpop.permute.xlu0 %493
      %495 = vrot.lane.b32.xlu0 %v227, 123
      %v496 = vpop.permute.xlu0 %495
      %497 = vrot.lane.b32.xlu0 %v235, 123
      %v498 = vpop.permute.xlu0 %497
      %499 = vrot.lane.b32.xlu0 %v228, 123
      %v500 = vpop.permute.xlu0 %499
      %501 = vrot.lane.b32.xlu0 %v236, 123
      %v502 = vpop.permute.xlu0 %501
      %vm503 = vcmp.lt.s32.totalorder %v266, 123
      %v504 = vsel %vm503, %v500, %v502
      %v505 = vsel %vm503, %v498, %v500
      %v506 = vsel %vm503, %v496, %v498
      %v507 = vsel %vm503, %v494, %v496
      %v508 = vsel %vm503, %v492, %v494
      %v509 = vsel %vm503, %v490, %v492
      %v510 = vsel %vm503, %v488, %v490
      %v511 = vsel %vm503, %v502, %v488
      %v520 = vrot.slane %v510, 1
      %v521 = vrot.slane %v509, 1
      %v522 = vrot.slane %v508, 1
      %v523 = vrot.slane %v507, 1
      %v524 = vrot.slane %v506, 1
      %v525 = vrot.slane %v505, 1
      %v526 = vrot.slane %v504, 1
      %v527 = vrot.slane %v511, 1
      %536 = vst [vmem:[#allocation2 + $0x40] sm:$0x80] %v520
      %537 = vst [vmem:[#allocation2 + $0x48] sm:$0x80] %v521
      %538 = vst [vmem:[#allocation2 + $0x50] sm:$0x80] %v522
      %539 = vst [vmem:[#allocation2 + $0x58] sm:$0x80] %v523
      %540 = vst [vmem:[#allocation2 + $0x60] sm:$0x80] %v524
      %541 = vst [vmem:[#allocation2 + $0x68] sm:$0x80] %v525
      %542 = vst [vmem:[#allocation2 + $0x70] sm:$0x80] %v526
      %543 = vst [vmem:[#allocation2 + $0x78] sm:$0x80] %v527
      %544 = vst [vmem:[#allocation2 + $0x80] sm:$0x3] %v520
      %545 = vst [vmem:[#allocation2 + $0x88] sm:$0x3] %v521
      %546 = vst [vmem:[#allocation2 + $0x90] sm:$0x3] %v522
      %547 = vst [vmem:[#allocation2 + $0x98] sm:$0x3] %v523
      %548 = vst [vmem:[#allocation2 + $0xa0] sm:$0x3] %v524
      %549 = vst [vmem:[#allocation2 + $0xa8] sm:$0x3] %v525
      %550 = vst [vmem:[#allocation2 + $0xb0] sm:$0x3] %v526
      %551 = vst [vmem:[#allocation2 + $0xb8] sm:$0x3] %v527
      %552 = vrot.lane.b32.xlu0 %v225, 122
      %v553 = vpop.permute.xlu0 %552
      %554 = vrot.lane.b32.xlu0 %v233, 122
      %v555 = vpop.permute.xlu0 %554
      %556 = vrot.lane.b32.xlu0 %v226, 122
      %v557 = vpop.permute.xlu0 %556
      %558 = vrot.lane.b32.xlu0 %v234, 122
      %v559 = vpop.permute.xlu0 %558
      %560 = vrot.lane.b32.xlu0 %v227, 122
      %v561 = vpop.permute.xlu0 %560
      %562 = vrot.lane.b32.xlu0 %v235, 122
      %v563 = vpop.permute.xlu0 %562
      %564 = vrot.lane.b32.xlu0 %v228, 122
      %v565 = vpop.permute.xlu0 %564
      %566 = vrot.lane.b32.xlu0 %v236, 122
      %v567 = vpop.permute.xlu0 %566
      %vm568 = vcmp.lt.s32.totalorder %v266, 122
      %v569 = vsel %vm568, %v565, %v567
      %v570 = vsel %vm568, %v563, %v565
      %v571 = vsel %vm568, %v561, %v563
      %v572 = vsel %vm568, %v559, %v561
      %v573 = vsel %vm568, %v557, %v559
      %v574 = vsel %vm568, %v555, %v557
      %v575 = vsel %vm568, %v553, %v555
      %v576 = vsel %vm568, %v567, %v553
      %v585 = vrot.slane %v575, 6
      %v586 = vrot.slane %v574, 6
      %v587 = vrot.slane %v573, 6
      %v588 = vrot.slane %v572, 6
      %v589 = vrot.slane %v571, 6
      %v590 = vrot.slane %v570, 6
      %v591 = vrot.slane %v569, 6
      %v592 = vrot.slane %v576, 6
      %601 = vst [vmem:[#allocation2 + $0x80] sm:$0x1c] %v585
      %602 = vst [vmem:[#allocation2 + $0x88] sm:$0x1c] %v586
      %603 = vst [vmem:[#allocation2 + $0x90] sm:$0x1c] %v587
      %604 = vst [vmem:[#allocation2 + $0x98] sm:$0x1c] %v588
      %605 = vst [vmem:[#allocation2 + $0xa0] sm:$0x1c] %v589
      %606 = vst [vmem:[#allocation2 + $0xa8] sm:$0x1c] %v590
      %607 = vst [vmem:[#allocation2 + $0xb0] sm:$0x1c] %v591
      %608 = vst [vmem:[#allocation2 + $0xb8] sm:$0x1c] %v592
      %609 = vrot.lane.b32.xlu0 %v225, 121
      %v610 = vpop.permute.xlu0 %609
      %611 = vrot.lane.b32.xlu0 %v233, 121
      %v612 = vpop.permute.xlu0 %611
      %613 = vrot.lane.b32.xlu0 %v226, 121
      %v614 = vpop.permute.xlu0 %613
      %615 = vrot.lane.b32.xlu0 %v234, 121
      %v616 = vpop.permute.xlu0 %615
      %617 = vrot.lane.b32.xlu0 %v227, 121
      %v618 = vpop.permute.xlu0 %617
      %619 = vrot.lane.b32.xlu0 %v235, 121
      %v620 = vpop.permute.xlu0 %619
      %621 = vrot.lane.b32.xlu0 %v228, 121
      %v622 = vpop.permute.xlu0 %621
      %623 = vrot.lane.b32.xlu0 %v236, 121
      %v624 = vpop.permute.xlu0 %623
      %vm625 = vcmp.lt.s32.totalorder %v266, 121
      %v626 = vsel %vm625, %v622, %v624
      %v627 = vsel %vm625, %v620, %v622
      %v628 = vsel %vm625, %v618, %v620
      %v629 = vsel %vm625, %v616, %v618
      %v630 = vsel %vm625, %v614, %v616
      %v631 = vsel %vm625, %v612, %v614
      %v632 = vsel %vm625, %v610, %v612
      %v633 = vsel %vm625, %v624, %v610
      %v642 = vrot.slane %v632, 3
      %v643 = vrot.slane %v631, 3
      %v644 = vrot.slane %v630, 3
      %v645 = vrot.slane %v629, 3
      %v646 = vrot.slane %v628, 3
      %v647 = vrot.slane %v627, 3
      %v648 = vrot.slane %v626, 3
      %v649 = vrot.slane %v633, 3
      %658 = vst [vmem:[#allocation2 + $0x80] sm:$0xe0] %v642
      %659 = vst [vmem:[#allocation2 + $0x88] sm:$0xe0] %v643
      %660 = vst [vmem:[#allocation2 + $0x90] sm:$0xe0] %v644
      %661 = vst [vmem:[#allocation2 + $0x98] sm:$0xe0] %v645
      %662 = vst [vmem:[#allocation2 + $0xa0] sm:$0xe0] %v646
      %663 = vst [vmem:[#allocation2 + $0xa8] sm:$0xe0] %v647
      %664 = vst [vmem:[#allocation2 + $0xb0] sm:$0xe0] %v648
      %665 = vst [vmem:[#allocation2 + $0xb8] sm:$0xe0] %v649
      %666 = vrot.lane.b32.xlu0 %v225, 120
      %v667 = vpop.permute.xlu0 %666
      %668 = vrot.lane.b32.xlu0 %v233, 120
      %v669 = vpop.permute.xlu0 %668
      %670 = vrot.lane.b32.xlu0 %v226, 120
      %v671 = vpop.permute.xlu0 %670
      %672 = vrot.lane.b32.xlu0 %v234, 120
      %v673 = vpop.permute.xlu0 %672
      %674 = vrot.lane.b32.xlu0 %v227, 120
      %v675 = vpop.permute.xlu0 %674
      %676 = vrot.lane.b32.xlu0 %v235, 120
      %v677 = vpop.permute.xlu0 %676
      %678 = vrot.lane.b32.xlu0 %v228, 120
      %v679 = vpop.permute.xlu0 %678
      %680 = vrot.lane.b32.xlu0 %v236, 120
      %v681 = vpop.permute.xlu0 %680
      %vm682 = vcmp.lt.s32.totalorder %v266, 120
      %v683 = vsel %vm682, %v679, %v681
      %v684 = vsel %vm682, %v677, %v679
      %v685 = vsel %vm682, %v675, %v677
      %v686 = vsel %vm682, %v673, %v675
      %v687 = vsel %vm682, %v671, %v673
      %v688 = vsel %vm682, %v669, %v671
      %v689 = vsel %vm682, %v667, %v669
      %v690 = vsel %vm682, %v681, %v667
      %691 = vst [vmem:[#allocation2 + $0xc0] sm:$0x7] %v689
      %692 = vst [vmem:[#allocation2 + $0xc8] sm:$0x7] %v688
      %693 = vst [vmem:[#allocation2 + $0xd0] sm:$0x7] %v687
      %694 = vst [vmem:[#allocation2 + $0xd8] sm:$0x7] %v686
      %695 = vst [vmem:[#allocation2 + $0xe0] sm:$0x7] %v685
      %696 = vst [vmem:[#allocation2 + $0xe8] sm:$0x7] %v684
      %697 = vst [vmem:[#allocation2 + $0xf0] sm:$0x7] %v683
      %698 = vst [vmem:[#allocation2 + $0xf8] sm:$0x7] %v690
      %699 = vrot.lane.b32.xlu0 %v225, 119
      %v700 = vpop.permute.xlu0 %699
      %701 = vrot.lane.b32.xlu0 %v233, 119
      %v702 = vpop.permute.xlu0 %701
      %703 = vrot.lane.b32.xlu0 %v226, 119
      %v704 = vpop.permute.xlu0 %703
      %705 = vrot.lane.b32.xlu0 %v234, 119
      %v706 = vpop.permute.xlu0 %705
      %707 = vrot.lane.b32.xlu0 %v227, 119
      %v708 = vpop.permute.xlu0 %707
      %709 = vrot.lane.b32.xlu0 %v235, 119
      %v710 = vpop.permute.xlu0 %709
      %711 = vrot.lane.b32.xlu0 %v228, 119
      %v712 = vpop.permute.xlu0 %711
      %713 = vrot.lane.b32.xlu0 %v236, 119
      %v714 = vpop.permute.xlu0 %713
      %vm715 = vcmp.lt.s32.totalorder %v266, 119
      %v716 = vsel %vm715, %v712, %v714
      %v717 = vsel %vm715, %v710, %v712
      %v718 = vsel %vm715, %v708, %v710
      %v719 = vsel %vm715, %v706, %v708
      %v720 = vsel %vm715, %v704, %v706
      %v721 = vsel %vm715, %v702, %v704
      %v722 = vsel %vm715, %v700, %v702
      %v723 = vsel %vm715, %v714, %v700
      %v732 = vrot.slane %v722, 5
      %v733 = vrot.slane %v721, 5
      %v734 = vrot.slane %v720, 5
      %v735 = vrot.slane %v719, 5
      %v736 = vrot.slane %v718, 5
      %v737 = vrot.slane %v717, 5
      %v738 = vrot.slane %v716, 5
      %v739 = vrot.slane %v723, 5
      %748 = vst [vmem:[#allocation2 + $0xc0] sm:$0x38] %v732
      %749 = vst [vmem:[#allocation2 + $0xc8] sm:$0x38] %v733
      %750 = vst [vmem:[#allocation2 + $0xd0] sm:$0x38] %v734
      %751 = vst [vmem:[#allocation2 + $0xd8] sm:$0x38] %v735
      %752 = vst [vmem:[#allocation2 + $0xe0] sm:$0x38] %v736
      %753 = vst [vmem:[#allocation2 + $0xe8] sm:$0x38] %v737
      %754 = vst [vmem:[#allocation2 + $0xf0] sm:$0x38] %v738
      %755 = vst [vmem:[#allocation2 + $0xf8] sm:$0x38] %v739
      %v756 = vld [vmem:[%s1] sm:$0xff]
      %v757 = vld [vmem:[%s1 + $0x8] sm:$0xff]
      %v758 = vld [vmem:[%s1 + $0x10] sm:$0xf]
      %v759 = vld [vmem:[#allocation2] sm:$0xff]
      %v760 = vld [vmem:[#allocation2 + $0x8] sm:$0xff]
      %v761 = vld [vmem:[#allocation2 + $0x10] sm:$0xff]
      %v762 = vld [vmem:[#allocation2 + $0x18] sm:$0xff]
      %v763 = vld [vmem:[#allocation2 + $0x20] sm:$0xff]
      %v764 = vld [vmem:[#allocation2 + $0x28] sm:$0xff]
      %v765 = vld [vmem:[#allocation2 + $0x30] sm:$0xff]
      %v766 = vld [vmem:[#allocation2 + $0x38] sm:$0xff]
      %v767 = vld [vmem:[#allocation2 + $0x40] sm:$0xff]
      %v768 = vld [vmem:[#allocation2 + $0x48] sm:$0xff]
      %v769 = vld [vmem:[#allocation2 + $0x50] sm:$0xff]
      %v770 = vld [vmem:[#allocation2 + $0x58] sm:$0xff]
      %v771 = vld [vmem:[#allocation2 + $0x60] sm:$0xff]
      %v772 = vld [vmem:[#allocation2 + $0x68] sm:$0xff]
      %v773 = vld [vmem:[#allocation2 + $0x70] sm:$0xff]
      %v774 = vld [vmem:[#allocation2 + $0x78] sm:$0xff]
      %v775 = vld [vmem:[#allocation2 + $0x80] sm:$0xff]
      %v776 = vld [vmem:[#allocation2 + $0x88] sm:$0xff]
      %v777 = vld [vmem:[#allocation2 + $0x90] sm:$0xff]
      %v778 = vld [vmem:[#allocation2 + $0x98] sm:$0xff]
      %v779 = vld [vmem:[#allocation2 + $0xa0] sm:$0xff]
      %v780 = vld [vmem:[#allocation2 + $0xa8] sm:$0xff]
      %v781 = vld [vmem:[#allocation2 + $0xb0] sm:$0xff]
      %v782 = vld [vmem:[#allocation2 + $0xb8] sm:$0xff]
      %v783 = vld [vmem:[#allocation2 + $0xc0] sm:$0x3f]
      %v784 = vld [vmem:[#allocation2 + $0xc8] sm:$0x3f]
      %v785 = vld [vmem:[#allocation2 + $0xd0] sm:$0x3f]
      %v786 = vld [vmem:[#allocation2 + $0xd8] sm:$0x3f]
      %v787 = vld [vmem:[#allocation2 + $0xe0] sm:$0x3f]
      %v788 = vld [vmem:[#allocation2 + $0xe8] sm:$0x3f]
      %v789 = vld [vmem:[#allocation2 + $0xf0] sm:$0x3f]
      %v790 = vld [vmem:[#allocation2 + $0xf8] sm:$0x3f]
      %s791 = scalar_lea.vmem %s1, 24
      %v792 = vld [vmem:[%s791] sm:$0xff]
      %v793 = vld [vmem:[%s791 + $0x8] sm:$0xff]
      %v794 = vld [vmem:[%s791 + $0x10] sm:$0xf]
      %vm795 = vcmask 244736
      %v797 = vsel %vm795, %v792, 0
      %v800 = vsel %vm795, %v793, 0
      %v803 = vsel %vm795, %v794, 0
      %vm805 = vcmask 1045504
      %v807 = vsel %vm805, %v783, 0
      %v810 = vsel %vm805, %v784, 0
      %v813 = vsel %vm805, %v785, 0
      %v816 = vsel %vm805, %v786, 0
      %v819 = vsel %vm805, %v787, 0
      %v822 = vsel %vm805, %v788, 0
      %v825 = vsel %vm805, %v789, 0
      %v828 = vsel %vm805, %v790, 0
      %830 = vmatprep.subr.mxu0 %v760
      %831 = vmatpush1.msra.mxu0 %v759
      %832 = vmatprep.subr.mxu0 %v768
      %833 = vmatpush1.msra.mxu0 %v767
      %834 = vmatprep.subr.mxu0 %v776
      %835 = vmatpush1.msra.mxu0 %v775
      %836 = vmatprep.subr.mxu0 %v810
      %837 = vmatpush1.msra.mxu0 %v807
      %838 = vmatprep.subr.mxu0 0.0
      %839 = vmatpush1.msra.mxu0 0.0
      %840 = vmatprep.subr.mxu0 0.0
      %841 = vmatpush1.msra.mxu0 0.0
      %842 = vmatprep.subr.mxu0 0.0
      %843 = vmatpush1.msra.mxu0 0.0
      %844 = vmatprep.subr.mxu0 0.0
      %845 = vmatpush1.msra.mxu0 0.0
      %846 = vmatprep.subr.mxu0 0.0
      %847 = vmatpush1.msra.mxu0 0.0
      %848 = vmatprep.subr.mxu0 0.0
      %849 = vmatpush1.msra.mxu0 0.0
      %850 = vmatprep.subr.mxu0 0.0
      %851 = vmatpush1.msra.mxu0 0.0
      %852 = vmatprep.subr.mxu0 0.0
      %853 = vmatpush1.msra.mxu0 0.0
      %854 = vmatprep.subr.mxu0 0.0
      %855 = vmatpush1.msra.mxu0 0.0
      %856 = vmatprep.subr.mxu0 0.0
      %857 = vmatpush1.msra.mxu0 0.0
      %858 = vmatprep.subr.mxu0 0.0
      %859 = vmatpush1.msra.mxu0 0.0
      %860 = vmatprep.subr.mxu0 0.0
      %861 = vmatpush1.msra.mxu0 0.0
      %862 = vmatprep.subr.mxu0 0.0
      %863 = vmatpush1.msra.mxu0 0.0
      %864 = vmatprep.subr.mxu0 0.0
      %865 = vmatpush1.msra.mxu0 0.0
      %866 = vmatprep.subr.mxu0 0.0
      %867 = vmatpush1.msra.mxu0 0.0
      %868 = vmatprep.subr.mxu0 0.0
      %869 = vmatpush1.msra.mxu0 0.0
      %870 = vmatprep.subr.mxu0 0.0
      %871 = vmatpush1.msra.mxu0 0.0
      %872 = vmatprep.subr.mxu0 0.0
      %873 = vmatpush1.msra.mxu0 0.0
      %874 = vmatprep.subr.mxu0 0.0
      %875 = vmatpush1.msra.mxu0 0.0
      %876 = vmatprep.subr.mxu0 0.0
      %877 = vmatpush1.msra.mxu0 0.0
      %878 = vmatprep.subr.mxu0 0.0
      %879 = vmatpush1.msra.mxu0 0.0
      %880 = vmatprep.subr.mxu0 0.0
      %881 = vmatpush1.msra.mxu0 0.0
      %882 = vmatprep.subr.mxu0 0.0
      %883 = vmatpush1.msra.mxu0 0.0
      %884 = vmatprep.subr.mxu0 0.0
      %885 = vmatpush1.msra.mxu0 0.0
      %886 = vmatprep.subr.mxu0 0.0
      %887 = vmatpush1.msra.mxu0 0.0
      %888 = vmatprep.subr.mxu0 0.0
      %889 = vmatpush1.msra.mxu0 0.0
      %890 = vmatprep.subr.mxu0 0.0
      %891 = vmatpush1.msra.mxu0 0.0
      %892 = vmatprep.subr.mxu0 0.0
      %893 = vmatpush1.msra.mxu0 0.0
      %894 = vmatprep.mubr.f32.mxu0 0.0
      %895 = vmatmul.mubr.f32.gmra.mrb[0].mxu0 %v797
      %v896 = vpop.f32.mrb[0].mxu0
      %v897 = vadd.f32 0.0, %v896
      %v898 = vpop.f32.mrb[0].mxu0
      %v899 = vadd.f32 0.0, %v898
      %900 = vmatprep.mubr.f32.mxu0 0.0
      %901 = vmatmul.mubr.f32.gmra.mrb[0].mxu0 %v800
      %v902 = vpop.f32.mrb[0].mxu0
      %v903 = vadd.f32 0.0, %v902
      %v904 = vpop.f32.mrb[0].mxu0
      %v905 = vadd.f32 0.0, %v904
      %906 = vmatprep.mubr.f32.mxu0 0.0
      %907 = vmatmul.mubr.f32.gmra.mrb[0].mxu0 %v803
      %v908 = vpop.f32.mrb[0].mxu0
      %v909 = vadd.f32 0.0, %v908
      %v910 = vpop.f32.mrb[0].mxu0
      %v911 = vadd.f32 0.0, %v910
      %912 = vdwg.mxu0
      %913 = vmatprep.subr.mxu0 %v762
      %914 = vmatpush1.msra.mxu0 %v761
      %915 = vmatprep.subr.mxu0 %v770
      %916 = vmatpush1.msra.mxu0 %v769
      %917 = vmatprep.subr.mxu0 %v778
      %918 = vmatpush1.msra.mxu0 %v777
      %919 = vmatprep.subr.mxu0 %v816
      %920 = vmatpush1.msra.mxu0 %v813
      %921 = vmatprep.subr.mxu0 0.0
      %922 = vmatpush1.msra.mxu0 0.0
      %923 = vmatprep.subr.mxu0 0.0
      %924 = vmatpush1.msra.mxu0 0.0
      %925 = vmatprep.subr.mxu0 0.0
      %926 = vmatpush1.msra.mxu0 0.0
      %927 = vmatprep.subr.mxu0 0.0
      %928 = vmatpush1.msra.mxu0 0.0
      %929 = vmatprep.subr.mxu0 0.0
      %930 = vmatpush1.msra.mxu0 0.0
      %931 = vmatprep.subr.mxu0 0.0
      %932 = vmatpush1.msra.mxu0 0.0
      %933 = vmatprep.subr.mxu0 0.0
      %934 = vmatpush1.msra.mxu0 0.0
      %935 = vmatprep.subr.mxu0 0.0
      %936 = vmatpush1.msra.mxu0 0.0
      %937 = vmatprep.subr.mxu0 0.0
      %938 = vmatpush1.msra.mxu0 0.0
      %939 = vmatprep.subr.mxu0 0.0
      %940 = vmatpush1.msra.mxu0 0.0
      %941 = vmatprep.subr.mxu0 0.0
      %942 = vmatpush1.msra.mxu0 0.0
      %943 = vmatprep.subr.mxu0 0.0
      %944 = vmatpush1.msra.mxu0 0.0
      %945 = vmatprep.subr.mxu0 0.0
      %946 = vmatpush1.msra.mxu0 0.0
      %947 = vmatprep.subr.mxu0 0.0
      %948 = vmatpush1.msra.mxu0 0.0
      %949 = vmatprep.subr.mxu0 0.0
      %950 = vmatpush1.msra.mxu0 0.0
      %951 = vmatprep.subr.mxu0 0.0
      %952 = vmatpush1.msra.mxu0 0.0
      %953 = vmatprep.subr.mxu0 0.0
      %954 = vmatpush1.msra.mxu0 0.0
      %955 = vmatprep.subr.mxu0 0.0
      %956 = vmatpush1.msra.mxu0 0.0
      %957 = vmatprep.subr.mxu0 0.0
      %958 = vmatpush1.msra.mxu0 0.0
      %959 = vmatprep.subr.mxu0 0.0
      %960 = vmatpush1.msra.mxu0 0.0
      %961 = vmatprep.subr.mxu0 0.0
      %962 = vmatpush1.msra.mxu0 0.0
      %963 = vmatprep.subr.mxu0 0.0
      %964 = vmatpush1.msra.mxu0 0.0
      %965 = vmatprep.subr.mxu0 0.0
      %966 = vmatpush1.msra.mxu0 0.0
      %967 = vmatprep.subr.mxu0 0.0
      %968 = vmatpush1.msra.mxu0 0.0
      %969 = vmatprep.subr.mxu0 0.0
      %970 = vmatpush1.msra.mxu0 0.0
      %971 = vmatprep.subr.mxu0 0.0
      %972 = vmatpush1.msra.mxu0 0.0
      %973 = vmatprep.subr.mxu0 0.0
      %974 = vmatpush1.msra.mxu0 0.0
      %975 = vmatprep.subr.mxu0 0.0
      %976 = vmatpush1.msra.mxu0 0.0
      %977 = vmatprep.mubr.f32.mxu0 0.0
      %978 = vmatmul.mubr.f32.gmra.mrb[0].mxu0 %v797
      %v979 = vpop.f32.mrb[0].mxu0
      %v980 = vadd.f32 0.0, %v979
      %v981 = vpop.f32.mrb[0].mxu0
      %v982 = vadd.f32 0.0, %v981
      %983 = vmatprep.mubr.f32.mxu0 0.0
      %984 = vmatmul.mubr.f32.gmra.mrb[0].mxu0 %v800
      %v985 = vpop.f32.mrb[0].mxu0
      %v986 = vadd.f32 0.0, %v985
      %v987 = vpop.f32.mrb[0].mxu0
      %v988 = vadd.f32 0.0, %v987
      %989 = vmatprep.mubr.f32.mxu0 0.0
      %990 = vmatmul.mubr.f32.gmra.mrb[0].mxu0 %v803
      %v991 = vpop.f32.mrb[0].mxu0
      %v992 = vadd.f32 0.0, %v991
      %v993 = vpop.f32.mrb[0].mxu0
      %v994 = vadd.f32 0.0, %v993
      %995 = vdwg.mxu0
      %996 = vmatprep.subr.mxu0 %v764
      %997 = vmatpush1.msra.mxu0 %v763
      %998 = vmatprep.subr.mxu0 %v772
      %999 = vmatpush1.msra.mxu0 %v771
      %1000 = vmatprep.subr.mxu0 %v780
      %1001 = vmatpush1.msra.mxu0 %v779
      %1002 = vmatprep.subr.mxu0 %v822
      %1003 = vmatpush1.msra.mxu0 %v819
      %1004 = vmatprep.subr.mxu0 0.0
      %1005 = vmatpush1.msra.mxu0 0.0
      %1006 = vmatprep.subr.mxu0 0.0
      %1007 = vmatpush1.msra.mxu0 0.0
      %1008 = vmatprep.subr.mxu0 0.0
      %1009 = vmatpush1.msra.mxu0 0.0
      %1010 = vmatprep.subr.mxu0 0.0
      %1011 = vmatpush1.msra.mxu0 0.0
      %1012 = vmatprep.subr.mxu0 0.0
      %1013 = vmatpush1.msra.mxu0 0.0
      %1014 = vmatprep.subr.mxu0 0.0
      %1015 = vmatpush1.msra.mxu0 0.0
      %1016 = vmatprep.subr.mxu0 0.0
      %1017 = vmatpush1.msra.mxu0 0.0
      %1018 = vmatprep.subr.mxu0 0.0
      %1019 = vmatpush1.msra.mxu0 0.0
      %1020 = vmatprep.subr.mxu0 0.0
      %1021 = vmatpush1.msra.mxu0 0.0
      %1022 = vmatprep.subr.mxu0 0.0
      %1023 = vmatpush1.msra.mxu0 0.0
      %1024 = vmatprep.subr.mxu0 0.0
      %1025 = vmatpush1.msra.mxu0 0.0
      %1026 = vmatprep.subr.mxu0 0.0
      %1027 = vmatpush1.msra.mxu0 0.0
      %1028 = vmatprep.subr.mxu0 0.0
      %1029 = vmatpush1.msra.mxu0 0.0
      %1030 = vmatprep.subr.mxu0 0.0
      %1031 = vmatpush1.msra.mxu0 0.0
      %1032 = vmatprep.subr.mxu0 0.0
      %1033 = vmatpush1.msra.mxu0 0.0
      %1034 = vmatprep.subr.mxu0 0.0
      %1035 = vmatpush1.msra.mxu0 0.0
      %1036 = vmatprep.subr.mxu0 0.0
      %1037 = vmatpush1.msra.mxu0 0.0
      %1038 = vmatprep.subr.mxu0 0.0
      %1039 = vmatpush1.msra.mxu0 0.0
      %1040 = vmatprep.subr.mxu0 0.0
      %1041 = vmatpush1.msra.mxu0 0.0
      %1042 = vmatprep.subr.mxu0 0.0
      %1043 = vmatpush1.msra.mxu0 0.0
      %1044 = vmatprep.subr.mxu0 0.0
      %1045 = vmatpush1.msra.mxu0 0.0
      %1046 = vmatprep.subr.mxu0 0.0
      %1047 = vmatpush1.msra.mxu0 0.0
      %1048 = vmatprep.subr.mxu0 0.0
      %1049 = vmatpush1.msra.mxu0 0.0
      %1050 = vmatprep.subr.mxu0 0.0
      %1051 = vmatpush1.msra.mxu0 0.0
      %1052 = vmatprep.subr.mxu0 0.0
      %1053 = vmatpush1.msra.mxu0 0.0
      %1054 = vmatprep.subr.mxu0 0.0
      %1055 = vmatpush1.msra.mxu0 0.0
      %1056 = vmatprep.subr.mxu0 0.0
      %1057 = vmatpush1.msra.mxu0 0.0
      %1058 = vmatprep.subr.mxu0 0.0
      %1059 = vmatpush1.msra.mxu0 0.0
      %1060 = vmatprep.mubr.f32.mxu0 0.0
      %1061 = vmatmul.mubr.f32.gmra.mrb[0].mxu0 %v797
      %v1062 = vpop.f32.mrb[0].mxu0
      %v1063 = vadd.f32 0.0, %v1062
      %v1064 = vpop.f32.mrb[0].mxu0
      %v1065 = vadd.f32 0.0, %v1064
      %1066 = vmatprep.mubr.f32.mxu0 0.0
      %1067 = vmatmul.mubr.f32.gmra.mrb[0].mxu0 %v800
      %v1068 = vpop.f32.mrb[0].mxu0
      %v1069 = vadd.f32 0.0, %v1068
      %v1070 = vpop.f32.mrb[0].mxu0
      %v1071 = vadd.f32 0.0, %v1070
      %1072 = vmatprep.mubr.f32.mxu0 0.0
      %1073 = vmatmul.mubr.f32.gmra.mrb[0].mxu0 %v803
      %v1074 = vpop.f32.mrb[0].mxu0
      %v1075 = vadd.f32 0.0, %v1074
      %v1076 = vpop.f32.mrb[0].mxu0
      %v1077 = vadd.f32 0.0, %v1076
      %1078 = vdwg.mxu0
      %1079 = vmatprep.subr.mxu0 %v766
      %1080 = vmatpush1.msra.mxu0 %v765
      %1081 = vmatprep.subr.mxu0 %v774
      %1082 = vmatpush1.msra.mxu0 %v773
      %1083 = vmatprep.subr.mxu0 %v782
      %1084 = vmatpush1.msra.mxu0 %v781
      %1085 = vmatprep.subr.mxu0 %v828
      %1086 = vmatpush1.msra.mxu0 %v825
      %1087 = vmatprep.subr.mxu0 0.0
      %1088 = vmatpush1.msra.mxu0 0.0
      %1089 = vmatprep.subr.mxu0 0.0
      %1090 = vmatpush1.msra.mxu0 0.0
      %1091 = vmatprep.subr.mxu0 0.0
      %1092 = vmatpush1.msra.mxu0 0.0
      %1093 = vmatprep.subr.mxu0 0.0
      %1094 = vmatpush1.msra.mxu0 0.0
      %1095 = vmatprep.subr.mxu0 0.0
      %1096 = vmatpush1.msra.mxu0 0.0
      %1097 = vmatprep.subr.mxu0 0.0
      %1098 = vmatpush1.msra.mxu0 0.0
      %1099 = vmatprep.subr.mxu0 0.0
      %1100 = vmatpush1.msra.mxu0 0.0
      %1101 = vmatprep.subr.mxu0 0.0
      %1102 = vmatpush1.msra.mxu0 0.0
      %1103 = vmatprep.subr.mxu0 0.0
      %1104 = vmatpush1.msra.mxu0 0.0
      %1105 = vmatprep.subr.mxu0 0.0
      %1106 = vmatpush1.msra.mxu0 0.0
      %1107 = vmatprep.subr.mxu0 0.0
      %1108 = vmatpush1.msra.mxu0 0.0
      %1109 = vmatprep.subr.mxu0 0.0
      %1110 = vmatpush1.msra.mxu0 0.0
      %1111 = vmatprep.subr.mxu0 0.0
      %1112 = vmatpush1.msra.mxu0 0.0
      %1113 = vmatprep.subr.mxu0 0.0
      %1114 = vmatpush1.msra.mxu0 0.0
      %1115 = vmatprep.subr.mxu0 0.0
      %1116 = vmatpush1.msra.mxu0 0.0
      %1117 = vmatprep.subr.mxu0 0.0
      %1118 = vmatpush1.msra.mxu0 0.0
      %1119 = vmatprep.subr.mxu0 0.0
      %1120 = vmatpush1.msra.mxu0 0.0
      %1121 = vmatprep.subr.mxu0 0.0
      %1122 = vmatpush1.msra.mxu0 0.0
      %1123 = vmatprep.subr.mxu0 0.0
      %1124 = vmatpush1.msra.mxu0 0.0
      %1125 = vmatprep.subr.mxu0 0.0
      %1126 = vmatpush1.msra.mxu0 0.0
      %1127 = vmatprep.subr.mxu0 0.0
      %1128 = vmatpush1.msra.mxu0 0.0
      %1129 = vmatprep.subr.mxu0 0.0
      %1130 = vmatpush1.msra.mxu0 0.0
      %1131 = vmatprep.subr.mxu0 0.0
      %1132 = vmatpush1.msra.mxu0 0.0
      %1133 = vmatprep.subr.mxu0 0.0
      %1134 = vmatpush1.msra.mxu0 0.0
      %1135 = vmatprep.subr.mxu0 0.0
      %1136 = vmatpush1.msra.mxu0 0.0
      %1137 = vmatprep.subr.mxu0 0.0
      %1138 = vmatpush1.msra.mxu0 0.0
      %1139 = vmatprep.subr.mxu0 0.0
      %1140 = vmatpush1.msra.mxu0 0.0
      %1141 = vmatprep.subr.mxu0 0.0
      %1142 = vmatpush1.msra.mxu0 0.0
      %1143 = vmatprep.mubr.f32.mxu0 0.0
      %1144 = vmatmul.mubr.f32.gmra.mrb[0].mxu0 %v797
      %v1145 = vpop.f32.mrb[0].mxu0
      %v1146 = vadd.f32 0.0, %v1145
      %v1147 = vpop.f32.mrb[0].mxu0
      %v1148 = vadd.f32 0.0, %v1147
      %1149 = vmatprep.mubr.f32.mxu0 0.0
      %1150 = vmatmul.mubr.f32.gmra.mrb[0].mxu0 %v800
      %v1151 = vpop.f32.mrb[0].mxu0
      %v1152 = vadd.f32 0.0, %v1151
      %v1153 = vpop.f32.mrb[0].mxu0
      %v1154 = vadd.f32 0.0, %v1153
      %1155 = vmatprep.mubr.f32.mxu0 0.0
      %1156 = vmatmul.mubr.f32.gmra.mrb[0].mxu0 %v803
      %v1157 = vpop.f32.mrb[0].mxu0
      %v1158 = vadd.f32 0.0, %v1157
      %v1159 = vpop.f32.mrb[0].mxu0
      %v1160 = vadd.f32 0.0, %v1159
      %1161 = vdwg.mxu0
      %1162 = vrot.lane.b32.xlu0 %v897, 96
      %v1163 = vpop.permute.xlu0 %1162
      %1164 = vrot.lane.b32.xlu0 %v903, 96
      %v1165 = vpop.permute.xlu0 %1164
      %1166 = vrot.lane.b32.xlu0 %v909, 96
      %v1167 = vpop.permute.xlu0 %1166
      %1168 = vrot.lane.b32.xlu0 %v899, 96
      %v1169 = vpop.permute.xlu0 %1168
      %1170 = vrot.lane.b32.xlu0 %v905, 96
      %v1171 = vpop.permute.xlu0 %1170
      %1172 = vrot.lane.b32.xlu0 %v911, 96
      %v1173 = vpop.permute.xlu0 %1172
      %1174 = vrot.lane.b32.xlu0 %v980, 96
      %v1175 = vpop.permute.xlu0 %1174
      %1176 = vrot.lane.b32.xlu0 %v986, 96
      %v1177 = vpop.permute.xlu0 %1176
      %1178 = vrot.lane.b32.xlu0 %v992, 96
      %v1179 = vpop.permute.xlu0 %1178
      %1180 = vrot.lane.b32.xlu0 %v982, 96
      %v1181 = vpop.permute.xlu0 %1180
      %1182 = vrot.lane.b32.xlu0 %v988, 96
      %v1183 = vpop.permute.xlu0 %1182
      %1184 = vrot.lane.b32.xlu0 %v994, 96
      %v1185 = vpop.permute.xlu0 %1184
      %1186 = vrot.lane.b32.xlu0 %v1063, 96
      %v1187 = vpop.permute.xlu0 %1186
      %1188 = vrot.lane.b32.xlu0 %v1069, 96
      %v1189 = vpop.permute.xlu0 %1188
      %1190 = vrot.lane.b32.xlu0 %v1075, 96
      %v1191 = vpop.permute.xlu0 %1190
      %1192 = vrot.lane.b32.xlu0 %v1065, 96
      %v1193 = vpop.permute.xlu0 %1192
      %1194 = vrot.lane.b32.xlu0 %v1071, 96
      %v1195 = vpop.permute.xlu0 %1194
      %1196 = vrot.lane.b32.xlu0 %v1077, 96
      %v1197 = vpop.permute.xlu0 %1196
      %1198 = vrot.lane.b32.xlu0 %v1146, 96
      %v1199 = vpop.permute.xlu0 %1198
      %1200 = vrot.lane.b32.xlu0 %v1152, 96
      %v1201 = vpop.permute.xlu0 %1200
      %1202 = vrot.lane.b32.xlu0 %v1158, 96
      %v1203 = vpop.permute.xlu0 %1202
      %1204 = vrot.lane.b32.xlu0 %v1148, 96
      %v1205 = vpop.permute.xlu0 %1204
      %1206 = vrot.lane.b32.xlu0 %v1154, 96
      %v1207 = vpop.permute.xlu0 %1206
      %1208 = vrot.lane.b32.xlu0 %v1160, 96
      %v1209 = vpop.permute.xlu0 %1208
      %vm1210 = vcmp.lt.s32.totalorder %v266, 96
      %v1211 = vsel %vm1210, %v1199, %v1205
      %v1212 = vsel %vm1210, %v1201, %v1207
      %v1213 = vsel %vm1210, %v1203, %v1209
      %v1214 = vsel %vm1210, %v1193, %v1199
      %v1215 = vsel %vm1210, %v1195, %v1201
      %v1216 = vsel %vm1210, %v1197, %v1203
      %v1217 = vsel %vm1210, %v1187, %v1193
      %v1218 = vsel %vm1210, %v1189, %v1195
      %v1219 = vsel %vm1210, %v1191, %v1197
      %v1220 = vsel %vm1210, %v1181, %v1187
      %v1221 = vsel %vm1210, %v1183, %v1189
      %v1222 = vsel %vm1210, %v1185, %v1191
      %v1223 = vsel %vm1210, %v1175, %v1181
      %v1224 = vsel %vm1210, %v1177, %v1183
      %v1225 = vsel %vm1210, %v1179, %v1185
      %v1226 = vsel %vm1210, %v1169, %v1175
      %v1227 = vsel %vm1210, %v1171, %v1177
      %v1228 = vsel %vm1210, %v1173, %v1179
      %v1229 = vsel %vm1210, %v1163, %v1169
      %v1230 = vsel %vm1210, %v1165, %v1171
      %v1231 = vsel %vm1210, %v1167, %v1173
      %v1232 = vsel %vm1210, %v1205, %v1163
      %v1233 = vsel %vm1210, %v1207, %v1165
      %v1234 = vsel %vm1210, %v1209, %v1167
      %v1236 = vsel %vm795, %v756, 0
      %v1239 = vsel %vm795, %v757, 0
      %v1242 = vsel %vm795, %v758, 0
      %1244 = vmatprep.subr.mxu0 %v760
      %1245 = vmatpush1.msra.mxu0 %v759
      %1246 = vmatprep.subr.mxu0 %v768
      %1247 = vmatpush1.msra.mxu0 %v767
      %1248 = vmatprep.subr.mxu0 %v776
      %1249 = vmatpush1.msra.mxu0 %v775
      %1250 = vmatprep.subr.mxu0 %v810
      %1251 = vmatpush1.msra.mxu0 %v807
      %1252 = vmatprep.subr.mxu0 0.0
      %1253 = vmatpush1.msra.mxu0 0.0
      %1254 = vmatprep.subr.mxu0 0.0
      %1255 = vmatpush1.msra.mxu0 0.0
      %1256 = vmatprep.subr.mxu0 0.0
      %1257 = vmatpush1.msra.mxu0 0.0
      %1258 = vmatprep.subr.mxu0 0.0
      %1259 = vmatpush1.msra.mxu0 0.0
      %1260 = vmatprep.subr.mxu0 0.0
      %1261 = vmatpush1.msra.mxu0 0.0
      %1262 = vmatprep.subr.mxu0 0.0
      %1263 = vmatpush1.msra.mxu0 0.0
      %1264 = vmatprep.subr.mxu0 0.0
      %1265 = vmatpush1.msra.mxu0 0.0
      %1266 = vmatprep.subr.mxu0 0.0
      %1267 = vmatpush1.msra.mxu0 0.0
      %1268 = vmatprep.subr.mxu0 0.0
      %1269 = vmatpush1.msra.mxu0 0.0
      %1270 = vmatprep.subr.mxu0 0.0
      %1271 = vmatpush1.msra.mxu0 0.0
      %1272 = vmatprep.subr.mxu0 0.0
      %1273 = vmatpush1.msra.mxu0 0.0
      %1274 = vmatprep.subr.mxu0 0.0
      %1275 = vmatpush1.msra.mxu0 0.0
      %1276 = vmatprep.subr.mxu0 0.0
      %1277 = vmatpush1.msra.mxu0 0.0
      %1278 = vmatprep.subr.mxu0 0.0
      %1279 = vmatpush1.msra.mxu0 0.0
      %1280 = vmatprep.subr.mxu0 0.0
      %1281 = vmatpush1.msra.mxu0 0.0
      %1282 = vmatprep.subr.mxu0 0.0
      %1283 = vmatpush1.msra.mxu0 0.0
      %1284 = vmatprep.subr.mxu0 0.0
      %1285 = vmatpush1.msra.mxu0 0.0
      %1286 = vmatprep.subr.mxu0 0.0
      %1287 = vmatpush1.msra.mxu0 0.0
      %1288 = vmatprep.subr.mxu0 0.0
      %1289 = vmatpush1.msra.mxu0 0.0
      %1290 = vmatprep.subr.mxu0 0.0
      %1291 = vmatpush1.msra.mxu0 0.0
      %1292 = vmatprep.subr.mxu0 0.0
      %1293 = vmatpush1.msra.mxu0 0.0
      %1294 = vmatprep.subr.mxu0 0.0
      %1295 = vmatpush1.msra.mxu0 0.0
      %1296 = vmatprep.subr.mxu0 0.0
      %1297 = vmatpush1.msra.mxu0 0.0
      %1298 = vmatprep.subr.mxu0 0.0
      %1299 = vmatpush1.msra.mxu0 0.0
      %1300 = vmatprep.subr.mxu0 0.0
      %1301 = vmatpush1.msra.mxu0 0.0
      %1302 = vmatprep.subr.mxu0 0.0
      %1303 = vmatpush1.msra.mxu0 0.0
      %1304 = vmatprep.subr.mxu0 0.0
      %1305 = vmatpush1.msra.mxu0 0.0
      %1306 = vmatprep.subr.mxu0 0.0
      %1307 = vmatpush1.msra.mxu0 0.0
      %1308 = vmatprep.mubr.f32.mxu0 0.0
      %1309 = vmatmul.mubr.f32.gmra.mrb[0].mxu0 %v1236
      %v1310 = vpop.f32.mrb[0].mxu0
      %v1311 = vadd.f32 %v1229, %v1310
      %v1312 = vpop.f32.mrb[0].mxu0
      %v1313 = vadd.f32 %v1226, %v1312
      %1314 = vmatprep.mubr.f32.mxu0 0.0
      %1315 = vmatmul.mubr.f32.gmra.mrb[0].mxu0 %v1239
      %v1316 = vpop.f32.mrb[0].mxu0
      %v1317 = vadd.f32 %v1230, %v1316
      %v1318 = vpop.f32.mrb[0].mxu0
      %v1319 = vadd.f32 %v1227, %v1318
      %1320 = vmatprep.mubr.f32.mxu0 0.0
      %1321 = vmatmul.mubr.f32.gmra.mrb[0].mxu0 %v1242
      %v1322 = vpop.f32.mrb[0].mxu0
      %v1323 = vadd.f32 %v1231, %v1322
      %v1324 = vpop.f32.mrb[0].mxu0
      %v1325 = vadd.f32 %v1228, %v1324
      %1326 = vdwg.mxu0
      %1327 = vmatprep.subr.mxu0 %v762
      %1328 = vmatpush1.msra.mxu0 %v761
      %1329 = vmatprep.subr.mxu0 %v770
      %1330 = vmatpush1.msra.mxu0 %v769
      %1331 = vmatprep.subr.mxu0 %v778
      %1332 = vmatpush1.msra.mxu0 %v777
      %1333 = vmatprep.subr.mxu0 %v816
      %1334 = vmatpush1.msra.mxu0 %v813
      %1335 = vmatprep.subr.mxu0 0.0
      %1336 = vmatpush1.msra.mxu0 0.0
      %1337 = vmatprep.subr.mxu0 0.0
      %1338 = vmatpush1.msra.mxu0 0.0
      %1339 = vmatprep.subr.mxu0 0.0
      %1340 = vmatpush1.msra.mxu0 0.0
      %1341 = vmatprep.subr.mxu0 0.0
      %1342 = vmatpush1.msra.mxu0 0.0
      %1343 = vmatprep.subr.mxu0 0.0
      %1344 = vmatpush1.msra.mxu0 0.0
      %1345 = vmatprep.subr.mxu0 0.0
      %1346 = vmatpush1.msra.mxu0 0.0
      %1347 = vmatprep.subr.mxu0 0.0
      %1348 = vmatpush1.msra.mxu0 0.0
      %1349 = vmatprep.subr.mxu0 0.0
      %1350 = vmatpush1.msra.mxu0 0.0
      %1351 = vmatprep.subr.mxu0 0.0
      %1352 = vmatpush1.msra.mxu0 0.0
      %1353 = vmatprep.subr.mxu0 0.0
      %1354 = vmatpush1.msra.mxu0 0.0
      %1355 = vmatprep.subr.mxu0 0.0
      %1356 = vmatpush1.msra.mxu0 0.0
      %1357 = vmatprep.subr.mxu0 0.0
      %1358 = vmatpush1.msra.mxu0 0.0
      %1359 = vmatprep.subr.mxu0 0.0
      %1360 = vmatpush1.msra.mxu0 0.0
      %1361 = vmatprep.subr.mxu0 0.0
      %1362 = vmatpush1.msra.mxu0 0.0
      %1363 = vmatprep.subr.mxu0 0.0
      %1364 = vmatpush1.msra.mxu0 0.0
      %1365 = vmatprep.subr.mxu0 0.0
      %1366 = vmatpush1.msra.mxu0 0.0
      %1367 = vmatprep.subr.mxu0 0.0
      %1368 = vmatpush1.msra.mxu0 0.0
      %1369 = vmatprep.subr.mxu0 0.0
      %1370 = vmatpush1.msra.mxu0 0.0
      %1371 = vmatprep.subr.mxu0 0.0
      %1372 = vmatpush1.msra.mxu0 0.0
      %1373 = vmatprep.subr.mxu0 0.0
      %1374 = vmatpush1.msra.mxu0 0.0
      %1375 = vmatprep.subr.mxu0 0.0
      %1376 = vmatpush1.msra.mxu0 0.0
      %1377 = vmatprep.subr.mxu0 0.0
      %1378 = vmatpush1.msra.mxu0 0.0
      %1379 = vmatprep.subr.mxu0 0.0
      %1380 = vmatpush1.msra.mxu0 0.0
      %1381 = vmatprep.subr.mxu0 0.0
      %1382 = vmatpush1.msra.mxu0 0.0
      %1383 = vmatprep.subr.mxu0 0.0
      %1384 = vmatpush1.msra.mxu0 0.0
      %1385 = vmatprep.subr.mxu0 0.0
      %1386 = vmatpush1.msra.mxu0 0.0
      %1387 = vmatprep.subr.mxu0 0.0
      %1388 = vmatpush1.msra.mxu0 0.0
      %1389 = vmatprep.subr.mxu0 0.0
      %1390 = vmatpush1.msra.mxu0 0.0
      %1391 = vmatprep.mubr.f32.mxu0 0.0
      %1392 = vmatmul.mubr.f32.gmra.mrb[0].mxu0 %v1236
      %v1393 = vpop.f32.mrb[0].mxu0
      %v1394 = vadd.f32 %v1223, %v1393
      %v1395 = vpop.f32.mrb[0].mxu0
      %v1396 = vadd.f32 %v1220, %v1395
      %1397 = vmatprep.mubr.f32.mxu0 0.0
      %1398 = vmatmul.mubr.f32.gmra.mrb[0].mxu0 %v1239
      %v1399 = vpop.f32.mrb[0].mxu0
      %v1400 = vadd.f32 %v1224, %v1399
      %v1401 = vpop.f32.mrb[0].mxu0
      %v1402 = vadd.f32 %v1221, %v1401
      %1403 = vmatprep.mubr.f32.mxu0 0.0
      %1404 = vmatmul.mubr.f32.gmra.mrb[0].mxu0 %v1242
      %v1405 = vpop.f32.mrb[0].mxu0
      %v1406 = vadd.f32 %v1225, %v1405
      %v1407 = vpop.f32.mrb[0].mxu0
      %v1408 = vadd.f32 %v1222, %v1407
      %1409 = vdwg.mxu0
      %1410 = vmatprep.subr.mxu0 %v764
      %1411 = vmatpush1.msra.mxu0 %v763
      %1412 = vmatprep.subr.mxu0 %v772
      %1413 = vmatpush1.msra.mxu0 %v771
      %1414 = vmatprep.subr.mxu0 %v780
      %1415 = vmatpush1.msra.mxu0 %v779
      %1416 = vmatprep.subr.mxu0 %v822
      %1417 = vmatpush1.msra.mxu0 %v819
      %1418 = vmatprep.subr.mxu0 0.0
      %1419 = vmatpush1.msra.mxu0 0.0
      %1420 = vmatprep.subr.mxu0 0.0
      %1421 = vmatpush1.msra.mxu0 0.0
      %1422 = vmatprep.subr.mxu0 0.0
      %1423 = vmatpush1.msra.mxu0 0.0
      %1424 = vmatprep.subr.mxu0 0.0
      %1425 = vmatpush1.msra.mxu0 0.0
      %1426 = vmatprep.subr.mxu0 0.0
      %1427 = vmatpush1.msra.mxu0 0.0
      %1428 = vmatprep.subr.mxu0 0.0
      %1429 = vmatpush1.msra.mxu0 0.0
      %1430 = vmatprep.subr.mxu0 0.0
      %1431 = vmatpush1.msra.mxu0 0.0
      %1432 = vmatprep.subr.mxu0 0.0
      %1433 = vmatpush1.msra.mxu0 0.0
      %1434 = vmatprep.subr.mxu0 0.0
      %1435 = vmatpush1.msra.mxu0 0.0
      %1436 = vmatprep.subr.mxu0 0.0
      %1437 = vmatpush1.msra.mxu0 0.0
      %1438 = vmatprep.subr.mxu0 0.0
      %1439 = vmatpush1.msra.mxu0 0.0
      %1440 = vmatprep.subr.mxu0 0.0
      %1441 = vmatpush1.msra.mxu0 0.0
      %1442 = vmatprep.subr.mxu0 0.0
      %1443 = vmatpush1.msra.mxu0 0.0
      %1444 = vmatprep.subr.mxu0 0.0
      %1445 = vmatpush1.msra.mxu0 0.0
      %1446 = vmatprep.subr.mxu0 0.0
      %1447 = vmatpush1.msra.mxu0 0.0
      %1448 = vmatprep.subr.mxu0 0.0
      %1449 = vmatpush1.msra.mxu0 0.0
      %1450 = vmatprep.subr.mxu0 0.0
      %1451 = vmatpush1.msra.mxu0 0.0
      %1452 = vmatprep.subr.mxu0 0.0
      %1453 = vmatpush1.msra.mxu0 0.0
      %1454 = vmatprep.subr.mxu0 0.0
      %1455 = vmatpush1.msra.mxu0 0.0
      %1456 = vmatprep.subr.mxu0 0.0
      %1457 = vmatpush1.msra.mxu0 0.0
      %1458 = vmatprep.subr.mxu0 0.0
      %1459 = vmatpush1.msra.mxu0 0.0
      %1460 = vmatprep.subr.mxu0 0.0
      %1461 = vmatpush1.msra.mxu0 0.0
      %1462 = vmatprep.subr.mxu0 0.0
      %1463 = vmatpush1.msra.mxu0 0.0
      %1464 = vmatprep.subr.mxu0 0.0
      %1465 = vmatpush1.msra.mxu0 0.0
      %1466 = vmatprep.subr.mxu0 0.0
      %1467 = vmatpush1.msra.mxu0 0.0
      %1468 = vmatprep.subr.mxu0 0.0
      %1469 = vmatpush1.msra.mxu0 0.0
      %1470 = vmatprep.subr.mxu0 0.0
      %1471 = vmatpush1.msra.mxu0 0.0
      %1472 = vmatprep.subr.mxu0 0.0
      %1473 = vmatpush1.msra.mxu0 0.0
      %1474 = vmatprep.mubr.f32.mxu0 0.0
      %1475 = vmatmul.mubr.f32.gmra.mrb[0].mxu0 %v1236
      %v1476 = vpop.f32.mrb[0].mxu0
      %v1477 = vadd.f32 %v1217, %v1476
      %v1478 = vpop.f32.mrb[0].mxu0
      %v1479 = vadd.f32 %v1214, %v1478
      %1480 = vmatprep.mubr.f32.mxu0 0.0
      %1481 = vmatmul.mubr.f32.gmra.mrb[0].mxu0 %v1239
      %v1482 = vpop.f32.mrb[0].mxu0
      %v1483 = vadd.f32 %v1218, %v1482
      %v1484 = vpop.f32.mrb[0].mxu0
      %v1485 = vadd.f32 %v1215, %v1484
      %1486 = vmatprep.mubr.f32.mxu0 0.0
      %1487 = vmatmul.mubr.f32.gmra.mrb[0].mxu0 %v1242
      %v1488 = vpop.f32.mrb[0].mxu0
      %v1489 = vadd.f32 %v1219, %v1488
      %v1490 = vpop.f32.mrb[0].mxu0
      %v1491 = vadd.f32 %v1216, %v1490
      %1492 = vdwg.mxu0
      %1493 = vmatprep.subr.mxu0 %v766
      %1494 = vmatpush1.msra.mxu0 %v765
      %1495 = vmatprep.subr.mxu0 %v774
      %1496 = vmatpush1.msra.mxu0 %v773
      %1497 = vmatprep.subr.mxu0 %v782
      %1498 = vmatpush1.msra.mxu0 %v781
      %1499 = vmatprep.subr.mxu0 %v828
      %1500 = vmatpush1.msra.mxu0 %v825
      %1501 = vmatprep.subr.mxu0 0.0
      %1502 = vmatpush1.msra.mxu0 0.0
      %1503 = vmatprep.subr.mxu0 0.0
      %1504 = vmatpush1.msra.mxu0 0.0
      %1505 = vmatprep.subr.mxu0 0.0
      %1506 = vmatpush1.msra.mxu0 0.0
      %1507 = vmatprep.subr.mxu0 0.0
      %1508 = vmatpush1.msra.mxu0 0.0
      %1509 = vmatprep.subr.mxu0 0.0
      %1510 = vmatpush1.msra.mxu0 0.0
      %1511 = vmatprep.subr.mxu0 0.0
      %1512 = vmatpush1.msra.mxu0 0.0
      %1513 = vmatprep.subr.mxu0 0.0
      %1514 = vmatpush1.msra.mxu0 0.0
      %1515 = vmatprep.subr.mxu0 0.0
      %1516 = vmatpush1.msra.mxu0 0.0
      %1517 = vmatprep.subr.mxu0 0.0
      %1518 = vmatpush1.msra.mxu0 0.0
      %1519 = vmatprep.subr.mxu0 0.0
      %1520 = vmatpush1.msra.mxu0 0.0
      %1521 = vmatprep.subr.mxu0 0.0
      %1522 = vmatpush1.msra.mxu0 0.0
      %1523 = vmatprep.subr.mxu0 0.0
      %1524 = vmatpush1.msra.mxu0 0.0
      %1525 = vmatprep.subr.mxu0 0.0
      %1526 = vmatpush1.msra.mxu0 0.0
      %1527 = vmatprep.subr.mxu0 0.0
      %1528 = vmatpush1.msra.mxu0 0.0
      %1529 = vmatprep.subr.mxu0 0.0
      %1530 = vmatpush1.msra.mxu0 0.0
      %1531 = vmatprep.subr.mxu0 0.0
      %1532 = vmatpush1.msra.mxu0 0.0
      %1533 = vmatprep.subr.mxu0 0.0
      %1534 = vmatpush1.msra.mxu0 0.0
      %1535 = vmatprep.subr.mxu0 0.0
      %1536 = vmatpush1.msra.mxu0 0.0
      %1537 = vmatprep.subr.mxu0 0.0
      %1538 = vmatpush1.msra.mxu0 0.0
      %1539 = vmatprep.subr.mxu0 0.0
      %1540 = vmatpush1.msra.mxu0 0.0
      %1541 = vmatprep.subr.mxu0 0.0
      %1542 = vmatpush1.msra.mxu0 0.0
      %1543 = vmatprep.subr.mxu0 0.0
      %1544 = vmatpush1.msra.mxu0 0.0
      %1545 = vmatprep.subr.mxu0 0.0
      %1546 = vmatpush1.msra.mxu0 0.0
      %1547 = vmatprep.subr.mxu0 0.0
      %1548 = vmatpush1.msra.mxu0 0.0
      %1549 = vmatprep.subr.mxu0 0.0
      %1550 = vmatpush1.msra.mxu0 0.0
      %1551 = vmatprep.subr.mxu0 0.0
      %1552 = vmatpush1.msra.mxu0 0.0
      %1553 = vmatprep.subr.mxu0 0.0
      %1554 = vmatpush1.msra.mxu0 0.0
      %1555 = vmatprep.subr.mxu0 0.0
      %1556 = vmatpush1.msra.mxu0 0.0
      %1557 = vmatprep.mubr.f32.mxu0 0.0
      %1558 = vmatmul.mubr.f32.gmra.mrb[0].mxu0 %v1236
      %v1559 = vpop.f32.mrb[0].mxu0
      %v1560 = vadd.f32 %v1211, %v1559
      %v1561 = vpop.f32.mrb[0].mxu0
      %v1562 = vadd.f32 %v1232, %v1561
      %1563 = vmatprep.mubr.f32.mxu0 0.0
      %1564 = vmatmul.mubr.f32.gmra.mrb[0].mxu0 %v1239
      %v1565 = vpop.f32.mrb[0].mxu0
      %v1566 = vadd.f32 %v1212, %v1565
      %v1567 = vpop.f32.mrb[0].mxu0
      %v1568 = vadd.f32 %v1233, %v1567
      %1569 = vmatprep.mubr.f32.mxu0 0.0
      %1570 = vmatmul.mubr.f32.gmra.mrb[0].mxu0 %v1242
      %v1571 = vpop.f32.mrb[0].mxu0
      %v1572 = vadd.f32 %v1213, %v1571
      %v1573 = vpop.f32.mrb[0].mxu0
      %v1574 = vadd.f32 %v1234, %v1573
      %1575 = vdwg.mxu0
      %s1576 = scalar_lea.vmem %s1, 48
      %v1577 = vld [vmem:[%s1576] sm:$0xff]
      %v1578 = vld [vmem:[%s1576 + $0x8] sm:$0xff]
      %v1579 = vld [vmem:[%s1576 + $0x10] sm:$0xf]
      %v1581 = vsel %vm795, %v1577, 0
      %v1584 = vsel %vm795, %v1578, 0
      %v1587 = vsel %vm795, %v1579, 0
      %1589 = vmatprep.subr.mxu0 %v760
      %1590 = vmatpush1.msra.mxu0 %v759
      %1591 = vmatprep.subr.mxu0 %v768
      %1592 = vmatpush1.msra.mxu0 %v767
      %1593 = vmatprep.subr.mxu0 %v776
      %1594 = vmatpush1.msra.mxu0 %v775
      %1595 = vmatprep.subr.mxu0 %v810
      %1596 = vmatpush1.msra.mxu0 %v807
      %1597 = vmatprep.subr.mxu0 0.0
      %1598 = vmatpush1.msra.mxu0 0.0
      %1599 = vmatprep.subr.mxu0 0.0
      %1600 = vmatpush1.msra.mxu0 0.0
      %1601 = vmatprep.subr.mxu0 0.0
      %1602 = vmatpush1.msra.mxu0 0.0
      %1603 = vmatprep.subr.mxu0 0.0
      %1604 = vmatpush1.msra.mxu0 0.0
      %1605 = vmatprep.subr.mxu0 0.0
      %1606 = vmatpush1.msra.mxu0 0.0
      %1607 = vmatprep.subr.mxu0 0.0
      %1608 = vmatpush1.msra.mxu0 0.0
      %1609 = vmatprep.subr.mxu0 0.0
      %1610 = vmatpush1.msra.mxu0 0.0
      %1611 = vmatprep.subr.mxu0 0.0
      %1612 = vmatpush1.msra.mxu0 0.0
      %1613 = vmatprep.subr.mxu0 0.0
      %1614 = vmatpush1.msra.mxu0 0.0
      %1615 = vmatprep.subr.mxu0 0.0
      %1616 = vmatpush1.msra.mxu0 0.0
      %1617 = vmatprep.subr.mxu0 0.0
      %1618 = vmatpush1.msra.mxu0 0.0
      %1619 = vmatprep.subr.mxu0 0.0
      %1620 = vmatpush1.msra.mxu0 0.0
      %1621 = vmatprep.subr.mxu0 0.0
      %1622 = vmatpush1.msra.mxu0 0.0
      %1623 = vmatprep.subr.mxu0 0.0
      %1624 = vmatpush1.msra.mxu0 0.0
      %1625 = vmatprep.subr.mxu0 0.0
      %1626 = vmatpush1.msra.mxu0 0.0
      %1627 = vmatprep.subr.mxu0 0.0
      %1628 = vmatpush1.msra.mxu0 0.0
      %1629 = vmatprep.subr.mxu0 0.0
      %1630 = vmatpush1.msra.mxu0 0.0
      %1631 = vmatprep.subr.mxu0 0.0
      %1632 = vmatpush1.msra.mxu0 0.0
      %1633 = vmatprep.subr.mxu0 0.0
      %1634 = vmatpush1.msra.mxu0 0.0
      %1635 = vmatprep.subr.mxu0 0.0
      %1636 = vmatpush1.msra.mxu0 0.0
      %1637 = vmatprep.subr.mxu0 0.0
      %1638 = vmatpush1.msra.mxu0 0.0
      %1639 = vmatprep.subr.mxu0 0.0
      %1640 = vmatpush1.msra.mxu0 0.0
      %1641 = vmatprep.subr.mxu0 0.0
      %1642 = vmatpush1.msra.mxu0 0.0
      %1643 = vmatprep.subr.mxu0 0.0
      %1644 = vmatpush1.msra.mxu0 0.0
      %1645 = vmatprep.subr.mxu0 0.0
      %1646 = vmatpush1.msra.mxu0 0.0
      %1647 = vmatprep.subr.mxu0 0.0
      %1648 = vmatpush1.msra.mxu0 0.0
      %1649 = vmatprep.subr.mxu0 0.0
      %1650 = vmatpush1.msra.mxu0 0.0
      %1651 = vmatprep.subr.mxu0 0.0
      %1652 = vmatpush1.msra.mxu0 0.0
      %1653 = vmatprep.mubr.f32.mxu0 0.0
      %1654 = vmatmul.mubr.f32.gmra.mrb[0].mxu0 %v1581
      %v1655 = vpop.f32.mrb[0].mxu0
      %v1656 = vadd.f32 0.0, %v1655
      %v1657 = vpop.f32.mrb[0].mxu0
      %v1658 = vadd.f32 0.0, %v1657
      %1659 = vmatprep.mubr.f32.mxu0 0.0
      %1660 = vmatmul.mubr.f32.gmra.mrb[0].mxu0 %v1584
      %v1661 = vpop.f32.mrb[0].mxu0
      %v1662 = vadd.f32 0.0, %v1661
      %v1663 = vpop.f32.mrb[0].mxu0
      %v1664 = vadd.f32 0.0, %v1663
      %1665 = vmatprep.mubr.f32.mxu0 0.0
      %1666 = vmatmul.mubr.f32.gmra.mrb[0].mxu0 %v1587
      %v1667 = vpop.f32.mrb[0].mxu0
      %v1668 = vadd.f32 0.0, %v1667
      %v1669 = vpop.f32.mrb[0].mxu0
      %v1670 = vadd.f32 0.0, %v1669
      %1671 = vdwg.mxu0
      %1672 = vmatprep.subr.mxu0 %v762
      %1673 = vmatpush1.msra.mxu0 %v761
      %1674 = vmatprep.subr.mxu0 %v770
      %1675 = vmatpush1.msra.mxu0 %v769
      %1676 = vmatprep.subr.mxu0 %v778
      %1677 = vmatpush1.msra.mxu0 %v777
      %1678 = vmatprep.subr.mxu0 %v816
      %1679 = vmatpush1.msra.mxu0 %v813
      %1680 = vmatprep.subr.mxu0 0.0
      %1681 = vmatpush1.msra.mxu0 0.0
      %1682 = vmatprep.subr.mxu0 0.0
      %1683 = vmatpush1.msra.mxu0 0.0
      %1684 = vmatprep.subr.mxu0 0.0
      %1685 = vmatpush1.msra.mxu0 0.0
      %1686 = vmatprep.subr.mxu0 0.0
      %1687 = vmatpush1.msra.mxu0 0.0
      %1688 = vmatprep.subr.mxu0 0.0
      %1689 = vmatpush1.msra.mxu0 0.0
      %1690 = vmatprep.subr.mxu0 0.0
      %1691 = vmatpush1.msra.mxu0 0.0
      %1692 = vmatprep.subr.mxu0 0.0
      %1693 = vmatpush1.msra.mxu0 0.0
      %1694 = vmatprep.subr.mxu0 0.0
      %1695 = vmatpush1.msra.mxu0 0.0
      %1696 = vmatprep.subr.mxu0 0.0
      %1697 = vmatpush1.msra.mxu0 0.0
      %1698 = vmatprep.subr.mxu0 0.0
      %1699 = vmatpush1.msra.mxu0 0.0
      %1700 = vmatprep.subr.mxu0 0.0
      %1701 = vmatpush1.msra.mxu0 0.0
      %1702 = vmatprep.subr.mxu0 0.0
      %1703 = vmatpush1.msra.mxu0 0.0
      %1704 = vmatprep.subr.mxu0 0.0
      %1705 = vmatpush1.msra.mxu0 0.0
      %1706 = vmatprep.subr.mxu0 0.0
      %1707 = vmatpush1.msra.mxu0 0.0
      %1708 = vmatprep.subr.mxu0 0.0
      %1709 = vmatpush1.msra.mxu0 0.0
      %1710 = vmatprep.subr.mxu0 0.0
      %1711 = vmatpush1.msra.mxu0 0.0
      %1712 = vmatprep.subr.mxu0 0.0
      %1713 = vmatpush1.msra.mxu0 0.0
      %1714 = vmatprep.subr.mxu0 0.0
      %1715 = vmatpush1.msra.mxu0 0.0
      %1716 = vmatprep.subr.mxu0 0.0
      %1717 = vmatpush1.msra.mxu0 0.0
      %1718 = vmatprep.subr.mxu0 0.0
      %1719 = vmatpush1.msra.mxu0 0.0
      %1720 = vmatprep.subr.mxu0 0.0
      %1721 = vmatpush1.msra.mxu0 0.0
      %1722 = vmatprep.subr.mxu0 0.0
      %1723 = vmatpush1.msra.mxu0 0.0
      %1724 = vmatprep.subr.mxu0 0.0
      %1725 = vmatpush1.msra.mxu0 0.0
      %1726 = vmatprep.subr.mxu0 0.0
      %1727 = vmatpush1.msra.mxu0 0.0
      %1728 = vmatprep.subr.mxu0 0.0
      %1729 = vmatpush1.msra.mxu0 0.0
      %1730 = vmatprep.subr.mxu0 0.0
      %1731 = vmatpush1.msra.mxu0 0.0
      %1732 = vmatprep.subr.mxu0 0.0
      %1733 = vmatpush1.msra.mxu0 0.0
      %1734 = vmatprep.subr.mxu0 0.0
      %1735 = vmatpush1.msra.mxu0 0.0
      %1736 = vmatprep.mubr.f32.mxu0 0.0
      %1737 = vmatmul.mubr.f32.gmra.mrb[0].mxu0 %v1581
      %v1738 = vpop.f32.mrb[0].mxu0
      %v1739 = vadd.f32 0.0, %v1738
      %v1740 = vpop.f32.mrb[0].mxu0
      %v1741 = vadd.f32 0.0, %v1740
      %1742 = vmatprep.mubr.f32.mxu0 0.0
      %1743 = vmatmul.mubr.f32.gmra.mrb[0].mxu0 %v1584
      %v1744 = vpop.f32.mrb[0].mxu0
      %v1745 = vadd.f32 0.0, %v1744
      %v1746 = vpop.f32.mrb[0].mxu0
      %v1747 = vadd.f32 0.0, %v1746
      %1748 = vmatprep.mubr.f32.mxu0 0.0
      %1749 = vmatmul.mubr.f32.gmra.mrb[0].mxu0 %v1587
      %v1750 = vpop.f32.mrb[0].mxu0
      %v1751 = vadd.f32 0.0, %v1750
      %v1752 = vpop.f32.mrb[0].mxu0
      %v1753 = vadd.f32 0.0, %v1752
      %1754 = vdwg.mxu0
      %1755 = vmatprep.subr.mxu0 %v764
      %1756 = vmatpush1.msra.mxu0 %v763
      %1757 = vmatprep.subr.mxu0 %v772
      %1758 = vmatpush1.msra.mxu0 %v771
      %1759 = vmatprep.subr.mxu0 %v780
      %1760 = vmatpush1.msra.mxu0 %v779
      %1761 = vmatprep.subr.mxu0 %v822
      %1762 = vmatpush1.msra.mxu0 %v819
      %1763 = vmatprep.subr.mxu0 0.0
      %1764 = vmatpush1.msra.mxu0 0.0
      %1765 = vmatprep.subr.mxu0 0.0
      %1766 = vmatpush1.msra.mxu0 0.0
      %1767 = vmatprep.subr.mxu0 0.0
      %1768 = vmatpush1.msra.mxu0 0.0
      %1769 = vmatprep.subr.mxu0 0.0
      %1770 = vmatpush1.msra.mxu0 0.0
      %1771 = vmatprep.subr.mxu0 0.0
      %1772 = vmatpush1.msra.mxu0 0.0
      %1773 = vmatprep.subr.mxu0 0.0
      %1774 = vmatpush1.msra.mxu0 0.0
      %1775 = vmatprep.subr.mxu0 0.0
      %1776 = vmatpush1.msra.mxu0 0.0
      %1777 = vmatprep.subr.mxu0 0.0
      %1778 = vmatpush1.msra.mxu0 0.0
      %1779 = vmatprep.subr.mxu0 0.0
      %1780 = vmatpush1.msra.mxu0 0.0
      %1781 = vmatprep.subr.mxu0 0.0
      %1782 = vmatpush1.msra.mxu0 0.0
      %1783 = vmatprep.subr.mxu0 0.0
      %1784 = vmatpush1.msra.mxu0 0.0
      %1785 = vmatprep.subr.mxu0 0.0
      %1786 = vmatpush1.msra.mxu0 0.0
      %1787 = vmatprep.subr.mxu0 0.0
      %1788 = vmatpush1.msra.mxu0 0.0
      %1789 = vmatprep.subr.mxu0 0.0
      %1790 = vmatpush1.msra.mxu0 0.0
      %1791 = vmatprep.subr.mxu0 0.0
      %1792 = vmatpush1.msra.mxu0 0.0
      %1793 = vmatprep.subr.mxu0 0.0
      %1794 = vmatpush1.msra.mxu0 0.0
      %1795 = vmatprep.subr.mxu0 0.0
      %1796 = vmatpush1.msra.mxu0 0.0
      %1797 = vmatprep.subr.mxu0 0.0
      %1798 = vmatpush1.msra.mxu0 0.0
      %1799 = vmatprep.subr.mxu0 0.0
      %1800 = vmatpush1.msra.mxu0 0.0
      %1801 = vmatprep.subr.mxu0 0.0
      %1802 = vmatpush1.msra.mxu0 0.0
      %1803 = vmatprep.subr.mxu0 0.0
      %1804 = vmatpush1.msra.mxu0 0.0
      %1805 = vmatprep.subr.mxu0 0.0
      %1806 = vmatpush1.msra.mxu0 0.0
      %1807 = vmatprep.subr.mxu0 0.0
      %1808 = vmatpush1.msra.mxu0 0.0
      %1809 = vmatprep.subr.mxu0 0.0
      %1810 = vmatpush1.msra.mxu0 0.0
      %1811 = vmatprep.subr.mxu0 0.0
      %1812 = vmatpush1.msra.mxu0 0.0
      %1813 = vmatprep.subr.mxu0 0.0
      %1814 = vmatpush1.msra.mxu0 0.0
      %1815 = vmatprep.subr.mxu0 0.0
      %1816 = vmatpush1.msra.mxu0 0.0
      %1817 = vmatprep.subr.mxu0 0.0
      %1818 = vmatpush1.msra.mxu0 0.0
      %1819 = vmatprep.mubr.f32.mxu0 0.0
      %1820 = vmatmul.mubr.f32.gmra.mrb[0].mxu0 %v1581
      %v1821 = vpop.f32.mrb[0].mxu0
      %v1822 = vadd.f32 0.0, %v1821
      %v1823 = vpop.f32.mrb[0].mxu0
      %v1824 = vadd.f32 0.0, %v1823
      %1825 = vmatprep.mubr.f32.mxu0 0.0
      %1826 = vmatmul.mubr.f32.gmra.mrb[0].mxu0 %v1584
      %v1827 = vpop.f32.mrb[0].mxu0
      %v1828 = vadd.f32 0.0, %v1827
      %v1829 = vpop.f32.mrb[0].mxu0
      %v1830 = vadd.f32 0.0, %v1829
      %1831 = vmatprep.mubr.f32.mxu0 0.0
      %1832 = vmatmul.mubr.f32.gmra.mrb[0].mxu0 %v1587
      %v1833 = vpop.f32.mrb[0].mxu0
      %v1834 = vadd.f32 0.0, %v1833
      %v1835 = vpop.f32.mrb[0].mxu0
      %v1836 = vadd.f32 0.0, %v1835
      %1837 = vdwg.mxu0
      %1838 = vmatprep.subr.mxu0 %v766
      %1839 = vmatpush1.msra.mxu0 %v765
      %1840 = vmatprep.subr.mxu0 %v774
      %1841 = vmatpush1.msra.mxu0 %v773
      %1842 = vmatprep.subr.mxu0 %v782
      %1843 = vmatpush1.msra.mxu0 %v781
      %1844 = vmatprep.subr.mxu0 %v828
      %1845 = vmatpush1.msra.mxu0 %v825
      %1846 = vmatprep.subr.mxu0 0.0
      %1847 = vmatpush1.msra.mxu0 0.0
      %1848 = vmatprep.subr.mxu0 0.0
      %1849 = vmatpush1.msra.mxu0 0.0
      %1850 = vmatprep.subr.mxu0 0.0
      %1851 = vmatpush1.msra.mxu0 0.0
      %1852 = vmatprep.subr.mxu0 0.0
      %1853 = vmatpush1.msra.mxu0 0.0
      %1854 = vmatprep.subr.mxu0 0.0
      %1855 = vmatpush1.msra.mxu0 0.0
      %1856 = vmatprep.subr.mxu0 0.0
      %1857 = vmatpush1.msra.mxu0 0.0
      %1858 = vmatprep.subr.mxu0 0.0
      %1859 = vmatpush1.msra.mxu0 0.0
      %1860 = vmatprep.subr.mxu0 0.0
      %1861 = vmatpush1.msra.mxu0 0.0
      %1862 = vmatprep.subr.mxu0 0.0
      %1863 = vmatpush1.msra.mxu0 0.0
      %1864 = vmatprep.subr.mxu0 0.0
      %1865 = vmatpush1.msra.mxu0 0.0
      %1866 = vmatprep.subr.mxu0 0.0
      %1867 = vmatpush1.msra.mxu0 0.0
      %1868 = vmatprep.subr.mxu0 0.0
      %1869 = vmatpush1.msra.mxu0 0.0
      %1870 = vmatprep.subr.mxu0 0.0
      %1871 = vmatpush1.msra.mxu0 0.0
      %1872 = vmatprep.subr.mxu0 0.0
      %1873 = vmatpush1.msra.mxu0 0.0
      %1874 = vmatprep.subr.mxu0 0.0
      %1875 = vmatpush1.msra.mxu0 0.0
      %1876 = vmatprep.subr.mxu0 0.0
      %1877 = vmatpush1.msra.mxu0 0.0
      %1878 = vmatprep.subr.mxu0 0.0
      %1879 = vmatpush1.msra.mxu0 0.0
      %1880 = vmatprep.subr.mxu0 0.0
      %1881 = vmatpush1.msra.mxu0 0.0
      %1882 = vmatprep.subr.mxu0 0.0
      %1883 = vmatpush1.msra.mxu0 0.0
      %1884 = vmatprep.subr.mxu0 0.0
      %1885 = vmatpush1.msra.mxu0 0.0
      %1886 = vmatprep.subr.mxu0 0.0
      %1887 = vmatpush1.msra.mxu0 0.0
      %1888 = vmatprep.subr.mxu0 0.0
      %1889 = vmatpush1.msra.mxu0 0.0
      %1890 = vmatprep.subr.mxu0 0.0
      %1891 = vmatpush1.msra.mxu0 0.0
      %1892 = vmatprep.subr.mxu0 0.0
      %1893 = vmatpush1.msra.mxu0 0.0
      %1894 = vmatprep.subr.mxu0 0.0
      %1895 = vmatpush1.msra.mxu0 0.0
      %1896 = vmatprep.subr.mxu0 0.0
      %1897 = vmatpush1.msra.mxu0 0.0
      %1898 = vmatprep.subr.mxu0 0.0
      %1899 = vmatpush1.msra.mxu0 0.0
      %1900 = vmatprep.subr.mxu0 0.0
      %1901 = vmatpush1.msra.mxu0 0.0
      %1902 = vmatprep.mubr.f32.mxu0 0.0
      %1903 = vmatmul.mubr.f32.gmra.mrb[0].mxu0 %v1581
      %v1904 = vpop.f32.mrb[0].mxu0
      %v1905 = vadd.f32 0.0, %v1904
      %v1906 = vpop.f32.mrb[0].mxu0
      %v1907 = vadd.f32 0.0, %v1906
      %1908 = vmatprep.mubr.f32.mxu0 0.0
      %1909 = vmatmul.mubr.f32.gmra.mrb[0].mxu0 %v1584
      %v1910 = vpop.f32.mrb[0].mxu0
      %v1911 = vadd.f32 0.0, %v1910
      %v1912 = vpop.f32.mrb[0].mxu0
      %v1913 = vadd.f32 0.0, %v1912
      %1914 = vmatprep.mubr.f32.mxu0 0.0
      %1915 = vmatmul.mubr.f32.gmra.mrb[0].mxu0 %v1587
      %v1916 = vpop.f32.mrb[0].mxu0
      %v1917 = vadd.f32 0.0, %v1916
      %v1918 = vpop.f32.mrb[0].mxu0
      %v1919 = vadd.f32 0.0, %v1918
      %1920 = vdwg.mxu0
      %1921 = vrot.lane.b32.xlu0 %v1656, 64
      %v1922 = vpop.permute.xlu0 %1921
      %1923 = vrot.lane.b32.xlu0 %v1662, 64
      %v1924 = vpop.permute.xlu0 %1923
      %1925 = vrot.lane.b32.xlu0 %v1668, 64
      %v1926 = vpop.permute.xlu0 %1925
      %1927 = vrot.lane.b32.xlu0 %v1658, 64
      %v1928 = vpop.permute.xlu0 %1927
      %1929 = vrot.lane.b32.xlu0 %v1664, 64
      %v1930 = vpop.permute.xlu0 %1929
      %1931 = vrot.lane.b32.xlu0 %v1670, 64
      %v1932 = vpop.permute.xlu0 %1931
      %1933 = vrot.lane.b32.xlu0 %v1739, 64
      %v1934 = vpop.permute.xlu0 %1933
      %1935 = vrot.lane.b32.xlu0 %v1745, 64
      %v1936 = vpop.permute.xlu0 %1935
      %1937 = vrot.lane.b32.xlu0 %v1751, 64
      %v1938 = vpop.permute.xlu0 %1937
      %1939 = vrot.lane.b32.xlu0 %v1741, 64
      %v1940 = vpop.permute.xlu0 %1939
      %1941 = vrot.lane.b32.xlu0 %v1747, 64
      %v1942 = vpop.permute.xlu0 %1941
      %1943 = vrot.lane.b32.xlu0 %v1753, 64
      %v1944 = vpop.permute.xlu0 %1943
      %1945 = vrot.lane.b32.xlu0 %v1822, 64
      %v1946 = vpop.permute.xlu0 %1945
      %1947 = vrot.lane.b32.xlu0 %v1828, 64
      %v1948 = vpop.permute.xlu0 %1947
      %1949 = vrot.lane.b32.xlu0 %v1834, 64
      %v1950 = vpop.permute.xlu0 %1949
      %1951 = vrot.lane.b32.xlu0 %v1824, 64
      %v1952 = vpop.permute.xlu0 %1951
      %1953 = vrot.lane.b32.xlu0 %v1830, 64
      %v1954 = vpop.permute.xlu0 %1953
      %1955 = vrot.lane.b32.xlu0 %v1836, 64
      %v1956 = vpop.permute.xlu0 %1955
      %1957 = vrot.lane.b32.xlu0 %v1905, 64
      %v1958 = vpop.permute.xlu0 %1957
      %1959 = vrot.lane.b32.xlu0 %v1911, 64
      %v1960 = vpop.permute.xlu0 %1959
      %1961 = vrot.lane.b32.xlu0 %v1917, 64
      %v1962 = vpop.permute.xlu0 %1961
      %1963 = vrot.lane.b32.xlu0 %v1907, 64
      %v1964 = vpop.permute.xlu0 %1963
      %1965 = vrot.lane.b32.xlu0 %v1913, 64
      %v1966 = vpop.permute.xlu0 %1965
      %1967 = vrot.lane.b32.xlu0 %v1919, 64
      %v1968 = vpop.permute.xlu0 %1967
      %vm1969 = vcmp.lt.s32.totalorder %v266, 64
      %v1970 = vsel %vm1969, %v1958, %v1964
      %v1971 = vsel %vm1969, %v1960, %v1966
      %v1972 = vsel %vm1969, %v1962, %v1968
      %v1973 = vsel %vm1969, %v1952, %v1958
      %v1974 = vsel %vm1969, %v1954, %v1960
      %v1975 = vsel %vm1969, %v1956, %v1962
      %v1976 = vsel %vm1969, %v1946, %v1952
      %v1977 = vsel %vm1969, %v1948, %v1954
      %v1978 = vsel %vm1969, %v1950, %v1956
      %v1979 = vsel %vm1969, %v1940, %v1946
      %v1980 = vsel %vm1969, %v1942, %v1948
      %v1981 = vsel %vm1969, %v1944, %v1950
      %v1982 = vsel %vm1969, %v1934, %v1940
      %v1983 = vsel %vm1969, %v1936, %v1942
      %v1984 = vsel %vm1969, %v1938, %v1944
      %v1985 = vsel %vm1969, %v1928, %v1934
      %v1986 = vsel %vm1969, %v1930, %v1936
      %v1987 = vsel %vm1969, %v1932, %v1938
      %v1988 = vsel %vm1969, %v1922, %v1928
      %v1989 = vsel %vm1969, %v1924, %v1930
      %v1990 = vsel %vm1969, %v1926, %v1932
      %v1991 = vsel %vm1969, %v1964, %v1922
      %v1992 = vsel %vm1969, %v1966, %v1924
      %v1993 = vsel %vm1969, %v1968, %v1926
      %v1994 = vadd.f32 %v1311, %v1988
      %v1995 = vadd.f32 %v1313, %v1985
      %v1996 = vadd.f32 %v1394, %v1982
      %v1997 = vadd.f32 %v1396, %v1979
      %v1998 = vadd.f32 %v1477, %v1976
      %v1999 = vadd.f32 %v1479, %v1973
      %v2000 = vadd.f32 %v1560, %v1970
      %v2001 = vadd.f32 %v1562, %v1991
      %v2002 = vadd.f32 %v1317, %v1989
      %v2003 = vadd.f32 %v1319, %v1986
      %v2004 = vadd.f32 %v1400, %v1983
      %v2005 = vadd.f32 %v1402, %v1980
      %v2006 = vadd.f32 %v1483, %v1977
      %v2007 = vadd.f32 %v1485, %v1974
      %v2008 = vadd.f32 %v1566, %v1971
      %v2009 = vadd.f32 %v1568, %v1992
      %v2010 = vadd.f32 %v1323, %v1990
      %v2011 = vadd.f32 %v1325, %v1987
      %v2012 = vadd.f32 %v1406, %v1984
      %v2013 = vadd.f32 %v1408, %v1981
      %v2014 = vadd.f32 %v1489, %v1978
      %v2015 = vadd.f32 %v1491, %v1975
      %v2016 = vadd.f32 %v1572, %v1972
      %v2017 = vadd.f32 %v1574, %v1993
      %s2018 = scalar_lea.vmem %s1, 72
      %v2019 = vld [vmem:[%s2018] sm:$0xff]
      %v2020 = vld [vmem:[%s2018 + $0x8] sm:$0xff]
      %v2021 = vld [vmem:[%s2018 + $0x10] sm:$0xf]
      %v2023 = vsel %vm795, %v2019, 0
      %v2026 = vsel %vm795, %v2020, 0
      %v2029 = vsel %vm795, %v2021, 0
      %2031 = vmatprep.subr.mxu0 %v760
      %2032 = vmatpush1.msra.mxu0 %v759
      %2033 = vmatprep.subr.mxu0 %v768
      %2034 = vmatpush1.msra.mxu0 %v767
      %2035 = vmatprep.subr.mxu0 %v776
      %2036 = vmatpush1.msra.mxu0 %v775
      %2037 = vmatprep.subr.mxu0 %v810
      %2038 = vmatpush1.msra.mxu0 %v807
      %2039 = vmatprep.subr.mxu0 0.0
      %2040 = vmatpush1.msra.mxu0 0.0
      %2041 = vmatprep.subr.mxu0 0.0
      %2042 = vmatpush1.msra.mxu0 0.0
      %2043 = vmatprep.subr.mxu0 0.0
      %2044 = vmatpush1.msra.mxu0 0.0
      %2045 = vmatprep.subr.mxu0 0.0
      %2046 = vmatpush1.msra.mxu0 0.0
      %2047 = vmatprep.subr.mxu0 0.0
      %2048 = vmatpush1.msra.mxu0 0.0
      %2049 = vmatprep.subr.mxu0 0.0
      %2050 = vmatpush1.msra.mxu0 0.0
      %2051 = vmatprep.subr.mxu0 0.0
      %2052 = vmatpush1.msra.mxu0 0.0
      %2053 = vmatprep.subr.mxu0 0.0
      %2054 = vmatpush1.msra.mxu0 0.0
      %2055 = vmatprep.subr.mxu0 0.0
      %2056 = vmatpush1.msra.mxu0 0.0
      %2057 = vmatprep.subr.mxu0 0.0
      %2058 = vmatpush1.msra.mxu0 0.0
      %2059 = vmatprep.subr.mxu0 0.0
      %2060 = vmatpush1.msra.mxu0 0.0
      %2061 = vmatprep.subr.mxu0 0.0
      %2062 = vmatpush1.msra.mxu0 0.0
      %2063 = vmatprep.subr.mxu0 0.0
      %2064 = vmatpush1.msra.mxu0 0.0
      %2065 = vmatprep.subr.mxu0 0.0
      %2066 = vmatpush1.msra.mxu0 0.0
      %2067 = vmatprep.subr.mxu0 0.0
      %2068 = vmatpush1.msra.mxu0 0.0
      %2069 = vmatprep.subr.mxu0 0.0
      %2070 = vmatpush1.msra.mxu0 0.0
      %2071 = vmatprep.subr.mxu0 0.0
      %2072 = vmatpush1.msra.mxu0 0.0
      %2073 = vmatprep.subr.mxu0 0.0
      %2074 = vmatpush1.msra.mxu0 0.0
      %2075 = vmatprep.subr.mxu0 0.0
      %2076 = vmatpush1.msra.mxu0 0.0
      %2077 = vmatprep.subr.mxu0 0.0
      %2078 = vmatpush1.msra.mxu0 0.0
      %2079 = vmatprep.subr.mxu0 0.0
      %2080 = vmatpush1.msra.mxu0 0.0
      %2081 = vmatprep.subr.mxu0 0.0
      %2082 = vmatpush1.msra.mxu0 0.0
      %2083 = vmatprep.subr.mxu0 0.0
      %2084 = vmatpush1.msra.mxu0 0.0
      %2085 = vmatprep.subr.mxu0 0.0
      %2086 = vmatpush1.msra.mxu0 0.0
      %2087 = vmatprep.subr.mxu0 0.0
      %2088 = vmatpush1.msra.mxu0 0.0
      %2089 = vmatprep.subr.mxu0 0.0
      %2090 = vmatpush1.msra.mxu0 0.0
      %2091 = vmatprep.subr.mxu0 0.0
      %2092 = vmatpush1.msra.mxu0 0.0
      %2093 = vmatprep.subr.mxu0 0.0
      %2094 = vmatpush1.msra.mxu0 0.0
      %2095 = vmatprep.mubr.f32.mxu0 0.0
      %2096 = vmatmul.mubr.f32.gmra.mrb[0].mxu0 %v2023
      %v2097 = vpop.f32.mrb[0].mxu0
      %v2098 = vadd.f32 0.0, %v2097
      %v2099 = vpop.f32.mrb[0].mxu0
      %v2100 = vadd.f32 0.0, %v2099
      %2101 = vmatprep.mubr.f32.mxu0 0.0
      %2102 = vmatmul.mubr.f32.gmra.mrb[0].mxu0 %v2026
      %v2103 = vpop.f32.mrb[0].mxu0
      %v2104 = vadd.f32 0.0, %v2103
      %v2105 = vpop.f32.mrb[0].mxu0
      %v2106 = vadd.f32 0.0, %v2105
      %2107 = vmatprep.mubr.f32.mxu0 0.0
      %2108 = vmatmul.mubr.f32.gmra.mrb[0].mxu0 %v2029
      %v2109 = vpop.f32.mrb[0].mxu0
      %v2110 = vadd.f32 0.0, %v2109
      %v2111 = vpop.f32.mrb[0].mxu0
      %v2112 = vadd.f32 0.0, %v2111
      %2113 = vdwg.mxu0
      %2114 = vmatprep.subr.mxu0 %v762
      %2115 = vmatpush1.msra.mxu0 %v761
      %2116 = vmatprep.subr.mxu0 %v770
      %2117 = vmatpush1.msra.mxu0 %v769
      %2118 = vmatprep.subr.mxu0 %v778
      %2119 = vmatpush1.msra.mxu0 %v777
      %2120 = vmatprep.subr.mxu0 %v816
      %2121 = vmatpush1.msra.mxu0 %v813
      %2122 = vmatprep.subr.mxu0 0.0
      %2123 = vmatpush1.msra.mxu0 0.0
      %2124 = vmatprep.subr.mxu0 0.0
      %2125 = vmatpush1.msra.mxu0 0.0
      %2126 = vmatprep.subr.mxu0 0.0
      %2127 = vmatpush1.msra.mxu0 0.0
      %2128 = vmatprep.subr.mxu0 0.0
      %2129 = vmatpush1.msra.mxu0 0.0
      %2130 = vmatprep.subr.mxu0 0.0
      %2131 = vmatpush1.msra.mxu0 0.0
      %2132 = vmatprep.subr.mxu0 0.0
      %2133 = vmatpush1.msra.mxu0 0.0
      %2134 = vmatprep.subr.mxu0 0.0
      %2135 = vmatpush1.msra.mxu0 0.0
      %2136 = vmatprep.subr.mxu0 0.0
      %2137 = vmatpush1.msra.mxu0 0.0
      %2138 = vmatprep.subr.mxu0 0.0
      %2139 = vmatpush1.msra.mxu0 0.0
      %2140 = vmatprep.subr.mxu0 0.0
      %2141 = vmatpush1.msra.mxu0 0.0
      %2142 = vmatprep.subr.mxu0 0.0
      %2143 = vmatpush1.msra.mxu0 0.0
      %2144 = vmatprep.subr.mxu0 0.0
      %2145 = vmatpush1.msra.mxu0 0.0
      %2146 = vmatprep.subr.mxu0 0.0
      %2147 = vmatpush1.msra.mxu0 0.0
      %2148 = vmatprep.subr.mxu0 0.0
      %2149 = vmatpush1.msra.mxu0 0.0
      %2150 = vmatprep.subr.mxu0 0.0
      %2151 = vmatpush1.msra.mxu0 0.0
      %2152 = vmatprep.subr.mxu0 0.0
      %2153 = vmatpush1.msra.mxu0 0.0
      %2154 = vmatprep.subr.mxu0 0.0
      %2155 = vmatpush1.msra.mxu0 0.0
      %2156 = vmatprep.subr.mxu0 0.0
      %2157 = vmatpush1.msra.mxu0 0.0
      %2158 = vmatprep.subr.mxu0 0.0
      %2159 = vmatpush1.msra.mxu0 0.0
      %2160 = vmatprep.subr.mxu0 0.0
      %2161 = vmatpush1.msra.mxu0 0.0
      %2162 = vmatprep.subr.mxu0 0.0
      %2163 = vmatpush1.msra.mxu0 0.0
      %2164 = vmatprep.subr.mxu0 0.0
      %2165 = vmatpush1.msra.mxu0 0.0
      %2166 = vmatprep.subr.mxu0 0.0
      %2167 = vmatpush1.msra.mxu0 0.0
      %2168 = vmatprep.subr.mxu0 0.0
      %2169 = vmatpush1.msra.mxu0 0.0
      %2170 = vmatprep.subr.mxu0 0.0
      %2171 = vmatpush1.msra.mxu0 0.0
      %2172 = vmatprep.subr.mxu0 0.0
      %2173 = vmatpush1.msra.mxu0 0.0
      %2174 = vmatprep.subr.mxu0 0.0
      %2175 = vmatpush1.msra.mxu0 0.0
      %2176 = vmatprep.subr.mxu0 0.0
      %2177 = vmatpush1.msra.mxu0 0.0
      %2178 = vmatprep.mubr.f32.mxu0 0.0
      %2179 = vmatmul.mubr.f32.gmra.mrb[0].mxu0 %v2023
      %v2180 = vpop.f32.mrb[0].mxu0
      %v2181 = vadd.f32 0.0, %v2180
      %v2182 = vpop.f32.mrb[0].mxu0
      %v2183 = vadd.f32 0.0, %v2182
      %2184 = vmatprep.mubr.f32.mxu0 0.0
      %2185 = vmatmul.mubr.f32.gmra.mrb[0].mxu0 %v2026
      %v2186 = vpop.f32.mrb[0].mxu0
      %v2187 = vadd.f32 0.0, %v2186
      %v2188 = vpop.f32.mrb[0].mxu0
      %v2189 = vadd.f32 0.0, %v2188
      %2190 = vmatprep.mubr.f32.mxu0 0.0
      %2191 = vmatmul.mubr.f32.gmra.mrb[0].mxu0 %v2029
      %v2192 = vpop.f32.mrb[0].mxu0
      %v2193 = vadd.f32 0.0, %v2192
      %v2194 = vpop.f32.mrb[0].mxu0
      %v2195 = vadd.f32 0.0, %v2194
      %2196 = vdwg.mxu0
      %2197 = vmatprep.subr.mxu0 %v764
      %2198 = vmatpush1.msra.mxu0 %v763
      %2199 = vmatprep.subr.mxu0 %v772
      %2200 = vmatpush1.msra.mxu0 %v771
      %2201 = vmatprep.subr.mxu0 %v780
      %2202 = vmatpush1.msra.mxu0 %v779
      %2203 = vmatprep.subr.mxu0 %v822
      %2204 = vmatpush1.msra.mxu0 %v819
      %2205 = vmatprep.subr.mxu0 0.0
      %2206 = vmatpush1.msra.mxu0 0.0
      %2207 = vmatprep.subr.mxu0 0.0
      %2208 = vmatpush1.msra.mxu0 0.0
      %2209 = vmatprep.subr.mxu0 0.0
      %2210 = vmatpush1.msra.mxu0 0.0
      %2211 = vmatprep.subr.mxu0 0.0
      %2212 = vmatpush1.msra.mxu0 0.0
      %2213 = vmatprep.subr.mxu0 0.0
      %2214 = vmatpush1.msra.mxu0 0.0
      %2215 = vmatprep.subr.mxu0 0.0
      %2216 = vmatpush1.msra.mxu0 0.0
      %2217 = vmatprep.subr.mxu0 0.0
      %2218 = vmatpush1.msra.mxu0 0.0
      %2219 = vmatprep.subr.mxu0 0.0
      %2220 = vmatpush1.msra.mxu0 0.0
      %2221 = vmatprep.subr.mxu0 0.0
      %2222 = vmatpush1.msra.mxu0 0.0
      %2223 = vmatprep.subr.mxu0 0.0
      %2224 = vmatpush1.msra.mxu0 0.0
      %2225 = vmatprep.subr.mxu0 0.0
      %2226 = vmatpush1.msra.mxu0 0.0
      %2227 = vmatprep.subr.mxu0 0.0
      %2228 = vmatpush1.msra.mxu0 0.0
      %2229 = vmatprep.subr.mxu0 0.0
      %2230 = vmatpush1.msra.mxu0 0.0
      %2231 = vmatprep.subr.mxu0 0.0
      %2232 = vmatpush1.msra.mxu0 0.0
      %2233 = vmatprep.subr.mxu0 0.0
      %2234 = vmatpush1.msra.mxu0 0.0
      %2235 = vmatprep.subr.mxu0 0.0
      %2236 = vmatpush1.msra.mxu0 0.0
      %2237 = vmatprep.subr.mxu0 0.0
      %2238 = vmatpush1.msra.mxu0 0.0
      %2239 = vmatprep.subr.mxu0 0.0
      %2240 = vmatpush1.msra.mxu0 0.0
      %2241 = vmatprep.subr.mxu0 0.0
      %2242 = vmatpush1.msra.mxu0 0.0
      %2243 = vmatprep.subr.mxu0 0.0
      %2244 = vmatpush1.msra.mxu0 0.0
      %2245 = vmatprep.subr.mxu0 0.0
      %2246 = vmatpush1.msra.mxu0 0.0
      %2247 = vmatprep.subr.mxu0 0.0
      %2248 = vmatpush1.msra.mxu0 0.0
      %2249 = vmatprep.subr.mxu0 0.0
      %2250 = vmatpush1.msra.mxu0 0.0
      %2251 = vmatprep.subr.mxu0 0.0
      %2252 = vmatpush1.msra.mxu0 0.0
      %2253 = vmatprep.subr.mxu0 0.0
      %2254 = vmatpush1.msra.mxu0 0.0
      %2255 = vmatprep.subr.mxu0 0.0
      %2256 = vmatpush1.msra.mxu0 0.0
      %2257 = vmatprep.subr.mxu0 0.0
      %2258 = vmatpush1.msra.mxu0 0.0
      %2259 = vmatprep.subr.mxu0 0.0
      %2260 = vmatpush1.msra.mxu0 0.0
      %2261 = vmatprep.mubr.f32.mxu0 0.0
      %2262 = vmatmul.mubr.f32.gmra.mrb[0].mxu0 %v2023
      %v2263 = vpop.f32.mrb[0].mxu0
      %v2264 = vadd.f32 0.0, %v2263
      %v2265 = vpop.f32.mrb[0].mxu0
      %v2266 = vadd.f32 0.0, %v2265
      %2267 = vmatprep.mubr.f32.mxu0 0.0
      %2268 = vmatmul.mubr.f32.gmra.mrb[0].mxu0 %v2026
      %v2269 = vpop.f32.mrb[0].mxu0
      %v2270 = vadd.f32 0.0, %v2269
      %v2271 = vpop.f32.mrb[0].mxu0
      %v2272 = vadd.f32 0.0, %v2271
      %2273 = vmatprep.mubr.f32.mxu0 0.0
      %2274 = vmatmul.mubr.f32.gmra.mrb[0].mxu0 %v2029
      %v2275 = vpop.f32.mrb[0].mxu0
      %v2276 = vadd.f32 0.0, %v2275
      %v2277 = vpop.f32.mrb[0].mxu0
      %v2278 = vadd.f32 0.0, %v2277
      %2279 = vdwg.mxu0
      %2280 = vmatprep.subr.mxu0 %v766
      %2281 = vmatpush1.msra.mxu0 %v765
      %2282 = vmatprep.subr.mxu0 %v774
      %2283 = vmatpush1.msra.mxu0 %v773
      %2284 = vmatprep.subr.mxu0 %v782
      %2285 = vmatpush1.msra.mxu0 %v781
      %2286 = vmatprep.subr.mxu0 %v828
      %2287 = vmatpush1.msra.mxu0 %v825
      %2288 = vmatprep.subr.mxu0 0.0
      %2289 = vmatpush1.msra.mxu0 0.0
      %2290 = vmatprep.subr.mxu0 0.0
      %2291 = vmatpush1.msra.mxu0 0.0
      %2292 = vmatprep.subr.mxu0 0.0
      %2293 = vmatpush1.msra.mxu0 0.0
      %2294 = vmatprep.subr.mxu0 0.0
      %2295 = vmatpush1.msra.mxu0 0.0
      %2296 = vmatprep.subr.mxu0 0.0
      %2297 = vmatpush1.msra.mxu0 0.0
      %2298 = vmatprep.subr.mxu0 0.0
      %2299 = vmatpush1.msra.mxu0 0.0
      %2300 = vmatprep.subr.mxu0 0.0
      %2301 = vmatpush1.msra.mxu0 0.0
      %2302 = vmatprep.subr.mxu0 0.0
      %2303 = vmatpush1.msra.mxu0 0.0
      %2304 = vmatprep.subr.mxu0 0.0
      %2305 = vmatpush1.msra.mxu0 0.0
      %2306 = vmatprep.subr.mxu0 0.0
      %2307 = vmatpush1.msra.mxu0 0.0
      %2308 = vmatprep.subr.mxu0 0.0
      %2309 = vmatpush1.msra.mxu0 0.0
      %2310 = vmatprep.subr.mxu0 0.0
      %2311 = vmatpush1.msra.mxu0 0.0
      %2312 = vmatprep.subr.mxu0 0.0
      %2313 = vmatpush1.msra.mxu0 0.0
      %2314 = vmatprep.subr.mxu0 0.0
      %2315 = vmatpush1.msra.mxu0 0.0
      %2316 = vmatprep.subr.mxu0 0.0
      %2317 = vmatpush1.msra.mxu0 0.0
      %2318 = vmatprep.subr.mxu0 0.0
      %2319 = vmatpush1.msra.mxu0 0.0
      %2320 = vmatprep.subr.mxu0 0.0
      %2321 = vmatpush1.msra.mxu0 0.0
      %2322 = vmatprep.subr.mxu0 0.0
      %2323 = vmatpush1.msra.mxu0 0.0
      %2324 = vmatprep.subr.mxu0 0.0
      %2325 = vmatpush1.msra.mxu0 0.0
      %2326 = vmatprep.subr.mxu0 0.0
      %2327 = vmatpush1.msra.mxu0 0.0
      %2328 = vmatprep.subr.mxu0 0.0
      %2329 = vmatpush1.msra.mxu0 0.0
      %2330 = vmatprep.subr.mxu0 0.0
      %2331 = vmatpush1.msra.mxu0 0.0
      %2332 = vmatprep.subr.mxu0 0.0
      %2333 = vmatpush1.msra.mxu0 0.0
      %2334 = vmatprep.subr.mxu0 0.0
      %2335 = vmatpush1.msra.mxu0 0.0
      %2336 = vmatprep.subr.mxu0 0.0
      %2337 = vmatpush1.msra.mxu0 0.0
      %2338 = vmatprep.subr.mxu0 0.0
      %2339 = vmatpush1.msra.mxu0 0.0
      %2340 = vmatprep.subr.mxu0 0.0
      %2341 = vmatpush1.msra.mxu0 0.0
      %2342 = vmatprep.subr.mxu0 0.0
      %2343 = vmatpush1.msra.mxu0 0.0
      %2344 = vmatprep.mubr.f32.mxu0 0.0
      %2345 = vmatmul.mubr.f32.gmra.mrb[0].mxu0 %v2023
      %v2346 = vpop.f32.mrb[0].mxu0
      %v2347 = vadd.f32 0.0, %v2346
      %v2348 = vpop.f32.mrb[0].mxu0
      %v2349 = vadd.f32 0.0, %v2348
      %2350 = vmatprep.mubr.f32.mxu0 0.0
      %2351 = vmatmul.mubr.f32.gmra.mrb[0].mxu0 %v2026
      %v2352 = vpop.f32.mrb[0].mxu0
      %v2353 = vadd.f32 0.0, %v2352
      %v2354 = vpop.f32.mrb[0].mxu0
      %v2355 = vadd.f32 0.0, %v2354
      %2356 = vmatprep.mubr.f32.mxu0 0.0
      %2357 = vmatmul.mubr.f32.gmra.mrb[0].mxu0 %v2029
      %v2358 = vpop.f32.mrb[0].mxu0
      %v2359 = vadd.f32 0.0, %v2358
      %v2360 = vpop.f32.mrb[0].mxu0
      %v2361 = vadd.f32 0.0, %v2360
      %2362 = vdwg.mxu0
      %2363 = vrot.lane.b32.xlu0 %v2098, 32
      %v2364 = vpop.permute.xlu0 %2363
      %2365 = vrot.lane.b32.xlu0 %v2104, 32
      %v2366 = vpop.permute.xlu0 %2365
      %2367 = vrot.lane.b32.xlu0 %v2110, 32
      %v2368 = vpop.permute.xlu0 %2367
      %2369 = vrot.lane.b32.xlu0 %v2100, 32
      %v2370 = vpop.permute.xlu0 %2369
      %2371 = vrot.lane.b32.xlu0 %v2106, 32
      %v2372 = vpop.permute.xlu0 %2371
      %2373 = vrot.lane.b32.xlu0 %v2112, 32
      %v2374 = vpop.permute.xlu0 %2373
      %2375 = vrot.lane.b32.xlu0 %v2181, 32
      %v2376 = vpop.permute.xlu0 %2375
      %2377 = vrot.lane.b32.xlu0 %v2187, 32
      %v2378 = vpop.permute.xlu0 %2377
      %2379 = vrot.lane.b32.xlu0 %v2193, 32
      %v2380 = vpop.permute.xlu0 %2379
      %2381 = vrot.lane.b32.xlu0 %v2183, 32
      %v2382 = vpop.permute.xlu0 %2381
      %2383 = vrot.lane.b32.xlu0 %v2189, 32
      %v2384 = vpop.permute.xlu0 %2383
      %2385 = vrot.lane.b32.xlu0 %v2195, 32
      %v2386 = vpop.permute.xlu0 %2385
      %2387 = vrot.lane.b32.xlu0 %v2264, 32
      %v2388 = vpop.permute.xlu0 %2387
      %2389 = vrot.lane.b32.xlu0 %v2270, 32
      %v2390 = vpop.permute.xlu0 %2389
      %2391 = vrot.lane.b32.xlu0 %v2276, 32
      %v2392 = vpop.permute.xlu0 %2391
      %2393 = vrot.lane.b32.xlu0 %v2266, 32
      %v2394 = vpop.permute.xlu0 %2393
      %2395 = vrot.lane.b32.xlu0 %v2272, 32
      %v2396 = vpop.permute.xlu0 %2395
      %2397 = vrot.lane.b32.xlu0 %v2278, 32
      %v2398 = vpop.permute.xlu0 %2397
      %2399 = vrot.lane.b32.xlu0 %v2347, 32
      %v2400 = vpop.permute.xlu0 %2399
      %2401 = vrot.lane.b32.xlu0 %v2353, 32
      %v2402 = vpop.permute.xlu0 %2401
      %2403 = vrot.lane.b32.xlu0 %v2359, 32
      %v2404 = vpop.permute.xlu0 %2403
      %2405 = vrot.lane.b32.xlu0 %v2349, 32
      %v2406 = vpop.permute.xlu0 %2405
      %2407 = vrot.lane.b32.xlu0 %v2355, 32
      %v2408 = vpop.permute.xlu0 %2407
      %2409 = vrot.lane.b32.xlu0 %v2361, 32
      %v2410 = vpop.permute.xlu0 %2409
      %vm2411 = vcmp.lt.s32.totalorder %v266, 32
      %v2412 = vsel %vm2411, %v2400, %v2406
      %v2413 = vsel %vm2411, %v2402, %v2408
      %v2414 = vsel %vm2411, %v2404, %v2410
      %v2415 = vsel %vm2411, %v2394, %v2400
      %v2416 = vsel %vm2411, %v2396, %v2402
      %v2417 = vsel %vm2411, %v2398, %v2404
      %v2418 = vsel %vm2411, %v2388, %v2394
      %v2419 = vsel %vm2411, %v2390, %v2396
      %v2420 = vsel %vm2411, %v2392, %v2398
      %v2421 = vsel %vm2411, %v2382, %v2388
      %v2422 = vsel %vm2411, %v2384, %v2390
      %v2423 = vsel %vm2411, %v2386, %v2392
      %v2424 = vsel %vm2411, %v2376, %v2382
      %v2425 = vsel %vm2411, %v2378, %v2384
      %v2426 = vsel %vm2411, %v2380, %v2386
      %v2427 = vsel %vm2411, %v2370, %v2376
      %v2428 = vsel %vm2411, %v2372, %v2378
      %v2429 = vsel %vm2411, %v2374, %v2380
      %v2430 = vsel %vm2411, %v2364, %v2370
      %v2431 = vsel %vm2411, %v2366, %v2372
      %v2432 = vsel %vm2411, %v2368, %v2374
      %v2433 = vsel %vm2411, %v2406, %v2364
      %v2434 = vsel %vm2411, %v2408, %v2366
      %v2435 = vsel %vm2411, %v2410, %v2368
      %v2436 = vadd.f32 %v1994, %v2430
      %v2437 = vadd.f32 %v1995, %v2427
      %v2438 = vadd.f32 %v1996, %v2424
      %v2439 = vadd.f32 %v1997, %v2421
      %v2440 = vadd.f32 %v1998, %v2418
      %v2441 = vadd.f32 %v1999, %v2415
      %v2442 = vadd.f32 %v2000, %v2412
      %v2443 = vadd.f32 %v2001, %v2433
      %v2444 = vadd.f32 %v2002, %v2431
      %v2445 = vadd.f32 %v2003, %v2428
      %v2446 = vadd.f32 %v2004, %v2425
      %v2447 = vadd.f32 %v2005, %v2422
      %v2448 = vadd.f32 %v2006, %v2419
      %v2449 = vadd.f32 %v2007, %v2416
      %v2450 = vadd.f32 %v2008, %v2413
      %v2451 = vadd.f32 %v2009, %v2434
      %v2452 = vadd.f32 %v2010, %v2432
      %v2453 = vadd.f32 %v2011, %v2429
      %v2454 = vadd.f32 %v2012, %v2426
      %v2455 = vadd.f32 %v2013, %v2423
      %v2456 = vadd.f32 %v2014, %v2420
      %v2457 = vadd.f32 %v2015, %v2417
      %v2458 = vadd.f32 %v2016, %v2414
      %v2459 = vadd.f32 %v2017, %v2435
      %s2460 = scalar_lea.vmem %s1, 96
      %v2461 = vld [vmem:[%s2460] sm:$0xff]
      %v2462 = vld [vmem:[%s2460 + $0x8] sm:$0xff]
      %v2463 = vld [vmem:[%s2460 + $0x10] sm:$0xf]
      %v2465 = vsel %vm795, %v2461, 0
      %v2468 = vsel %vm795, %v2462, 0
      %v2471 = vsel %vm795, %v2463, 0
      %2473 = vmatprep.subr.mxu0 %v760
      %2474 = vmatpush1.msra.mxu0 %v759
      %2475 = vmatprep.subr.mxu0 %v768
      %2476 = vmatpush1.msra.mxu0 %v767
      %2477 = vmatprep.subr.mxu0 %v776
      %2478 = vmatpush1.msra.mxu0 %v775
      %2479 = vmatprep.subr.mxu0 %v810
      %2480 = vmatpush1.msra.mxu0 %v807
      %2481 = vmatprep.subr.mxu0 0.0
      %2482 = vmatpush1.msra.mxu0 0.0
      %2483 = vmatprep.subr.mxu0 0.0
      %2484 = vmatpush1.msra.mxu0 0.0
      %2485 = vmatprep.subr.mxu0 0.0
      %2486 = vmatpush1.msra.mxu0 0.0
      %2487 = vmatprep.subr.mxu0 0.0
      %2488 = vmatpush1.msra.mxu0 0.0
      %2489 = vmatprep.subr.mxu0 0.0
      %2490 = vmatpush1.msra.mxu0 0.0
      %2491 = vmatprep.subr.mxu0 0.0
      %2492 = vmatpush1.msra.mxu0 0.0
      %2493 = vmatprep.subr.mxu0 0.0
      %2494 = vmatpush1.msra.mxu0 0.0
      %2495 = vmatprep.subr.mxu0 0.0
      %2496 = vmatpush1.msra.mxu0 0.0
      %2497 = vmatprep.subr.mxu0 0.0
      %2498 = vmatpush1.msra.mxu0 0.0
      %2499 = vmatprep.subr.mxu0 0.0
      %2500 = vmatpush1.msra.mxu0 0.0
      %2501 = vmatprep.subr.mxu0 0.0
      %2502 = vmatpush1.msra.mxu0 0.0
      %2503 = vmatprep.subr.mxu0 0.0
      %2504 = vmatpush1.msra.mxu0 0.0
      %2505 = vmatprep.subr.mxu0 0.0
      %2506 = vmatpush1.msra.mxu0 0.0
      %2507 = vmatprep.subr.mxu0 0.0
      %2508 = vmatpush1.msra.mxu0 0.0
      %2509 = vmatprep.subr.mxu0 0.0
      %2510 = vmatpush1.msra.mxu0 0.0
      %2511 = vmatprep.subr.mxu0 0.0
      %2512 = vmatpush1.msra.mxu0 0.0
      %2513 = vmatprep.subr.mxu0 0.0
      %2514 = vmatpush1.msra.mxu0 0.0
      %2515 = vmatprep.subr.mxu0 0.0
      %2516 = vmatpush1.msra.mxu0 0.0
      %2517 = vmatprep.subr.mxu0 0.0
      %2518 = vmatpush1.msra.mxu0 0.0
      %2519 = vmatprep.subr.mxu0 0.0
      %2520 = vmatpush1.msra.mxu0 0.0
      %2521 = vmatprep.subr.mxu0 0.0
      %2522 = vmatpush1.msra.mxu0 0.0
      %2523 = vmatprep.subr.mxu0 0.0
      %2524 = vmatpush1.msra.mxu0 0.0
      %2525 = vmatprep.subr.mxu0 0.0
      %2526 = vmatpush1.msra.mxu0 0.0
      %2527 = vmatprep.subr.mxu0 0.0
      %2528 = vmatpush1.msra.mxu0 0.0
      %2529 = vmatprep.subr.mxu0 0.0
      %2530 = vmatpush1.msra.mxu0 0.0
      %2531 = vmatprep.subr.mxu0 0.0
      %2532 = vmatpush1.msra.mxu0 0.0
      %2533 = vmatprep.subr.mxu0 0.0
      %2534 = vmatpush1.msra.mxu0 0.0
      %2535 = vmatprep.subr.mxu0 0.0
      %2536 = vmatpush1.msra.mxu0 0.0
      %2537 = vmatprep.mubr.f32.mxu0 0.0
      %2538 = vmatmul.mubr.f32.gmra.mrb[0].mxu0 %v2465
      %v2539 = vpop.f32.mrb[0].mxu0
      %v2540 = vadd.f32 0.0, %v2539
      %v2541 = vpop.f32.mrb[0].mxu0
      %v2542 = vadd.f32 0.0, %v2541
      %2543 = vmatprep.mubr.f32.mxu0 0.0
      %2544 = vmatmul.mubr.f32.gmra.mrb[0].mxu0 %v2468
      %v2545 = vpop.f32.mrb[0].mxu0
      %v2546 = vadd.f32 0.0, %v2545
      %v2547 = vpop.f32.mrb[0].mxu0
      %v2548 = vadd.f32 0.0, %v2547
      %2549 = vmatprep.mubr.f32.mxu0 0.0
      %2550 = vmatmul.mubr.f32.gmra.mrb[0].mxu0 %v2471
      %v2551 = vpop.f32.mrb[0].mxu0
      %v2552 = vadd.f32 0.0, %v2551
      %v2553 = vpop.f32.mrb[0].mxu0
      %v2554 = vadd.f32 0.0, %v2553
      %2555 = vdwg.mxu0
      %2556 = vmatprep.subr.mxu0 %v762
      %2557 = vmatpush1.msra.mxu0 %v761
      %2558 = vmatprep.subr.mxu0 %v770
      %2559 = vmatpush1.msra.mxu0 %v769
      %2560 = vmatprep.subr.mxu0 %v778
      %2561 = vmatpush1.msra.mxu0 %v777
      %2562 = vmatprep.subr.mxu0 %v816
      %2563 = vmatpush1.msra.mxu0 %v813
      %2564 = vmatprep.subr.mxu0 0.0
      %2565 = vmatpush1.msra.mxu0 0.0
      %2566 = vmatprep.subr.mxu0 0.0
      %2567 = vmatpush1.msra.mxu0 0.0
      %2568 = vmatprep.subr.mxu0 0.0
      %2569 = vmatpush1.msra.mxu0 0.0
      %2570 = vmatprep.subr.mxu0 0.0
      %2571 = vmatpush1.msra.mxu0 0.0
      %2572 = vmatprep.subr.mxu0 0.0
      %2573 = vmatpush1.msra.mxu0 0.0
      %2574 = vmatprep.subr.mxu0 0.0
      %2575 = vmatpush1.msra.mxu0 0.0
      %2576 = vmatprep.subr.mxu0 0.0
      %2577 = vmatpush1.msra.mxu0 0.0
      %2578 = vmatprep.subr.mxu0 0.0
      %2579 = vmatpush1.msra.mxu0 0.0
      %2580 = vmatprep.subr.mxu0 0.0
      %2581 = vmatpush1.msra.mxu0 0.0
      %2582 = vmatprep.subr.mxu0 0.0
      %2583 = vmatpush1.msra.mxu0 0.0
      %2584 = vmatprep.subr.mxu0 0.0
      %2585 = vmatpush1.msra.mxu0 0.0
      %2586 = vmatprep.subr.mxu0 0.0
      %2587 = vmatpush1.msra.mxu0 0.0
      %2588 = vmatprep.subr.mxu0 0.0
      %2589 = vmatpush1.msra.mxu0 0.0
      %2590 = vmatprep.subr.mxu0 0.0
      %2591 = vmatpush1.msra.mxu0 0.0
      %2592 = vmatprep.subr.mxu0 0.0
      %2593 = vmatpush1.msra.mxu0 0.0
      %2594 = vmatprep.subr.mxu0 0.0
      %2595 = vmatpush1.msra.mxu0 0.0
      %2596 = vmatprep.subr.mxu0 0.0
      %2597 = vmatpush1.msra.mxu0 0.0
      %2598 = vmatprep.subr.mxu0 0.0
      %2599 = vmatpush1.msra.mxu0 0.0
      %2600 = vmatprep.subr.mxu0 0.0
      %2601 = vmatpush1.msra.mxu0 0.0
      %2602 = vmatprep.subr.mxu0 0.0
      %2603 = vmatpush1.msra.mxu0 0.0
      %2604 = vmatprep.subr.mxu0 0.0
      %2605 = vmatpush1.msra.mxu0 0.0
      %2606 = vmatprep.subr.mxu0 0.0
      %2607 = vmatpush1.msra.mxu0 0.0
      %2608 = vmatprep.subr.mxu0 0.0
      %2609 = vmatpush1.msra.mxu0 0.0
      %2610 = vmatprep.subr.mxu0 0.0
      %2611 = vmatpush1.msra.mxu0 0.0
      %2612 = vmatprep.subr.mxu0 0.0
      %2613 = vmatpush1.msra.mxu0 0.0
      %2614 = vmatprep.subr.mxu0 0.0
      %2615 = vmatpush1.msra.mxu0 0.0
      %2616 = vmatprep.subr.mxu0 0.0
      %2617 = vmatpush1.msra.mxu0 0.0
      %2618 = vmatprep.subr.mxu0 0.0
      %2619 = vmatpush1.msra.mxu0 0.0
      %2620 = vmatprep.mubr.f32.mxu0 0.0
      %2621 = vmatmul.mubr.f32.gmra.mrb[0].mxu0 %v2465
      %v2622 = vpop.f32.mrb[0].mxu0
      %v2623 = vadd.f32 0.0, %v2622
      %v2624 = vpop.f32.mrb[0].mxu0
      %v2625 = vadd.f32 0.0, %v2624
      %2626 = vmatprep.mubr.f32.mxu0 0.0
      %2627 = vmatmul.mubr.f32.gmra.mrb[0].mxu0 %v2468
      %v2628 = vpop.f32.mrb[0].mxu0
      %v2629 = vadd.f32 0.0, %v2628
      %v2630 = vpop.f32.mrb[0].mxu0
      %v2631 = vadd.f32 0.0, %v2630
      %2632 = vmatprep.mubr.f32.mxu0 0.0
      %2633 = vmatmul.mubr.f32.gmra.mrb[0].mxu0 %v2471
      %v2634 = vpop.f32.mrb[0].mxu0
      %v2635 = vadd.f32 0.0, %v2634
      %v2636 = vpop.f32.mrb[0].mxu0
      %v2637 = vadd.f32 0.0, %v2636
      %2638 = vdwg.mxu0
      %2639 = vmatprep.subr.mxu0 %v764
      %2640 = vmatpush1.msra.mxu0 %v763
      %2641 = vmatprep.subr.mxu0 %v772
      %2642 = vmatpush1.msra.mxu0 %v771
      %2643 = vmatprep.subr.mxu0 %v780
      %2644 = vmatpush1.msra.mxu0 %v779
      %2645 = vmatprep.subr.mxu0 %v822
      %2646 = vmatpush1.msra.mxu0 %v819
      %2647 = vmatprep.subr.mxu0 0.0
      %2648 = vmatpush1.msra.mxu0 0.0
      %2649 = vmatprep.subr.mxu0 0.0
      %2650 = vmatpush1.msra.mxu0 0.0
      %2651 = vmatprep.subr.mxu0 0.0
      %2652 = vmatpush1.msra.mxu0 0.0
      %2653 = vmatprep.subr.mxu0 0.0
      %2654 = vmatpush1.msra.mxu0 0.0
      %2655 = vmatprep.subr.mxu0 0.0
      %2656 = vmatpush1.msra.mxu0 0.0
      %2657 = vmatprep.subr.mxu0 0.0
      %2658 = vmatpush1.msra.mxu0 0.0
      %2659 = vmatprep.subr.mxu0 0.0
      %2660 = vmatpush1.msra.mxu0 0.0
      %2661 = vmatprep.subr.mxu0 0.0
      %2662 = vmatpush1.msra.mxu0 0.0
      %2663 = vmatprep.subr.mxu0 0.0
      %2664 = vmatpush1.msra.mxu0 0.0
      %2665 = vmatprep.subr.mxu0 0.0
      %2666 = vmatpush1.msra.mxu0 0.0
      %2667 = vmatprep.subr.mxu0 0.0
      %2668 = vmatpush1.msra.mxu0 0.0
      %2669 = vmatprep.subr.mxu0 0.0
      %2670 = vmatpush1.msra.mxu0 0.0
      %2671 = vmatprep.subr.mxu0 0.0
      %2672 = vmatpush1.msra.mxu0 0.0
      %2673 = vmatprep.subr.mxu0 0.0
      %2674 = vmatpush1.msra.mxu0 0.0
      %2675 = vmatprep.subr.mxu0 0.0
      %2676 = vmatpush1.msra.mxu0 0.0
      %2677 = vmatprep.subr.mxu0 0.0
      %2678 = vmatpush1.msra.mxu0 0.0
      %2679 = vmatprep.subr.mxu0 0.0
      %2680 = vmatpush1.msra.mxu0 0.0
      %2681 = vmatprep.subr.mxu0 0.0
      %2682 = vmatpush1.msra.mxu0 0.0
      %2683 = vmatprep.subr.mxu0 0.0
      %2684 = vmatpush1.msra.mxu0 0.0
      %2685 = vmatprep.subr.mxu0 0.0
      %2686 = vmatpush1.msra.mxu0 0.0
      %2687 = vmatprep.subr.mxu0 0.0
      %2688 = vmatpush1.msra.mxu0 0.0
      %2689 = vmatprep.subr.mxu0 0.0
      %2690 = vmatpush1.msra.mxu0 0.0
      %2691 = vmatprep.subr.mxu0 0.0
      %2692 = vmatpush1.msra.mxu0 0.0
      %2693 = vmatprep.subr.mxu0 0.0
      %2694 = vmatpush1.msra.mxu0 0.0
      %2695 = vmatprep.subr.mxu0 0.0
      %2696 = vmatpush1.msra.mxu0 0.0
      %2697 = vmatprep.subr.mxu0 0.0
      %2698 = vmatpush1.msra.mxu0 0.0
      %2699 = vmatprep.subr.mxu0 0.0
      %2700 = vmatpush1.msra.mxu0 0.0
      %2701 = vmatprep.subr.mxu0 0.0
      %2702 = vmatpush1.msra.mxu0 0.0
      %2703 = vmatprep.mubr.f32.mxu0 0.0
      %2704 = vmatmul.mubr.f32.gmra.mrb[0].mxu0 %v2465
      %v2705 = vpop.f32.mrb[0].mxu0
      %v2706 = vadd.f32 0.0, %v2705
      %v2707 = vpop.f32.mrb[0].mxu0
      %v2708 = vadd.f32 0.0, %v2707
      %2709 = vmatprep.mubr.f32.mxu0 0.0
      %2710 = vmatmul.mubr.f32.gmra.mrb[0].mxu0 %v2468
      %v2711 = vpop.f32.mrb[0].mxu0
      %v2712 = vadd.f32 0.0, %v2711
      %v2713 = vpop.f32.mrb[0].mxu0
      %v2714 = vadd.f32 0.0, %v2713
      %2715 = vmatprep.mubr.f32.mxu0 0.0
      %2716 = vmatmul.mubr.f32.gmra.mrb[0].mxu0 %v2471
      %v2717 = vpop.f32.mrb[0].mxu0
      %v2718 = vadd.f32 0.0, %v2717
      %v2719 = vpop.f32.mrb[0].mxu0
      %v2720 = vadd.f32 0.0, %v2719
      %2721 = vdwg.mxu0
      %2722 = vmatprep.subr.mxu0 %v766
      %2723 = vmatpush1.msra.mxu0 %v765
      %2724 = vmatprep.subr.mxu0 %v774
      %2725 = vmatpush1.msra.mxu0 %v773
      %2726 = vmatprep.subr.mxu0 %v782
      %2727 = vmatpush1.msra.mxu0 %v781
      %2728 = vmatprep.subr.mxu0 %v828
      %2729 = vmatpush1.msra.mxu0 %v825
      %2730 = vmatprep.subr.mxu0 0.0
      %2731 = vmatpush1.msra.mxu0 0.0
      %2732 = vmatprep.subr.mxu0 0.0
      %2733 = vmatpush1.msra.mxu0 0.0
      %2734 = vmatprep.subr.mxu0 0.0
      %2735 = vmatpush1.msra.mxu0 0.0
      %2736 = vmatprep.subr.mxu0 0.0
      %2737 = vmatpush1.msra.mxu0 0.0
      %2738 = vmatprep.subr.mxu0 0.0
      %2739 = vmatpush1.msra.mxu0 0.0
      %2740 = vmatprep.subr.mxu0 0.0
      %2741 = vmatpush1.msra.mxu0 0.0
      %2742 = vmatprep.subr.mxu0 0.0
      %2743 = vmatpush1.msra.mxu0 0.0
      %2744 = vmatprep.subr.mxu0 0.0
      %2745 = vmatpush1.msra.mxu0 0.0
      %2746 = vmatprep.subr.mxu0 0.0
      %2747 = vmatpush1.msra.mxu0 0.0
      %2748 = vmatprep.subr.mxu0 0.0
      %2749 = vmatpush1.msra.mxu0 0.0
      %2750 = vmatprep.subr.mxu0 0.0
      %2751 = vmatpush1.msra.mxu0 0.0
      %2752 = vmatprep.subr.mxu0 0.0
      %2753 = vmatpush1.msra.mxu0 0.0
      %2754 = vmatprep.subr.mxu0 0.0
      %2755 = vmatpush1.msra.mxu0 0.0
      %2756 = vmatprep.subr.mxu0 0.0
      %2757 = vmatpush1.msra.mxu0 0.0
      %2758 = vmatprep.subr.mxu0 0.0
      %2759 = vmatpush1.msra.mxu0 0.0
      %2760 = vmatprep.subr.mxu0 0.0
      %2761 = vmatpush1.msra.mxu0 0.0
      %2762 = vmatprep.subr.mxu0 0.0
      %2763 = vmatpush1.msra.mxu0 0.0
      %2764 = vmatprep.subr.mxu0 0.0
      %2765 = vmatpush1.msra.mxu0 0.0
      %2766 = vmatprep.subr.mxu0 0.0
      %2767 = vmatpush1.msra.mxu0 0.0
      %2768 = vmatprep.subr.mxu0 0.0
      %2769 = vmatpush1.msra.mxu0 0.0
      %2770 = vmatprep.subr.mxu0 0.0
      %2771 = vmatpush1.msra.mxu0 0.0
      %2772 = vmatprep.subr.mxu0 0.0
      %2773 = vmatpush1.msra.mxu0 0.0
      %2774 = vmatprep.subr.mxu0 0.0
      %2775 = vmatpush1.msra.mxu0 0.0
      %2776 = vmatprep.subr.mxu0 0.0
      %2777 = vmatpush1.msra.mxu0 0.0
      %2778 = vmatprep.subr.mxu0 0.0
      %2779 = vmatpush1.msra.mxu0 0.0
      %2780 = vmatprep.subr.mxu0 0.0
      %2781 = vmatpush1.msra.mxu0 0.0
      %2782 = vmatprep.subr.mxu0 0.0
      %2783 = vmatpush1.msra.mxu0 0.0
      %2784 = vmatprep.subr.mxu0 0.0
      %2785 = vmatpush1.msra.mxu0 0.0
      %2786 = vmatprep.mubr.f32.mxu0 0.0
      %2787 = vmatmul.mubr.f32.gmra.mrb[0].mxu0 %v2465
      %v2788 = vpop.f32.mrb[0].mxu0
      %v2789 = vadd.f32 0.0, %v2788
      %v2790 = vpop.f32.mrb[0].mxu0
      %v2791 = vadd.f32 0.0, %v2790
      %2792 = vmatprep.mubr.f32.mxu0 0.0
      %2793 = vmatmul.mubr.f32.gmra.mrb[0].mxu0 %v2468
      %v2794 = vpop.f32.mrb[0].mxu0
      %v2795 = vadd.f32 0.0, %v2794
      %v2796 = vpop.f32.mrb[0].mxu0
      %v2797 = vadd.f32 0.0, %v2796
      %2798 = vmatprep.mubr.f32.mxu0 0.0
      %2799 = vmatmul.mubr.f32.gmra.mrb[0].mxu0 %v2471
      %v2800 = vpop.f32.mrb[0].mxu0
      %v2801 = vadd.f32 0.0, %v2800
      %v2802 = vpop.f32.mrb[0].mxu0
      %v2803 = vadd.f32 0.0, %v2802
      %2804 = vdwg.mxu0
      %v2805 = vadd.f32 %v2436, %v2542
      %v2806 = vadd.f32 %v2437, %v2623
      %v2807 = vadd.f32 %v2438, %v2625
      %v2808 = vadd.f32 %v2439, %v2706
      %v2809 = vadd.f32 %v2440, %v2708
      %v2810 = vadd.f32 %v2441, %v2789
      %v2811 = vadd.f32 %v2442, %v2791
      %v2812 = vadd.f32 %v2443, %v2540
      %v2813 = vadd.f32 %v2444, %v2548
      %v2814 = vadd.f32 %v2445, %v2629
      %v2815 = vadd.f32 %v2446, %v2631
      %v2816 = vadd.f32 %v2447, %v2712
      %v2817 = vadd.f32 %v2448, %v2714
      %v2818 = vadd.f32 %v2449, %v2795
      %v2819 = vadd.f32 %v2450, %v2797
      %v2820 = vadd.f32 %v2451, %v2546
      %v2821 = vadd.f32 %v2452, %v2554
      %v2822 = vadd.f32 %v2453, %v2635
      %v2823 = vadd.f32 %v2454, %v2637
      %v2824 = vadd.f32 %v2455, %v2718
      %v2825 = vadd.f32 %v2456, %v2720
      %v2826 = vadd.f32 %v2457, %v2801
      %v2827 = vadd.f32 %v2458, %v2803
      %v2828 = vadd.f32 %v2459, %v2552
      %s2829 = scalar_lea.vmem %s1, 120
      %v2830 = vld [vmem:[%s2829] sm:$0xff]
      %v2831 = vld [vmem:[%s2829 + $0x8] sm:$0xff]
      %v2832 = vld [vmem:[%s2829 + $0x10] sm:$0xf]
      %v2834 = vsel %vm795, %v2830, 0
      %v2837 = vsel %vm795, %v2831, 0
      %v2840 = vsel %vm795, %v2832, 0
      %2842 = vmatprep.subr.mxu0 %v760
      %2843 = vmatpush1.msra.mxu0 %v759
      %2844 = vmatprep.subr.mxu0 %v768
      %2845 = vmatpush1.msra.mxu0 %v767
      %2846 = vmatprep.subr.mxu0 %v776
      %2847 = vmatpush1.msra.mxu0 %v775
      %2848 = vmatprep.subr.mxu0 %v810
      %2849 = vmatpush1.msra.mxu0 %v807
      %2850 = vmatprep.subr.mxu0 0.0
      %2851 = vmatpush1.msra.mxu0 0.0
      %2852 = vmatprep.subr.mxu0 0.0
      %2853 = vmatpush1.msra.mxu0 0.0
      %2854 = vmatprep.subr.mxu0 0.0
      %2855 = vmatpush1.msra.mxu0 0.0
      %2856 = vmatprep.subr.mxu0 0.0
      %2857 = vmatpush1.msra.mxu0 0.0
      %2858 = vmatprep.subr.mxu0 0.0
      %2859 = vmatpush1.msra.mxu0 0.0
      %2860 = vmatprep.subr.mxu0 0.0
      %2861 = vmatpush1.msra.mxu0 0.0
      %2862 = vmatprep.subr.mxu0 0.0
      %2863 = vmatpush1.msra.mxu0 0.0
      %2864 = vmatprep.subr.mxu0 0.0
      %2865 = vmatpush1.msra.mxu0 0.0
      %2866 = vmatprep.subr.mxu0 0.0
      %2867 = vmatpush1.msra.mxu0 0.0
      %2868 = vmatprep.subr.mxu0 0.0
      %2869 = vmatpush1.msra.mxu0 0.0
      %2870 = vmatprep.subr.mxu0 0.0
      %2871 = vmatpush1.msra.mxu0 0.0
      %2872 = vmatprep.subr.mxu0 0.0
      %2873 = vmatpush1.msra.mxu0 0.0
      %2874 = vmatprep.subr.mxu0 0.0
      %2875 = vmatpush1.msra.mxu0 0.0
      %2876 = vmatprep.subr.mxu0 0.0
      %2877 = vmatpush1.msra.mxu0 0.0
      %2878 = vmatprep.subr.mxu0 0.0
      %2879 = vmatpush1.msra.mxu0 0.0
      %2880 = vmatprep.subr.mxu0 0.0
      %2881 = vmatpush1.msra.mxu0 0.0
      %2882 = vmatprep.subr.mxu0 0.0
      %2883 = vmatpush1.msra.mxu0 0.0
      %2884 = vmatprep.subr.mxu0 0.0
      %2885 = vmatpush1.msra.mxu0 0.0
      %2886 = vmatprep.subr.mxu0 0.0
      %2887 = vmatpush1.msra.mxu0 0.0
      %2888 = vmatprep.subr.mxu0 0.0
      %2889 = vmatpush1.msra.mxu0 0.0
      %2890 = vmatprep.subr.mxu0 0.0
      %2891 = vmatpush1.msra.mxu0 0.0
      %2892 = vmatprep.subr.mxu0 0.0
      %2893 = vmatpush1.msra.mxu0 0.0
      %2894 = vmatprep.subr.mxu0 0.0
      %2895 = vmatpush1.msra.mxu0 0.0
      %2896 = vmatprep.subr.mxu0 0.0
      %2897 = vmatpush1.msra.mxu0 0.0
      %2898 = vmatprep.subr.mxu0 0.0
      %2899 = vmatpush1.msra.mxu0 0.0
      %2900 = vmatprep.subr.mxu0 0.0
      %2901 = vmatpush1.msra.mxu0 0.0
      %2902 = vmatprep.subr.mxu0 0.0
      %2903 = vmatpush1.msra.mxu0 0.0
      %2904 = vmatprep.subr.mxu0 0.0
      %2905 = vmatpush1.msra.mxu0 0.0
      %2906 = vmatprep.mubr.f32.mxu0 0.0
      %2907 = vmatmul.mubr.f32.gmra.mrb[0].mxu0 %v2834
      %v2908 = vpop.f32.mrb[0].mxu0
      %v2909 = vadd.f32 0.0, %v2908
      %v2910 = vpop.f32.mrb[0].mxu0
      %v2911 = vadd.f32 0.0, %v2910
      %2912 = vmatprep.mubr.f32.mxu0 0.0
      %2913 = vmatmul.mubr.f32.gmra.mrb[0].mxu0 %v2837
      %v2914 = vpop.f32.mrb[0].mxu0
      %v2915 = vadd.f32 0.0, %v2914
      %v2916 = vpop.f32.mrb[0].mxu0
      %v2917 = vadd.f32 0.0, %v2916
      %2918 = vmatprep.mubr.f32.mxu0 0.0
      %2919 = vmatmul.mubr.f32.gmra.mrb[0].mxu0 %v2840
      %v2920 = vpop.f32.mrb[0].mxu0
      %v2921 = vadd.f32 0.0, %v2920
      %v2922 = vpop.f32.mrb[0].mxu0
      %v2923 = vadd.f32 0.0, %v2922
      %2924 = vdwg.mxu0
      %2925 = vmatprep.subr.mxu0 %v762
      %2926 = vmatpush1.msra.mxu0 %v761
      %2927 = vmatprep.subr.mxu0 %v770
      %2928 = vmatpush1.msra.mxu0 %v769
      %2929 = vmatprep.subr.mxu0 %v778
      %2930 = vmatpush1.msra.mxu0 %v777
      %2931 = vmatprep.subr.mxu0 %v816
      %2932 = vmatpush1.msra.mxu0 %v813
      %2933 = vmatprep.subr.mxu0 0.0
      %2934 = vmatpush1.msra.mxu0 0.0
      %2935 = vmatprep.subr.mxu0 0.0
      %2936 = vmatpush1.msra.mxu0 0.0
      %2937 = vmatprep.subr.mxu0 0.0
      %2938 = vmatpush1.msra.mxu0 0.0
      %2939 = vmatprep.subr.mxu0 0.0
      %2940 = vmatpush1.msra.mxu0 0.0
      %2941 = vmatprep.subr.mxu0 0.0
      %2942 = vmatpush1.msra.mxu0 0.0
      %2943 = vmatprep.subr.mxu0 0.0
      %2944 = vmatpush1.msra.mxu0 0.0
      %2945 = vmatprep.subr.mxu0 0.0
      %2946 = vmatpush1.msra.mxu0 0.0
      %2947 = vmatprep.subr.mxu0 0.0
      %2948 = vmatpush1.msra.mxu0 0.0
      %2949 = vmatprep.subr.mxu0 0.0
      %2950 = vmatpush1.msra.mxu0 0.0
      %2951 = vmatprep.subr.mxu0 0.0
      %2952 = vmatpush1.msra.mxu0 0.0
      %2953 = vmatprep.subr.mxu0 0.0
      %2954 = vmatpush1.msra.mxu0 0.0
      %2955 = vmatprep.subr.mxu0 0.0
      %2956 = vmatpush1.msra.mxu0 0.0
      %2957 = vmatprep.subr.mxu0 0.0
      %2958 = vmatpush1.msra.mxu0 0.0
      %2959 = vmatprep.subr.mxu0 0.0
      %2960 = vmatpush1.msra.mxu0 0.0
      %2961 = vmatprep.subr.mxu0 0.0
      %2962 = vmatpush1.msra.mxu0 0.0
      %2963 = vmatprep.subr.mxu0 0.0
      %2964 = vmatpush1.msra.mxu0 0.0
      %2965 = vmatprep.subr.mxu0 0.0
      %2966 = vmatpush1.msra.mxu0 0.0
      %2967 = vmatprep.subr.mxu0 0.0
      %2968 = vmatpush1.msra.mxu0 0.0
      %2969 = vmatprep.subr.mxu0 0.0
      %2970 = vmatpush1.msra.mxu0 0.0
      %2971 = vmatprep.subr.mxu0 0.0
      %2972 = vmatpush1.msra.mxu0 0.0
      %2973 = vmatprep.subr.mxu0 0.0
      %2974 = vmatpush1.msra.mxu0 0.0
      %2975 = vmatprep.subr.mxu0 0.0
      %2976 = vmatpush1.msra.mxu0 0.0
      %2977 = vmatprep.subr.mxu0 0.0
      %2978 = vmatpush1.msra.mxu0 0.0
      %2979 = vmatprep.subr.mxu0 0.0
      %2980 = vmatpush1.msra.mxu0 0.0
      %2981 = vmatprep.subr.mxu0 0.0
      %2982 = vmatpush1.msra.mxu0 0.0
      %2983 = vmatprep.subr.mxu0 0.0
      %2984 = vmatpush1.msra.mxu0 0.0
      %2985 = vmatprep.subr.mxu0 0.0
      %2986 = vmatpush1.msra.mxu0 0.0
      %2987 = vmatprep.subr.mxu0 0.0
      %2988 = vmatpush1.msra.mxu0 0.0
      %2989 = vmatprep.mubr.f32.mxu0 0.0
      %2990 = vmatmul.mubr.f32.gmra.mrb[0].mxu0 %v2834
      %v2991 = vpop.f32.mrb[0].mxu0
      %v2992 = vadd.f32 0.0, %v2991
      %v2993 = vpop.f32.mrb[0].mxu0
      %v2994 = vadd.f32 0.0, %v2993
      %2995 = vmatprep.mubr.f32.mxu0 0.0
      %2996 = vmatmul.mubr.f32.gmra.mrb[0].mxu0 %v2837
      %v2997 = vpop.f32.mrb[0].mxu0
      %v2998 = vadd.f32 0.0, %v2997
      %v2999 = vpop.f32.mrb[0].mxu0
      %v3000 = vadd.f32 0.0, %v2999
      %3001 = vmatprep.mubr.f32.mxu0 0.0
      %3002 = vmatmul.mubr.f32.gmra.mrb[0].mxu0 %v2840
      %v3003 = vpop.f32.mrb[0].mxu0
      %v3004 = vadd.f32 0.0, %v3003
      %v3005 = vpop.f32.mrb[0].mxu0
      %v3006 = vadd.f32 0.0, %v3005
      %3007 = vdwg.mxu0
      %3008 = vmatprep.subr.mxu0 %v764
      %3009 = vmatpush1.msra.mxu0 %v763
      %3010 = vmatprep.subr.mxu0 %v772
      %3011 = vmatpush1.msra.mxu0 %v771
      %3012 = vmatprep.subr.mxu0 %v780
      %3013 = vmatpush1.msra.mxu0 %v779
      %3014 = vmatprep.subr.mxu0 %v822
      %3015 = vmatpush1.msra.mxu0 %v819
      %3016 = vmatprep.subr.mxu0 0.0
      %3017 = vmatpush1.msra.mxu0 0.0
      %3018 = vmatprep.subr.mxu0 0.0
      %3019 = vmatpush1.msra.mxu0 0.0
      %3020 = vmatprep.subr.mxu0 0.0
      %3021 = vmatpush1.msra.mxu0 0.0
      %3022 = vmatprep.subr.mxu0 0.0
      %3023 = vmatpush1.msra.mxu0 0.0
      %3024 = vmatprep.subr.mxu0 0.0
      %3025 = vmatpush1.msra.mxu0 0.0
      %3026 = vmatprep.subr.mxu0 0.0
      %3027 = vmatpush1.msra.mxu0 0.0
      %3028 = vmatprep.subr.mxu0 0.0
      %3029 = vmatpush1.msra.mxu0 0.0
      %3030 = vmatprep.subr.mxu0 0.0
      %3031 = vmatpush1.msra.mxu0 0.0
      %3032 = vmatprep.subr.mxu0 0.0
      %3033 = vmatpush1.msra.mxu0 0.0
      %3034 = vmatprep.subr.mxu0 0.0
      %3035 = vmatpush1.msra.mxu0 0.0
      %3036 = vmatprep.subr.mxu0 0.0
      %3037 = vmatpush1.msra.mxu0 0.0
      %3038 = vmatprep.subr.mxu0 0.0
      %3039 = vmatpush1.msra.mxu0 0.0
      %3040 = vmatprep.subr.mxu0 0.0
      %3041 = vmatpush1.msra.mxu0 0.0
      %3042 = vmatprep.subr.mxu0 0.0
      %3043 = vmatpush1.msra.mxu0 0.0
      %3044 = vmatprep.subr.mxu0 0.0
      %3045 = vmatpush1.msra.mxu0 0.0
      %3046 = vmatprep.subr.mxu0 0.0
      %3047 = vmatpush1.msra.mxu0 0.0
      %3048 = vmatprep.subr.mxu0 0.0
      %3049 = vmatpush1.msra.mxu0 0.0
      %3050 = vmatprep.subr.mxu0 0.0
      %3051 = vmatpush1.msra.mxu0 0.0
      %3052 = vmatprep.subr.mxu0 0.0
      %3053 = vmatpush1.msra.mxu0 0.0
      %3054 = vmatprep.subr.mxu0 0.0
      %3055 = vmatpush1.msra.mxu0 0.0
      %3056 = vmatprep.subr.mxu0 0.0
      %3057 = vmatpush1.msra.mxu0 0.0
      %3058 = vmatprep.subr.mxu0 0.0
      %3059 = vmatpush1.msra.mxu0 0.0
      %3060 = vmatprep.subr.mxu0 0.0
      %3061 = vmatpush1.msra.mxu0 0.0
      %3062 = vmatprep.subr.mxu0 0.0
      %3063 = vmatpush1.msra.mxu0 0.0
      %3064 = vmatprep.subr.mxu0 0.0
      %3065 = vmatpush1.msra.mxu0 0.0
      %3066 = vmatprep.subr.mxu0 0.0
      %3067 = vmatpush1.msra.mxu0 0.0
      %3068 = vmatprep.subr.mxu0 0.0
      %3069 = vmatpush1.msra.mxu0 0.0
      %3070 = vmatprep.subr.mxu0 0.0
      %3071 = vmatpush1.msra.mxu0 0.0
      %3072 = vmatprep.mubr.f32.mxu0 0.0
      %3073 = vmatmul.mubr.f32.gmra.mrb[0].mxu0 %v2834
      %v3074 = vpop.f32.mrb[0].mxu0
      %v3075 = vadd.f32 0.0, %v3074
      %v3076 = vpop.f32.mrb[0].mxu0
      %v3077 = vadd.f32 0.0, %v3076
      %3078 = vmatprep.mubr.f32.mxu0 0.0
      %3079 = vmatmul.mubr.f32.gmra.mrb[0].mxu0 %v2837
      %v3080 = vpop.f32.mrb[0].mxu0
      %v3081 = vadd.f32 0.0, %v3080
      %v3082 = vpop.f32.mrb[0].mxu0
      %v3083 = vadd.f32 0.0, %v3082
      %3084 = vmatprep.mubr.f32.mxu0 0.0
      %3085 = vmatmul.mubr.f32.gmra.mrb[0].mxu0 %v2840
      %v3086 = vpop.f32.mrb[0].mxu0
      %v3087 = vadd.f32 0.0, %v3086
      %v3088 = vpop.f32.mrb[0].mxu0
      %v3089 = vadd.f32 0.0, %v3088
      %3090 = vdwg.mxu0
      %3091 = vmatprep.subr.mxu0 %v766
      %3092 = vmatpush1.msra.mxu0 %v765
      %3093 = vmatprep.subr.mxu0 %v774
      %3094 = vmatpush1.msra.mxu0 %v773
      %3095 = vmatprep.subr.mxu0 %v782
      %3096 = vmatpush1.msra.mxu0 %v781
      %3097 = vmatprep.subr.mxu0 %v828
      %3098 = vmatpush1.msra.mxu0 %v825
      %3099 = vmatprep.subr.mxu0 0.0
      %3100 = vmatpush1.msra.mxu0 0.0
      %3101 = vmatprep.subr.mxu0 0.0
      %3102 = vmatpush1.msra.mxu0 0.0
      %3103 = vmatprep.subr.mxu0 0.0
      %3104 = vmatpush1.msra.mxu0 0.0
      %3105 = vmatprep.subr.mxu0 0.0
      %3106 = vmatpush1.msra.mxu0 0.0
      %3107 = vmatprep.subr.mxu0 0.0
      %3108 = vmatpush1.msra.mxu0 0.0
      %3109 = vmatprep.subr.mxu0 0.0
      %3110 = vmatpush1.msra.mxu0 0.0
      %3111 = vmatprep.subr.mxu0 0.0
      %3112 = vmatpush1.msra.mxu0 0.0
      %3113 = vmatprep.subr.mxu0 0.0
      %3114 = vmatpush1.msra.mxu0 0.0
      %3115 = vmatprep.subr.mxu0 0.0
      %3116 = vmatpush1.msra.mxu0 0.0
      %3117 = vmatprep.subr.mxu0 0.0
      %3118 = vmatpush1.msra.mxu0 0.0
      %3119 = vmatprep.subr.mxu0 0.0
      %3120 = vmatpush1.msra.mxu0 0.0
      %3121 = vmatprep.subr.mxu0 0.0
      %3122 = vmatpush1.msra.mxu0 0.0
      %3123 = vmatprep.subr.mxu0 0.0
      %3124 = vmatpush1.msra.mxu0 0.0
      %3125 = vmatprep.subr.mxu0 0.0
      %3126 = vmatpush1.msra.mxu0 0.0
      %3127 = vmatprep.subr.mxu0 0.0
      %3128 = vmatpush1.msra.mxu0 0.0
      %3129 = vmatprep.subr.mxu0 0.0
      %3130 = vmatpush1.msra.mxu0 0.0
      %3131 = vmatprep.subr.mxu0 0.0
      %3132 = vmatpush1.msra.mxu0 0.0
      %3133 = vmatprep.subr.mxu0 0.0
      %3134 = vmatpush1.msra.mxu0 0.0
      %3135 = vmatprep.subr.mxu0 0.0
      %3136 = vmatpush1.msra.mxu0 0.0
      %3137 = vmatprep.subr.mxu0 0.0
      %3138 = vmatpush1.msra.mxu0 0.0
      %3139 = vmatprep.subr.mxu0 0.0
      %3140 = vmatpush1.msra.mxu0 0.0
      %3141 = vmatprep.subr.mxu0 0.0
      %3142 = vmatpush1.msra.mxu0 0.0
      %3143 = vmatprep.subr.mxu0 0.0
      %3144 = vmatpush1.msra.mxu0 0.0
      %3145 = vmatprep.subr.mxu0 0.0
      %3146 = vmatpush1.msra.mxu0 0.0
      %3147 = vmatprep.subr.mxu0 0.0
      %3148 = vmatpush1.msra.mxu0 0.0
      %3149 = vmatprep.subr.mxu0 0.0
      %3150 = vmatpush1.msra.mxu0 0.0
      %3151 = vmatprep.subr.mxu0 0.0
      %3152 = vmatpush1.msra.mxu0 0.0
      %3153 = vmatprep.subr.mxu0 0.0
      %3154 = vmatpush1.msra.mxu0 0.0
      %3155 = vmatprep.mubr.f32.mxu0 0.0
      %3156 = vmatmul.mubr.f32.gmra.mrb[0].mxu0 %v2834
      %v3157 = vpop.f32.mrb[0].mxu0
      %v3158 = vadd.f32 0.0, %v3157
      %v3159 = vpop.f32.mrb[0].mxu0
      %v3160 = vadd.f32 0.0, %v3159
      %3161 = vmatprep.mubr.f32.mxu0 0.0
      %3162 = vmatmul.mubr.f32.gmra.mrb[0].mxu0 %v2837
      %v3163 = vpop.f32.mrb[0].mxu0
      %v3164 = vadd.f32 0.0, %v3163
      %v3165 = vpop.f32.mrb[0].mxu0
      %v3166 = vadd.f32 0.0, %v3165
      %3167 = vmatprep.mubr.f32.mxu0 0.0
      %3168 = vmatmul.mubr.f32.gmra.mrb[0].mxu0 %v2840
      %v3169 = vpop.f32.mrb[0].mxu0
      %v3170 = vadd.f32 0.0, %v3169
      %v3171 = vpop.f32.mrb[0].mxu0
      %v3172 = vadd.f32 0.0, %v3171
      %3173 = vdwg.mxu0
      %3174 = vrot.lane.b32.xlu0 %v2909, 96
      %v3175 = vpop.permute.xlu0 %3174
      %3176 = vrot.lane.b32.xlu0 %v2915, 96
      %v3177 = vpop.permute.xlu0 %3176
      %3178 = vrot.lane.b32.xlu0 %v2921, 96
      %v3179 = vpop.permute.xlu0 %3178
      %3180 = vrot.lane.b32.xlu0 %v2911, 96
      %v3181 = vpop.permute.xlu0 %3180
      %3182 = vrot.lane.b32.xlu0 %v2917, 96
      %v3183 = vpop.permute.xlu0 %3182
      %3184 = vrot.lane.b32.xlu0 %v2923, 96
      %v3185 = vpop.permute.xlu0 %3184
      %3186 = vrot.lane.b32.xlu0 %v2992, 96
      %v3187 = vpop.permute.xlu0 %3186
      %3188 = vrot.lane.b32.xlu0 %v2998, 96
      %v3189 = vpop.permute.xlu0 %3188
      %3190 = vrot.lane.b32.xlu0 %v3004, 96
      %v3191 = vpop.permute.xlu0 %3190
      %3192 = vrot.lane.b32.xlu0 %v2994, 96
      %v3193 = vpop.permute.xlu0 %3192
      %3194 = vrot.lane.b32.xlu0 %v3000, 96
      %v3195 = vpop.permute.xlu0 %3194
      %3196 = vrot.lane.b32.xlu0 %v3006, 96
      %v3197 = vpop.permute.xlu0 %3196
      %3198 = vrot.lane.b32.xlu0 %v3075, 96
      %v3199 = vpop.permute.xlu0 %3198
      %3200 = vrot.lane.b32.xlu0 %v3081, 96
      %v3201 = vpop.permute.xlu0 %3200
      %3202 = vrot.lane.b32.xlu0 %v3087, 96
      %v3203 = vpop.permute.xlu0 %3202
      %3204 = vrot.lane.b32.xlu0 %v3077, 96
      %v3205 = vpop.permute.xlu0 %3204
      %3206 = vrot.lane.b32.xlu0 %v3083, 96
      %v3207 = vpop.permute.xlu0 %3206
      %3208 = vrot.lane.b32.xlu0 %v3089, 96
      %v3209 = vpop.permute.xlu0 %3208
      %3210 = vrot.lane.b32.xlu0 %v3158, 96
      %v3211 = vpop.permute.xlu0 %3210
      %3212 = vrot.lane.b32.xlu0 %v3164, 96
      %v3213 = vpop.permute.xlu0 %3212
      %3214 = vrot.lane.b32.xlu0 %v3170, 96
      %v3215 = vpop.permute.xlu0 %3214
      %3216 = vrot.lane.b32.xlu0 %v3160, 96
      %v3217 = vpop.permute.xlu0 %3216
      %3218 = vrot.lane.b32.xlu0 %v3166, 96
      %v3219 = vpop.permute.xlu0 %3218
      %3220 = vrot.lane.b32.xlu0 %v3172, 96
      %v3221 = vpop.permute.xlu0 %3220
      %v3222 = vsel %vm1210, %v3211, %v3217
      %v3223 = vsel %vm1210, %v3213, %v3219
      %v3224 = vsel %vm1210, %v3215, %v3221
      %v3225 = vsel %vm1210, %v3205, %v3211
      %v3226 = vsel %vm1210, %v3207, %v3213
      %v3227 = vsel %vm1210, %v3209, %v3215
      %v3228 = vsel %vm1210, %v3199, %v3205
      %v3229 = vsel %vm1210, %v3201, %v3207
      %v3230 = vsel %vm1210, %v3203, %v3209
      %v3231 = vsel %vm1210, %v3193, %v3199
      %v3232 = vsel %vm1210, %v3195, %v3201
      %v3233 = vsel %vm1210, %v3197, %v3203
      %v3234 = vsel %vm1210, %v3187, %v3193
      %v3235 = vsel %vm1210, %v3189, %v3195
      %v3236 = vsel %vm1210, %v3191, %v3197
      %v3237 = vsel %vm1210, %v3181, %v3187
      %v3238 = vsel %vm1210, %v3183, %v3189
      %v3239 = vsel %vm1210, %v3185, %v3191
      %v3240 = vsel %vm1210, %v3175, %v3181
      %v3241 = vsel %vm1210, %v3177, %v3183
      %v3242 = vsel %vm1210, %v3179, %v3185
      %v3243 = vsel %vm1210, %v3217, %v3175
      %v3244 = vsel %vm1210, %v3219, %v3177
      %v3245 = vsel %vm1210, %v3221, %v3179
      %v3246 = vadd.f32 %v2805, %v3237
      %v3247 = vadd.f32 %v2806, %v3234
      %v3248 = vadd.f32 %v2807, %v3231
      %v3249 = vadd.f32 %v2808, %v3228
      %v3250 = vadd.f32 %v2809, %v3225
      %v3251 = vadd.f32 %v2810, %v3222
      %v3252 = vadd.f32 %v2811, %v3243
      %v3253 = vadd.f32 %v2812, %v3240
      %v3254 = vadd.f32 %v2813, %v3238
      %v3255 = vadd.f32 %v2814, %v3235
      %v3256 = vadd.f32 %v2815, %v3232
      %v3257 = vadd.f32 %v2816, %v3229
      %v3258 = vadd.f32 %v2817, %v3226
      %v3259 = vadd.f32 %v2818, %v3223
      %v3260 = vadd.f32 %v2819, %v3244
      %v3261 = vadd.f32 %v2820, %v3241
      %v3262 = vadd.f32 %v2821, %v3239
      %v3263 = vadd.f32 %v2822, %v3236
      %v3264 = vadd.f32 %v2823, %v3233
      %v3265 = vadd.f32 %v2824, %v3230
      %v3266 = vadd.f32 %v2825, %v3227
      %v3267 = vadd.f32 %v2826, %v3224
      %v3268 = vadd.f32 %v2827, %v3245
      %v3269 = vadd.f32 %v2828, %v3242
      %s3270 = scalar_lea.vmem %s1, 144
      %v3271 = vld [vmem:[%s3270] sm:$0xff]
      %v3272 = vld [vmem:[%s3270 + $0x8] sm:$0xff]
      %v3273 = vld [vmem:[%s3270 + $0x10] sm:$0xf]
      %v3275 = vsel %vm795, %v3271, 0
      %v3278 = vsel %vm795, %v3272, 0
      %v3281 = vsel %vm795, %v3273, 0
      %3283 = vmatprep.subr.mxu0 %v760
      %3284 = vmatpush1.msra.mxu0 %v759
      %3285 = vmatprep.subr.mxu0 %v768
      %3286 = vmatpush1.msra.mxu0 %v767
      %3287 = vmatprep.subr.mxu0 %v776
      %3288 = vmatpush1.msra.mxu0 %v775
      %3289 = vmatprep.subr.mxu0 %v810
      %3290 = vmatpush1.msra.mxu0 %v807
      %3291 = vmatprep.subr.mxu0 0.0
      %3292 = vmatpush1.msra.mxu0 0.0
      %3293 = vmatprep.subr.mxu0 0.0
      %3294 = vmatpush1.msra.mxu0 0.0
      %3295 = vmatprep.subr.mxu0 0.0
      %3296 = vmatpush1.msra.mxu0 0.0
      %3297 = vmatprep.subr.mxu0 0.0
      %3298 = vmatpush1.msra.mxu0 0.0
      %3299 = vmatprep.subr.mxu0 0.0
      %3300 = vmatpush1.msra.mxu0 0.0
      %3301 = vmatprep.subr.mxu0 0.0
      %3302 = vmatpush1.msra.mxu0 0.0
      %3303 = vmatprep.subr.mxu0 0.0
      %3304 = vmatpush1.msra.mxu0 0.0
      %3305 = vmatprep.subr.mxu0 0.0
      %3306 = vmatpush1.msra.mxu0 0.0
      %3307 = vmatprep.subr.mxu0 0.0
      %3308 = vmatpush1.msra.mxu0 0.0
      %3309 = vmatprep.subr.mxu0 0.0
      %3310 = vmatpush1.msra.mxu0 0.0
      %3311 = vmatprep.subr.mxu0 0.0
      %3312 = vmatpush1.msra.mxu0 0.0
      %3313 = vmatprep.subr.mxu0 0.0
      %3314 = vmatpush1.msra.mxu0 0.0
      %3315 = vmatprep.subr.mxu0 0.0
      %3316 = vmatpush1.msra.mxu0 0.0
      %3317 = vmatprep.subr.mxu0 0.0
      %3318 = vmatpush1.msra.mxu0 0.0
      %3319 = vmatprep.subr.mxu0 0.0
      %3320 = vmatpush1.msra.mxu0 0.0
      %3321 = vmatprep.subr.mxu0 0.0
      %3322 = vmatpush1.msra.mxu0 0.0
      %3323 = vmatprep.subr.mxu0 0.0
      %3324 = vmatpush1.msra.mxu0 0.0
      %3325 = vmatprep.subr.mxu0 0.0
      %3326 = vmatpush1.msra.mxu0 0.0
      %3327 = vmatprep.subr.mxu0 0.0
      %3328 = vmatpush1.msra.mxu0 0.0
      %3329 = vmatprep.subr.mxu0 0.0
      %3330 = vmatpush1.msra.mxu0 0.0
      %3331 = vmatprep.subr.mxu0 0.0
      %3332 = vmatpush1.msra.mxu0 0.0
      %3333 = vmatprep.subr.mxu0 0.0
      %3334 = vmatpush1.msra.mxu0 0.0
      %3335 = vmatprep.subr.mxu0 0.0
      %3336 = vmatpush1.msra.mxu0 0.0
      %3337 = vmatprep.subr.mxu0 0.0
      %3338 = vmatpush1.msra.mxu0 0.0
      %3339 = vmatprep.subr.mxu0 0.0
      %3340 = vmatpush1.msra.mxu0 0.0
      %3341 = vmatprep.subr.mxu0 0.0
      %3342 = vmatpush1.msra.mxu0 0.0
      %3343 = vmatprep.subr.mxu0 0.0
      %3344 = vmatpush1.msra.mxu0 0.0
      %3345 = vmatprep.subr.mxu0 0.0
      %3346 = vmatpush1.msra.mxu0 0.0
      %3347 = vmatprep.mubr.f32.mxu0 0.0
      %3348 = vmatmul.mubr.f32.gmra.mrb[0].mxu0 %v3275
      %v3349 = vpop.f32.mrb[0].mxu0
      %v3350 = vadd.f32 0.0, %v3349
      %v3351 = vpop.f32.mrb[0].mxu0
      %v3352 = vadd.f32 0.0, %v3351
      %3353 = vmatprep.mubr.f32.mxu0 0.0
      %3354 = vmatmul.mubr.f32.gmra.mrb[0].mxu0 %v3278
      %v3355 = vpop.f32.mrb[0].mxu0
      %v3356 = vadd.f32 0.0, %v3355
      %v3357 = vpop.f32.mrb[0].mxu0
      %v3358 = vadd.f32 0.0, %v3357
      %3359 = vmatprep.mubr.f32.mxu0 0.0
      %3360 = vmatmul.mubr.f32.gmra.mrb[0].mxu0 %v3281
      %v3361 = vpop.f32.mrb[0].mxu0
      %v3362 = vadd.f32 0.0, %v3361
      %v3363 = vpop.f32.mrb[0].mxu0
      %v3364 = vadd.f32 0.0, %v3363
      %3365 = vdwg.mxu0
      %3366 = vmatprep.subr.mxu0 %v762
      %3367 = vmatpush1.msra.mxu0 %v761
      %3368 = vmatprep.subr.mxu0 %v770
      %3369 = vmatpush1.msra.mxu0 %v769
      %3370 = vmatprep.subr.mxu0 %v778
      %3371 = vmatpush1.msra.mxu0 %v777
      %3372 = vmatprep.subr.mxu0 %v816
      %3373 = vmatpush1.msra.mxu0 %v813
      %3374 = vmatprep.subr.mxu0 0.0
      %3375 = vmatpush1.msra.mxu0 0.0
      %3376 = vmatprep.subr.mxu0 0.0
      %3377 = vmatpush1.msra.mxu0 0.0
      %3378 = vmatprep.subr.mxu0 0.0
      %3379 = vmatpush1.msra.mxu0 0.0
      %3380 = vmatprep.subr.mxu0 0.0
      %3381 = vmatpush1.msra.mxu0 0.0
      %3382 = vmatprep.subr.mxu0 0.0
      %3383 = vmatpush1.msra.mxu0 0.0
      %3384 = vmatprep.subr.mxu0 0.0
      %3385 = vmatpush1.msra.mxu0 0.0
      %3386 = vmatprep.subr.mxu0 0.0
      %3387 = vmatpush1.msra.mxu0 0.0
      %3388 = vmatprep.subr.mxu0 0.0
      %3389 = vmatpush1.msra.mxu0 0.0
      %3390 = vmatprep.subr.mxu0 0.0
      %3391 = vmatpush1.msra.mxu0 0.0
      %3392 = vmatprep.subr.mxu0 0.0
      %3393 = vmatpush1.msra.mxu0 0.0
      %3394 = vmatprep.subr.mxu0 0.0
      %3395 = vmatpush1.msra.mxu0 0.0
      %3396 = vmatprep.subr.mxu0 0.0
      %3397 = vmatpush1.msra.mxu0 0.0
      %3398 = vmatprep.subr.mxu0 0.0
      %3399 = vmatpush1.msra.mxu0 0.0
      %3400 = vmatprep.subr.mxu0 0.0
      %3401 = vmatpush1.msra.mxu0 0.0
      %3402 = vmatprep.subr.mxu0 0.0
      %3403 = vmatpush1.msra.mxu0 0.0
      %3404 = vmatprep.subr.mxu0 0.0
      %3405 = vmatpush1.msra.mxu0 0.0
      %3406 = vmatprep.subr.mxu0 0.0
      %3407 = vmatpush1.msra.mxu0 0.0
      %3408 = vmatprep.subr.mxu0 0.0
      %3409 = vmatpush1.msra.mxu0 0.0
      %3410 = vmatprep.subr.mxu0 0.0
      %3411 = vmatpush1.msra.mxu0 0.0
      %3412 = vmatprep.subr.mxu0 0.0
      %3413 = vmatpush1.msra.mxu0 0.0
      %3414 = vmatprep.subr.mxu0 0.0
      %3415 = vmatpush1.msra.mxu0 0.0
      %3416 = vmatprep.subr.mxu0 0.0
      %3417 = vmatpush1.msra.mxu0 0.0
      %3418 = vmatprep.subr.mxu0 0.0
      %3419 = vmatpush1.msra.mxu0 0.0
      %3420 = vmatprep.subr.mxu0 0.0
      %3421 = vmatpush1.msra.mxu0 0.0
      %3422 = vmatprep.subr.mxu0 0.0
      %3423 = vmatpush1.msra.mxu0 0.0
      %3424 = vmatprep.subr.mxu0 0.0
      %3425 = vmatpush1.msra.mxu0 0.0
      %3426 = vmatprep.subr.mxu0 0.0
      %3427 = vmatpush1.msra.mxu0 0.0
      %3428 = vmatprep.subr.mxu0 0.0
      %3429 = vmatpush1.msra.mxu0 0.0
      %3430 = vmatprep.mubr.f32.mxu0 0.0
      %3431 = vmatmul.mubr.f32.gmra.mrb[0].mxu0 %v3275
      %v3432 = vpop.f32.mrb[0].mxu0
      %v3433 = vadd.f32 0.0, %v3432
      %v3434 = vpop.f32.mrb[0].mxu0
      %v3435 = vadd.f32 0.0, %v3434
      %3436 = vmatprep.mubr.f32.mxu0 0.0
      %3437 = vmatmul.mubr.f32.gmra.mrb[0].mxu0 %v3278
      %v3438 = vpop.f32.mrb[0].mxu0
      %v3439 = vadd.f32 0.0, %v3438
      %v3440 = vpop.f32.mrb[0].mxu0
      %v3441 = vadd.f32 0.0, %v3440
      %3442 = vmatprep.mubr.f32.mxu0 0.0
      %3443 = vmatmul.mubr.f32.gmra.mrb[0].mxu0 %v3281
      %v3444 = vpop.f32.mrb[0].mxu0
      %v3445 = vadd.f32 0.0, %v3444
      %v3446 = vpop.f32.mrb[0].mxu0
      %v3447 = vadd.f32 0.0, %v3446
      %3448 = vdwg.mxu0
      %3449 = vmatprep.subr.mxu0 %v764
      %3450 = vmatpush1.msra.mxu0 %v763
      %3451 = vmatprep.subr.mxu0 %v772
      %3452 = vmatpush1.msra.mxu0 %v771
      %3453 = vmatprep.subr.mxu0 %v780
      %3454 = vmatpush1.msra.mxu0 %v779
      %3455 = vmatprep.subr.mxu0 %v822
      %3456 = vmatpush1.msra.mxu0 %v819
      %3457 = vmatprep.subr.mxu0 0.0
      %3458 = vmatpush1.msra.mxu0 0.0
      %3459 = vmatprep.subr.mxu0 0.0
      %3460 = vmatpush1.msra.mxu0 0.0
      %3461 = vmatprep.subr.mxu0 0.0
      %3462 = vmatpush1.msra.mxu0 0.0
      %3463 = vmatprep.subr.mxu0 0.0
      %3464 = vmatpush1.msra.mxu0 0.0
      %3465 = vmatprep.subr.mxu0 0.0
      %3466 = vmatpush1.msra.mxu0 0.0
      %3467 = vmatprep.subr.mxu0 0.0
      %3468 = vmatpush1.msra.mxu0 0.0
      %3469 = vmatprep.subr.mxu0 0.0
      %3470 = vmatpush1.msra.mxu0 0.0
      %3471 = vmatprep.subr.mxu0 0.0
      %3472 = vmatpush1.msra.mxu0 0.0
      %3473 = vmatprep.subr.mxu0 0.0
      %3474 = vmatpush1.msra.mxu0 0.0
      %3475 = vmatprep.subr.mxu0 0.0
      %3476 = vmatpush1.msra.mxu0 0.0
      %3477 = vmatprep.subr.mxu0 0.0
      %3478 = vmatpush1.msra.mxu0 0.0
      %3479 = vmatprep.subr.mxu0 0.0
      %3480 = vmatpush1.msra.mxu0 0.0
      %3481 = vmatprep.subr.mxu0 0.0
      %3482 = vmatpush1.msra.mxu0 0.0
      %3483 = vmatprep.subr.mxu0 0.0
      %3484 = vmatpush1.msra.mxu0 0.0
      %3485 = vmatprep.subr.mxu0 0.0
      %3486 = vmatpush1.msra.mxu0 0.0
      %3487 = vmatprep.subr.mxu0 0.0
      %3488 = vmatpush1.msra.mxu0 0.0
      %3489 = vmatprep.subr.mxu0 0.0
      %3490 = vmatpush1.msra.mxu0 0.0
      %3491 = vmatprep.subr.mxu0 0.0
      %3492 = vmatpush1.msra.mxu0 0.0
      %3493 = vmatprep.subr.mxu0 0.0
      %3494 = vmatpush1.msra.mxu0 0.0
      %3495 = vmatprep.subr.mxu0 0.0
      %3496 = vmatpush1.msra.mxu0 0.0
      %3497 = vmatprep.subr.mxu0 0.0
      %3498 = vmatpush1.msra.mxu0 0.0
      %3499 = vmatprep.subr.mxu0 0.0
      %3500 = vmatpush1.msra.mxu0 0.0
      %3501 = vmatprep.subr.mxu0 0.0
      %3502 = vmatpush1.msra.mxu0 0.0
      %3503 = vmatprep.subr.mxu0 0.0
      %3504 = vmatpush1.msra.mxu0 0.0
      %3505 = vmatprep.subr.mxu0 0.0
      %3506 = vmatpush1.msra.mxu0 0.0
      %3507 = vmatprep.subr.mxu0 0.0
      %3508 = vmatpush1.msra.mxu0 0.0
      %3509 = vmatprep.subr.mxu0 0.0
      %3510 = vmatpush1.msra.mxu0 0.0
      %3511 = vmatprep.subr.mxu0 0.0
      %3512 = vmatpush1.msra.mxu0 0.0
      %3513 = vmatprep.mubr.f32.mxu0 0.0
      %3514 = vmatmul.mubr.f32.gmra.mrb[0].mxu0 %v3275
      %v3515 = vpop.f32.mrb[0].mxu0
      %v3516 = vadd.f32 0.0, %v3515
      %v3517 = vpop.f32.mrb[0].mxu0
      %v3518 = vadd.f32 0.0, %v3517
      %3519 = vmatprep.mubr.f32.mxu0 0.0
      %3520 = vmatmul.mubr.f32.gmra.mrb[0].mxu0 %v3278
      %v3521 = vpop.f32.mrb[0].mxu0
      %v3522 = vadd.f32 0.0, %v3521
      %v3523 = vpop.f32.mrb[0].mxu0
      %v3524 = vadd.f32 0.0, %v3523
      %3525 = vmatprep.mubr.f32.mxu0 0.0
      %3526 = vmatmul.mubr.f32.gmra.mrb[0].mxu0 %v3281
      %v3527 = vpop.f32.mrb[0].mxu0
      %v3528 = vadd.f32 0.0, %v3527
      %v3529 = vpop.f32.mrb[0].mxu0
      %v3530 = vadd.f32 0.0, %v3529
      %3531 = vdwg.mxu0
      %3532 = vmatprep.subr.mxu0 %v766
      %3533 = vmatpush1.msra.mxu0 %v765
      %3534 = vmatprep.subr.mxu0 %v774
      %3535 = vmatpush1.msra.mxu0 %v773
      %3536 = vmatprep.subr.mxu0 %v782
      %3537 = vmatpush1.msra.mxu0 %v781
      %3538 = vmatprep.subr.mxu0 %v828
      %3539 = vmatpush1.msra.mxu0 %v825
      %3540 = vmatprep.subr.mxu0 0.0
      %3541 = vmatpush1.msra.mxu0 0.0
      %3542 = vmatprep.subr.mxu0 0.0
      %3543 = vmatpush1.msra.mxu0 0.0
      %3544 = vmatprep.subr.mxu0 0.0
      %3545 = vmatpush1.msra.mxu0 0.0
      %3546 = vmatprep.subr.mxu0 0.0
      %3547 = vmatpush1.msra.mxu0 0.0
      %3548 = vmatprep.subr.mxu0 0.0
      %3549 = vmatpush1.msra.mxu0 0.0
      %3550 = vmatprep.subr.mxu0 0.0
      %3551 = vmatpush1.msra.mxu0 0.0
      %3552 = vmatprep.subr.mxu0 0.0
      %3553 = vmatpush1.msra.mxu0 0.0
      %3554 = vmatprep.subr.mxu0 0.0
      %3555 = vmatpush1.msra.mxu0 0.0
      %3556 = vmatprep.subr.mxu0 0.0
      %3557 = vmatpush1.msra.mxu0 0.0
      %3558 = vmatprep.subr.mxu0 0.0
      %3559 = vmatpush1.msra.mxu0 0.0
      %3560 = vmatprep.subr.mxu0 0.0
      %3561 = vmatpush1.msra.mxu0 0.0
      %3562 = vmatprep.subr.mxu0 0.0
      %3563 = vmatpush1.msra.mxu0 0.0
      %3564 = vmatprep.subr.mxu0 0.0
      %3565 = vmatpush1.msra.mxu0 0.0
      %3566 = vmatprep.subr.mxu0 0.0
      %3567 = vmatpush1.msra.mxu0 0.0
      %3568 = vmatprep.subr.mxu0 0.0
      %3569 = vmatpush1.msra.mxu0 0.0
      %3570 = vmatprep.subr.mxu0 0.0
      %3571 = vmatpush1.msra.mxu0 0.0
      %3572 = vmatprep.subr.mxu0 0.0
      %3573 = vmatpush1.msra.mxu0 0.0
      %3574 = vmatprep.subr.mxu0 0.0
      %3575 = vmatpush1.msra.mxu0 0.0
      %3576 = vmatprep.subr.mxu0 0.0
      %3577 = vmatpush1.msra.mxu0 0.0
      %3578 = vmatprep.subr.mxu0 0.0
      %3579 = vmatpush1.msra.mxu0 0.0
      %3580 = vmatprep.subr.mxu0 0.0
      %3581 = vmatpush1.msra.mxu0 0.0
      %3582 = vmatprep.subr.mxu0 0.0
      %3583 = vmatpush1.msra.mxu0 0.0
      %3584 = vmatprep.subr.mxu0 0.0
      %3585 = vmatpush1.msra.mxu0 0.0
      %3586 = vmatprep.subr.mxu0 0.0
      %3587 = vmatpush1.msra.mxu0 0.0
      %3588 = vmatprep.subr.mxu0 0.0
      %3589 = vmatpush1.msra.mxu0 0.0
      %3590 = vmatprep.subr.mxu0 0.0
      %3591 = vmatpush1.msra.mxu0 0.0
      %3592 = vmatprep.subr.mxu0 0.0
      %3593 = vmatpush1.msra.mxu0 0.0
      %3594 = vmatprep.subr.mxu0 0.0
      %3595 = vmatpush1.msra.mxu0 0.0
      %3596 = vmatprep.mubr.f32.mxu0 0.0
      %3597 = vmatmul.mubr.f32.gmra.mrb[0].mxu0 %v3275
      %v3598 = vpop.f32.mrb[0].mxu0
      %v3599 = vadd.f32 0.0, %v3598
      %v3600 = vpop.f32.mrb[0].mxu0
      %v3601 = vadd.f32 0.0, %v3600
      %3602 = vmatprep.mubr.f32.mxu0 0.0
      %3603 = vmatmul.mubr.f32.gmra.mrb[0].mxu0 %v3278
      %v3604 = vpop.f32.mrb[0].mxu0
      %v3605 = vadd.f32 0.0, %v3604
      %v3606 = vpop.f32.mrb[0].mxu0
      %v3607 = vadd.f32 0.0, %v3606
      %3608 = vmatprep.mubr.f32.mxu0 0.0
      %3609 = vmatmul.mubr.f32.gmra.mrb[0].mxu0 %v3281
      %v3610 = vpop.f32.mrb[0].mxu0
      %v3611 = vadd.f32 0.0, %v3610
      %v3612 = vpop.f32.mrb[0].mxu0
      %v3613 = vadd.f32 0.0, %v3612
      %3614 = vdwg.mxu0
      %3615 = vrot.lane.b32.xlu0 %v3350, 64
      %v3616 = vpop.permute.xlu0 %3615
      %3617 = vrot.lane.b32.xlu0 %v3356, 64
      %v3618 = vpop.permute.xlu0 %3617
      %3619 = vrot.lane.b32.xlu0 %v3362, 64
      %v3620 = vpop.permute.xlu0 %3619
      %3621 = vrot.lane.b32.xlu0 %v3352, 64
      %v3622 = vpop.permute.xlu0 %3621
      %3623 = vrot.lane.b32.xlu0 %v3358, 64
      %v3624 = vpop.permute.xlu0 %3623
      %3625 = vrot.lane.b32.xlu0 %v3364, 64
      %v3626 = vpop.permute.xlu0 %3625
      %3627 = vrot.lane.b32.xlu0 %v3433, 64
      %v3628 = vpop.permute.xlu0 %3627
      %3629 = vrot.lane.b32.xlu0 %v3439, 64
      %v3630 = vpop.permute.xlu0 %3629
      %3631 = vrot.lane.b32.xlu0 %v3445, 64
      %v3632 = vpop.permute.xlu0 %3631
      %3633 = vrot.lane.b32.xlu0 %v3435, 64
      %v3634 = vpop.permute.xlu0 %3633
      %3635 = vrot.lane.b32.xlu0 %v3441, 64
      %v3636 = vpop.permute.xlu0 %3635
      %3637 = vrot.lane.b32.xlu0 %v3447, 64
      %v3638 = vpop.permute.xlu0 %3637
      %3639 = vrot.lane.b32.xlu0 %v3516, 64
      %v3640 = vpop.permute.xlu0 %3639
      %3641 = vrot.lane.b32.xlu0 %v3522, 64
      %v3642 = vpop.permute.xlu0 %3641
      %3643 = vrot.lane.b32.xlu0 %v3528, 64
      %v3644 = vpop.permute.xlu0 %3643
      %3645 = vrot.lane.b32.xlu0 %v3518, 64
      %v3646 = vpop.permute.xlu0 %3645
      %3647 = vrot.lane.b32.xlu0 %v3524, 64
      %v3648 = vpop.permute.xlu0 %3647
      %3649 = vrot.lane.b32.xlu0 %v3530, 64
      %v3650 = vpop.permute.xlu0 %3649
      %3651 = vrot.lane.b32.xlu0 %v3599, 64
      %v3652 = vpop.permute.xlu0 %3651
      %3653 = vrot.lane.b32.xlu0 %v3605, 64
      %v3654 = vpop.permute.xlu0 %3653
      %3655 = vrot.lane.b32.xlu0 %v3611, 64
      %v3656 = vpop.permute.xlu0 %3655
      %3657 = vrot.lane.b32.xlu0 %v3601, 64
      %v3658 = vpop.permute.xlu0 %3657
      %3659 = vrot.lane.b32.xlu0 %v3607, 64
      %v3660 = vpop.permute.xlu0 %3659
      %3661 = vrot.lane.b32.xlu0 %v3613, 64
      %v3662 = vpop.permute.xlu0 %3661
      %v3663 = vsel %vm1969, %v3652, %v3658
      %v3664 = vsel %vm1969, %v3654, %v3660
      %v3665 = vsel %vm1969, %v3656, %v3662
      %v3666 = vsel %vm1969, %v3646, %v3652
      %v3667 = vsel %vm1969, %v3648, %v3654
      %v3668 = vsel %vm1969, %v3650, %v3656
      %v3669 = vsel %vm1969, %v3640, %v3646
      %v3670 = vsel %vm1969, %v3642, %v3648
      %v3671 = vsel %vm1969, %v3644, %v3650
      %v3672 = vsel %vm1969, %v3634, %v3640
      %v3673 = vsel %vm1969, %v3636, %v3642
      %v3674 = vsel %vm1969, %v3638, %v3644
      %v3675 = vsel %vm1969, %v3628, %v3634
      %v3676 = vsel %vm1969, %v3630, %v3636
      %v3677 = vsel %vm1969, %v3632, %v3638
      %v3678 = vsel %vm1969, %v3622, %v3628
      %v3679 = vsel %vm1969, %v3624, %v3630
      %v3680 = vsel %vm1969, %v3626, %v3632
      %v3681 = vsel %vm1969, %v3616, %v3622
      %v3682 = vsel %vm1969, %v3618, %v3624
      %v3683 = vsel %vm1969, %v3620, %v3626
      %v3684 = vsel %vm1969, %v3658, %v3616
      %v3685 = vsel %vm1969, %v3660, %v3618
      %v3686 = vsel %vm1969, %v3662, %v3620
      %v3687 = vadd.f32 %v3246, %v3678
      %v3688 = vadd.f32 %v3247, %v3675
      %v3689 = vadd.f32 %v3248, %v3672
      %v3690 = vadd.f32 %v3249, %v3669
      %v3691 = vadd.f32 %v3250, %v3666
      %v3692 = vadd.f32 %v3251, %v3663
      %v3693 = vadd.f32 %v3252, %v3684
      %v3694 = vadd.f32 %v3253, %v3681
      %v3695 = vadd.f32 %v3254, %v3679
      %v3696 = vadd.f32 %v3255, %v3676
      %v3697 = vadd.f32 %v3256, %v3673
      %v3698 = vadd.f32 %v3257, %v3670
      %v3699 = vadd.f32 %v3258, %v3667
      %v3700 = vadd.f32 %v3259, %v3664
      %v3701 = vadd.f32 %v3260, %v3685
      %v3702 = vadd.f32 %v3261, %v3682
      %v3703 = vadd.f32 %v3262, %v3680
      %v3704 = vadd.f32 %v3263, %v3677
      %v3705 = vadd.f32 %v3264, %v3674
      %v3706 = vadd.f32 %v3265, %v3671
      %v3707 = vadd.f32 %v3266, %v3668
      %v3708 = vadd.f32 %v3267, %v3665
      %v3709 = vadd.f32 %v3268, %v3686
      %v3710 = vadd.f32 %v3269, %v3683
      %s3711 = scalar_lea.vmem %s1, 168
      %v3712 = vld [vmem:[%s3711] sm:$0xff]
      %v3713 = vld [vmem:[%s3711 + $0x8] sm:$0xff]
      %v3714 = vld [vmem:[%s3711 + $0x10] sm:$0xf]
      %v3716 = vsel %vm795, %v3712, 0
      %v3719 = vsel %vm795, %v3713, 0
      %v3722 = vsel %vm795, %v3714, 0
      %3724 = vmatprep.subr.mxu0 %v760
      %3725 = vmatpush1.msra.mxu0 %v759
      %3726 = vmatprep.subr.mxu0 %v768
      %3727 = vmatpush1.msra.mxu0 %v767
      %3728 = vmatprep.subr.mxu0 %v776
      %3729 = vmatpush1.msra.mxu0 %v775
      %3730 = vmatprep.subr.mxu0 %v810
      %3731 = vmatpush1.msra.mxu0 %v807
      %3732 = vmatprep.subr.mxu0 0.0
      %3733 = vmatpush1.msra.mxu0 0.0
      %3734 = vmatprep.subr.mxu0 0.0
      %3735 = vmatpush1.msra.mxu0 0.0
      %3736 = vmatprep.subr.mxu0 0.0
      %3737 = vmatpush1.msra.mxu0 0.0
      %3738 = vmatprep.subr.mxu0 0.0
      %3739 = vmatpush1.msra.mxu0 0.0
      %3740 = vmatprep.subr.mxu0 0.0
      %3741 = vmatpush1.msra.mxu0 0.0
      %3742 = vmatprep.subr.mxu0 0.0
      %3743 = vmatpush1.msra.mxu0 0.0
      %3744 = vmatprep.subr.mxu0 0.0
      %3745 = vmatpush1.msra.mxu0 0.0
      %3746 = vmatprep.subr.mxu0 0.0
      %3747 = vmatpush1.msra.mxu0 0.0
      %3748 = vmatprep.subr.mxu0 0.0
      %3749 = vmatpush1.msra.mxu0 0.0
      %3750 = vmatprep.subr.mxu0 0.0
      %3751 = vmatpush1.msra.mxu0 0.0
      %3752 = vmatprep.subr.mxu0 0.0
      %3753 = vmatpush1.msra.mxu0 0.0
      %3754 = vmatprep.subr.mxu0 0.0
      %3755 = vmatpush1.msra.mxu0 0.0
      %3756 = vmatprep.subr.mxu0 0.0
      %3757 = vmatpush1.msra.mxu0 0.0
      %3758 = vmatprep.subr.mxu0 0.0
      %3759 = vmatpush1.msra.mxu0 0.0
      %3760 = vmatprep.subr.mxu0 0.0
      %3761 = vmatpush1.msra.mxu0 0.0
      %3762 = vmatprep.subr.mxu0 0.0
      %3763 = vmatpush1.msra.mxu0 0.0
      %3764 = vmatprep.subr.mxu0 0.0
      %3765 = vmatpush1.msra.mxu0 0.0
      %3766 = vmatprep.subr.mxu0 0.0
      %3767 = vmatpush1.msra.mxu0 0.0
      %3768 = vmatprep.subr.mxu0 0.0
      %3769 = vmatpush1.msra.mxu0 0.0
      %3770 = vmatprep.subr.mxu0 0.0
      %3771 = vmatpush1.msra.mxu0 0.0
      %3772 = vmatprep.subr.mxu0 0.0
      %3773 = vmatpush1.msra.mxu0 0.0
      %3774 = vmatprep.subr.mxu0 0.0
      %3775 = vmatpush1.msra.mxu0 0.0
      %3776 = vmatprep.subr.mxu0 0.0
      %3777 = vmatpush1.msra.mxu0 0.0
      %3778 = vmatprep.subr.mxu0 0.0
      %3779 = vmatpush1.msra.mxu0 0.0
      %3780 = vmatprep.subr.mxu0 0.0
      %3781 = vmatpush1.msra.mxu0 0.0
      %3782 = vmatprep.subr.mxu0 0.0
      %3783 = vmatpush1.msra.mxu0 0.0
      %3784 = vmatprep.subr.mxu0 0.0
      %3785 = vmatpush1.msra.mxu0 0.0
      %3786 = vmatprep.subr.mxu0 0.0
      %3787 = vmatpush1.msra.mxu0 0.0
      %3788 = vmatprep.mubr.f32.mxu0 0.0
      %3789 = vmatmul.mubr.f32.gmra.mrb[0].mxu0 %v3716
      %v3790 = vpop.f32.mrb[0].mxu0
      %v3791 = vadd.f32 0.0, %v3790
      %v3792 = vpop.f32.mrb[0].mxu0
      %v3793 = vadd.f32 0.0, %v3792
      %3794 = vmatprep.mubr.f32.mxu0 0.0
      %3795 = vmatmul.mubr.f32.gmra.mrb[0].mxu0 %v3719
      %v3796 = vpop.f32.mrb[0].mxu0
      %v3797 = vadd.f32 0.0, %v3796
      %v3798 = vpop.f32.mrb[0].mxu0
      %v3799 = vadd.f32 0.0, %v3798
      %3800 = vmatprep.mubr.f32.mxu0 0.0
      %3801 = vmatmul.mubr.f32.gmra.mrb[0].mxu0 %v3722
      %v3802 = vpop.f32.mrb[0].mxu0
      %v3803 = vadd.f32 0.0, %v3802
      %v3804 = vpop.f32.mrb[0].mxu0
      %v3805 = vadd.f32 0.0, %v3804
      %3806 = vdwg.mxu0
      %3807 = vmatprep.subr.mxu0 %v762
      %3808 = vmatpush1.msra.mxu0 %v761
      %3809 = vmatprep.subr.mxu0 %v770
      %3810 = vmatpush1.msra.mxu0 %v769
      %3811 = vmatprep.subr.mxu0 %v778
      %3812 = vmatpush1.msra.mxu0 %v777
      %3813 = vmatprep.subr.mxu0 %v816
      %3814 = vmatpush1.msra.mxu0 %v813
      %3815 = vmatprep.subr.mxu0 0.0
      %3816 = vmatpush1.msra.mxu0 0.0
      %3817 = vmatprep.subr.mxu0 0.0
      %3818 = vmatpush1.msra.mxu0 0.0
      %3819 = vmatprep.subr.mxu0 0.0
      %3820 = vmatpush1.msra.mxu0 0.0
      %3821 = vmatprep.subr.mxu0 0.0
      %3822 = vmatpush1.msra.mxu0 0.0
      %3823 = vmatprep.subr.mxu0 0.0
      %3824 = vmatpush1.msra.mxu0 0.0
      %3825 = vmatprep.subr.mxu0 0.0
      %3826 = vmatpush1.msra.mxu0 0.0
      %3827 = vmatprep.subr.mxu0 0.0
      %3828 = vmatpush1.msra.mxu0 0.0
      %3829 = vmatprep.subr.mxu0 0.0
      %3830 = vmatpush1.msra.mxu0 0.0
      %3831 = vmatprep.subr.mxu0 0.0
      %3832 = vmatpush1.msra.mxu0 0.0
      %3833 = vmatprep.subr.mxu0 0.0
      %3834 = vmatpush1.msra.mxu0 0.0
      %3835 = vmatprep.subr.mxu0 0.0
      %3836 = vmatpush1.msra.mxu0 0.0
      %3837 = vmatprep.subr.mxu0 0.0
      %3838 = vmatpush1.msra.mxu0 0.0
      %3839 = vmatprep.subr.mxu0 0.0
      %3840 = vmatpush1.msra.mxu0 0.0
      %3841 = vmatprep.subr.mxu0 0.0
      %3842 = vmatpush1.msra.mxu0 0.0
      %3843 = vmatprep.subr.mxu0 0.0
      %3844 = vmatpush1.msra.mxu0 0.0
      %3845 = vmatprep.subr.mxu0 0.0
      %3846 = vmatpush1.msra.mxu0 0.0
      %3847 = vmatprep.subr.mxu0 0.0
      %3848 = vmatpush1.msra.mxu0 0.0
      %3849 = vmatprep.subr.mxu0 0.0
      %3850 = vmatpush1.msra.mxu0 0.0
      %3851 = vmatprep.subr.mxu0 0.0
      %3852 = vmatpush1.msra.mxu0 0.0
      %3853 = vmatprep.subr.mxu0 0.0
      %3854 = vmatpush1.msra.mxu0 0.0
      %3855 = vmatprep.subr.mxu0 0.0
      %3856 = vmatpush1.msra.mxu0 0.0
      %3857 = vmatprep.subr.mxu0 0.0
      %3858 = vmatpush1.msra.mxu0 0.0
      %3859 = vmatprep.subr.mxu0 0.0
      %3860 = vmatpush1.msra.mxu0 0.0
      %3861 = vmatprep.subr.mxu0 0.0
      %3862 = vmatpush1.msra.mxu0 0.0
      %3863 = vmatprep.subr.mxu0 0.0
      %3864 = vmatpush1.msra.mxu0 0.0
      %3865 = vmatprep.subr.mxu0 0.0
      %3866 = vmatpush1.msra.mxu0 0.0
      %3867 = vmatprep.subr.mxu0 0.0
      %3868 = vmatpush1.msra.mxu0 0.0
      %3869 = vmatprep.subr.mxu0 0.0
      %3870 = vmatpush1.msra.mxu0 0.0
      %3871 = vmatprep.mubr.f32.mxu0 0.0
      %3872 = vmatmul.mubr.f32.gmra.mrb[0].mxu0 %v3716
      %v3873 = vpop.f32.mrb[0].mxu0
      %v3874 = vadd.f32 0.0, %v3873
      %v3875 = vpop.f32.mrb[0].mxu0
      %v3876 = vadd.f32 0.0, %v3875
      %3877 = vmatprep.mubr.f32.mxu0 0.0
      %3878 = vmatmul.mubr.f32.gmra.mrb[0].mxu0 %v3719
      %v3879 = vpop.f32.mrb[0].mxu0
      %v3880 = vadd.f32 0.0, %v3879
      %v3881 = vpop.f32.mrb[0].mxu0
      %v3882 = vadd.f32 0.0, %v3881
      %3883 = vmatprep.mubr.f32.mxu0 0.0
      %3884 = vmatmul.mubr.f32.gmra.mrb[0].mxu0 %v3722
      %v3885 = vpop.f32.mrb[0].mxu0
      %v3886 = vadd.f32 0.0, %v3885
      %v3887 = vpop.f32.mrb[0].mxu0
      %v3888 = vadd.f32 0.0, %v3887
      %3889 = vdwg.mxu0
      %3890 = vmatprep.subr.mxu0 %v764
      %3891 = vmatpush1.msra.mxu0 %v763
      %3892 = vmatprep.subr.mxu0 %v772
      %3893 = vmatpush1.msra.mxu0 %v771
      %3894 = vmatprep.subr.mxu0 %v780
      %3895 = vmatpush1.msra.mxu0 %v779
      %3896 = vmatprep.subr.mxu0 %v822
      %3897 = vmatpush1.msra.mxu0 %v819
      %3898 = vmatprep.subr.mxu0 0.0
      %3899 = vmatpush1.msra.mxu0 0.0
      %3900 = vmatprep.subr.mxu0 0.0
      %3901 = vmatpush1.msra.mxu0 0.0
      %3902 = vmatprep.subr.mxu0 0.0
      %3903 = vmatpush1.msra.mxu0 0.0
      %3904 = vmatprep.subr.mxu0 0.0
      %3905 = vmatpush1.msra.mxu0 0.0
      %3906 = vmatprep.subr.mxu0 0.0
      %3907 = vmatpush1.msra.mxu0 0.0
      %3908 = vmatprep.subr.mxu0 0.0
      %3909 = vmatpush1.msra.mxu0 0.0
      %3910 = vmatprep.subr.mxu0 0.0
      %3911 = vmatpush1.msra.mxu0 0.0
      %3912 = vmatprep.subr.mxu0 0.0
      %3913 = vmatpush1.msra.mxu0 0.0
      %3914 = vmatprep.subr.mxu0 0.0
      %3915 = vmatpush1.msra.mxu0 0.0
      %3916 = vmatprep.subr.mxu0 0.0
      %3917 = vmatpush1.msra.mxu0 0.0
      %3918 = vmatprep.subr.mxu0 0.0
      %3919 = vmatpush1.msra.mxu0 0.0
      %3920 = vmatprep.subr.mxu0 0.0
      %3921 = vmatpush1.msra.mxu0 0.0
      %3922 = vmatprep.subr.mxu0 0.0
      %3923 = vmatpush1.msra.mxu0 0.0
      %3924 = vmatprep.subr.mxu0 0.0
      %3925 = vmatpush1.msra.mxu0 0.0
      %3926 = vmatprep.subr.mxu0 0.0
      %3927 = vmatpush1.msra.mxu0 0.0
      %3928 = vmatprep.subr.mxu0 0.0
      %3929 = vmatpush1.msra.mxu0 0.0
      %3930 = vmatprep.subr.mxu0 0.0
      %3931 = vmatpush1.msra.mxu0 0.0
      %3932 = vmatprep.subr.mxu0 0.0
      %3933 = vmatpush1.msra.mxu0 0.0
      %3934 = vmatprep.subr.mxu0 0.0
      %3935 = vmatpush1.msra.mxu0 0.0
      %3936 = vmatprep.subr.mxu0 0.0
      %3937 = vmatpush1.msra.mxu0 0.0
      %3938 = vmatprep.subr.mxu0 0.0
      %3939 = vmatpush1.msra.mxu0 0.0
      %3940 = vmatprep.subr.mxu0 0.0
      %3941 = vmatpush1.msra.mxu0 0.0
      %3942 = vmatprep.subr.mxu0 0.0
      %3943 = vmatpush1.msra.mxu0 0.0
      %3944 = vmatprep.subr.mxu0 0.0
      %3945 = vmatpush1.msra.mxu0 0.0
      %3946 = vmatprep.subr.mxu0 0.0
      %3947 = vmatpush1.msra.mxu0 0.0
      %3948 = vmatprep.subr.mxu0 0.0
      %3949 = vmatpush1.msra.mxu0 0.0
      %3950 = vmatprep.subr.mxu0 0.0
      %3951 = vmatpush1.msra.mxu0 0.0
      %3952 = vmatprep.subr.mxu0 0.0
      %3953 = vmatpush1.msra.mxu0 0.0
      %3954 = vmatprep.mubr.f32.mxu0 0.0
      %3955 = vmatmul.mubr.f32.gmra.mrb[0].mxu0 %v3716
      %v3956 = vpop.f32.mrb[0].mxu0
      %v3957 = vadd.f32 0.0, %v3956
      %v3958 = vpop.f32.mrb[0].mxu0
      %v3959 = vadd.f32 0.0, %v3958
      %3960 = vmatprep.mubr.f32.mxu0 0.0
      %3961 = vmatmul.mubr.f32.gmra.mrb[0].mxu0 %v3719
      %v3962 = vpop.f32.mrb[0].mxu0
      %v3963 = vadd.f32 0.0, %v3962
      %v3964 = vpop.f32.mrb[0].mxu0
      %v3965 = vadd.f32 0.0, %v3964
      %3966 = vmatprep.mubr.f32.mxu0 0.0
      %3967 = vmatmul.mubr.f32.gmra.mrb[0].mxu0 %v3722
      %v3968 = vpop.f32.mrb[0].mxu0
      %v3969 = vadd.f32 0.0, %v3968
      %v3970 = vpop.f32.mrb[0].mxu0
      %v3971 = vadd.f32 0.0, %v3970
      %3972 = vdwg.mxu0
      %3973 = vmatprep.subr.mxu0 %v766
      %3974 = vmatpush1.msra.mxu0 %v765
      %3975 = vmatprep.subr.mxu0 %v774
      %3976 = vmatpush1.msra.mxu0 %v773
      %3977 = vmatprep.subr.mxu0 %v782
      %3978 = vmatpush1.msra.mxu0 %v781
      %3979 = vmatprep.subr.mxu0 %v828
      %3980 = vmatpush1.msra.mxu0 %v825
      %3981 = vmatprep.subr.mxu0 0.0
      %3982 = vmatpush1.msra.mxu0 0.0
      %3983 = vmatprep.subr.mxu0 0.0
      %3984 = vmatpush1.msra.mxu0 0.0
      %3985 = vmatprep.subr.mxu0 0.0
      %3986 = vmatpush1.msra.mxu0 0.0
      %3987 = vmatprep.subr.mxu0 0.0
      %3988 = vmatpush1.msra.mxu0 0.0
      %3989 = vmatprep.subr.mxu0 0.0
      %3990 = vmatpush1.msra.mxu0 0.0
      %3991 = vmatprep.subr.mxu0 0.0
      %3992 = vmatpush1.msra.mxu0 0.0
      %3993 = vmatprep.subr.mxu0 0.0
      %3994 = vmatpush1.msra.mxu0 0.0
      %3995 = vmatprep.subr.mxu0 0.0
      %3996 = vmatpush1.msra.mxu0 0.0
      %3997 = vmatprep.subr.mxu0 0.0
      %3998 = vmatpush1.msra.mxu0 0.0
      %3999 = vmatprep.subr.mxu0 0.0
      %4000 = vmatpush1.msra.mxu0 0.0
      %4001 = vmatprep.subr.mxu0 0.0
      %4002 = vmatpush1.msra.mxu0 0.0
      %4003 = vmatprep.subr.mxu0 0.0
      %4004 = vmatpush1.msra.mxu0 0.0
      %4005 = vmatprep.subr.mxu0 0.0
      %4006 = vmatpush1.msra.mxu0 0.0
      %4007 = vmatprep.subr.mxu0 0.0
      %4008 = vmatpush1.msra.mxu0 0.0
      %4009 = vmatprep.subr.mxu0 0.0
      %4010 = vmatpush1.msra.mxu0 0.0
      %4011 = vmatprep.subr.mxu0 0.0
      %4012 = vmatpush1.msra.mxu0 0.0
      %4013 = vmatprep.subr.mxu0 0.0
      %4014 = vmatpush1.msra.mxu0 0.0
      %4015 = vmatprep.subr.mxu0 0.0
      %4016 = vmatpush1.msra.mxu0 0.0
      %4017 = vmatprep.subr.mxu0 0.0
      %4018 = vmatpush1.msra.mxu0 0.0
      %4019 = vmatprep.subr.mxu0 0.0
      %4020 = vmatpush1.msra.mxu0 0.0
      %4021 = vmatprep.subr.mxu0 0.0
      %4022 = vmatpush1.msra.mxu0 0.0
      %4023 = vmatprep.subr.mxu0 0.0
      %4024 = vmatpush1.msra.mxu0 0.0
      %4025 = vmatprep.subr.mxu0 0.0
      %4026 = vmatpush1.msra.mxu0 0.0
      %4027 = vmatprep.subr.mxu0 0.0
      %4028 = vmatpush1.msra.mxu0 0.0
      %4029 = vmatprep.subr.mxu0 0.0
      %4030 = vmatpush1.msra.mxu0 0.0
      %4031 = vmatprep.subr.mxu0 0.0
      %4032 = vmatpush1.msra.mxu0 0.0
      %4033 = vmatprep.subr.mxu0 0.0
      %4034 = vmatpush1.msra.mxu0 0.0
      %4035 = vmatprep.subr.mxu0 0.0
      %4036 = vmatpush1.msra.mxu0 0.0
      %4037 = vmatprep.mubr.f32.mxu0 0.0
      %4038 = vmatmul.mubr.f32.gmra.mrb[0].mxu0 %v3716
      %v4039 = vpop.f32.mrb[0].mxu0
      %v4040 = vadd.f32 0.0, %v4039
      %v4041 = vpop.f32.mrb[0].mxu0
      %v4042 = vadd.f32 0.0, %v4041
      %4043 = vmatprep.mubr.f32.mxu0 0.0
      %4044 = vmatmul.mubr.f32.gmra.mrb[0].mxu0 %v3719
      %v4045 = vpop.f32.mrb[0].mxu0
      %v4046 = vadd.f32 0.0, %v4045
      %v4047 = vpop.f32.mrb[0].mxu0
      %v4048 = vadd.f32 0.0, %v4047
      %4049 = vmatprep.mubr.f32.mxu0 0.0
      %4050 = vmatmul.mubr.f32.gmra.mrb[0].mxu0 %v3722
      %v4051 = vpop.f32.mrb[0].mxu0
      %v4052 = vadd.f32 0.0, %v4051
      %v4053 = vpop.f32.mrb[0].mxu0
      %v4054 = vadd.f32 0.0, %v4053
      %4055 = vdwg.mxu0
      %4056 = vrot.lane.b32.xlu0 %v3791, 32
      %v4057 = vpop.permute.xlu0 %4056
      %4058 = vrot.lane.b32.xlu0 %v3797, 32
      %v4059 = vpop.permute.xlu0 %4058
      %4060 = vrot.lane.b32.xlu0 %v3803, 32
      %v4061 = vpop.permute.xlu0 %4060
      %4062 = vrot.lane.b32.xlu0 %v3793, 32
      %v4063 = vpop.permute.xlu0 %4062
      %4064 = vrot.lane.b32.xlu0 %v3799, 32
      %v4065 = vpop.permute.xlu0 %4064
      %4066 = vrot.lane.b32.xlu0 %v3805, 32
      %v4067 = vpop.permute.xlu0 %4066
      %4068 = vrot.lane.b32.xlu0 %v3874, 32
      %v4069 = vpop.permute.xlu0 %4068
      %4070 = vrot.lane.b32.xlu0 %v3880, 32
      %v4071 = vpop.permute.xlu0 %4070
      %4072 = vrot.lane.b32.xlu0 %v3886, 32
      %v4073 = vpop.permute.xlu0 %4072
      %4074 = vrot.lane.b32.xlu0 %v3876, 32
      %v4075 = vpop.permute.xlu0 %4074
      %4076 = vrot.lane.b32.xlu0 %v3882, 32
      %v4077 = vpop.permute.xlu0 %4076
      %4078 = vrot.lane.b32.xlu0 %v3888, 32
      %v4079 = vpop.permute.xlu0 %4078
      %4080 = vrot.lane.b32.xlu0 %v3957, 32
      %v4081 = vpop.permute.xlu0 %4080
      %4082 = vrot.lane.b32.xlu0 %v3963, 32
      %v4083 = vpop.permute.xlu0 %4082
      %4084 = vrot.lane.b32.xlu0 %v3969, 32
      %v4085 = vpop.permute.xlu0 %4084
      %4086 = vrot.lane.b32.xlu0 %v3959, 32
      %v4087 = vpop.permute.xlu0 %4086
      %4088 = vrot.lane.b32.xlu0 %v3965, 32
      %v4089 = vpop.permute.xlu0 %4088
      %4090 = vrot.lane.b32.xlu0 %v3971, 32
      %v4091 = vpop.permute.xlu0 %4090
      %4092 = vrot.lane.b32.xlu0 %v4040, 32
      %v4093 = vpop.permute.xlu0 %4092
      %4094 = vrot.lane.b32.xlu0 %v4046, 32
      %v4095 = vpop.permute.xlu0 %4094
      %4096 = vrot.lane.b32.xlu0 %v4052, 32
      %v4097 = vpop.permute.xlu0 %4096
      %4098 = vrot.lane.b32.xlu0 %v4042, 32
      %v4099 = vpop.permute.xlu0 %4098
      %4100 = vrot.lane.b32.xlu0 %v4048, 32
      %v4101 = vpop.permute.xlu0 %4100
      %4102 = vrot.lane.b32.xlu0 %v4054, 32
      %v4103 = vpop.permute.xlu0 %4102
      %v4104 = vsel %vm2411, %v4093, %v4099
      %v4105 = vsel %vm2411, %v4095, %v4101
      %v4106 = vsel %vm2411, %v4097, %v4103
      %v4107 = vsel %vm2411, %v4087, %v4093
      %v4108 = vsel %vm2411, %v4089, %v4095
      %v4109 = vsel %vm2411, %v4091, %v4097
      %v4110 = vsel %vm2411, %v4081, %v4087
      %v4111 = vsel %vm2411, %v4083, %v4089
      %v4112 = vsel %vm2411, %v4085, %v4091
      %v4113 = vsel %vm2411, %v4075, %v4081
      %v4114 = vsel %vm2411, %v4077, %v4083
      %v4115 = vsel %vm2411, %v4079, %v4085
      %v4116 = vsel %vm2411, %v4069, %v4075
      %v4117 = vsel %vm2411, %v4071, %v4077
      %v4118 = vsel %vm2411, %v4073, %v4079
      %v4119 = vsel %vm2411, %v4063, %v4069
      %v4120 = vsel %vm2411, %v4065, %v4071
      %v4121 = vsel %vm2411, %v4067, %v4073
      %v4122 = vsel %vm2411, %v4057, %v4063
      %v4123 = vsel %vm2411, %v4059, %v4065
      %v4124 = vsel %vm2411, %v4061, %v4067
      %v4125 = vsel %vm2411, %v4099, %v4057
      %v4126 = vsel %vm2411, %v4101, %v4059
      %v4127 = vsel %vm2411, %v4103, %v4061
      %v4128 = vadd.f32 %v3687, %v4119
      %v4129 = vadd.f32 %v3688, %v4116
      %v4130 = vadd.f32 %v3689, %v4113
      %v4131 = vadd.f32 %v3690, %v4110
      %v4132 = vadd.f32 %v3691, %v4107
      %v4133 = vadd.f32 %v3692, %v4104
      %v4134 = vadd.f32 %v3693, %v4125
      %v4135 = vadd.f32 %v3694, %v4122
      %v4136 = vadd.f32 %v3695, %v4120
      %v4137 = vadd.f32 %v3696, %v4117
      %v4138 = vadd.f32 %v3697, %v4114
      %v4139 = vadd.f32 %v3698, %v4111
      %v4140 = vadd.f32 %v3699, %v4108
      %v4141 = vadd.f32 %v3700, %v4105
      %v4142 = vadd.f32 %v3701, %v4126
      %v4143 = vadd.f32 %v3702, %v4123
      %v4144 = vadd.f32 %v3703, %v4121
      %v4145 = vadd.f32 %v3704, %v4118
      %v4146 = vadd.f32 %v3705, %v4115
      %v4147 = vadd.f32 %v3706, %v4112
      %v4148 = vadd.f32 %v3707, %v4109
      %v4149 = vadd.f32 %v3708, %v4106
      %v4150 = vadd.f32 %v3709, %v4127
      %v4151 = vadd.f32 %v3710, %v4124
      %s4152 = scalar_lea.vmem %s1, 192
      %v4153 = vld [vmem:[%s4152] sm:$0xff]
      %v4154 = vld [vmem:[%s4152 + $0x8] sm:$0xff]
      %v4155 = vld [vmem:[%s4152 + $0x10] sm:$0xf]
      %v4157 = vsel %vm795, %v4153, 0
      %v4160 = vsel %vm795, %v4154, 0
      %v4163 = vsel %vm795, %v4155, 0
      %4165 = vmatprep.subr.mxu0 %v760
      %4166 = vmatpush1.msra.mxu0 %v759
      %4167 = vmatprep.subr.mxu0 %v768
      %4168 = vmatpush1.msra.mxu0 %v767
      %4169 = vmatprep.subr.mxu0 %v776
      %4170 = vmatpush1.msra.mxu0 %v775
      %4171 = vmatprep.subr.mxu0 %v810
      %4172 = vmatpush1.msra.mxu0 %v807
      %4173 = vmatprep.subr.mxu0 0.0
      %4174 = vmatpush1.msra.mxu0 0.0
      %4175 = vmatprep.subr.mxu0 0.0
      %4176 = vmatpush1.msra.mxu0 0.0
      %4177 = vmatprep.subr.mxu0 0.0
      %4178 = vmatpush1.msra.mxu0 0.0
      %4179 = vmatprep.subr.mxu0 0.0
      %4180 = vmatpush1.msra.mxu0 0.0
      %4181 = vmatprep.subr.mxu0 0.0
      %4182 = vmatpush1.msra.mxu0 0.0
      %4183 = vmatprep.subr.mxu0 0.0
      %4184 = vmatpush1.msra.mxu0 0.0
      %4185 = vmatprep.subr.mxu0 0.0
      %4186 = vmatpush1.msra.mxu0 0.0
      %4187 = vmatprep.subr.mxu0 0.0
      %4188 = vmatpush1.msra.mxu0 0.0
      %4189 = vmatprep.subr.mxu0 0.0
      %4190 = vmatpush1.msra.mxu0 0.0
      %4191 = vmatprep.subr.mxu0 0.0
      %4192 = vmatpush1.msra.mxu0 0.0
      %4193 = vmatprep.subr.mxu0 0.0
      %4194 = vmatpush1.msra.mxu0 0.0
      %4195 = vmatprep.subr.mxu0 0.0
      %4196 = vmatpush1.msra.mxu0 0.0
      %4197 = vmatprep.subr.mxu0 0.0
      %4198 = vmatpush1.msra.mxu0 0.0
      %4199 = vmatprep.subr.mxu0 0.0
      %4200 = vmatpush1.msra.mxu0 0.0
      %4201 = vmatprep.subr.mxu0 0.0
      %4202 = vmatpush1.msra.mxu0 0.0
      %4203 = vmatprep.subr.mxu0 0.0
      %4204 = vmatpush1.msra.mxu0 0.0
      %4205 = vmatprep.subr.mxu0 0.0
      %4206 = vmatpush1.msra.mxu0 0.0
      %4207 = vmatprep.subr.mxu0 0.0
      %4208 = vmatpush1.msra.mxu0 0.0
      %4209 = vmatprep.subr.mxu0 0.0
      %4210 = vmatpush1.msra.mxu0 0.0
      %4211 = vmatprep.subr.mxu0 0.0
      %4212 = vmatpush1.msra.mxu0 0.0
      %4213 = vmatprep.subr.mxu0 0.0
      %4214 = vmatpush1.msra.mxu0 0.0
      %4215 = vmatprep.subr.mxu0 0.0
      %4216 = vmatpush1.msra.mxu0 0.0
      %4217 = vmatprep.subr.mxu0 0.0
      %4218 = vmatpush1.msra.mxu0 0.0
      %4219 = vmatprep.subr.mxu0 0.0
      %4220 = vmatpush1.msra.mxu0 0.0
      %4221 = vmatprep.subr.mxu0 0.0
      %4222 = vmatpush1.msra.mxu0 0.0
      %4223 = vmatprep.subr.mxu0 0.0
      %4224 = vmatpush1.msra.mxu0 0.0
      %4225 = vmatprep.subr.mxu0 0.0
      %4226 = vmatpush1.msra.mxu0 0.0
      %4227 = vmatprep.subr.mxu0 0.0
      %4228 = vmatpush1.msra.mxu0 0.0
      %4229 = vmatprep.mubr.f32.mxu0 0.0
      %4230 = vmatmul.mubr.f32.gmra.mrb[0].mxu0 %v4157
      %v4231 = vpop.f32.mrb[0].mxu0
      %v4232 = vadd.f32 0.0, %v4231
      %v4233 = vpop.f32.mrb[0].mxu0
      %v4234 = vadd.f32 0.0, %v4233
      %4235 = vmatprep.mubr.f32.mxu0 0.0
      %4236 = vmatmul.mubr.f32.gmra.mrb[0].mxu0 %v4160
      %v4237 = vpop.f32.mrb[0].mxu0
      %v4238 = vadd.f32 0.0, %v4237
      %v4239 = vpop.f32.mrb[0].mxu0
      %v4240 = vadd.f32 0.0, %v4239
      %4241 = vmatprep.mubr.f32.mxu0 0.0
      %4242 = vmatmul.mubr.f32.gmra.mrb[0].mxu0 %v4163
      %v4243 = vpop.f32.mrb[0].mxu0
      %v4244 = vadd.f32 0.0, %v4243
      %v4245 = vpop.f32.mrb[0].mxu0
      %v4246 = vadd.f32 0.0, %v4245
      %4247 = vdwg.mxu0
      %4248 = vmatprep.subr.mxu0 %v762
      %4249 = vmatpush1.msra.mxu0 %v761
      %4250 = vmatprep.subr.mxu0 %v770
      %4251 = vmatpush1.msra.mxu0 %v769
      %4252 = vmatprep.subr.mxu0 %v778
      %4253 = vmatpush1.msra.mxu0 %v777
      %4254 = vmatprep.subr.mxu0 %v816
      %4255 = vmatpush1.msra.mxu0 %v813
      %4256 = vmatprep.subr.mxu0 0.0
      %4257 = vmatpush1.msra.mxu0 0.0
      %4258 = vmatprep.subr.mxu0 0.0
      %4259 = vmatpush1.msra.mxu0 0.0
      %4260 = vmatprep.subr.mxu0 0.0
      %4261 = vmatpush1.msra.mxu0 0.0
      %4262 = vmatprep.subr.mxu0 0.0
      %4263 = vmatpush1.msra.mxu0 0.0
      %4264 = vmatprep.subr.mxu0 0.0
      %4265 = vmatpush1.msra.mxu0 0.0
      %4266 = vmatprep.subr.mxu0 0.0
      %4267 = vmatpush1.msra.mxu0 0.0
      %4268 = vmatprep.subr.mxu0 0.0
      %4269 = vmatpush1.msra.mxu0 0.0
      %4270 = vmatprep.subr.mxu0 0.0
      %4271 = vmatpush1.msra.mxu0 0.0
      %4272 = vmatprep.subr.mxu0 0.0
      %4273 = vmatpush1.msra.mxu0 0.0
      %4274 = vmatprep.subr.mxu0 0.0
      %4275 = vmatpush1.msra.mxu0 0.0
      %4276 = vmatprep.subr.mxu0 0.0
      %4277 = vmatpush1.msra.mxu0 0.0
      %4278 = vmatprep.subr.mxu0 0.0
      %4279 = vmatpush1.msra.mxu0 0.0
      %4280 = vmatprep.subr.mxu0 0.0
      %4281 = vmatpush1.msra.mxu0 0.0
      %4282 = vmatprep.subr.mxu0 0.0
      %4283 = vmatpush1.msra.mxu0 0.0
      %4284 = vmatprep.subr.mxu0 0.0
      %4285 = vmatpush1.msra.mxu0 0.0
      %4286 = vmatprep.subr.mxu0 0.0
      %4287 = vmatpush1.msra.mxu0 0.0
      %4288 = vmatprep.subr.mxu0 0.0
      %4289 = vmatpush1.msra.mxu0 0.0
      %4290 = vmatprep.subr.mxu0 0.0
      %4291 = vmatpush1.msra.mxu0 0.0
      %4292 = vmatprep.subr.mxu0 0.0
      %4293 = vmatpush1.msra.mxu0 0.0
      %4294 = vmatprep.subr.mxu0 0.0
      %4295 = vmatpush1.msra.mxu0 0.0
      %4296 = vmatprep.subr.mxu0 0.0
      %4297 = vmatpush1.msra.mxu0 0.0
      %4298 = vmatprep.subr.mxu0 0.0
      %4299 = vmatpush1.msra.mxu0 0.0
      %4300 = vmatprep.subr.mxu0 0.0
      %4301 = vmatpush1.msra.mxu0 0.0
      %4302 = vmatprep.subr.mxu0 0.0
      %4303 = vmatpush1.msra.mxu0 0.0
      %4304 = vmatprep.subr.mxu0 0.0
      %4305 = vmatpush1.msra.mxu0 0.0
      %4306 = vmatprep.subr.mxu0 0.0
      %4307 = vmatpush1.msra.mxu0 0.0
      %4308 = vmatprep.subr.mxu0 0.0
      %4309 = vmatpush1.msra.mxu0 0.0
      %4310 = vmatprep.subr.mxu0 0.0
      %4311 = vmatpush1.msra.mxu0 0.0
      %4312 = vmatprep.mubr.f32.mxu0 0.0
      %4313 = vmatmul.mubr.f32.gmra.mrb[0].mxu0 %v4157
      %v4314 = vpop.f32.mrb[0].mxu0
      %v4315 = vadd.f32 0.0, %v4314
      %v4316 = vpop.f32.mrb[0].mxu0
      %v4317 = vadd.f32 0.0, %v4316
      %4318 = vmatprep.mubr.f32.mxu0 0.0
      %4319 = vmatmul.mubr.f32.gmra.mrb[0].mxu0 %v4160
      %v4320 = vpop.f32.mrb[0].mxu0
      %v4321 = vadd.f32 0.0, %v4320
      %v4322 = vpop.f32.mrb[0].mxu0
      %v4323 = vadd.f32 0.0, %v4322
      %4324 = vmatprep.mubr.f32.mxu0 0.0
      %4325 = vmatmul.mubr.f32.gmra.mrb[0].mxu0 %v4163
      %v4326 = vpop.f32.mrb[0].mxu0
      %v4327 = vadd.f32 0.0, %v4326
      %v4328 = vpop.f32.mrb[0].mxu0
      %v4329 = vadd.f32 0.0, %v4328
      %4330 = vdwg.mxu0
      %4331 = vmatprep.subr.mxu0 %v764
      %4332 = vmatpush1.msra.mxu0 %v763
      %4333 = vmatprep.subr.mxu0 %v772
      %4334 = vmatpush1.msra.mxu0 %v771
      %4335 = vmatprep.subr.mxu0 %v780
      %4336 = vmatpush1.msra.mxu0 %v779
      %4337 = vmatprep.subr.mxu0 %v822
      %4338 = vmatpush1.msra.mxu0 %v819
      %4339 = vmatprep.subr.mxu0 0.0
      %4340 = vmatpush1.msra.mxu0 0.0
      %4341 = vmatprep.subr.mxu0 0.0
      %4342 = vmatpush1.msra.mxu0 0.0
      %4343 = vmatprep.subr.mxu0 0.0
      %4344 = vmatpush1.msra.mxu0 0.0
      %4345 = vmatprep.subr.mxu0 0.0
      %4346 = vmatpush1.msra.mxu0 0.0
      %4347 = vmatprep.subr.mxu0 0.0
      %4348 = vmatpush1.msra.mxu0 0.0
      %4349 = vmatprep.subr.mxu0 0.0
      %4350 = vmatpush1.msra.mxu0 0.0
      %4351 = vmatprep.subr.mxu0 0.0
      %4352 = vmatpush1.msra.mxu0 0.0
      %4353 = vmatprep.subr.mxu0 0.0
      %4354 = vmatpush1.msra.mxu0 0.0
      %4355 = vmatprep.subr.mxu0 0.0
      %4356 = vmatpush1.msra.mxu0 0.0
      %4357 = vmatprep.subr.mxu0 0.0
      %4358 = vmatpush1.msra.mxu0 0.0
      %4359 = vmatprep.subr.mxu0 0.0
      %4360 = vmatpush1.msra.mxu0 0.0
      %4361 = vmatprep.subr.mxu0 0.0
      %4362 = vmatpush1.msra.mxu0 0.0
      %4363 = vmatprep.subr.mxu0 0.0
      %4364 = vmatpush1.msra.mxu0 0.0
      %4365 = vmatprep.subr.mxu0 0.0
      %4366 = vmatpush1.msra.mxu0 0.0
      %4367 = vmatprep.subr.mxu0 0.0
      %4368 = vmatpush1.msra.mxu0 0.0
      %4369 = vmatprep.subr.mxu0 0.0
      %4370 = vmatpush1.msra.mxu0 0.0
      %4371 = vmatprep.subr.mxu0 0.0
      %4372 = vmatpush1.msra.mxu0 0.0
      %4373 = vmatprep.subr.mxu0 0.0
      %4374 = vmatpush1.msra.mxu0 0.0
      %4375 = vmatprep.subr.mxu0 0.0
      %4376 = vmatpush1.msra.mxu0 0.0
      %4377 = vmatprep.subr.mxu0 0.0
      %4378 = vmatpush1.msra.mxu0 0.0
      %4379 = vmatprep.subr.mxu0 0.0
      %4380 = vmatpush1.msra.mxu0 0.0
      %4381 = vmatprep.subr.mxu0 0.0
      %4382 = vmatpush1.msra.mxu0 0.0
      %4383 = vmatprep.subr.mxu0 0.0
      %4384 = vmatpush1.msra.mxu0 0.0
      %4385 = vmatprep.subr.mxu0 0.0
      %4386 = vmatpush1.msra.mxu0 0.0
      %4387 = vmatprep.subr.mxu0 0.0
      %4388 = vmatpush1.msra.mxu0 0.0
      %4389 = vmatprep.subr.mxu0 0.0
      %4390 = vmatpush1.msra.mxu0 0.0
      %4391 = vmatprep.subr.mxu0 0.0
      %4392 = vmatpush1.msra.mxu0 0.0
      %4393 = vmatprep.subr.mxu0 0.0
      %4394 = vmatpush1.msra.mxu0 0.0
      %4395 = vmatprep.mubr.f32.mxu0 0.0
      %4396 = vmatmul.mubr.f32.gmra.mrb[0].mxu0 %v4157
      %v4397 = vpop.f32.mrb[0].mxu0
      %v4398 = vadd.f32 0.0, %v4397
      %v4399 = vpop.f32.mrb[0].mxu0
      %v4400 = vadd.f32 0.0, %v4399
      %4401 = vmatprep.mubr.f32.mxu0 0.0
      %4402 = vmatmul.mubr.f32.gmra.mrb[0].mxu0 %v4160
      %v4403 = vpop.f32.mrb[0].mxu0
      %v4404 = vadd.f32 0.0, %v4403
      %v4405 = vpop.f32.mrb[0].mxu0
      %v4406 = vadd.f32 0.0, %v4405
      %4407 = vmatprep.mubr.f32.mxu0 0.0
      %4408 = vmatmul.mubr.f32.gmra.mrb[0].mxu0 %v4163
      %v4409 = vpop.f32.mrb[0].mxu0
      %v4410 = vadd.f32 0.0, %v4409
      %v4411 = vpop.f32.mrb[0].mxu0
      %v4412 = vadd.f32 0.0, %v4411
      %4413 = vdwg.mxu0
      %4414 = vmatprep.subr.mxu0 %v766
      %4415 = vmatpush1.msra.mxu0 %v765
      %4416 = vmatprep.subr.mxu0 %v774
      %4417 = vmatpush1.msra.mxu0 %v773
      %4418 = vmatprep.subr.mxu0 %v782
      %4419 = vmatpush1.msra.mxu0 %v781
      %4420 = vmatprep.subr.mxu0 %v828
      %4421 = vmatpush1.msra.mxu0 %v825
      %4422 = vmatprep.subr.mxu0 0.0
      %4423 = vmatpush1.msra.mxu0 0.0
      %4424 = vmatprep.subr.mxu0 0.0
      %4425 = vmatpush1.msra.mxu0 0.0
      %4426 = vmatprep.subr.mxu0 0.0
      %4427 = vmatpush1.msra.mxu0 0.0
      %4428 = vmatprep.subr.mxu0 0.0
      %4429 = vmatpush1.msra.mxu0 0.0
      %4430 = vmatprep.subr.mxu0 0.0
      %4431 = vmatpush1.msra.mxu0 0.0
      %4432 = vmatprep.subr.mxu0 0.0
      %4433 = vmatpush1.msra.mxu0 0.0
      %4434 = vmatprep.subr.mxu0 0.0
      %4435 = vmatpush1.msra.mxu0 0.0
      %4436 = vmatprep.subr.mxu0 0.0
      %4437 = vmatpush1.msra.mxu0 0.0
      %4438 = vmatprep.subr.mxu0 0.0
      %4439 = vmatpush1.msra.mxu0 0.0
      %4440 = vmatprep.subr.mxu0 0.0
      %4441 = vmatpush1.msra.mxu0 0.0
      %4442 = vmatprep.subr.mxu0 0.0
      %4443 = vmatpush1.msra.mxu0 0.0
      %4444 = vmatprep.subr.mxu0 0.0
      %4445 = vmatpush1.msra.mxu0 0.0
      %4446 = vmatprep.subr.mxu0 0.0
      %4447 = vmatpush1.msra.mxu0 0.0
      %4448 = vmatprep.subr.mxu0 0.0
      %4449 = vmatpush1.msra.mxu0 0.0
      %4450 = vmatprep.subr.mxu0 0.0
      %4451 = vmatpush1.msra.mxu0 0.0
      %4452 = vmatprep.subr.mxu0 0.0
      %4453 = vmatpush1.msra.mxu0 0.0
      %4454 = vmatprep.subr.mxu0 0.0
      %4455 = vmatpush1.msra.mxu0 0.0
      %4456 = vmatprep.subr.mxu0 0.0
      %4457 = vmatpush1.msra.mxu0 0.0
      %4458 = vmatprep.subr.mxu0 0.0
      %4459 = vmatpush1.msra.mxu0 0.0
      %4460 = vmatprep.subr.mxu0 0.0
      %4461 = vmatpush1.msra.mxu0 0.0
      %4462 = vmatprep.subr.mxu0 0.0
      %4463 = vmatpush1.msra.mxu0 0.0
      %4464 = vmatprep.subr.mxu0 0.0
      %4465 = vmatpush1.msra.mxu0 0.0
      %4466 = vmatprep.subr.mxu0 0.0
      %4467 = vmatpush1.msra.mxu0 0.0
      %4468 = vmatprep.subr.mxu0 0.0
      %4469 = vmatpush1.msra.mxu0 0.0
      %4470 = vmatprep.subr.mxu0 0.0
      %4471 = vmatpush1.msra.mxu0 0.0
      %4472 = vmatprep.subr.mxu0 0.0
      %4473 = vmatpush1.msra.mxu0 0.0
      %4474 = vmatprep.subr.mxu0 0.0
      %4475 = vmatpush1.msra.mxu0 0.0
      %4476 = vmatprep.subr.mxu0 0.0
      %4477 = vmatpush1.msra.mxu0 0.0
      %4478 = vmatprep.mubr.f32.mxu0 0.0
      %4479 = vmatmul.mubr.f32.gmra.mrb[0].mxu0 %v4157
      %v4480 = vpop.f32.mrb[0].mxu0
      %v4481 = vadd.f32 0.0, %v4480
      %v4482 = vpop.f32.mrb[0].mxu0
      %v4483 = vadd.f32 0.0, %v4482
      %4484 = vmatprep.mubr.f32.mxu0 0.0
      %4485 = vmatmul.mubr.f32.gmra.mrb[0].mxu0 %v4160
      %v4486 = vpop.f32.mrb[0].mxu0
      %v4487 = vadd.f32 0.0, %v4486
      %v4488 = vpop.f32.mrb[0].mxu0
      %v4489 = vadd.f32 0.0, %v4488
      %4490 = vmatprep.mubr.f32.mxu0 0.0
      %4491 = vmatmul.mubr.f32.gmra.mrb[0].mxu0 %v4163
      %v4492 = vpop.f32.mrb[0].mxu0
      %v4493 = vadd.f32 0.0, %v4492
      %v4494 = vpop.f32.mrb[0].mxu0
      %v4495 = vadd.f32 0.0, %v4494
      %4496 = vdwg.mxu0
      %v4497 = vadd.f32 %v4128, %v4315
      %v4498 = vadd.f32 %v4129, %v4317
      %v4499 = vadd.f32 %v4130, %v4398
      %v4500 = vadd.f32 %v4131, %v4400
      %v4501 = vadd.f32 %v4132, %v4481
      %v4502 = vadd.f32 %v4133, %v4483
      %v4503 = vadd.f32 %v4134, %v4232
      %v4504 = vadd.f32 %v4135, %v4234
      %v4505 = vadd.f32 %v4136, %v4321
      %v4506 = vadd.f32 %v4137, %v4323
      %v4507 = vadd.f32 %v4138, %v4404
      %v4508 = vadd.f32 %v4139, %v4406
      %v4509 = vadd.f32 %v4140, %v4487
      %v4510 = vadd.f32 %v4141, %v4489
      %v4511 = vadd.f32 %v4142, %v4238
      %v4512 = vadd.f32 %v4143, %v4240
      %v4513 = vadd.f32 %v4144, %v4327
      %v4514 = vadd.f32 %v4145, %v4329
      %v4515 = vadd.f32 %v4146, %v4410
      %v4516 = vadd.f32 %v4147, %v4412
      %v4517 = vadd.f32 %v4148, %v4493
      %v4518 = vadd.f32 %v4149, %v4495
      %v4519 = vadd.f32 %v4150, %v4244
      %v4520 = vadd.f32 %v4151, %v4246
      %s4521 = scalar_lea.vmem %s1, 216
      %v4522 = vld [vmem:[%s4521] sm:$0xff]
      %v4523 = vld [vmem:[%s4521 + $0x8] sm:$0xff]
      %v4524 = vld [vmem:[%s4521 + $0x10] sm:$0xf]
      %v4526 = vsel %vm795, %v4522, 0
      %v4529 = vsel %vm795, %v4523, 0
      %v4532 = vsel %vm795, %v4524, 0
      %4534 = vmatprep.subr.mxu0 %v760
      %4535 = vmatpush1.msra.mxu0 %v759
      %4536 = vmatprep.subr.mxu0 %v768
      %4537 = vmatpush1.msra.mxu0 %v767
      %4538 = vmatprep.subr.mxu0 %v776
      %4539 = vmatpush1.msra.mxu0 %v775
      %4540 = vmatprep.subr.mxu0 %v810
      %4541 = vmatpush1.msra.mxu0 %v807
      %4542 = vmatprep.subr.mxu0 0.0
      %4543 = vmatpush1.msra.mxu0 0.0
      %4544 = vmatprep.subr.mxu0 0.0
      %4545 = vmatpush1.msra.mxu0 0.0
      %4546 = vmatprep.subr.mxu0 0.0
      %4547 = vmatpush1.msra.mxu0 0.0
      %4548 = vmatprep.subr.mxu0 0.0
      %4549 = vmatpush1.msra.mxu0 0.0
      %4550 = vmatprep.subr.mxu0 0.0
      %4551 = vmatpush1.msra.mxu0 0.0
      %4552 = vmatprep.subr.mxu0 0.0
      %4553 = vmatpush1.msra.mxu0 0.0
      %4554 = vmatprep.subr.mxu0 0.0
      %4555 = vmatpush1.msra.mxu0 0.0
      %4556 = vmatprep.subr.mxu0 0.0
      %4557 = vmatpush1.msra.mxu0 0.0
      %4558 = vmatprep.subr.mxu0 0.0
      %4559 = vmatpush1.msra.mxu0 0.0
      %4560 = vmatprep.subr.mxu0 0.0
      %4561 = vmatpush1.msra.mxu0 0.0
      %4562 = vmatprep.subr.mxu0 0.0
      %4563 = vmatpush1.msra.mxu0 0.0
      %4564 = vmatprep.subr.mxu0 0.0
      %4565 = vmatpush1.msra.mxu0 0.0
      %4566 = vmatprep.subr.mxu0 0.0
      %4567 = vmatpush1.msra.mxu0 0.0
      %4568 = vmatprep.subr.mxu0 0.0
      %4569 = vmatpush1.msra.mxu0 0.0
      %4570 = vmatprep.subr.mxu0 0.0
      %4571 = vmatpush1.msra.mxu0 0.0
      %4572 = vmatprep.subr.mxu0 0.0
      %4573 = vmatpush1.msra.mxu0 0.0
      %4574 = vmatprep.subr.mxu0 0.0
      %4575 = vmatpush1.msra.mxu0 0.0
      %4576 = vmatprep.subr.mxu0 0.0
      %4577 = vmatpush1.msra.mxu0 0.0
      %4578 = vmatprep.subr.mxu0 0.0
      %4579 = vmatpush1.msra.mxu0 0.0
      %4580 = vmatprep.subr.mxu0 0.0
      %4581 = vmatpush1.msra.mxu0 0.0
      %4582 = vmatprep.subr.mxu0 0.0
      %4583 = vmatpush1.msra.mxu0 0.0
      %4584 = vmatprep.subr.mxu0 0.0
      %4585 = vmatpush1.msra.mxu0 0.0
      %4586 = vmatprep.subr.mxu0 0.0
      %4587 = vmatpush1.msra.mxu0 0.0
      %4588 = vmatprep.subr.mxu0 0.0
      %4589 = vmatpush1.msra.mxu0 0.0
      %4590 = vmatprep.subr.mxu0 0.0
      %4591 = vmatpush1.msra.mxu0 0.0
      %4592 = vmatprep.subr.mxu0 0.0
      %4593 = vmatpush1.msra.mxu0 0.0
      %4594 = vmatprep.subr.mxu0 0.0
      %4595 = vmatpush1.msra.mxu0 0.0
      %4596 = vmatprep.subr.mxu0 0.0
      %4597 = vmatpush1.msra.mxu0 0.0
      %4598 = vmatprep.mubr.f32.mxu0 0.0
      %4599 = vmatmul.mubr.f32.gmra.mrb[0].mxu0 %v4526
      %v4600 = vpop.f32.mrb[0].mxu0
      %v4601 = vadd.f32 0.0, %v4600
      %v4602 = vpop.f32.mrb[0].mxu0
      %v4603 = vadd.f32 0.0, %v4602
      %4604 = vmatprep.mubr.f32.mxu0 0.0
      %4605 = vmatmul.mubr.f32.gmra.mrb[0].mxu0 %v4529
      %v4606 = vpop.f32.mrb[0].mxu0
      %v4607 = vadd.f32 0.0, %v4606
      %v4608 = vpop.f32.mrb[0].mxu0
      %v4609 = vadd.f32 0.0, %v4608
      %4610 = vmatprep.mubr.f32.mxu0 0.0
      %4611 = vmatmul.mubr.f32.gmra.mrb[0].mxu0 %v4532
      %v4612 = vpop.f32.mrb[0].mxu0
      %v4613 = vadd.f32 0.0, %v4612
      %v4614 = vpop.f32.mrb[0].mxu0
      %v4615 = vadd.f32 0.0, %v4614
      %4616 = vdwg.mxu0
      %4617 = vmatprep.subr.mxu0 %v762
      %4618 = vmatpush1.msra.mxu0 %v761
      %4619 = vmatprep.subr.mxu0 %v770
      %4620 = vmatpush1.msra.mxu0 %v769
      %4621 = vmatprep.subr.mxu0 %v778
      %4622 = vmatpush1.msra.mxu0 %v777
      %4623 = vmatprep.subr.mxu0 %v816
      %4624 = vmatpush1.msra.mxu0 %v813
      %4625 = vmatprep.subr.mxu0 0.0
      %4626 = vmatpush1.msra.mxu0 0.0
      %4627 = vmatprep.subr.mxu0 0.0
      %4628 = vmatpush1.msra.mxu0 0.0
      %4629 = vmatprep.subr.mxu0 0.0
      %4630 = vmatpush1.msra.mxu0 0.0
      %4631 = vmatprep.subr.mxu0 0.0
      %4632 = vmatpush1.msra.mxu0 0.0
      %4633 = vmatprep.subr.mxu0 0.0
      %4634 = vmatpush1.msra.mxu0 0.0
      %4635 = vmatprep.subr.mxu0 0.0
      %4636 = vmatpush1.msra.mxu0 0.0
      %4637 = vmatprep.subr.mxu0 0.0
      %4638 = vmatpush1.msra.mxu0 0.0
      %4639 = vmatprep.subr.mxu0 0.0
      %4640 = vmatpush1.msra.mxu0 0.0
      %4641 = vmatprep.subr.mxu0 0.0
      %4642 = vmatpush1.msra.mxu0 0.0
      %4643 = vmatprep.subr.mxu0 0.0
      %4644 = vmatpush1.msra.mxu0 0.0
      %4645 = vmatprep.subr.mxu0 0.0
      %4646 = vmatpush1.msra.mxu0 0.0
      %4647 = vmatprep.subr.mxu0 0.0
      %4648 = vmatpush1.msra.mxu0 0.0
      %4649 = vmatprep.subr.mxu0 0.0
      %4650 = vmatpush1.msra.mxu0 0.0
      %4651 = vmatprep.subr.mxu0 0.0
      %4652 = vmatpush1.msra.mxu0 0.0
      %4653 = vmatprep.subr.mxu0 0.0
      %4654 = vmatpush1.msra.mxu0 0.0
      %4655 = vmatprep.subr.mxu0 0.0
      %4656 = vmatpush1.msra.mxu0 0.0
      %4657 = vmatprep.subr.mxu0 0.0
      %4658 = vmatpush1.msra.mxu0 0.0
      %4659 = vmatprep.subr.mxu0 0.0
      %4660 = vmatpush1.msra.mxu0 0.0
      %4661 = vmatprep.subr.mxu0 0.0
      %4662 = vmatpush1.msra.mxu0 0.0
      %4663 = vmatprep.subr.mxu0 0.0
      %4664 = vmatpush1.msra.mxu0 0.0
      %4665 = vmatprep.subr.mxu0 0.0
      %4666 = vmatpush1.msra.mxu0 0.0
      %4667 = vmatprep.subr.mxu0 0.0
      %4668 = vmatpush1.msra.mxu0 0.0
      %4669 = vmatprep.subr.mxu0 0.0
      %4670 = vmatpush1.msra.mxu0 0.0
      %4671 = vmatprep.subr.mxu0 0.0
      %4672 = vmatpush1.msra.mxu0 0.0
      %4673 = vmatprep.subr.mxu0 0.0
      %4674 = vmatpush1.msra.mxu0 0.0
      %4675 = vmatprep.subr.mxu0 0.0
      %4676 = vmatpush1.msra.mxu0 0.0
      %4677 = vmatprep.subr.mxu0 0.0
      %4678 = vmatpush1.msra.mxu0 0.0
      %4679 = vmatprep.subr.mxu0 0.0
      %4680 = vmatpush1.msra.mxu0 0.0
      %4681 = vmatprep.mubr.f32.mxu0 0.0
      %4682 = vmatmul.mubr.f32.gmra.mrb[0].mxu0 %v4526
      %v4683 = vpop.f32.mrb[0].mxu0
      %v4684 = vadd.f32 0.0, %v4683
      %v4685 = vpop.f32.mrb[0].mxu0
      %v4686 = vadd.f32 0.0, %v4685
      %4687 = vmatprep.mubr.f32.mxu0 0.0
      %4688 = vmatmul.mubr.f32.gmra.mrb[0].mxu0 %v4529
      %v4689 = vpop.f32.mrb[0].mxu0
      %v4690 = vadd.f32 0.0, %v4689
      %v4691 = vpop.f32.mrb[0].mxu0
      %v4692 = vadd.f32 0.0, %v4691
      %4693 = vmatprep.mubr.f32.mxu0 0.0
      %4694 = vmatmul.mubr.f32.gmra.mrb[0].mxu0 %v4532
      %v4695 = vpop.f32.mrb[0].mxu0
      %v4696 = vadd.f32 0.0, %v4695
      %v4697 = vpop.f32.mrb[0].mxu0
      %v4698 = vadd.f32 0.0, %v4697
      %4699 = vdwg.mxu0
      %4700 = vmatprep.subr.mxu0 %v764
      %4701 = vmatpush1.msra.mxu0 %v763
      %4702 = vmatprep.subr.mxu0 %v772
      %4703 = vmatpush1.msra.mxu0 %v771
      %4704 = vmatprep.subr.mxu0 %v780
      %4705 = vmatpush1.msra.mxu0 %v779
      %4706 = vmatprep.subr.mxu0 %v822
      %4707 = vmatpush1.msra.mxu0 %v819
      %4708 = vmatprep.subr.mxu0 0.0
      %4709 = vmatpush1.msra.mxu0 0.0
      %4710 = vmatprep.subr.mxu0 0.0
      %4711 = vmatpush1.msra.mxu0 0.0
      %4712 = vmatprep.subr.mxu0 0.0
      %4713 = vmatpush1.msra.mxu0 0.0
      %4714 = vmatprep.subr.mxu0 0.0
      %4715 = vmatpush1.msra.mxu0 0.0
      %4716 = vmatprep.subr.mxu0 0.0
      %4717 = vmatpush1.msra.mxu0 0.0
      %4718 = vmatprep.subr.mxu0 0.0
      %4719 = vmatpush1.msra.mxu0 0.0
      %4720 = vmatprep.subr.mxu0 0.0
      %4721 = vmatpush1.msra.mxu0 0.0
      %4722 = vmatprep.subr.mxu0 0.0
      %4723 = vmatpush1.msra.mxu0 0.0
      %4724 = vmatprep.subr.mxu0 0.0
      %4725 = vmatpush1.msra.mxu0 0.0
      %4726 = vmatprep.subr.mxu0 0.0
      %4727 = vmatpush1.msra.mxu0 0.0
      %4728 = vmatprep.subr.mxu0 0.0
      %4729 = vmatpush1.msra.mxu0 0.0
      %4730 = vmatprep.subr.mxu0 0.0
      %4731 = vmatpush1.msra.mxu0 0.0
      %4732 = vmatprep.subr.mxu0 0.0
      %4733 = vmatpush1.msra.mxu0 0.0
      %4734 = vmatprep.subr.mxu0 0.0
      %4735 = vmatpush1.msra.mxu0 0.0
      %4736 = vmatprep.subr.mxu0 0.0
      %4737 = vmatpush1.msra.mxu0 0.0
      %4738 = vmatprep.subr.mxu0 0.0
      %4739 = vmatpush1.msra.mxu0 0.0
      %4740 = vmatprep.subr.mxu0 0.0
      %4741 = vmatpush1.msra.mxu0 0.0
      %4742 = vmatprep.subr.mxu0 0.0
      %4743 = vmatpush1.msra.mxu0 0.0
      %4744 = vmatprep.subr.mxu0 0.0
      %4745 = vmatpush1.msra.mxu0 0.0
      %4746 = vmatprep.subr.mxu0 0.0
      %4747 = vmatpush1.msra.mxu0 0.0
      %4748 = vmatprep.subr.mxu0 0.0
      %4749 = vmatpush1.msra.mxu0 0.0
      %4750 = vmatprep.subr.mxu0 0.0
      %4751 = vmatpush1.msra.mxu0 0.0
      %4752 = vmatprep.subr.mxu0 0.0
      %4753 = vmatpush1.msra.mxu0 0.0
      %4754 = vmatprep.subr.mxu0 0.0
      %4755 = vmatpush1.msra.mxu0 0.0
      %4756 = vmatprep.subr.mxu0 0.0
      %4757 = vmatpush1.msra.mxu0 0.0
      %4758 = vmatprep.subr.mxu0 0.0
      %4759 = vmatpush1.msra.mxu0 0.0
      %4760 = vmatprep.subr.mxu0 0.0
      %4761 = vmatpush1.msra.mxu0 0.0
      %4762 = vmatprep.subr.mxu0 0.0
      %4763 = vmatpush1.msra.mxu0 0.0
      %4764 = vmatprep.mubr.f32.mxu0 0.0
      %4765 = vmatmul.mubr.f32.gmra.mrb[0].mxu0 %v4526
      %v4766 = vpop.f32.mrb[0].mxu0
      %v4767 = vadd.f32 0.0, %v4766
      %v4768 = vpop.f32.mrb[0].mxu0
      %v4769 = vadd.f32 0.0, %v4768
      %4770 = vmatprep.mubr.f32.mxu0 0.0
      %4771 = vmatmul.mubr.f32.gmra.mrb[0].mxu0 %v4529
      %v4772 = vpop.f32.mrb[0].mxu0
      %v4773 = vadd.f32 0.0, %v4772
      %v4774 = vpop.f32.mrb[0].mxu0
      %v4775 = vadd.f32 0.0, %v4774
      %4776 = vmatprep.mubr.f32.mxu0 0.0
      %4777 = vmatmul.mubr.f32.gmra.mrb[0].mxu0 %v4532
      %v4778 = vpop.f32.mrb[0].mxu0
      %v4779 = vadd.f32 0.0, %v4778
      %v4780 = vpop.f32.mrb[0].mxu0
      %v4781 = vadd.f32 0.0, %v4780
      %4782 = vdwg.mxu0
      %4783 = vmatprep.subr.mxu0 %v766
      %4784 = vmatpush1.msra.mxu0 %v765
      %4785 = vmatprep.subr.mxu0 %v774
      %4786 = vmatpush1.msra.mxu0 %v773
      %4787 = vmatprep.subr.mxu0 %v782
      %4788 = vmatpush1.msra.mxu0 %v781
      %4789 = vmatprep.subr.mxu0 %v828
      %4790 = vmatpush1.msra.mxu0 %v825
      %4791 = vmatprep.subr.mxu0 0.0
      %4792 = vmatpush1.msra.mxu0 0.0
      %4793 = vmatprep.subr.mxu0 0.0
      %4794 = vmatpush1.msra.mxu0 0.0
      %4795 = vmatprep.subr.mxu0 0.0
      %4796 = vmatpush1.msra.mxu0 0.0
      %4797 = vmatprep.subr.mxu0 0.0
      %4798 = vmatpush1.msra.mxu0 0.0
      %4799 = vmatprep.subr.mxu0 0.0
      %4800 = vmatpush1.msra.mxu0 0.0
      %4801 = vmatprep.subr.mxu0 0.0
      %4802 = vmatpush1.msra.mxu0 0.0
      %4803 = vmatprep.subr.mxu0 0.0
      %4804 = vmatpush1.msra.mxu0 0.0
      %4805 = vmatprep.subr.mxu0 0.0
      %4806 = vmatpush1.msra.mxu0 0.0
      %4807 = vmatprep.subr.mxu0 0.0
      %4808 = vmatpush1.msra.mxu0 0.0
      %4809 = vmatprep.subr.mxu0 0.0
      %4810 = vmatpush1.msra.mxu0 0.0
      %4811 = vmatprep.subr.mxu0 0.0
      %4812 = vmatpush1.msra.mxu0 0.0
      %4813 = vmatprep.subr.mxu0 0.0
      %4814 = vmatpush1.msra.mxu0 0.0
      %4815 = vmatprep.subr.mxu0 0.0
      %4816 = vmatpush1.msra.mxu0 0.0
      %4817 = vmatprep.subr.mxu0 0.0
      %4818 = vmatpush1.msra.mxu0 0.0
      %4819 = vmatprep.subr.mxu0 0.0
      %4820 = vmatpush1.msra.mxu0 0.0
      %4821 = vmatprep.subr.mxu0 0.0
      %4822 = vmatpush1.msra.mxu0 0.0
      %4823 = vmatprep.subr.mxu0 0.0
      %4824 = vmatpush1.msra.mxu0 0.0
      %4825 = vmatprep.subr.mxu0 0.0
      %4826 = vmatpush1.msra.mxu0 0.0
      %4827 = vmatprep.subr.mxu0 0.0
      %4828 = vmatpush1.msra.mxu0 0.0
      %4829 = vmatprep.subr.mxu0 0.0
      %4830 = vmatpush1.msra.mxu0 0.0
      %4831 = vmatprep.subr.mxu0 0.0
      %4832 = vmatpush1.msra.mxu0 0.0
      %4833 = vmatprep.subr.mxu0 0.0
      %4834 = vmatpush1.msra.mxu0 0.0
      %4835 = vmatprep.subr.mxu0 0.0
      %4836 = vmatpush1.msra.mxu0 0.0
      %4837 = vmatprep.subr.mxu0 0.0
      %4838 = vmatpush1.msra.mxu0 0.0
      %4839 = vmatprep.subr.mxu0 0.0
      %4840 = vmatpush1.msra.mxu0 0.0
      %4841 = vmatprep.subr.mxu0 0.0
      %4842 = vmatpush1.msra.mxu0 0.0
      %4843 = vmatprep.subr.mxu0 0.0
      %4844 = vmatpush1.msra.mxu0 0.0
      %4845 = vmatprep.subr.mxu0 0.0
      %4846 = vmatpush1.msra.mxu0 0.0
      %4847 = vmatprep.mubr.f32.mxu0 0.0
      %4848 = vmatmul.mubr.f32.gmra.mrb[0].mxu0 %v4526
      %v4849 = vpop.f32.mrb[0].mxu0
      %v4850 = vadd.f32 0.0, %v4849
      %v4851 = vpop.f32.mrb[0].mxu0
      %v4852 = vadd.f32 0.0, %v4851
      %4853 = vmatprep.mubr.f32.mxu0 0.0
      %4854 = vmatmul.mubr.f32.gmra.mrb[0].mxu0 %v4529
      %v4855 = vpop.f32.mrb[0].mxu0
      %v4856 = vadd.f32 0.0, %v4855
      %v4857 = vpop.f32.mrb[0].mxu0
      %v4858 = vadd.f32 0.0, %v4857
      %4859 = vmatprep.mubr.f32.mxu0 0.0
      %4860 = vmatmul.mubr.f32.gmra.mrb[0].mxu0 %v4532
      %v4861 = vpop.f32.mrb[0].mxu0
      %v4862 = vadd.f32 0.0, %v4861
      %v4863 = vpop.f32.mrb[0].mxu0
      %v4864 = vadd.f32 0.0, %v4863
      %4865 = vdwg.mxu0
      %4866 = vrot.lane.b32.xlu0 %v4601, 96
      %v4867 = vpop.permute.xlu0 %4866
      %4868 = vrot.lane.b32.xlu0 %v4607, 96
      %v4869 = vpop.permute.xlu0 %4868
      %4870 = vrot.lane.b32.xlu0 %v4613, 96
      %v4871 = vpop.permute.xlu0 %4870
      %4872 = vrot.lane.b32.xlu0 %v4603, 96
      %v4873 = vpop.permute.xlu0 %4872
      %4874 = vrot.lane.b32.xlu0 %v4609, 96
      %v4875 = vpop.permute.xlu0 %4874
      %4876 = vrot.lane.b32.xlu0 %v4615, 96
      %v4877 = vpop.permute.xlu0 %4876
      %4878 = vrot.lane.b32.xlu0 %v4684, 96
      %v4879 = vpop.permute.xlu0 %4878
      %4880 = vrot.lane.b32.xlu0 %v4690, 96
      %v4881 = vpop.permute.xlu0 %4880
      %4882 = vrot.lane.b32.xlu0 %v4696, 96
      %v4883 = vpop.permute.xlu0 %4882
      %4884 = vrot.lane.b32.xlu0 %v4686, 96
      %v4885 = vpop.permute.xlu0 %4884
      %4886 = vrot.lane.b32.xlu0 %v4692, 96
      %v4887 = vpop.permute.xlu0 %4886
      %4888 = vrot.lane.b32.xlu0 %v4698, 96
      %v4889 = vpop.permute.xlu0 %4888
      %4890 = vrot.lane.b32.xlu0 %v4767, 96
      %v4891 = vpop.permute.xlu0 %4890
      %4892 = vrot.lane.b32.xlu0 %v4773, 96
      %v4893 = vpop.permute.xlu0 %4892
      %4894 = vrot.lane.b32.xlu0 %v4779, 96
      %v4895 = vpop.permute.xlu0 %4894
      %4896 = vrot.lane.b32.xlu0 %v4769, 96
      %v4897 = vpop.permute.xlu0 %4896
      %4898 = vrot.lane.b32.xlu0 %v4775, 96
      %v4899 = vpop.permute.xlu0 %4898
      %4900 = vrot.lane.b32.xlu0 %v4781, 96
      %v4901 = vpop.permute.xlu0 %4900
      %4902 = vrot.lane.b32.xlu0 %v4850, 96
      %v4903 = vpop.permute.xlu0 %4902
      %4904 = vrot.lane.b32.xlu0 %v4856, 96
      %v4905 = vpop.permute.xlu0 %4904
      %4906 = vrot.lane.b32.xlu0 %v4862, 96
      %v4907 = vpop.permute.xlu0 %4906
      %4908 = vrot.lane.b32.xlu0 %v4852, 96
      %v4909 = vpop.permute.xlu0 %4908
      %4910 = vrot.lane.b32.xlu0 %v4858, 96
      %v4911 = vpop.permute.xlu0 %4910
      %4912 = vrot.lane.b32.xlu0 %v4864, 96
      %v4913 = vpop.permute.xlu0 %4912
      %v4914 = vsel %vm1210, %v4903, %v4909
      %v4915 = vsel %vm1210, %v4905, %v4911
      %v4916 = vsel %vm1210, %v4907, %v4913
      %v4917 = vsel %vm1210, %v4897, %v4903
      %v4918 = vsel %vm1210, %v4899, %v4905
      %v4919 = vsel %vm1210, %v4901, %v4907
      %v4920 = vsel %vm1210, %v4891, %v4897
      %v4921 = vsel %vm1210, %v4893, %v4899
      %v4922 = vsel %vm1210, %v4895, %v4901
      %v4923 = vsel %vm1210, %v4885, %v4891
      %v4924 = vsel %vm1210, %v4887, %v4893
      %v4925 = vsel %vm1210, %v4889, %v4895
      %v4926 = vsel %vm1210, %v4879, %v4885
      %v4927 = vsel %vm1210, %v4881, %v4887
      %v4928 = vsel %vm1210, %v4883, %v4889
      %v4929 = vsel %vm1210, %v4873, %v4879
      %v4930 = vsel %vm1210, %v4875, %v4881
      %v4931 = vsel %vm1210, %v4877, %v4883
      %v4932 = vsel %vm1210, %v4867, %v4873
      %v4933 = vsel %vm1210, %v4869, %v4875
      %v4934 = vsel %vm1210, %v4871, %v4877
      %v4935 = vsel %vm1210, %v4909, %v4867
      %v4936 = vsel %vm1210, %v4911, %v4869
      %v4937 = vsel %vm1210, %v4913, %v4871
      %v4938 = vadd.f32 %v4497, %v4926
      %v4939 = vadd.f32 %v4498, %v4923
      %v4940 = vadd.f32 %v4499, %v4920
      %v4941 = vadd.f32 %v4500, %v4917
      %v4942 = vadd.f32 %v4501, %v4914
      %v4943 = vadd.f32 %v4502, %v4935
      %v4944 = vadd.f32 %v4503, %v4932
      %v4945 = vadd.f32 %v4504, %v4929
      %v4946 = vadd.f32 %v4505, %v4927
      %v4947 = vadd.f32 %v4506, %v4924
      %v4948 = vadd.f32 %v4507, %v4921
      %v4949 = vadd.f32 %v4508, %v4918
      %v4950 = vadd.f32 %v4509, %v4915
      %v4951 = vadd.f32 %v4510, %v4936
      %v4952 = vadd.f32 %v4511, %v4933
      %v4953 = vadd.f32 %v4512, %v4930
      %v4954 = vadd.f32 %v4513, %v4928
      %v4955 = vadd.f32 %v4514, %v4925
      %v4956 = vadd.f32 %v4515, %v4922
      %v4957 = vadd.f32 %v4516, %v4919
      %v4958 = vadd.f32 %v4517, %v4916
      %v4959 = vadd.f32 %v4518, %v4937
      %v4960 = vadd.f32 %v4519, %v4934
      %v4961 = vadd.f32 %v4520, %v4931
      %v4962 = vld [vmem:[%s2] sm:$0xff]
      %v4963 = vld [vmem:[%s2 + $0x8] sm:$0xff]
      %v4964 = vld [vmem:[%s2 + $0x10] sm:$0xf]
      %4966 = vset.pattern.permute.xlu0 0
      %4967 = vperm.xlu0 %4966, %v4962
      %v4968 = vpop.permute.xlu0 %4967
      %4971 = vset.pattern.permute.xlu0 0
      %4972 = vperm.xlu0 %4971, %v4963
      %v4973 = vpop.permute.xlu0 %4972
      %4976 = vset.pattern.permute.xlu0 0
      %4977 = vperm.xlu0 %4976, %v4964
      %v4978 = vpop.permute.xlu0 %4977
      %v4980 = vadd.f32 %v4938, %v4968
      %v4981 = vadd.f32 %v4939, %v4968
      %v4982 = vadd.f32 %v4940, %v4968
      %v4983 = vadd.f32 %v4941, %v4968
      %v4984 = vadd.f32 %v4942, %v4968
      %v4985 = vadd.f32 %v4943, %v4968
      %v4986 = vadd.f32 %v4944, %v4968
      %v4987 = vadd.f32 %v4945, %v4968
      %v4988 = vadd.f32 %v4946, %v4973
      %v4989 = vadd.f32 %v4947, %v4973
      %v4990 = vadd.f32 %v4948, %v4973
      %v4991 = vadd.f32 %v4949, %v4973
      %v4992 = vadd.f32 %v4950, %v4973
      %v4993 = vadd.f32 %v4951, %v4973
      %v4994 = vadd.f32 %v4952, %v4973
      %v4995 = vadd.f32 %v4953, %v4973
      %v4996 = vadd.f32 %v4954, %v4978
      %v4997 = vadd.f32 %v4955, %v4978
      %v4998 = vadd.f32 %v4956, %v4978
      %v4999 = vadd.f32 %v4957, %v4978
      %v5000 = vadd.f32 %v4958, %v4978
      %v5001 = vadd.f32 %v4959, %v4978
      %v5002 = vadd.f32 %v4960, %v4978
      %v5003 = vadd.f32 %v4961, %v4978
      %v5004 = vmax.f32 %v4980, 0.0
      %v5005 = vmax.f32 %v4981, 0.0
      %v5006 = vmax.f32 %v4982, 0.0
      %v5007 = vmax.f32 %v4983, 0.0
      %v5008 = vmax.f32 %v4984, 0.0
      %v5009 = vmax.f32 %v4985, 0.0
      %v5010 = vmax.f32 %v4986, 0.0
      %v5011 = vmax.f32 %v4987, 0.0
      %v5012 = vmax.f32 %v4988, 0.0
      %v5013 = vmax.f32 %v4989, 0.0
      %v5014 = vmax.f32 %v4990, 0.0
      %v5015 = vmax.f32 %v4991, 0.0
      %v5016 = vmax.f32 %v4992, 0.0
      %v5017 = vmax.f32 %v4993, 0.0
      %v5018 = vmax.f32 %v4994, 0.0
      %v5019 = vmax.f32 %v4995, 0.0
      %v5020 = vmax.f32 %v4996, 0.0
      %v5021 = vmax.f32 %v4997, 0.0
      %v5022 = vmax.f32 %v4998, 0.0
      %v5023 = vmax.f32 %v4999, 0.0
      %v5024 = vmax.f32 %v5000, 0.0
      %v5025 = vmax.f32 %v5001, 0.0
      %v5026 = vmax.f32 %v5002, 0.0
      %v5027 = vmax.f32 %v5003, 0.0
      %5028 = vst [vmem:[#allocation3] sm:$0xff] %v5004
      %5029 = vst [vmem:[#allocation3 + $0x8] sm:$0xff] %v5005
      %5030 = vst [vmem:[#allocation3 + $0x10] sm:$0xff] %v5006
      %5031 = vst [vmem:[#allocation3 + $0x18] sm:$0xff] %v5007
      %5032 = vst [vmem:[#allocation3 + $0x20] sm:$0xff] %v5008
      %5033 = vst [vmem:[#allocation3 + $0x28] sm:$0xff] %v5009
      %5034 = vst [vmem:[#allocation3 + $0x30] sm:$0xff] %v5010
      %5035 = vst [vmem:[#allocation3 + $0x38] sm:$0xff] %v5011
      %5036 = vst [vmem:[#allocation3 + $0x40] sm:$0xff] %v5012
      %5037 = vst [vmem:[#allocation3 + $0x48] sm:$0xff] %v5013
      %5038 = vst [vmem:[#allocation3 + $0x50] sm:$0xff] %v5014
      %5039 = vst [vmem:[#allocation3 + $0x58] sm:$0xff] %v5015
      %5040 = vst [vmem:[#allocation3 + $0x60] sm:$0xff] %v5016
      %5041 = vst [vmem:[#allocation3 + $0x68] sm:$0xff] %v5017
      %5042 = vst [vmem:[#allocation3 + $0x70] sm:$0xff] %v5018
      %5043 = vst [vmem:[#allocation3 + $0x78] sm:$0xff] %v5019
      %5044 = vst [vmem:[#allocation3 + $0x80] sm:$0xf] %v5020
      %5045 = vst [vmem:[#allocation3 + $0x88] sm:$0xf] %v5021
      %5046 = vst [vmem:[#allocation3 + $0x90] sm:$0xf] %v5022
      %5047 = vst [vmem:[#allocation3 + $0x98] sm:$0xf] %v5023
      %5048 = vst [vmem:[#allocation3 + $0xa0] sm:$0xf] %v5024
      %5049 = vst [vmem:[#allocation3 + $0xa8] sm:$0xf] %v5025
      %5050 = vst [vmem:[#allocation3 + $0xb0] sm:$0xf] %v5026
      %5051 = vst [vmem:[#allocation3 + $0xb8] sm:$0xf] %v5027
      %5052 = vrot.lane.b32.xlu0 %v5004, 127
      %v5053 = vpop.permute.xlu0 %5052
      %5054 = vrot.lane.b32.xlu0 %v5012, 127
      %v5055 = vpop.permute.xlu0 %5054
      %5056 = vrot.lane.b32.xlu0 %v5020, 127
      %v5057 = vpop.permute.xlu0 %5056
      %5058 = vrot.lane.b32.xlu0 %v5005, 127
      %v5059 = vpop.permute.xlu0 %5058
      %5060 = vrot.lane.b32.xlu0 %v5013, 127
      %v5061 = vpop.permute.xlu0 %5060
      %5062 = vrot.lane.b32.xlu0 %v5021, 127
      %v5063 = vpop.permute.xlu0 %5062
      %5064 = vrot.lane.b32.xlu0 %v5006, 127
      %v5065 = vpop.permute.xlu0 %5064
      %5066 = vrot.lane.b32.xlu0 %v5014, 127
      %v5067 = vpop.permute.xlu0 %5066
      %5068 = vrot.lane.b32.xlu0 %v5022, 127
      %v5069 = vpop.permute.xlu0 %5068
      %5070 = vrot.lane.b32.xlu0 %v5007, 127
      %v5071 = vpop.permute.xlu0 %5070
      %5072 = vrot.lane.b32.xlu0 %v5015, 127
      %v5073 = vpop.permute.xlu0 %5072
      %5074 = vrot.lane.b32.xlu0 %v5023, 127
      %v5075 = vpop.permute.xlu0 %5074
      %5076 = vrot.lane.b32.xlu0 %v5008, 127
      %v5077 = vpop.permute.xlu0 %5076
      %5078 = vrot.lane.b32.xlu0 %v5016, 127
      %v5079 = vpop.permute.xlu0 %5078
      %5080 = vrot.lane.b32.xlu0 %v5024, 127
      %v5081 = vpop.permute.xlu0 %5080
      %5082 = vrot.lane.b32.xlu0 %v5009, 127
      %v5083 = vpop.permute.xlu0 %5082
      %5084 = vrot.lane.b32.xlu0 %v5017, 127
      %v5085 = vpop.permute.xlu0 %5084
      %5086 = vrot.lane.b32.xlu0 %v5025, 127
      %v5087 = vpop.permute.xlu0 %5086
      %5088 = vrot.lane.b32.xlu0 %v5010, 127
      %v5089 = vpop.permute.xlu0 %5088
      %5090 = vrot.lane.b32.xlu0 %v5018, 127
      %v5091 = vpop.permute.xlu0 %5090
      %5092 = vrot.lane.b32.xlu0 %v5026, 127
      %v5093 = vpop.permute.xlu0 %5092
      %5094 = vrot.lane.b32.xlu0 %v5011, 127
      %v5095 = vpop.permute.xlu0 %5094
      %5096 = vrot.lane.b32.xlu0 %v5019, 127
      %v5097 = vpop.permute.xlu0 %5096
      %5098 = vrot.lane.b32.xlu0 %v5027, 127
      %v5099 = vpop.permute.xlu0 %5098
      %v5100 = vsel %vm267, %v5089, %v5095
      %v5101 = vsel %vm267, %v5091, %v5097
      %v5102 = vsel %vm267, %v5093, %v5099
      %v5103 = vsel %vm267, %v5083, %v5089
      %v5104 = vsel %vm267, %v5085, %v5091
      %v5105 = vsel %vm267, %v5087, %v5093
      %v5106 = vsel %vm267, %v5077, %v5083
      %v5107 = vsel %vm267, %v5079, %v5085
      %v5108 = vsel %vm267, %v5081, %v5087
      %v5109 = vsel %vm267, %v5071, %v5077
      %v5110 = vsel %vm267, %v5073, %v5079
      %v5111 = vsel %vm267, %v5075, %v5081
      %v5112 = vsel %vm267, %v5065, %v5071
      %v5113 = vsel %vm267, %v5067, %v5073
      %v5114 = vsel %vm267, %v5069, %v5075
      %v5115 = vsel %vm267, %v5059, %v5065
      %v5116 = vsel %vm267, %v5061, %v5067
      %v5117 = vsel %vm267, %v5063, %v5069
      %v5118 = vsel %vm267, %v5053, %v5059
      %v5119 = vsel %vm267, %v5055, %v5061
      %v5120 = vsel %vm267, %v5057, %v5063
      %v5121 = vsel %vm267, %v5095, %v5053
      %v5122 = vsel %vm267, %v5097, %v5055
      %v5123 = vsel %vm267, %v5099, %v5057
      %vm5148 = vcmask 1043456
      %v5149 = vrot.slane %v5118, 4
      %v5150 = vrot.slane %v5115, 4
      %v5151 = vrot.slane %v5112, 4
      %v5152 = vrot.slane %v5109, 4
      %v5153 = vrot.slane %v5106, 4
      %v5154 = vrot.slane %v5103, 4
      %v5155 = vrot.slane %v5100, 4
      %v5156 = vrot.slane %v5121, 4
      %v5157 = vrot.slane %v5119, 4
      %v5158 = vsel %vm5148, %v5149, %v5157
      %v5159 = vrot.slane %v5116, 4
      %v5160 = vsel %vm5148, %v5150, %v5159
      %v5161 = vrot.slane %v5113, 4
      %v5162 = vsel %vm5148, %v5151, %v5161
      %v5163 = vrot.slane %v5110, 4
      %v5164 = vsel %vm5148, %v5152, %v5163
      %v5165 = vrot.slane %v5107, 4
      %v5166 = vsel %vm5148, %v5153, %v5165
      %v5167 = vrot.slane %v5104, 4
      %v5168 = vsel %vm5148, %v5154, %v5167
      %v5169 = vrot.slane %v5101, 4
      %v5170 = vsel %vm5148, %v5155, %v5169
      %v5171 = vrot.slane %v5122, 4
      %v5172 = vsel %vm5148, %v5156, %v5171
      %v5173 = vrot.slane %v5120, 4
      %v5174 = vsel %vm5148, %v5157, %v5173
      %v5175 = vrot.slane %v5117, 4
      %v5176 = vsel %vm5148, %v5159, %v5175
      %v5177 = vrot.slane %v5114, 4
      %v5178 = vsel %vm5148, %v5161, %v5177
      %v5179 = vrot.slane %v5111, 4
      %v5180 = vsel %vm5148, %v5163, %v5179
      %v5181 = vrot.slane %v5108, 4
      %v5182 = vsel %vm5148, %v5165, %v5181
      %v5183 = vrot.slane %v5105, 4
      %v5184 = vsel %vm5148, %v5167, %v5183
      %v5185 = vrot.slane %v5102, 4
      %v5186 = vsel %vm5148, %v5169, %v5185
      %v5187 = vrot.slane %v5123, 4
      %v5188 = vsel %vm5148, %v5171, %v5187
      %5213 = vst [vmem:[#allocation3 + $0x80] sm:$0xf0] %v5149
      %5214 = vst [vmem:[#allocation3 + $0x88] sm:$0xf0] %v5150
      %5215 = vst [vmem:[#allocation3 + $0x90] sm:$0xf0] %v5151
      %5216 = vst [vmem:[#allocation3 + $0x98] sm:$0xf0] %v5152
      %5217 = vst [vmem:[#allocation3 + $0xa0] sm:$0xf0] %v5153
      %5218 = vst [vmem:[#allocation3 + $0xa8] sm:$0xf0] %v5154
      %5219 = vst [vmem:[#allocation3 + $0xb0] sm:$0xf0] %v5155
      %5220 = vst [vmem:[#allocation3 + $0xb8] sm:$0xf0] %v5156
      %5221 = vst [vmem:[#allocation3 + $0xc0] sm:$0xff] %v5158
      %5222 = vst [vmem:[#allocation3 + $0xc8] sm:$0xff] %v5160
      %5223 = vst [vmem:[#allocation3 + $0xd0] sm:$0xff] %v5162
      %5224 = vst [vmem:[#allocation3 + $0xd8] sm:$0xff] %v5164
      %5225 = vst [vmem:[#allocation3 + $0xe0] sm:$0xff] %v5166
      %5226 = vst [vmem:[#allocation3 + $0xe8] sm:$0xff] %v5168
      %5227 = vst [vmem:[#allocation3 + $0xf0] sm:$0xff] %v5170
      %5228 = vst [vmem:[#allocation3 + $0xf8] sm:$0xff] %v5172
      %5229 = vst [vmem:[#allocation3 + $0x100] sm:$0xff] %v5174
      %5230 = vst [vmem:[#allocation3 + $0x108] sm:$0xff] %v5176
      %5231 = vst [vmem:[#allocation3 + $0x110] sm:$0xff] %v5178
      %5232 = vst [vmem:[#allocation3 + $0x118] sm:$0xff] %v5180
      %5233 = vst [vmem:[#allocation3 + $0x120] sm:$0xff] %v5182
      %5234 = vst [vmem:[#allocation3 + $0x128] sm:$0xff] %v5184
      %5235 = vst [vmem:[#allocation3 + $0x130] sm:$0xff] %v5186
      %5236 = vst [vmem:[#allocation3 + $0x138] sm:$0xff] %v5188
      %5237 = vrot.lane.b32.xlu0 %v5004, 126
      %v5238 = vpop.permute.xlu0 %5237
      %5239 = vrot.lane.b32.xlu0 %v5012, 126
      %v5240 = vpop.permute.xlu0 %5239
      %5241 = vrot.lane.b32.xlu0 %v5020, 126
      %v5242 = vpop.permute.xlu0 %5241
      %5243 = vrot.lane.b32.xlu0 %v5005, 126
      %v5244 = vpop.permute.xlu0 %5243
      %5245 = vrot.lane.b32.xlu0 %v5013, 126
      %v5246 = vpop.permute.xlu0 %5245
      %5247 = vrot.lane.b32.xlu0 %v5021, 126
      %v5248 = vpop.permute.xlu0 %5247
      %5249 = vrot.lane.b32.xlu0 %v5006, 126
      %v5250 = vpop.permute.xlu0 %5249
      %5251 = vrot.lane.b32.xlu0 %v5014, 126
      %v5252 = vpop.permute.xlu0 %5251
      %5253 = vrot.lane.b32.xlu0 %v5022, 126
      %v5254 = vpop.permute.xlu0 %5253
      %5255 = vrot.lane.b32.xlu0 %v5007, 126
      %v5256 = vpop.permute.xlu0 %5255
      %5257 = vrot.lane.b32.xlu0 %v5015, 126
      %v5258 = vpop.permute.xlu0 %5257
      %5259 = vrot.lane.b32.xlu0 %v5023, 126
      %v5260 = vpop.permute.xlu0 %5259
      %5261 = vrot.lane.b32.xlu0 %v5008, 126
      %v5262 = vpop.permute.xlu0 %5261
      %5263 = vrot.lane.b32.xlu0 %v5016, 126
      %v5264 = vpop.permute.xlu0 %5263
      %5265 = vrot.lane.b32.xlu0 %v5024, 126
      %v5266 = vpop.permute.xlu0 %5265
      %5267 = vrot.lane.b32.xlu0 %v5009, 126
      %v5268 = vpop.permute.xlu0 %5267
      %5269 = vrot.lane.b32.xlu0 %v5017, 126
      %v5270 = vpop.permute.xlu0 %5269
      %5271 = vrot.lane.b32.xlu0 %v5025, 126
      %v5272 = vpop.permute.xlu0 %5271
      %5273 = vrot.lane.b32.xlu0 %v5010, 126
      %v5274 = vpop.permute.xlu0 %5273
      %5275 = vrot.lane.b32.xlu0 %v5018, 126
      %v5276 = vpop.permute.xlu0 %5275
      %5277 = vrot.lane.b32.xlu0 %v5026, 126
      %v5278 = vpop.permute.xlu0 %5277
      %5279 = vrot.lane.b32.xlu0 %v5011, 126
      %v5280 = vpop.permute.xlu0 %5279
      %5281 = vrot.lane.b32.xlu0 %v5019, 126
      %v5282 = vpop.permute.xlu0 %5281
      %5283 = vrot.lane.b32.xlu0 %v5027, 126
      %v5284 = vpop.permute.xlu0 %5283
      %v5285 = vsel %vm324, %v5274, %v5280
      %v5286 = vsel %vm324, %v5276, %v5282
      %v5287 = vsel %vm324, %v5278, %v5284
      %v5288 = vsel %vm324, %v5268, %v5274
      %v5289 = vsel %vm324, %v5270, %v5276
      %v5290 = vsel %vm324, %v5272, %v5278
      %v5291 = vsel %vm324, %v5262, %v5268
      %v5292 = vsel %vm324, %v5264, %v5270
      %v5293 = vsel %vm324, %v5266, %v5272
      %v5294 = vsel %vm324, %v5256, %v5262
      %v5295 = vsel %vm324, %v5258, %v5264
      %v5296 = vsel %vm324, %v5260, %v5266
      %v5297 = vsel %vm324, %v5250, %v5256
      %v5298 = vsel %vm324, %v5252, %v5258
      %v5299 = vsel %vm324, %v5254, %v5260
      %v5300 = vsel %vm324, %v5244, %v5250
      %v5301 = vsel %vm324, %v5246, %v5252
      %v5302 = vsel %vm324, %v5248, %v5254
      %v5303 = vsel %vm324, %v5238, %v5244
      %v5304 = vsel %vm324, %v5240, %v5246
      %v5305 = vsel %vm324, %v5242, %v5248
      %v5306 = vsel %vm324, %v5280, %v5238
      %v5307 = vsel %vm324, %v5282, %v5240
      %v5308 = vsel %vm324, %v5284, %v5242
      %5309 = vst [vmem:[#allocation3 + $0x140] sm:$0xff] %v5303
      %5310 = vst [vmem:[#allocation3 + $0x148] sm:$0xff] %v5300
      %5311 = vst [vmem:[#allocation3 + $0x150] sm:$0xff] %v5297
      %5312 = vst [vmem:[#allocation3 + $0x158] sm:$0xff] %v5294
      %5313 = vst [vmem:[#allocation3 + $0x160] sm:$0xff] %v5291
      %5314 = vst [vmem:[#allocation3 + $0x168] sm:$0xff] %v5288
      %5315 = vst [vmem:[#allocation3 + $0x170] sm:$0xff] %v5285
      %5316 = vst [vmem:[#allocation3 + $0x178] sm:$0xff] %v5306
      %5317 = vst [vmem:[#allocation3 + $0x180] sm:$0xff] %v5304
      %5318 = vst [vmem:[#allocation3 + $0x188] sm:$0xff] %v5301
      %5319 = vst [vmem:[#allocation3 + $0x190] sm:$0xff] %v5298
      %5320 = vst [vmem:[#allocation3 + $0x198] sm:$0xff] %v5295
      %5321 = vst [vmem:[#allocation3 + $0x1a0] sm:$0xff] %v5292
      %5322 = vst [vmem:[#allocation3 + $0x1a8] sm:$0xff] %v5289
      %5323 = vst [vmem:[#allocation3 + $0x1b0] sm:$0xff] %v5286
      %5324 = vst [vmem:[#allocation3 + $0x1b8] sm:$0xff] %v5307
      %5325 = vst [vmem:[#allocation3 + $0x1c0] sm:$0xf] %v5305
      %5326 = vst [vmem:[#allocation3 + $0x1c8] sm:$0xf] %v5302
      %5327 = vst [vmem:[#allocation3 + $0x1d0] sm:$0xf] %v5299
      %5328 = vst [vmem:[#allocation3 + $0x1d8] sm:$0xf] %v5296
      %5329 = vst [vmem:[#allocation3 + $0x1e0] sm:$0xf] %v5293
      %5330 = vst [vmem:[#allocation3 + $0x1e8] sm:$0xf] %v5290
      %5331 = vst [vmem:[#allocation3 + $0x1f0] sm:$0xf] %v5287
      %5332 = vst [vmem:[#allocation3 + $0x1f8] sm:$0xf] %v5308
      %5333 = vrot.lane.b32.xlu0 %v5004, 125
      %v5334 = vpop.permute.xlu0 %5333
      %5335 = vrot.lane.b32.xlu0 %v5012, 125
      %v5336 = vpop.permute.xlu0 %5335
      %5337 = vrot.lane.b32.xlu0 %v5020, 125
      %v5338 = vpop.permute.xlu0 %5337
      %5339 = vrot.lane.b32.xlu0 %v5005, 125
      %v5340 = vpop.permute.xlu0 %5339
      %5341 = vrot.lane.b32.xlu0 %v5013, 125
      %v5342 = vpop.permute.xlu0 %5341
      %5343 = vrot.lane.b32.xlu0 %v5021, 125
      %v5344 = vpop.permute.xlu0 %5343
      %5345 = vrot.lane.b32.xlu0 %v5006, 125
      %v5346 = vpop.permute.xlu0 %5345
      %5347 = vrot.lane.b32.xlu0 %v5014, 125
      %v5348 = vpop.permute.xlu0 %5347
      %5349 = vrot.lane.b32.xlu0 %v5022, 125
      %v5350 = vpop.permute.xlu0 %5349
      %5351 = vrot.lane.b32.xlu0 %v5007, 125
      %v5352 = vpop.permute.xlu0 %5351
      %5353 = vrot.lane.b32.xlu0 %v5015, 125
      %v5354 = vpop.permute.xlu0 %5353
      %5355 = vrot.lane.b32.xlu0 %v5023, 125
      %v5356 = vpop.permute.xlu0 %5355
      %5357 = vrot.lane.b32.xlu0 %v5008, 125
      %v5358 = vpop.permute.xlu0 %5357
      %5359 = vrot.lane.b32.xlu0 %v5016, 125
      %v5360 = vpop.permute.xlu0 %5359
      %5361 = vrot.lane.b32.xlu0 %v5024, 125
      %v5362 = vpop.permute.xlu0 %5361
      %5363 = vrot.lane.b32.xlu0 %v5009, 125
      %v5364 = vpop.permute.xlu0 %5363
      %5365 = vrot.lane.b32.xlu0 %v5017, 125
      %v5366 = vpop.permute.xlu0 %5365
      %5367 = vrot.lane.b32.xlu0 %v5025, 125
      %v5368 = vpop.permute.xlu0 %5367
      %5369 = vrot.lane.b32.xlu0 %v5010, 125
      %v5370 = vpop.permute.xlu0 %5369
      %5371 = vrot.lane.b32.xlu0 %v5018, 125
      %v5372 = vpop.permute.xlu0 %5371
      %5373 = vrot.lane.b32.xlu0 %v5026, 125
      %v5374 = vpop.permute.xlu0 %5373
      %5375 = vrot.lane.b32.xlu0 %v5011, 125
      %v5376 = vpop.permute.xlu0 %5375
      %5377 = vrot.lane.b32.xlu0 %v5019, 125
      %v5378 = vpop.permute.xlu0 %5377
      %5379 = vrot.lane.b32.xlu0 %v5027, 125
      %v5380 = vpop.permute.xlu0 %5379
      %v5381 = vsel %vm389, %v5370, %v5376
      %v5382 = vsel %vm389, %v5372, %v5378
      %v5383 = vsel %vm389, %v5374, %v5380
      %v5384 = vsel %vm389, %v5364, %v5370
      %v5385 = vsel %vm389, %v5366, %v5372
      %v5386 = vsel %vm389, %v5368, %v5374
      %v5387 = vsel %vm389, %v5358, %v5364
      %v5388 = vsel %vm389, %v5360, %v5366
      %v5389 = vsel %vm389, %v5362, %v5368
      %v5390 = vsel %vm389, %v5352, %v5358
      %v5391 = vsel %vm389, %v5354, %v5360
      %v5392 = vsel %vm389, %v5356, %v5362
      %v5393 = vsel %vm389, %v5346, %v5352
      %v5394 = vsel %vm389, %v5348, %v5354
      %v5395 = vsel %vm389, %v5350, %v5356
      %v5396 = vsel %vm389, %v5340, %v5346
      %v5397 = vsel %vm389, %v5342, %v5348
      %v5398 = vsel %vm389, %v5344, %v5350
      %v5399 = vsel %vm389, %v5334, %v5340
      %v5400 = vsel %vm389, %v5336, %v5342
      %v5401 = vsel %vm389, %v5338, %v5344
      %v5402 = vsel %vm389, %v5376, %v5334
      %v5403 = vsel %vm389, %v5378, %v5336
      %v5404 = vsel %vm389, %v5380, %v5338
      %v5429 = vrot.slane %v5399, 4
      %v5430 = vrot.slane %v5396, 4
      %v5431 = vrot.slane %v5393, 4
      %v5432 = vrot.slane %v5390, 4
      %v5433 = vrot.slane %v5387, 4
      %v5434 = vrot.slane %v5384, 4
      %v5435 = vrot.slane %v5381, 4
      %v5436 = vrot.slane %v5402, 4
      %v5437 = vrot.slane %v5400, 4
      %v5438 = vsel %vm5148, %v5429, %v5437
      %v5439 = vrot.slane %v5397, 4
      %v5440 = vsel %vm5148, %v5430, %v5439
      %v5441 = vrot.slane %v5394, 4
      %v5442 = vsel %vm5148, %v5431, %v5441
      %v5443 = vrot.slane %v5391, 4
      %v5444 = vsel %vm5148, %v5432, %v5443
      %v5445 = vrot.slane %v5388, 4
      %v5446 = vsel %vm5148, %v5433, %v5445
      %v5447 = vrot.slane %v5385, 4
      %v5448 = vsel %vm5148, %v5434, %v5447
      %v5449 = vrot.slane %v5382, 4
      %v5450 = vsel %vm5148, %v5435, %v5449
      %v5451 = vrot.slane %v5403, 4
      %v5452 = vsel %vm5148, %v5436, %v5451
      %v5453 = vrot.slane %v5401, 4
      %v5454 = vsel %vm5148, %v5437, %v5453
      %v5455 = vrot.slane %v5398, 4
      %v5456 = vsel %vm5148, %v5439, %v5455
      %v5457 = vrot.slane %v5395, 4
      %v5458 = vsel %vm5148, %v5441, %v5457
      %v5459 = vrot.slane %v5392, 4
      %v5460 = vsel %vm5148, %v5443, %v5459
      %v5461 = vrot.slane %v5389, 4
      %v5462 = vsel %vm5148, %v5445, %v5461
      %v5463 = vrot.slane %v5386, 4
      %v5464 = vsel %vm5148, %v5447, %v5463
      %v5465 = vrot.slane %v5383, 4
      %v5466 = vsel %vm5148, %v5449, %v5465
      %v5467 = vrot.slane %v5404, 4
      %v5468 = vsel %vm5148, %v5451, %v5467
      %5493 = vst [vmem:[#allocation3 + $0x1c0] sm:$0xf0] %v5429
      %5494 = vst [vmem:[#allocation3 + $0x1c8] sm:$0xf0] %v5430
      %5495 = vst [vmem:[#allocation3 + $0x1d0] sm:$0xf0] %v5431
      %5496 = vst [vmem:[#allocation3 + $0x1d8] sm:$0xf0] %v5432
      %5497 = vst [vmem:[#allocation3 + $0x1e0] sm:$0xf0] %v5433
      %5498 = vst [vmem:[#allocation3 + $0x1e8] sm:$0xf0] %v5434
      %5499 = vst [vmem:[#allocation3 + $0x1f0] sm:$0xf0] %v5435
      %5500 = vst [vmem:[#allocation3 + $0x1f8] sm:$0xf0] %v5436
      %5501 = vst [vmem:[#allocation3 + $0x200] sm:$0xff] %v5438
      %5502 = vst [vmem:[#allocation3 + $0x208] sm:$0xff] %v5440
      %5503 = vst [vmem:[#allocation3 + $0x210] sm:$0xff] %v5442
      %5504 = vst [vmem:[#allocation3 + $0x218] sm:$0xff] %v5444
      %5505 = vst [vmem:[#allocation3 + $0x220] sm:$0xff] %v5446
      %5506 = vst [vmem:[#allocation3 + $0x228] sm:$0xff] %v5448
      %5507 = vst [vmem:[#allocation3 + $0x230] sm:$0xff] %v5450
      %5508 = vst [vmem:[#allocation3 + $0x238] sm:$0xff] %v5452
      %5509 = vst [vmem:[#allocation3 + $0x240] sm:$0xff] %v5454
      %5510 = vst [vmem:[#allocation3 + $0x248] sm:$0xff] %v5456
      %5511 = vst [vmem:[#allocation3 + $0x250] sm:$0xff] %v5458
      %5512 = vst [vmem:[#allocation3 + $0x258] sm:$0xff] %v5460
      %5513 = vst [vmem:[#allocation3 + $0x260] sm:$0xff] %v5462
      %5514 = vst [vmem:[#allocation3 + $0x268] sm:$0xff] %v5464
      %5515 = vst [vmem:[#allocation3 + $0x270] sm:$0xff] %v5466
      %5516 = vst [vmem:[#allocation3 + $0x278] sm:$0xff] %v5468
      %5517 = vrot.lane.b32.xlu0 %v5004, 124
      %v5518 = vpop.permute.xlu0 %5517
      %5519 = vrot.lane.b32.xlu0 %v5012, 124
      %v5520 = vpop.permute.xlu0 %5519
      %5521 = vrot.lane.b32.xlu0 %v5020, 124
      %v5522 = vpop.permute.xlu0 %5521
      %5523 = vrot.lane.b32.xlu0 %v5005, 124
      %v5524 = vpop.permute.xlu0 %5523
      %5525 = vrot.lane.b32.xlu0 %v5013, 124
      %v5526 = vpop.permute.xlu0 %5525
      %5527 = vrot.lane.b32.xlu0 %v5021, 124
      %v5528 = vpop.permute.xlu0 %5527
      %5529 = vrot.lane.b32.xlu0 %v5006, 124
      %v5530 = vpop.permute.xlu0 %5529
      %5531 = vrot.lane.b32.xlu0 %v5014, 124
      %v5532 = vpop.permute.xlu0 %5531
      %5533 = vrot.lane.b32.xlu0 %v5022, 124
      %v5534 = vpop.permute.xlu0 %5533
      %5535 = vrot.lane.b32.xlu0 %v5007, 124
      %v5536 = vpop.permute.xlu0 %5535
      %5537 = vrot.lane.b32.xlu0 %v5015, 124
      %v5538 = vpop.permute.xlu0 %5537
      %5539 = vrot.lane.b32.xlu0 %v5023, 124
      %v5540 = vpop.permute.xlu0 %5539
      %5541 = vrot.lane.b32.xlu0 %v5008, 124
      %v5542 = vpop.permute.xlu0 %5541
      %5543 = vrot.lane.b32.xlu0 %v5016, 124
      %v5544 = vpop.permute.xlu0 %5543
      %5545 = vrot.lane.b32.xlu0 %v5024, 124
      %v5546 = vpop.permute.xlu0 %5545
      %5547 = vrot.lane.b32.xlu0 %v5009, 124
      %v5548 = vpop.permute.xlu0 %5547
      %5549 = vrot.lane.b32.xlu0 %v5017, 124
      %v5550 = vpop.permute.xlu0 %5549
      %5551 = vrot.lane.b32.xlu0 %v5025, 124
      %v5552 = vpop.permute.xlu0 %5551
      %5553 = vrot.lane.b32.xlu0 %v5010, 124
      %v5554 = vpop.permute.xlu0 %5553
      %5555 = vrot.lane.b32.xlu0 %v5018, 124
      %v5556 = vpop.permute.xlu0 %5555
      %5557 = vrot.lane.b32.xlu0 %v5026, 124
      %v5558 = vpop.permute.xlu0 %5557
      %5559 = vrot.lane.b32.xlu0 %v5011, 124
      %v5560 = vpop.permute.xlu0 %5559
      %5561 = vrot.lane.b32.xlu0 %v5019, 124
      %v5562 = vpop.permute.xlu0 %5561
      %5563 = vrot.lane.b32.xlu0 %v5027, 124
      %v5564 = vpop.permute.xlu0 %5563
      %v5565 = vsel %vm446, %v5554, %v5560
      %v5566 = vsel %vm446, %v5556, %v5562
      %v5567 = vsel %vm446, %v5558, %v5564
      %v5568 = vsel %vm446, %v5548, %v5554
      %v5569 = vsel %vm446, %v5550, %v5556
      %v5570 = vsel %vm446, %v5552, %v5558
      %v5571 = vsel %vm446, %v5542, %v5548
      %v5572 = vsel %vm446, %v5544, %v5550
      %v5573 = vsel %vm446, %v5546, %v5552
      %v5574 = vsel %vm446, %v5536, %v5542
      %v5575 = vsel %vm446, %v5538, %v5544
      %v5576 = vsel %vm446, %v5540, %v5546
      %v5577 = vsel %vm446, %v5530, %v5536
      %v5578 = vsel %vm446, %v5532, %v5538
      %v5579 = vsel %vm446, %v5534, %v5540
      %v5580 = vsel %vm446, %v5524, %v5530
      %v5581 = vsel %vm446, %v5526, %v5532
      %v5582 = vsel %vm446, %v5528, %v5534
      %v5583 = vsel %vm446, %v5518, %v5524
      %v5584 = vsel %vm446, %v5520, %v5526
      %v5585 = vsel %vm446, %v5522, %v5528
      %v5586 = vsel %vm446, %v5560, %v5518
      %v5587 = vsel %vm446, %v5562, %v5520
      %v5588 = vsel %vm446, %v5564, %v5522
      %5589 = vst [vmem:[#allocation3 + $0x280] sm:$0xff] %v5583
      %5590 = vst [vmem:[#allocation3 + $0x288] sm:$0xff] %v5580
      %5591 = vst [vmem:[#allocation3 + $0x290] sm:$0xff] %v5577
      %5592 = vst [vmem:[#allocation3 + $0x298] sm:$0xff] %v5574
      %5593 = vst [vmem:[#allocation3 + $0x2a0] sm:$0xff] %v5571
      %5594 = vst [vmem:[#allocation3 + $0x2a8] sm:$0xff] %v5568
      %5595 = vst [vmem:[#allocation3 + $0x2b0] sm:$0xff] %v5565
      %5596 = vst [vmem:[#allocation3 + $0x2b8] sm:$0xff] %v5586
      %5597 = vst [vmem:[#allocation3 + $0x2c0] sm:$0xff] %v5584
      %5598 = vst [vmem:[#allocation3 + $0x2c8] sm:$0xff] %v5581
      %5599 = vst [vmem:[#allocation3 + $0x2d0] sm:$0xff] %v5578
      %5600 = vst [vmem:[#allocation3 + $0x2d8] sm:$0xff] %v5575
      %5601 = vst [vmem:[#allocation3 + $0x2e0] sm:$0xff] %v5572
      %5602 = vst [vmem:[#allocation3 + $0x2e8] sm:$0xff] %v5569
      %5603 = vst [vmem:[#allocation3 + $0x2f0] sm:$0xff] %v5566
      %5604 = vst [vmem:[#allocation3 + $0x2f8] sm:$0xff] %v5587
      %5605 = vst [vmem:[#allocation3 + $0x300] sm:$0xf] %v5585
      %5606 = vst [vmem:[#allocation3 + $0x308] sm:$0xf] %v5582
      %5607 = vst [vmem:[#allocation3 + $0x310] sm:$0xf] %v5579
      %5608 = vst [vmem:[#allocation3 + $0x318] sm:$0xf] %v5576
      %5609 = vst [vmem:[#allocation3 + $0x320] sm:$0xf] %v5573
      %5610 = vst [vmem:[#allocation3 + $0x328] sm:$0xf] %v5570
      %5611 = vst [vmem:[#allocation3 + $0x330] sm:$0xf] %v5567
      %5612 = vst [vmem:[#allocation3 + $0x338] sm:$0xf] %v5588
      %5613 = vrot.lane.b32.xlu0 %v5004, 123
      %v5614 = vpop.permute.xlu0 %5613
      %5615 = vrot.lane.b32.xlu0 %v5012, 123
      %v5616 = vpop.permute.xlu0 %5615
      %5617 = vrot.lane.b32.xlu0 %v5020, 123
      %v5618 = vpop.permute.xlu0 %5617
      %5619 = vrot.lane.b32.xlu0 %v5005, 123
      %v5620 = vpop.permute.xlu0 %5619
      %5621 = vrot.lane.b32.xlu0 %v5013, 123
      %v5622 = vpop.permute.xlu0 %5621
      %5623 = vrot.lane.b32.xlu0 %v5021, 123
      %v5624 = vpop.permute.xlu0 %5623
      %5625 = vrot.lane.b32.xlu0 %v5006, 123
      %v5626 = vpop.permute.xlu0 %5625
      %5627 = vrot.lane.b32.xlu0 %v5014, 123
      %v5628 = vpop.permute.xlu0 %5627
      %5629 = vrot.lane.b32.xlu0 %v5022, 123
      %v5630 = vpop.permute.xlu0 %5629
      %5631 = vrot.lane.b32.xlu0 %v5007, 123
      %v5632 = vpop.permute.xlu0 %5631
      %5633 = vrot.lane.b32.xlu0 %v5015, 123
      %v5634 = vpop.permute.xlu0 %5633
      %5635 = vrot.lane.b32.xlu0 %v5023, 123
      %v5636 = vpop.permute.xlu0 %5635
      %5637 = vrot.lane.b32.xlu0 %v5008, 123
      %v5638 = vpop.permute.xlu0 %5637
      %5639 = vrot.lane.b32.xlu0 %v5016, 123
      %v5640 = vpop.permute.xlu0 %5639
      %5641 = vrot.lane.b32.xlu0 %v5024, 123
      %v5642 = vpop.permute.xlu0 %5641
      %5643 = vrot.lane.b32.xlu0 %v5009, 123
      %v5644 = vpop.permute.xlu0 %5643
      %5645 = vrot.lane.b32.xlu0 %v5017, 123
      %v5646 = vpop.permute.xlu0 %5645
      %5647 = vrot.lane.b32.xlu0 %v5025, 123
      %v5648 = vpop.permute.xlu0 %5647
      %5649 = vrot.lane.b32.xlu0 %v5010, 123
      %v5650 = vpop.permute.xlu0 %5649
      %5651 = vrot.lane.b32.xlu0 %v5018, 123
      %v5652 = vpop.permute.xlu0 %5651
      %5653 = vrot.lane.b32.xlu0 %v5026, 123
      %v5654 = vpop.permute.xlu0 %5653
      %5655 = vrot.lane.b32.xlu0 %v5011, 123
      %v5656 = vpop.permute.xlu0 %5655
      %5657 = vrot.lane.b32.xlu0 %v5019, 123
      %v5658 = vpop.permute.xlu0 %5657
      %5659 = vrot.lane.b32.xlu0 %v5027, 123
      %v5660 = vpop.permute.xlu0 %5659
      %v5661 = vsel %vm503, %v5650, %v5656
      %v5662 = vsel %vm503, %v5652, %v5658
      %v5663 = vsel %vm503, %v5654, %v5660
      %v5664 = vsel %vm503, %v5644, %v5650
      %v5665 = vsel %vm503, %v5646, %v5652
      %v5666 = vsel %vm503, %v5648, %v5654
      %v5667 = vsel %vm503, %v5638, %v5644
      %v5668 = vsel %vm503, %v5640, %v5646
      %v5669 = vsel %vm503, %v5642, %v5648
      %v5670 = vsel %vm503, %v5632, %v5638
      %v5671 = vsel %vm503, %v5634, %v5640
      %v5672 = vsel %vm503, %v5636, %v5642
      %v5673 = vsel %vm503, %v5626, %v5632
      %v5674 = vsel %vm503, %v5628, %v5634
      %v5675 = vsel %vm503, %v5630, %v5636
      %v5676 = vsel %vm503, %v5620, %v5626
      %v5677 = vsel %vm503, %v5622, %v5628
      %v5678 = vsel %vm503, %v5624, %v5630
      %v5679 = vsel %vm503, %v5614, %v5620
      %v5680 = vsel %vm503, %v5616, %v5622
      %v5681 = vsel %vm503, %v5618, %v5624
      %v5682 = vsel %vm503, %v5656, %v5614
      %v5683 = vsel %vm503, %v5658, %v5616
      %v5684 = vsel %vm503, %v5660, %v5618
      %v5709 = vrot.slane %v5679, 4
      %v5710 = vrot.slane %v5676, 4
      %v5711 = vrot.slane %v5673, 4
      %v5712 = vrot.slane %v5670, 4
      %v5713 = vrot.slane %v5667, 4
      %v5714 = vrot.slane %v5664, 4
      %v5715 = vrot.slane %v5661, 4
      %v5716 = vrot.slane %v5682, 4
      %v5717 = vrot.slane %v5680, 4
      %v5718 = vsel %vm5148, %v5709, %v5717
      %v5719 = vrot.slane %v5677, 4
      %v5720 = vsel %vm5148, %v5710, %v5719
      %v5721 = vrot.slane %v5674, 4
      %v5722 = vsel %vm5148, %v5711, %v5721
      %v5723 = vrot.slane %v5671, 4
      %v5724 = vsel %vm5148, %v5712, %v5723
      %v5725 = vrot.slane %v5668, 4
      %v5726 = vsel %vm5148, %v5713, %v5725
      %v5727 = vrot.slane %v5665, 4
      %v5728 = vsel %vm5148, %v5714, %v5727
      %v5729 = vrot.slane %v5662, 4
      %v5730 = vsel %vm5148, %v5715, %v5729
      %v5731 = vrot.slane %v5683, 4
      %v5732 = vsel %vm5148, %v5716, %v5731
      %v5733 = vrot.slane %v5681, 4
      %v5734 = vsel %vm5148, %v5717, %v5733
      %v5735 = vrot.slane %v5678, 4
      %v5736 = vsel %vm5148, %v5719, %v5735
      %v5737 = vrot.slane %v5675, 4
      %v5738 = vsel %vm5148, %v5721, %v5737
      %v5739 = vrot.slane %v5672, 4
      %v5740 = vsel %vm5148, %v5723, %v5739
      %v5741 = vrot.slane %v5669, 4
      %v5742 = vsel %vm5148, %v5725, %v5741
      %v5743 = vrot.slane %v5666, 4
      %v5744 = vsel %vm5148, %v5727, %v5743
      %v5745 = vrot.slane %v5663, 4
      %v5746 = vsel %vm5148, %v5729, %v5745
      %v5747 = vrot.slane %v5684, 4
      %v5748 = vsel %vm5148, %v5731, %v5747
      %5773 = vst [vmem:[#allocation3 + $0x300] sm:$0xf0] %v5709
      %5774 = vst [vmem:[#allocation3 + $0x308] sm:$0xf0] %v5710
      %5775 = vst [vmem:[#allocation3 + $0x310] sm:$0xf0] %v5711
      %5776 = vst [vmem:[#allocation3 + $0x318] sm:$0xf0] %v5712
      %5777 = vst [vmem:[#allocation3 + $0x320] sm:$0xf0] %v5713
      %5778 = vst [vmem:[#allocation3 + $0x328] sm:$0xf0] %v5714
      %5779 = vst [vmem:[#allocation3 + $0x330] sm:$0xf0] %v5715
      %5780 = vst [vmem:[#allocation3 + $0x338] sm:$0xf0] %v5716
      %5781 = vst [vmem:[#allocation3 + $0x340] sm:$0xff] %v5718
      %5782 = vst [vmem:[#allocation3 + $0x348] sm:$0xff] %v5720
      %5783 = vst [vmem:[#allocation3 + $0x350] sm:$0xff] %v5722
      %5784 = vst [vmem:[#allocation3 + $0x358] sm:$0xff] %v5724
      %5785 = vst [vmem:[#allocation3 + $0x360] sm:$0xff] %v5726
      %5786 = vst [vmem:[#allocation3 + $0x368] sm:$0xff] %v5728
      %5787 = vst [vmem:[#allocation3 + $0x370] sm:$0xff] %v5730
      %5788 = vst [vmem:[#allocation3 + $0x378] sm:$0xff] %v5732
      %5789 = vst [vmem:[#allocation3 + $0x380] sm:$0xff] %v5734
      %5790 = vst [vmem:[#allocation3 + $0x388] sm:$0xff] %v5736
      %5791 = vst [vmem:[#allocation3 + $0x390] sm:$0xff] %v5738
      %5792 = vst [vmem:[#allocation3 + $0x398] sm:$0xff] %v5740
      %5793 = vst [vmem:[#allocation3 + $0x3a0] sm:$0xff] %v5742
      %5794 = vst [vmem:[#allocation3 + $0x3a8] sm:$0xff] %v5744
      %5795 = vst [vmem:[#allocation3 + $0x3b0] sm:$0xff] %v5746
      %5796 = vst [vmem:[#allocation3 + $0x3b8] sm:$0xff] %v5748
      %5797 = vrot.lane.b32.xlu0 %v5004, 122
      %v5798 = vpop.permute.xlu0 %5797
      %5799 = vrot.lane.b32.xlu0 %v5012, 122
      %v5800 = vpop.permute.xlu0 %5799
      %5801 = vrot.lane.b32.xlu0 %v5020, 122
      %v5802 = vpop.permute.xlu0 %5801
      %5803 = vrot.lane.b32.xlu0 %v5005, 122
      %v5804 = vpop.permute.xlu0 %5803
      %5805 = vrot.lane.b32.xlu0 %v5013, 122
      %v5806 = vpop.permute.xlu0 %5805
      %5807 = vrot.lane.b32.xlu0 %v5021, 122
      %v5808 = vpop.permute.xlu0 %5807
      %5809 = vrot.lane.b32.xlu0 %v5006, 122
      %v5810 = vpop.permute.xlu0 %5809
      %5811 = vrot.lane.b32.xlu0 %v5014, 122
      %v5812 = vpop.permute.xlu0 %5811
      %5813 = vrot.lane.b32.xlu0 %v5022, 122
      %v5814 = vpop.permute.xlu0 %5813
      %5815 = vrot.lane.b32.xlu0 %v5007, 122
      %v5816 = vpop.permute.xlu0 %5815
      %5817 = vrot.lane.b32.xlu0 %v5015, 122
      %v5818 = vpop.permute.xlu0 %5817
      %5819 = vrot.lane.b32.xlu0 %v5023, 122
      %v5820 = vpop.permute.xlu0 %5819
      %5821 = vrot.lane.b32.xlu0 %v5008, 122
      %v5822 = vpop.permute.xlu0 %5821
      %5823 = vrot.lane.b32.xlu0 %v5016, 122
      %v5824 = vpop.permute.xlu0 %5823
      %5825 = vrot.lane.b32.xlu0 %v5024, 122
      %v5826 = vpop.permute.xlu0 %5825
      %5827 = vrot.lane.b32.xlu0 %v5009, 122
      %v5828 = vpop.permute.xlu0 %5827
      %5829 = vrot.lane.b32.xlu0 %v5017, 122
      %v5830 = vpop.permute.xlu0 %5829
      %5831 = vrot.lane.b32.xlu0 %v5025, 122
      %v5832 = vpop.permute.xlu0 %5831
      %5833 = vrot.lane.b32.xlu0 %v5010, 122
      %v5834 = vpop.permute.xlu0 %5833
      %5835 = vrot.lane.b32.xlu0 %v5018, 122
      %v5836 = vpop.permute.xlu0 %5835
      %5837 = vrot.lane.b32.xlu0 %v5026, 122
      %v5838 = vpop.permute.xlu0 %5837
      %5839 = vrot.lane.b32.xlu0 %v5011, 122
      %v5840 = vpop.permute.xlu0 %5839
      %5841 = vrot.lane.b32.xlu0 %v5019, 122
      %v5842 = vpop.permute.xlu0 %5841
      %5843 = vrot.lane.b32.xlu0 %v5027, 122
      %v5844 = vpop.permute.xlu0 %5843
      %v5845 = vsel %vm568, %v5834, %v5840
      %v5846 = vsel %vm568, %v5836, %v5842
      %v5847 = vsel %vm568, %v5838, %v5844
      %v5848 = vsel %vm568, %v5828, %v5834
      %v5849 = vsel %vm568, %v5830, %v5836
      %v5850 = vsel %vm568, %v5832, %v5838
      %v5851 = vsel %vm568, %v5822, %v5828
      %v5852 = vsel %vm568, %v5824, %v5830
      %v5853 = vsel %vm568, %v5826, %v5832
      %v5854 = vsel %vm568, %v5816, %v5822
      %v5855 = vsel %vm568, %v5818, %v5824
      %v5856 = vsel %vm568, %v5820, %v5826
      %v5857 = vsel %vm568, %v5810, %v5816
      %v5858 = vsel %vm568, %v5812, %v5818
      %v5859 = vsel %vm568, %v5814, %v5820
      %v5860 = vsel %vm568, %v5804, %v5810
      %v5861 = vsel %vm568, %v5806, %v5812
      %v5862 = vsel %vm568, %v5808, %v5814
      %v5863 = vsel %vm568, %v5798, %v5804
      %v5864 = vsel %vm568, %v5800, %v5806
      %v5865 = vsel %vm568, %v5802, %v5808
      %v5866 = vsel %vm568, %v5840, %v5798
      %v5867 = vsel %vm568, %v5842, %v5800
      %v5868 = vsel %vm568, %v5844, %v5802
      %5869 = vst [vmem:[#allocation3 + $0x3c0] sm:$0xff] %v5863
      %5870 = vst [vmem:[#allocation3 + $0x3c8] sm:$0xff] %v5860
      %5871 = vst [vmem:[#allocation3 + $0x3d0] sm:$0xff] %v5857
      %5872 = vst [vmem:[#allocation3 + $0x3d8] sm:$0xff] %v5854
      %5873 = vst [vmem:[#allocation3 + $0x3e0] sm:$0xff] %v5851
      %5874 = vst [vmem:[#allocation3 + $0x3e8] sm:$0xff] %v5848
      %5875 = vst [vmem:[#allocation3 + $0x3f0] sm:$0xff] %v5845
      %5876 = vst [vmem:[#allocation3 + $0x3f8] sm:$0xff] %v5866
      %5877 = vst [vmem:[#allocation3 + $0x400] sm:$0xff] %v5864
      %5878 = vst [vmem:[#allocation3 + $0x408] sm:$0xff] %v5861
      %5879 = vst [vmem:[#allocation3 + $0x410] sm:$0xff] %v5858
      %5880 = vst [vmem:[#allocation3 + $0x418] sm:$0xff] %v5855
      %5881 = vst [vmem:[#allocation3 + $0x420] sm:$0xff] %v5852
      %5882 = vst [vmem:[#allocation3 + $0x428] sm:$0xff] %v5849
      %5883 = vst [vmem:[#allocation3 + $0x430] sm:$0xff] %v5846
      %5884 = vst [vmem:[#allocation3 + $0x438] sm:$0xff] %v5867
      %5885 = vst [vmem:[#allocation3 + $0x440] sm:$0xf] %v5865
      %5886 = vst [vmem:[#allocation3 + $0x448] sm:$0xf] %v5862
      %5887 = vst [vmem:[#allocation3 + $0x450] sm:$0xf] %v5859
      %5888 = vst [vmem:[#allocation3 + $0x458] sm:$0xf] %v5856
      %5889 = vst [vmem:[#allocation3 + $0x460] sm:$0xf] %v5853
      %5890 = vst [vmem:[#allocation3 + $0x468] sm:$0xf] %v5850
      %5891 = vst [vmem:[#allocation3 + $0x470] sm:$0xf] %v5847
      %5892 = vst [vmem:[#allocation3 + $0x478] sm:$0xf] %v5868
      %5893 = vrot.lane.b32.xlu0 %v5004, 121
      %v5894 = vpop.permute.xlu0 %5893
      %5895 = vrot.lane.b32.xlu0 %v5012, 121
      %v5896 = vpop.permute.xlu0 %5895
      %5897 = vrot.lane.b32.xlu0 %v5020, 121
      %v5898 = vpop.permute.xlu0 %5897
      %5899 = vrot.lane.b32.xlu0 %v5005, 121
      %v5900 = vpop.permute.xlu0 %5899
      %5901 = vrot.lane.b32.xlu0 %v5013, 121
      %v5902 = vpop.permute.xlu0 %5901
      %5903 = vrot.lane.b32.xlu0 %v5021, 121
      %v5904 = vpop.permute.xlu0 %5903
      %5905 = vrot.lane.b32.xlu0 %v5006, 121
      %v5906 = vpop.permute.xlu0 %5905
      %5907 = vrot.lane.b32.xlu0 %v5014, 121
      %v5908 = vpop.permute.xlu0 %5907
      %5909 = vrot.lane.b32.xlu0 %v5022, 121
      %v5910 = vpop.permute.xlu0 %5909
      %5911 = vrot.lane.b32.xlu0 %v5007, 121
      %v5912 = vpop.permute.xlu0 %5911
      %5913 = vrot.lane.b32.xlu0 %v5015, 121
      %v5914 = vpop.permute.xlu0 %5913
      %5915 = vrot.lane.b32.xlu0 %v5023, 121
      %v5916 = vpop.permute.xlu0 %5915
      %5917 = vrot.lane.b32.xlu0 %v5008, 121
      %v5918 = vpop.permute.xlu0 %5917
      %5919 = vrot.lane.b32.xlu0 %v5016, 121
      %v5920 = vpop.permute.xlu0 %5919
      %5921 = vrot.lane.b32.xlu0 %v5024, 121
      %v5922 = vpop.permute.xlu0 %5921
      %5923 = vrot.lane.b32.xlu0 %v5009, 121
      %v5924 = vpop.permute.xlu0 %5923
      %5925 = vrot.lane.b32.xlu0 %v5017, 121
      %v5926 = vpop.permute.xlu0 %5925
      %5927 = vrot.lane.b32.xlu0 %v5025, 121
      %v5928 = vpop.permute.xlu0 %5927
      %5929 = vrot.lane.b32.xlu0 %v5010, 121
      %v5930 = vpop.permute.xlu0 %5929
      %5931 = vrot.lane.b32.xlu0 %v5018, 121
      %v5932 = vpop.permute.xlu0 %5931
      %5933 = vrot.lane.b32.xlu0 %v5026, 121
      %v5934 = vpop.permute.xlu0 %5933
      %5935 = vrot.lane.b32.xlu0 %v5011, 121
      %v5936 = vpop.permute.xlu0 %5935
      %5937 = vrot.lane.b32.xlu0 %v5019, 121
      %v5938 = vpop.permute.xlu0 %5937
      %5939 = vrot.lane.b32.xlu0 %v5027, 121
      %v5940 = vpop.permute.xlu0 %5939
      %v5941 = vsel %vm625, %v5930, %v5936
      %v5942 = vsel %vm625, %v5932, %v5938
      %v5943 = vsel %vm625, %v5934, %v5940
      %v5944 = vsel %vm625, %v5924, %v5930
      %v5945 = vsel %vm625, %v5926, %v5932
      %v5946 = vsel %vm625, %v5928, %v5934
      %v5947 = vsel %vm625, %v5918, %v5924
      %v5948 = vsel %vm625, %v5920, %v5926
      %v5949 = vsel %vm625, %v5922, %v5928
      %v5950 = vsel %vm625, %v5912, %v5918
      %v5951 = vsel %vm625, %v5914, %v5920
      %v5952 = vsel %vm625, %v5916, %v5922
      %v5953 = vsel %vm625, %v5906, %v5912
      %v5954 = vsel %vm625, %v5908, %v5914
      %v5955 = vsel %vm625, %v5910, %v5916
      %v5956 = vsel %vm625, %v5900, %v5906
      %v5957 = vsel %vm625, %v5902, %v5908
      %v5958 = vsel %vm625, %v5904, %v5910
      %v5959 = vsel %vm625, %v5894, %v5900
      %v5960 = vsel %vm625, %v5896, %v5902
      %v5961 = vsel %vm625, %v5898, %v5904
      %v5962 = vsel %vm625, %v5936, %v5894
      %v5963 = vsel %vm625, %v5938, %v5896
      %v5964 = vsel %vm625, %v5940, %v5898
      %v5989 = vrot.slane %v5959, 4
      %v5990 = vrot.slane %v5956, 4
      %v5991 = vrot.slane %v5953, 4
      %v5992 = vrot.slane %v5950, 4
      %v5993 = vrot.slane %v5947, 4
      %v5994 = vrot.slane %v5944, 4
      %v5995 = vrot.slane %v5941, 4
      %v5996 = vrot.slane %v5962, 4
      %v5997 = vrot.slane %v5960, 4
      %v5998 = vsel %vm5148, %v5989, %v5997
      %v5999 = vrot.slane %v5957, 4
      %v6000 = vsel %vm5148, %v5990, %v5999
      %v6001 = vrot.slane %v5954, 4
      %v6002 = vsel %vm5148, %v5991, %v6001
      %v6003 = vrot.slane %v5951, 4
      %v6004 = vsel %vm5148, %v5992, %v6003
      %v6005 = vrot.slane %v5948, 4
      %v6006 = vsel %vm5148, %v5993, %v6005
      %v6007 = vrot.slane %v5945, 4
      %v6008 = vsel %vm5148, %v5994, %v6007
      %v6009 = vrot.slane %v5942, 4
      %v6010 = vsel %vm5148, %v5995, %v6009
      %v6011 = vrot.slane %v5963, 4
      %v6012 = vsel %vm5148, %v5996, %v6011
      %v6013 = vrot.slane %v5961, 4
      %v6014 = vsel %vm5148, %v5997, %v6013
      %v6015 = vrot.slane %v5958, 4
      %v6016 = vsel %vm5148, %v5999, %v6015
      %v6017 = vrot.slane %v5955, 4
      %v6018 = vsel %vm5148, %v6001, %v6017
      %v6019 = vrot.slane %v5952, 4
      %v6020 = vsel %vm5148, %v6003, %v6019
      %v6021 = vrot.slane %v5949, 4
      %v6022 = vsel %vm5148, %v6005, %v6021
      %v6023 = vrot.slane %v5946, 4
      %v6024 = vsel %vm5148, %v6007, %v6023
      %v6025 = vrot.slane %v5943, 4
      %v6026 = vsel %vm5148, %v6009, %v6025
      %v6027 = vrot.slane %v5964, 4
      %v6028 = vsel %vm5148, %v6011, %v6027
      %6053 = vst [vmem:[#allocation3 + $0x440] sm:$0xf0] %v5989
      %6054 = vst [vmem:[#allocation3 + $0x448] sm:$0xf0] %v5990
      %6055 = vst [vmem:[#allocation3 + $0x450] sm:$0xf0] %v5991
      %6056 = vst [vmem:[#allocation3 + $0x458] sm:$0xf0] %v5992
      %6057 = vst [vmem:[#allocation3 + $0x460] sm:$0xf0] %v5993
      %6058 = vst [vmem:[#allocation3 + $0x468] sm:$0xf0] %v5994
      %6059 = vst [vmem:[#allocation3 + $0x470] sm:$0xf0] %v5995
      %6060 = vst [vmem:[#allocation3 + $0x478] sm:$0xf0] %v5996
      %6061 = vst [vmem:[#allocation3 + $0x480] sm:$0xff] %v5998
      %6062 = vst [vmem:[#allocation3 + $0x488] sm:$0xff] %v6000
      %6063 = vst [vmem:[#allocation3 + $0x490] sm:$0xff] %v6002
      %6064 = vst [vmem:[#allocation3 + $0x498] sm:$0xff] %v6004
      %6065 = vst [vmem:[#allocation3 + $0x4a0] sm:$0xff] %v6006
      %6066 = vst [vmem:[#allocation3 + $0x4a8] sm:$0xff] %v6008
      %6067 = vst [vmem:[#allocation3 + $0x4b0] sm:$0xff] %v6010
      %6068 = vst [vmem:[#allocation3 + $0x4b8] sm:$0xff] %v6012
      %6069 = vst [vmem:[#allocation3 + $0x4c0] sm:$0xff] %v6014
      %6070 = vst [vmem:[#allocation3 + $0x4c8] sm:$0xff] %v6016
      %6071 = vst [vmem:[#allocation3 + $0x4d0] sm:$0xff] %v6018
      %6072 = vst [vmem:[#allocation3 + $0x4d8] sm:$0xff] %v6020
      %6073 = vst [vmem:[#allocation3 + $0x4e0] sm:$0xff] %v6022
      %6074 = vst [vmem:[#allocation3 + $0x4e8] sm:$0xff] %v6024
      %6075 = vst [vmem:[#allocation3 + $0x4f0] sm:$0xff] %v6026
      %6076 = vst [vmem:[#allocation3 + $0x4f8] sm:$0xff] %v6028
      %6077 = vrot.lane.b32.xlu0 %v5004, 120
      %v6078 = vpop.permute.xlu0 %6077
      %6079 = vrot.lane.b32.xlu0 %v5012, 120
      %v6080 = vpop.permute.xlu0 %6079
      %6081 = vrot.lane.b32.xlu0 %v5020, 120
      %v6082 = vpop.permute.xlu0 %6081
      %6083 = vrot.lane.b32.xlu0 %v5005, 120
      %v6084 = vpop.permute.xlu0 %6083
      %6085 = vrot.lane.b32.xlu0 %v5013, 120
      %v6086 = vpop.permute.xlu0 %6085
      %6087 = vrot.lane.b32.xlu0 %v5021, 120
      %v6088 = vpop.permute.xlu0 %6087
      %6089 = vrot.lane.b32.xlu0 %v5006, 120
      %v6090 = vpop.permute.xlu0 %6089
      %6091 = vrot.lane.b32.xlu0 %v5014, 120
      %v6092 = vpop.permute.xlu0 %6091
      %6093 = vrot.lane.b32.xlu0 %v5022, 120
      %v6094 = vpop.permute.xlu0 %6093
      %6095 = vrot.lane.b32.xlu0 %v5007, 120
      %v6096 = vpop.permute.xlu0 %6095
      %6097 = vrot.lane.b32.xlu0 %v5015, 120
      %v6098 = vpop.permute.xlu0 %6097
      %6099 = vrot.lane.b32.xlu0 %v5023, 120
      %v6100 = vpop.permute.xlu0 %6099
      %6101 = vrot.lane.b32.xlu0 %v5008, 120
      %v6102 = vpop.permute.xlu0 %6101
      %6103 = vrot.lane.b32.xlu0 %v5016, 120
      %v6104 = vpop.permute.xlu0 %6103
      %6105 = vrot.lane.b32.xlu0 %v5024, 120
      %v6106 = vpop.permute.xlu0 %6105
      %6107 = vrot.lane.b32.xlu0 %v5009, 120
      %v6108 = vpop.permute.xlu0 %6107
      %6109 = vrot.lane.b32.xlu0 %v5017, 120
      %v6110 = vpop.permute.xlu0 %6109
      %6111 = vrot.lane.b32.xlu0 %v5025, 120
      %v6112 = vpop.permute.xlu0 %6111
      %6113 = vrot.lane.b32.xlu0 %v5010, 120
      %v6114 = vpop.permute.xlu0 %6113
      %6115 = vrot.lane.b32.xlu0 %v5018, 120
      %v6116 = vpop.permute.xlu0 %6115
      %6117 = vrot.lane.b32.xlu0 %v5026, 120
      %v6118 = vpop.permute.xlu0 %6117
      %6119 = vrot.lane.b32.xlu0 %v5011, 120
      %v6120 = vpop.permute.xlu0 %6119
      %6121 = vrot.lane.b32.xlu0 %v5019, 120
      %v6122 = vpop.permute.xlu0 %6121
      %6123 = vrot.lane.b32.xlu0 %v5027, 120
      %v6124 = vpop.permute.xlu0 %6123
      %v6125 = vsel %vm682, %v6114, %v6120
      %v6126 = vsel %vm682, %v6116, %v6122
      %v6127 = vsel %vm682, %v6118, %v6124
      %v6128 = vsel %vm682, %v6108, %v6114
      %v6129 = vsel %vm682, %v6110, %v6116
      %v6130 = vsel %vm682, %v6112, %v6118
      %v6131 = vsel %vm682, %v6102, %v6108
      %v6132 = vsel %vm682, %v6104, %v6110
      %v6133 = vsel %vm682, %v6106, %v6112
      %v6134 = vsel %vm682, %v6096, %v6102
      %v6135 = vsel %vm682, %v6098, %v6104
      %v6136 = vsel %vm682, %v6100, %v6106
      %v6137 = vsel %vm682, %v6090, %v6096
      %v6138 = vsel %vm682, %v6092, %v6098
      %v6139 = vsel %vm682, %v6094, %v6100
      %v6140 = vsel %vm682, %v6084, %v6090
      %v6141 = vsel %vm682, %v6086, %v6092
      %v6142 = vsel %vm682, %v6088, %v6094
      %v6143 = vsel %vm682, %v6078, %v6084
      %v6144 = vsel %vm682, %v6080, %v6086
      %v6145 = vsel %vm682, %v6082, %v6088
      %v6146 = vsel %vm682, %v6120, %v6078
      %v6147 = vsel %vm682, %v6122, %v6080
      %v6148 = vsel %vm682, %v6124, %v6082
      %6149 = vst [vmem:[#allocation3 + $0x500] sm:$0xff] %v6143
      %6150 = vst [vmem:[#allocation3 + $0x508] sm:$0xff] %v6140
      %6151 = vst [vmem:[#allocation3 + $0x510] sm:$0xff] %v6137
      %6152 = vst [vmem:[#allocation3 + $0x518] sm:$0xff] %v6134
      %6153 = vst [vmem:[#allocation3 + $0x520] sm:$0xff] %v6131
      %6154 = vst [vmem:[#allocation3 + $0x528] sm:$0xff] %v6128
      %6155 = vst [vmem:[#allocation3 + $0x530] sm:$0xff] %v6125
      %6156 = vst [vmem:[#allocation3 + $0x538] sm:$0xff] %v6146
      %6157 = vst [vmem:[#allocation3 + $0x540] sm:$0xff] %v6144
      %6158 = vst [vmem:[#allocation3 + $0x548] sm:$0xff] %v6141
      %6159 = vst [vmem:[#allocation3 + $0x550] sm:$0xff] %v6138
      %6160 = vst [vmem:[#allocation3 + $0x558] sm:$0xff] %v6135
      %6161 = vst [vmem:[#allocation3 + $0x560] sm:$0xff] %v6132
      %6162 = vst [vmem:[#allocation3 + $0x568] sm:$0xff] %v6129
      %6163 = vst [vmem:[#allocation3 + $0x570] sm:$0xff] %v6126
      %6164 = vst [vmem:[#allocation3 + $0x578] sm:$0xff] %v6147
      %6165 = vst [vmem:[#allocation3 + $0x580] sm:$0xf] %v6145
      %6166 = vst [vmem:[#allocation3 + $0x588] sm:$0xf] %v6142
      %6167 = vst [vmem:[#allocation3 + $0x590] sm:$0xf] %v6139
      %6168 = vst [vmem:[#allocation3 + $0x598] sm:$0xf] %v6136
      %6169 = vst [vmem:[#allocation3 + $0x5a0] sm:$0xf] %v6133
      %6170 = vst [vmem:[#allocation3 + $0x5a8] sm:$0xf] %v6130
      %6171 = vst [vmem:[#allocation3 + $0x5b0] sm:$0xf] %v6127
      %6172 = vst [vmem:[#allocation3 + $0x5b8] sm:$0xf] %v6148
      %6173 = vrot.lane.b32.xlu0 %v5004, 119
      %v6174 = vpop.permute.xlu0 %6173
      %6175 = vrot.lane.b32.xlu0 %v5012, 119
      %v6176 = vpop.permute.xlu0 %6175
      %6177 = vrot.lane.b32.xlu0 %v5020, 119
      %v6178 = vpop.permute.xlu0 %6177
      %6179 = vrot.lane.b32.xlu0 %v5005, 119
      %v6180 = vpop.permute.xlu0 %6179
      %6181 = vrot.lane.b32.xlu0 %v5013, 119
      %v6182 = vpop.permute.xlu0 %6181
      %6183 = vrot.lane.b32.xlu0 %v5021, 119
      %v6184 = vpop.permute.xlu0 %6183
      %6185 = vrot.lane.b32.xlu0 %v5006, 119
      %v6186 = vpop.permute.xlu0 %6185
      %6187 = vrot.lane.b32.xlu0 %v5014, 119
      %v6188 = vpop.permute.xlu0 %6187
      %6189 = vrot.lane.b32.xlu0 %v5022, 119
      %v6190 = vpop.permute.xlu0 %6189
      %6191 = vrot.lane.b32.xlu0 %v5007, 119
      %v6192 = vpop.permute.xlu0 %6191
      %6193 = vrot.lane.b32.xlu0 %v5015, 119
      %v6194 = vpop.permute.xlu0 %6193
      %6195 = vrot.lane.b32.xlu0 %v5023, 119
      %v6196 = vpop.permute.xlu0 %6195
      %6197 = vrot.lane.b32.xlu0 %v5008, 119
      %v6198 = vpop.permute.xlu0 %6197
      %6199 = vrot.lane.b32.xlu0 %v5016, 119
      %v6200 = vpop.permute.xlu0 %6199
      %6201 = vrot.lane.b32.xlu0 %v5024, 119
      %v6202 = vpop.permute.xlu0 %6201
      %6203 = vrot.lane.b32.xlu0 %v5009, 119
      %v6204 = vpop.permute.xlu0 %6203
      %6205 = vrot.lane.b32.xlu0 %v5017, 119
      %v6206 = vpop.permute.xlu0 %6205
      %6207 = vrot.lane.b32.xlu0 %v5025, 119
      %v6208 = vpop.permute.xlu0 %6207
      %6209 = vrot.lane.b32.xlu0 %v5010, 119
      %v6210 = vpop.permute.xlu0 %6209
      %6211 = vrot.lane.b32.xlu0 %v5018, 119
      %v6212 = vpop.permute.xlu0 %6211
      %6213 = vrot.lane.b32.xlu0 %v5026, 119
      %v6214 = vpop.permute.xlu0 %6213
      %6215 = vrot.lane.b32.xlu0 %v5011, 119
      %v6216 = vpop.permute.xlu0 %6215
      %6217 = vrot.lane.b32.xlu0 %v5019, 119
      %v6218 = vpop.permute.xlu0 %6217
      %6219 = vrot.lane.b32.xlu0 %v5027, 119
      %v6220 = vpop.permute.xlu0 %6219
      %v6221 = vsel %vm715, %v6210, %v6216
      %v6222 = vsel %vm715, %v6212, %v6218
      %v6223 = vsel %vm715, %v6214, %v6220
      %v6224 = vsel %vm715, %v6204, %v6210
      %v6225 = vsel %vm715, %v6206, %v6212
      %v6226 = vsel %vm715, %v6208, %v6214
      %v6227 = vsel %vm715, %v6198, %v6204
      %v6228 = vsel %vm715, %v6200, %v6206
      %v6229 = vsel %vm715, %v6202, %v6208
      %v6230 = vsel %vm715, %v6192, %v6198
      %v6231 = vsel %vm715, %v6194, %v6200
      %v6232 = vsel %vm715, %v6196, %v6202
      %v6233 = vsel %vm715, %v6186, %v6192
      %v6234 = vsel %vm715, %v6188, %v6194
      %v6235 = vsel %vm715, %v6190, %v6196
      %v6236 = vsel %vm715, %v6180, %v6186
      %v6237 = vsel %vm715, %v6182, %v6188
      %v6238 = vsel %vm715, %v6184, %v6190
      %v6239 = vsel %vm715, %v6174, %v6180
      %v6240 = vsel %vm715, %v6176, %v6182
      %v6241 = vsel %vm715, %v6178, %v6184
      %v6242 = vsel %vm715, %v6216, %v6174
      %v6243 = vsel %vm715, %v6218, %v6176
      %v6244 = vsel %vm715, %v6220, %v6178
      %v6269 = vrot.slane %v6239, 4
      %v6270 = vrot.slane %v6236, 4
      %v6271 = vrot.slane %v6233, 4
      %v6272 = vrot.slane %v6230, 4
      %v6273 = vrot.slane %v6227, 4
      %v6274 = vrot.slane %v6224, 4
      %v6275 = vrot.slane %v6221, 4
      %v6276 = vrot.slane %v6242, 4
      %v6277 = vrot.slane %v6240, 4
      %v6278 = vsel %vm5148, %v6269, %v6277
      %v6279 = vrot.slane %v6237, 4
      %v6280 = vsel %vm5148, %v6270, %v6279
      %v6281 = vrot.slane %v6234, 4
      %v6282 = vsel %vm5148, %v6271, %v6281
      %v6283 = vrot.slane %v6231, 4
      %v6284 = vsel %vm5148, %v6272, %v6283
      %v6285 = vrot.slane %v6228, 4
      %v6286 = vsel %vm5148, %v6273, %v6285
      %v6287 = vrot.slane %v6225, 4
      %v6288 = vsel %vm5148, %v6274, %v6287
      %v6289 = vrot.slane %v6222, 4
      %v6290 = vsel %vm5148, %v6275, %v6289
      %v6291 = vrot.slane %v6243, 4
      %v6292 = vsel %vm5148, %v6276, %v6291
      %v6293 = vrot.slane %v6241, 4
      %v6294 = vsel %vm5148, %v6277, %v6293
      %v6295 = vrot.slane %v6238, 4
      %v6296 = vsel %vm5148, %v6279, %v6295
      %v6297 = vrot.slane %v6235, 4
      %v6298 = vsel %vm5148, %v6281, %v6297
      %v6299 = vrot.slane %v6232, 4
      %v6300 = vsel %vm5148, %v6283, %v6299
      %v6301 = vrot.slane %v6229, 4
      %v6302 = vsel %vm5148, %v6285, %v6301
      %v6303 = vrot.slane %v6226, 4
      %v6304 = vsel %vm5148, %v6287, %v6303
      %v6305 = vrot.slane %v6223, 4
      %v6306 = vsel %vm5148, %v6289, %v6305
      %v6307 = vrot.slane %v6244, 4
      %v6308 = vsel %vm5148, %v6291, %v6307
      %6333 = vst [vmem:[#allocation3 + $0x580] sm:$0xf0] %v6269
      %6334 = vst [vmem:[#allocation3 + $0x588] sm:$0xf0] %v6270
      %6335 = vst [vmem:[#allocation3 + $0x590] sm:$0xf0] %v6271
      %6336 = vst [vmem:[#allocation3 + $0x598] sm:$0xf0] %v6272
      %6337 = vst [vmem:[#allocation3 + $0x5a0] sm:$0xf0] %v6273
      %6338 = vst [vmem:[#allocation3 + $0x5a8] sm:$0xf0] %v6274
      %6339 = vst [vmem:[#allocation3 + $0x5b0] sm:$0xf0] %v6275
      %6340 = vst [vmem:[#allocation3 + $0x5b8] sm:$0xf0] %v6276
      %6341 = vst [vmem:[#allocation3 + $0x5c0] sm:$0xff] %v6278
      %6342 = vst [vmem:[#allocation3 + $0x5c8] sm:$0xff] %v6280
      %6343 = vst [vmem:[#allocation3 + $0x5d0] sm:$0xff] %v6282
      %6344 = vst [vmem:[#allocation3 + $0x5d8] sm:$0xff] %v6284
      %6345 = vst [vmem:[#allocation3 + $0x5e0] sm:$0xff] %v6286
      %6346 = vst [vmem:[#allocation3 + $0x5e8] sm:$0xff] %v6288
      %6347 = vst [vmem:[#allocation3 + $0x5f0] sm:$0xff] %v6290
      %6348 = vst [vmem:[#allocation3 + $0x5f8] sm:$0xff] %v6292
      %6349 = vst [vmem:[#allocation3 + $0x600] sm:$0xff] %v6294
      %6350 = vst [vmem:[#allocation3 + $0x608] sm:$0xff] %v6296
      %6351 = vst [vmem:[#allocation3 + $0x610] sm:$0xff] %v6298
      %6352 = vst [vmem:[#allocation3 + $0x618] sm:$0xff] %v6300
      %6353 = vst [vmem:[#allocation3 + $0x620] sm:$0xff] %v6302
      %6354 = vst [vmem:[#allocation3 + $0x628] sm:$0xff] %v6304
      %6355 = vst [vmem:[#allocation3 + $0x630] sm:$0xff] %v6306
      %6356 = vst [vmem:[#allocation3 + $0x638] sm:$0xff] %v6308
      %v6357 = vld [vmem:[%s3] sm:$0xff]
      %v6358 = vld [vmem:[%s3 + $0x8] sm:$0xff]
      %v6359 = vld [vmem:[%s3 + $0x10] sm:$0xff]
      %v6360 = vld [vmem:[%s3 + $0x18] sm:$0xff]
      %v6361 = vld [vmem:[%s3 + $0x20] sm:$0xff]
      %v6362 = vld [vmem:[%s3 + $0x28] sm:$0xff]
      %v6363 = vld [vmem:[%s3 + $0x30] sm:$0x3f]
      %v6364 = vld [vmem:[%s3 + $0x38] sm:$0x3f]
      %v6365 = vld [vmem:[#allocation3] sm:$0xff]
      %v6366 = vld [vmem:[#allocation3 + $0x8] sm:$0xff]
      %v6367 = vld [vmem:[#allocation3 + $0x10] sm:$0xff]
      %v6368 = vld [vmem:[#allocation3 + $0x18] sm:$0xff]
      %v6369 = vld [vmem:[#allocation3 + $0x20] sm:$0xff]
      %v6370 = vld [vmem:[#allocation3 + $0x28] sm:$0xff]
      %v6371 = vld [vmem:[#allocation3 + $0x30] sm:$0xff]
      %v6372 = vld [vmem:[#allocation3 + $0x38] sm:$0xff]
      %v6373 = vld [vmem:[#allocation3 + $0x40] sm:$0xff]
      %v6374 = vld [vmem:[#allocation3 + $0x48] sm:$0xff]
      %v6375 = vld [vmem:[#allocation3 + $0x50] sm:$0xff]
      %v6376 = vld [vmem:[#allocation3 + $0x58] sm:$0xff]
      %v6377 = vld [vmem:[#allocation3 + $0x60] sm:$0xff]
      %v6378 = vld [vmem:[#allocation3 + $0x68] sm:$0xff]
      %v6379 = vld [vmem:[#allocation3 + $0x70] sm:$0xff]
      %v6380 = vld [vmem:[#allocation3 + $0x78] sm:$0xff]
      %v6381 = vld [vmem:[#allocation3 + $0x80] sm:$0xff]
      %v6382 = vld [vmem:[#allocation3 + $0x88] sm:$0xff]
      %v6383 = vld [vmem:[#allocation3 + $0x90] sm:$0xff]
      %v6384 = vld [vmem:[#allocation3 + $0x98] sm:$0xff]
      %v6385 = vld [vmem:[#allocation3 + $0xa0] sm:$0xff]
      %v6386 = vld [vmem:[#allocation3 + $0xa8] sm:$0xff]
      %v6387 = vld [vmem:[#allocation3 + $0xb0] sm:$0xff]
      %v6388 = vld [vmem:[#allocation3 + $0xb8] sm:$0xff]
      %v6389 = vld [vmem:[#allocation3 + $0xc0] sm:$0xff]
      %v6390 = vld [vmem:[#allocation3 + $0xc8] sm:$0xff]
      %v6391 = vld [vmem:[#allocation3 + $0xd0] sm:$0xff]
      %v6392 = vld [vmem:[#allocation3 + $0xd8] sm:$0xff]
      %v6393 = vld [vmem:[#allocation3 + $0xe0] sm:$0xff]
      %v6394 = vld [vmem:[#allocation3 + $0xe8] sm:$0xff]
      %v6395 = vld [vmem:[#allocation3 + $0xf0] sm:$0xff]
      %v6396 = vld [vmem:[#allocation3 + $0xf8] sm:$0xff]
      %v6397 = vld [vmem:[#allocation3 + $0x100] sm:$0xff]
      %v6398 = vld [vmem:[#allocation3 + $0x108] sm:$0xff]
      %v6399 = vld [vmem:[#allocation3 + $0x110] sm:$0xff]
      %v6400 = vld [vmem:[#allocation3 + $0x118] sm:$0xff]
      %v6401 = vld [vmem:[#allocation3 + $0x120] sm:$0xff]
      %v6402 = vld [vmem:[#allocation3 + $0x128] sm:$0xff]
      %v6403 = vld [vmem:[#allocation3 + $0x130] sm:$0xff]
      %v6404 = vld [vmem:[#allocation3 + $0x138] sm:$0xff]
      %v6405 = vld [vmem:[#allocation3 + $0x140] sm:$0xff]
      %v6406 = vld [vmem:[#allocation3 + $0x148] sm:$0xff]
      %v6407 = vld [vmem:[#allocation3 + $0x150] sm:$0xff]
      %v6408 = vld [vmem:[#allocation3 + $0x158] sm:$0xff]
      %v6409 = vld [vmem:[#allocation3 + $0x160] sm:$0xff]
      %v6410 = vld [vmem:[#allocation3 + $0x168] sm:$0xff]
      %v6411 = vld [vmem:[#allocation3 + $0x170] sm:$0xff]
      %v6412 = vld [vmem:[#allocation3 + $0x178] sm:$0xff]
      %v6413 = vld [vmem:[#allocation3 + $0x180] sm:$0xff]
      %v6414 = vld [vmem:[#allocation3 + $0x188] sm:$0xff]
      %v6415 = vld [vmem:[#allocation3 + $0x190] sm:$0xff]
      %v6416 = vld [vmem:[#allocation3 + $0x198] sm:$0xff]
      %v6417 = vld [vmem:[#allocation3 + $0x1a0] sm:$0xff]
      %v6418 = vld [vmem:[#allocation3 + $0x1a8] sm:$0xff]
      %v6419 = vld [vmem:[#allocation3 + $0x1b0] sm:$0xff]
      %v6420 = vld [vmem:[#allocation3 + $0x1b8] sm:$0xff]
      %v6421 = vld [vmem:[#allocation3 + $0x1c0] sm:$0xff]
      %v6422 = vld [vmem:[#allocation3 + $0x1c8] sm:$0xff]
      %v6423 = vld [vmem:[#allocation3 + $0x1d0] sm:$0xff]
      %v6424 = vld [vmem:[#allocation3 + $0x1d8] sm:$0xff]
      %v6425 = vld [vmem:[#allocation3 + $0x1e0] sm:$0xff]
      %v6426 = vld [vmem:[#allocation3 + $0x1e8] sm:$0xff]
      %v6427 = vld [vmem:[#allocation3 + $0x1f0] sm:$0xff]
      %v6428 = vld [vmem:[#allocation3 + $0x1f8] sm:$0xff]
      %v6429 = vld [vmem:[#allocation3 + $0x200] sm:$0xff]
      %v6430 = vld [vmem:[#allocation3 + $0x208] sm:$0xff]
      %v6431 = vld [vmem:[#allocation3 + $0x210] sm:$0xff]
      %v6432 = vld [vmem:[#allocation3 + $0x218] sm:$0xff]
      %v6433 = vld [vmem:[#allocation3 + $0x220] sm:$0xff]
      %v6434 = vld [vmem:[#allocation3 + $0x228] sm:$0xff]
      %v6435 = vld [vmem:[#allocation3 + $0x230] sm:$0xff]
      %v6436 = vld [vmem:[#allocation3 + $0x238] sm:$0xff]
      %v6437 = vld [vmem:[#allocation3 + $0x240] sm:$0xff]
      %v6438 = vld [vmem:[#allocation3 + $0x248] sm:$0xff]
      %v6439 = vld [vmem:[#allocation3 + $0x250] sm:$0xff]
      %v6440 = vld [vmem:[#allocation3 + $0x258] sm:$0xff]
      %v6441 = vld [vmem:[#allocation3 + $0x260] sm:$0xff]
      %v6442 = vld [vmem:[#allocation3 + $0x268] sm:$0xff]
      %v6443 = vld [vmem:[#allocation3 + $0x270] sm:$0xff]
      %v6444 = vld [vmem:[#allocation3 + $0x278] sm:$0xff]
      %v6445 = vld [vmem:[#allocation3 + $0x280] sm:$0xff]
      %v6446 = vld [vmem:[#allocation3 + $0x288] sm:$0xff]
      %v6447 = vld [vmem:[#allocation3 + $0x290] sm:$0xff]
      %v6448 = vld [vmem:[#allocation3 + $0x298] sm:$0xff]
      %v6449 = vld [vmem:[#allocation3 + $0x2a0] sm:$0xff]
      %v6450 = vld [vmem:[#allocation3 + $0x2a8] sm:$0xff]
      %v6451 = vld [vmem:[#allocation3 + $0x2b0] sm:$0xff]
      %v6452 = vld [vmem:[#allocation3 + $0x2b8] sm:$0xff]
      %v6453 = vld [vmem:[#allocation3 + $0x2c0] sm:$0xff]
      %v6454 = vld [vmem:[#allocation3 + $0x2c8] sm:$0xff]
      %v6455 = vld [vmem:[#allocation3 + $0x2d0] sm:$0xff]
      %v6456 = vld [vmem:[#allocation3 + $0x2d8] sm:$0xff]
      %v6457 = vld [vmem:[#allocation3 + $0x2e0] sm:$0xff]
      %v6458 = vld [vmem:[#allocation3 + $0x2e8] sm:$0xff]
      %v6459 = vld [vmem:[#allocation3 + $0x2f0] sm:$0xff]
      %v6460 = vld [vmem:[#allocation3 + $0x2f8] sm:$0xff]
      %v6461 = vld [vmem:[#allocation3 + $0x300] sm:$0xff]
      %v6462 = vld [vmem:[#allocation3 + $0x308] sm:$0xff]
      %v6463 = vld [vmem:[#allocation3 + $0x310] sm:$0xff]
      %v6464 = vld [vmem:[#allocation3 + $0x318] sm:$0xff]
      %v6465 = vld [vmem:[#allocation3 + $0x320] sm:$0xff]
      %v6466 = vld [vmem:[#allocation3 + $0x328] sm:$0xff]
      %v6467 = vld [vmem:[#allocation3 + $0x330] sm:$0xff]
      %v6468 = vld [vmem:[#allocation3 + $0x338] sm:$0xff]
      %v6469 = vld [vmem:[#allocation3 + $0x340] sm:$0xff]
      %v6470 = vld [vmem:[#allocation3 + $0x348] sm:$0xff]
      %v6471 = vld [vmem:[#allocation3 + $0x350] sm:$0xff]
      %v6472 = vld [vmem:[#allocation3 + $0x358] sm:$0xff]
      %v6473 = vld [vmem:[#allocation3 + $0x360] sm:$0xff]
      %v6474 = vld [vmem:[#allocation3 + $0x368] sm:$0xff]
      %v6475 = vld [vmem:[#allocation3 + $0x370] sm:$0xff]
      %v6476 = vld [vmem:[#allocation3 + $0x378] sm:$0xff]
      %v6477 = vld [vmem:[#allocation3 + $0x380] sm:$0xff]
      %v6478 = vld [vmem:[#allocation3 + $0x388] sm:$0xff]
      %v6479 = vld [vmem:[#allocation3 + $0x390] sm:$0xff]
      %v6480 = vld [vmem:[#allocation3 + $0x398] sm:$0xff]
      %v6481 = vld [vmem:[#allocation3 + $0x3a0] sm:$0xff]
      %v6482 = vld [vmem:[#allocation3 + $0x3a8] sm:$0xff]
      %v6483 = vld [vmem:[#allocation3 + $0x3b0] sm:$0xff]
      %v6484 = vld [vmem:[#allocation3 + $0x3b8] sm:$0xff]
      %v6485 = vld [vmem:[#allocation3 + $0x3c0] sm:$0xff]
      %v6486 = vld [vmem:[#allocation3 + $0x3c8] sm:$0xff]
      %v6487 = vld [vmem:[#allocation3 + $0x3d0] sm:$0xff]
      %v6488 = vld [vmem:[#allocation3 + $0x3d8] sm:$0xff]
      %v6489 = vld [vmem:[#allocation3 + $0x3e0] sm:$0xff]
      %v6490 = vld [vmem:[#allocation3 + $0x3e8] sm:$0xff]
      %v6491 = vld [vmem:[#allocation3 + $0x3f0] sm:$0xff]
      %v6492 = vld [vmem:[#allocation3 + $0x3f8] sm:$0xff]
      %v6493 = vld [vmem:[#allocation3 + $0x400] sm:$0xff]
      %v6494 = vld [vmem:[#allocation3 + $0x408] sm:$0xff]
      %v6495 = vld [vmem:[#allocation3 + $0x410] sm:$0xff]
      %v6496 = vld [vmem:[#allocation3 + $0x418] sm:$0xff]
      %v6497 = vld [vmem:[#allocation3 + $0x420] sm:$0xff]
      %v6498 = vld [vmem:[#allocation3 + $0x428] sm:$0xff]
      %v6499 = vld [vmem:[#allocation3 + $0x430] sm:$0xff]
      %v6500 = vld [vmem:[#allocation3 + $0x438] sm:$0xff]
      %v6501 = vld [vmem:[#allocation3 + $0x440] sm:$0xff]
      %v6502 = vld [vmem:[#allocation3 + $0x448] sm:$0xff]
      %v6503 = vld [vmem:[#allocation3 + $0x450] sm:$0xff]
      %v6504 = vld [vmem:[#allocation3 + $0x458] sm:$0xff]
      %v6505 = vld [vmem:[#allocation3 + $0x460] sm:$0xff]
      %v6506 = vld [vmem:[#allocation3 + $0x468] sm:$0xff]
      %v6507 = vld [vmem:[#allocation3 + $0x470] sm:$0xff]
      %v6508 = vld [vmem:[#allocation3 + $0x478] sm:$0xff]
      %v6509 = vld [vmem:[#allocation3 + $0x480] sm:$0xff]
      %v6510 = vld [vmem:[#allocation3 + $0x488] sm:$0xff]
      %v6511 = vld [vmem:[#allocation3 + $0x490] sm:$0xff]
      %v6512 = vld [vmem:[#allocation3 + $0x498] sm:$0xff]
      %v6513 = vld [vmem:[#allocation3 + $0x4a0] sm:$0xff]
      %v6514 = vld [vmem:[#allocation3 + $0x4a8] sm:$0xff]
      %v6515 = vld [vmem:[#allocation3 + $0x4b0] sm:$0xff]
      %v6516 = vld [vmem:[#allocation3 + $0x4b8] sm:$0xff]
      %v6517 = vld [vmem:[#allocation3 + $0x4c0] sm:$0xff]
      %v6518 = vld [vmem:[#allocation3 + $0x4c8] sm:$0xff]
      %v6519 = vld [vmem:[#allocation3 + $0x4d0] sm:$0xff]
      %v6520 = vld [vmem:[#allocation3 + $0x4d8] sm:$0xff]
      %v6521 = vld [vmem:[#allocation3 + $0x4e0] sm:$0xff]
      %v6522 = vld [vmem:[#allocation3 + $0x4e8] sm:$0xff]
      %v6523 = vld [vmem:[#allocation3 + $0x4f0] sm:$0xff]
      %v6524 = vld [vmem:[#allocation3 + $0x4f8] sm:$0xff]
      %v6525 = vld [vmem:[#allocation3 + $0x500] sm:$0xff]
      %v6526 = vld [vmem:[#allocation3 + $0x508] sm:$0xff]
      %v6527 = vld [vmem:[#allocation3 + $0x510] sm:$0xff]
      %v6528 = vld [vmem:[#allocation3 + $0x518] sm:$0xff]
      %v6529 = vld [vmem:[#allocation3 + $0x520] sm:$0xff]
      %v6530 = vld [vmem:[#allocation3 + $0x528] sm:$0xff]
      %v6531 = vld [vmem:[#allocation3 + $0x530] sm:$0xff]
      %v6532 = vld [vmem:[#allocation3 + $0x538] sm:$0xff]
      %v6533 = vld [vmem:[#allocation3 + $0x540] sm:$0xff]
      %v6534 = vld [vmem:[#allocation3 + $0x548] sm:$0xff]
      %v6535 = vld [vmem:[#allocation3 + $0x550] sm:$0xff]
      %v6536 = vld [vmem:[#allocation3 + $0x558] sm:$0xff]
      %v6537 = vld [vmem:[#allocation3 + $0x560] sm:$0xff]
      %v6538 = vld [vmem:[#allocation3 + $0x568] sm:$0xff]
      %v6539 = vld [vmem:[#allocation3 + $0x570] sm:$0xff]
      %v6540 = vld [vmem:[#allocation3 + $0x578] sm:$0xff]
      %v6541 = vld [vmem:[#allocation3 + $0x580] sm:$0xff]
      %v6542 = vld [vmem:[#allocation3 + $0x588] sm:$0xff]
      %v6543 = vld [vmem:[#allocation3 + $0x590] sm:$0xff]
      %v6544 = vld [vmem:[#allocation3 + $0x598] sm:$0xff]
      %v6545 = vld [vmem:[#allocation3 + $0x5a0] sm:$0xff]
      %v6546 = vld [vmem:[#allocation3 + $0x5a8] sm:$0xff]
      %v6547 = vld [vmem:[#allocation3 + $0x5b0] sm:$0xff]
      %v6548 = vld [vmem:[#allocation3 + $0x5b8] sm:$0xff]
      %v6549 = vld [vmem:[#allocation3 + $0x5c0] sm:$0xff]
      %v6550 = vld [vmem:[#allocation3 + $0x5c8] sm:$0xff]
      %v6551 = vld [vmem:[#allocation3 + $0x5d0] sm:$0xff]
      %v6552 = vld [vmem:[#allocation3 + $0x5d8] sm:$0xff]
      %v6553 = vld [vmem:[#allocation3 + $0x5e0] sm:$0xff]
      %v6554 = vld [vmem:[#allocation3 + $0x5e8] sm:$0xff]
      %v6555 = vld [vmem:[#allocation3 + $0x5f0] sm:$0xff]
      %v6556 = vld [vmem:[#allocation3 + $0x5f8] sm:$0xff]
      %v6557 = vld [vmem:[#allocation3 + $0x600] sm:$0xff]
      %v6558 = vld [vmem:[#allocation3 + $0x608] sm:$0xff]
      %v6559 = vld [vmem:[#allocation3 + $0x610] sm:$0xff]
      %v6560 = vld [vmem:[#allocation3 + $0x618] sm:$0xff]
      %v6561 = vld [vmem:[#allocation3 + $0x620] sm:$0xff]
      %v6562 = vld [vmem:[#allocation3 + $0x628] sm:$0xff]
      %v6563 = vld [vmem:[#allocation3 + $0x630] sm:$0xff]
      %v6564 = vld [vmem:[#allocation3 + $0x638] sm:$0xff]
      %vm6565 = vcmask 588800
      %v6567 = vsel %vm6565, %v6358, 0
      %v6570 = vsel %vm6565, %v6360, 0
      %v6573 = vsel %vm6565, %v6362, 0
      %v6576 = vsel %vm6565, %v6364, 0
      %6578 = vmatprep.subr.mxu0 %v6366
      %6579 = vmatpush1.msra.mxu0 %v6365
      %6580 = vmatprep.subr.mxu0 %v6374
      %6581 = vmatpush1.msra.mxu0 %v6373
      %6582 = vmatprep.subr.mxu0 %v6382
      %6583 = vmatpush1.msra.mxu0 %v6381
      %6584 = vmatprep.subr.mxu0 %v6390
      %6585 = vmatpush1.msra.mxu0 %v6389
      %6586 = vmatprep.subr.mxu0 %v6398
      %6587 = vmatpush1.msra.mxu0 %v6397
      %6588 = vmatprep.subr.mxu0 %v6406
      %6589 = vmatpush1.msra.mxu0 %v6405
      %6590 = vmatprep.subr.mxu0 %v6414
      %6591 = vmatpush1.msra.mxu0 %v6413
      %6592 = vmatprep.subr.mxu0 %v6422
      %6593 = vmatpush1.msra.mxu0 %v6421
      %6594 = vmatprep.subr.mxu0 %v6430
      %6595 = vmatpush1.msra.mxu0 %v6429
      %6596 = vmatprep.subr.mxu0 %v6438
      %6597 = vmatpush1.msra.mxu0 %v6437
      %6598 = vmatprep.subr.mxu0 %v6446
      %6599 = vmatpush1.msra.mxu0 %v6445
      %6600 = vmatprep.subr.mxu0 %v6454
      %6601 = vmatpush1.msra.mxu0 %v6453
      %6602 = vmatprep.subr.mxu0 %v6462
      %6603 = vmatpush1.msra.mxu0 %v6461
      %6604 = vmatprep.subr.mxu0 %v6470
      %6605 = vmatpush1.msra.mxu0 %v6469
      %6606 = vmatprep.subr.mxu0 %v6478
      %6607 = vmatpush1.msra.mxu0 %v6477
      %6608 = vmatprep.subr.mxu0 %v6486
      %6609 = vmatpush1.msra.mxu0 %v6485
      %6610 = vmatprep.subr.mxu0 %v6494
      %6611 = vmatpush1.msra.mxu0 %v6493
      %6612 = vmatprep.subr.mxu0 %v6502
      %6613 = vmatpush1.msra.mxu0 %v6501
      %6614 = vmatprep.subr.mxu0 %v6510
      %6615 = vmatpush1.msra.mxu0 %v6509
      %6616 = vmatprep.subr.mxu0 %v6518
      %6617 = vmatpush1.msra.mxu0 %v6517
      %6618 = vmatprep.subr.mxu0 %v6526
      %6619 = vmatpush1.msra.mxu0 %v6525
      %6620 = vmatprep.subr.mxu0 %v6534
      %6621 = vmatpush1.msra.mxu0 %v6533
      %6622 = vmatprep.subr.mxu0 %v6542
      %6623 = vmatpush1.msra.mxu0 %v6541
      %6624 = vmatprep.subr.mxu0 %v6550
      %6625 = vmatpush1.msra.mxu0 %v6549
      %6626 = vmatprep.subr.mxu0 %v6558
      %6627 = vmatpush1.msra.mxu0 %v6557
      %6628 = vmatprep.subr.mxu0 0.0
      %6629 = vmatpush1.msra.mxu0 0.0
      %6630 = vmatprep.subr.mxu0 0.0
      %6631 = vmatpush1.msra.mxu0 0.0
      %6632 = vmatprep.subr.mxu0 0.0
      %6633 = vmatpush1.msra.mxu0 0.0
      %6634 = vmatprep.subr.mxu0 0.0
      %6635 = vmatpush1.msra.mxu0 0.0
      %6636 = vmatprep.subr.mxu0 0.0
      %6637 = vmatpush1.msra.mxu0 0.0
      %6638 = vmatprep.subr.mxu0 0.0
      %6639 = vmatpush1.msra.mxu0 0.0
      %6640 = vmatprep.subr.mxu0 0.0
      %6641 = vmatpush1.msra.mxu0 0.0
      %6642 = vmatprep.mubr.f32.mxu0 %v6567
      %6643 = vmatmul.mubr.f32.gmra.mrb[0].mxu0 %v6357
      %v6644 = vpop.f32.mrb[0].mxu0
      %v6645 = vadd.f32 0.0, %v6644
      %v6646 = vpop.f32.mrb[0].mxu0
      %v6647 = vadd.f32 0.0, %v6646
      %6648 = vmatprep.mubr.f32.mxu0 %v6570
      %6649 = vmatmul.mubr.f32.gmra.mrb[0].mxu0 %v6359
      %v6650 = vpop.f32.mrb[0].mxu0
      %v6651 = vadd.f32 0.0, %v6650
      %v6652 = vpop.f32.mrb[0].mxu0
      %v6653 = vadd.f32 0.0, %v6652
      %6654 = vmatprep.mubr.f32.mxu0 %v6573
      %6655 = vmatmul.mubr.f32.gmra.mrb[0].mxu0 %v6361
      %v6656 = vpop.f32.mrb[0].mxu0
      %v6657 = vadd.f32 0.0, %v6656
      %v6658 = vpop.f32.mrb[0].mxu0
      %v6659 = vadd.f32 0.0, %v6658
      %6660 = vmatprep.mubr.f32.mxu0 %v6576
      %6661 = vmatmul.mubr.f32.gmra.mrb[0].mxu0 %v6363
      %v6662 = vpop.f32.mrb[0].mxu0
      %v6663 = vadd.f32 0.0, %v6662
      %v6664 = vpop.f32.mrb[0].mxu0
      %v6665 = vadd.f32 0.0, %v6664
      %6666 = vdwg.mxu0
      %6667 = vmatprep.subr.mxu0 %v6368
      %6668 = vmatpush1.msra.mxu0 %v6367
      %6669 = vmatprep.subr.mxu0 %v6376
      %6670 = vmatpush1.msra.mxu0 %v6375
      %6671 = vmatprep.subr.mxu0 %v6384
      %6672 = vmatpush1.msra.mxu0 %v6383
      %6673 = vmatprep.subr.mxu0 %v6392
      %6674 = vmatpush1.msra.mxu0 %v6391
      %6675 = vmatprep.subr.mxu0 %v6400
      %6676 = vmatpush1.msra.mxu0 %v6399
      %6677 = vmatprep.subr.mxu0 %v6408
      %6678 = vmatpush1.msra.mxu0 %v6407
      %6679 = vmatprep.subr.mxu0 %v6416
      %6680 = vmatpush1.msra.mxu0 %v6415
      %6681 = vmatprep.subr.mxu0 %v6424
      %6682 = vmatpush1.msra.mxu0 %v6423
      %6683 = vmatprep.subr.mxu0 %v6432
      %6684 = vmatpush1.msra.mxu0 %v6431
      %6685 = vmatprep.subr.mxu0 %v6440
      %6686 = vmatpush1.msra.mxu0 %v6439
      %6687 = vmatprep.subr.mxu0 %v6448
      %6688 = vmatpush1.msra.mxu0 %v6447
      %6689 = vmatprep.subr.mxu0 %v6456
      %6690 = vmatpush1.msra.mxu0 %v6455
      %6691 = vmatprep.subr.mxu0 %v6464
      %6692 = vmatpush1.msra.mxu0 %v6463
      %6693 = vmatprep.subr.mxu0 %v6472
      %6694 = vmatpush1.msra.mxu0 %v6471
      %6695 = vmatprep.subr.mxu0 %v6480
      %6696 = vmatpush1.msra.mxu0 %v6479
      %6697 = vmatprep.subr.mxu0 %v6488
      %6698 = vmatpush1.msra.mxu0 %v6487
      %6699 = vmatprep.subr.mxu0 %v6496
      %6700 = vmatpush1.msra.mxu0 %v6495
      %6701 = vmatprep.subr.mxu0 %v6504
      %6702 = vmatpush1.msra.mxu0 %v6503
      %6703 = vmatprep.subr.mxu0 %v6512
      %6704 = vmatpush1.msra.mxu0 %v6511
      %6705 = vmatprep.subr.mxu0 %v6520
      %6706 = vmatpush1.msra.mxu0 %v6519
      %6707 = vmatprep.subr.mxu0 %v6528
      %6708 = vmatpush1.msra.mxu0 %v6527
      %6709 = vmatprep.subr.mxu0 %v6536
      %6710 = vmatpush1.msra.mxu0 %v6535
      %6711 = vmatprep.subr.mxu0 %v6544
      %6712 = vmatpush1.msra.mxu0 %v6543
      %6713 = vmatprep.subr.mxu0 %v6552
      %6714 = vmatpush1.msra.mxu0 %v6551
      %6715 = vmatprep.subr.mxu0 %v6560
      %6716 = vmatpush1.msra.mxu0 %v6559
      %6717 = vmatprep.subr.mxu0 0.0
      %6718 = vmatpush1.msra.mxu0 0.0
      %6719 = vmatprep.subr.mxu0 0.0
      %6720 = vmatpush1.msra.mxu0 0.0
      %6721 = vmatprep.subr.mxu0 0.0
      %6722 = vmatpush1.msra.mxu0 0.0
      %6723 = vmatprep.subr.mxu0 0.0
      %6724 = vmatpush1.msra.mxu0 0.0
      %6725 = vmatprep.subr.mxu0 0.0
      %6726 = vmatpush1.msra.mxu0 0.0
      %6727 = vmatprep.subr.mxu0 0.0
      %6728 = vmatpush1.msra.mxu0 0.0
      %6729 = vmatprep.subr.mxu0 0.0
      %6730 = vmatpush1.msra.mxu0 0.0
      %6731 = vmatprep.mubr.f32.mxu0 %v6567
      %6732 = vmatmul.mubr.f32.gmra.mrb[0].mxu0 %v6357
      %v6733 = vpop.f32.mrb[0].mxu0
      %v6734 = vadd.f32 0.0, %v6733
      %v6735 = vpop.f32.mrb[0].mxu0
      %v6736 = vadd.f32 0.0, %v6735
      %6737 = vmatprep.mubr.f32.mxu0 %v6570
      %6738 = vmatmul.mubr.f32.gmra.mrb[0].mxu0 %v6359
      %v6739 = vpop.f32.mrb[0].mxu0
      %v6740 = vadd.f32 0.0, %v6739
      %v6741 = vpop.f32.mrb[0].mxu0
      %v6742 = vadd.f32 0.0, %v6741
      %6743 = vmatprep.mubr.f32.mxu0 %v6573
      %6744 = vmatmul.mubr.f32.gmra.mrb[0].mxu0 %v6361
      %v6745 = vpop.f32.mrb[0].mxu0
      %v6746 = vadd.f32 0.0, %v6745
      %v6747 = vpop.f32.mrb[0].mxu0
      %v6748 = vadd.f32 0.0, %v6747
      %6749 = vmatprep.mubr.f32.mxu0 %v6576
      %6750 = vmatmul.mubr.f32.gmra.mrb[0].mxu0 %v6363
      %v6751 = vpop.f32.mrb[0].mxu0
      %v6752 = vadd.f32 0.0, %v6751
      %v6753 = vpop.f32.mrb[0].mxu0
      %v6754 = vadd.f32 0.0, %v6753
      %6755 = vdwg.mxu0
      %6756 = vmatprep.subr.mxu0 %v6370
      %6757 = vmatpush1.msra.mxu0 %v6369
      %6758 = vmatprep.subr.mxu0 %v6378
      %6759 = vmatpush1.msra.mxu0 %v6377
      %6760 = vmatprep.subr.mxu0 %v6386
      %6761 = vmatpush1.msra.mxu0 %v6385
      %6762 = vmatprep.subr.mxu0 %v6394
      %6763 = vmatpush1.msra.mxu0 %v6393
      %6764 = vmatprep.subr.mxu0 %v6402
      %6765 = vmatpush1.msra.mxu0 %v6401
      %6766 = vmatprep.subr.mxu0 %v6410
      %6767 = vmatpush1.msra.mxu0 %v6409
      %6768 = vmatprep.subr.mxu0 %v6418
      %6769 = vmatpush1.msra.mxu0 %v6417
      %6770 = vmatprep.subr.mxu0 %v6426
      %6771 = vmatpush1.msra.mxu0 %v6425
      %6772 = vmatprep.subr.mxu0 %v6434
      %6773 = vmatpush1.msra.mxu0 %v6433
      %6774 = vmatprep.subr.mxu0 %v6442
      %6775 = vmatpush1.msra.mxu0 %v6441
      %6776 = vmatprep.subr.mxu0 %v6450
      %6777 = vmatpush1.msra.mxu0 %v6449
      %6778 = vmatprep.subr.mxu0 %v6458
      %6779 = vmatpush1.msra.mxu0 %v6457
      %6780 = vmatprep.subr.mxu0 %v6466
      %6781 = vmatpush1.msra.mxu0 %v6465
      %6782 = vmatprep.subr.mxu0 %v6474
      %6783 = vmatpush1.msra.mxu0 %v6473
      %6784 = vmatprep.subr.mxu0 %v6482
      %6785 = vmatpush1.msra.mxu0 %v6481
      %6786 = vmatprep.subr.mxu0 %v6490
      %6787 = vmatpush1.msra.mxu0 %v6489
      %6788 = vmatprep.subr.mxu0 %v6498
      %6789 = vmatpush1.msra.mxu0 %v6497
      %6790 = vmatprep.subr.mxu0 %v6506
      %6791 = vmatpush1.msra.mxu0 %v6505
      %6792 = vmatprep.subr.mxu0 %v6514
      %6793 = vmatpush1.msra.mxu0 %v6513
      %6794 = vmatprep.subr.mxu0 %v6522
      %6795 = vmatpush1.msra.mxu0 %v6521
      %6796 = vmatprep.subr.mxu0 %v6530
      %6797 = vmatpush1.msra.mxu0 %v6529
      %6798 = vmatprep.subr.mxu0 %v6538
      %6799 = vmatpush1.msra.mxu0 %v6537
      %6800 = vmatprep.subr.mxu0 %v6546
      %6801 = vmatpush1.msra.mxu0 %v6545
      %6802 = vmatprep.subr.mxu0 %v6554
      %6803 = vmatpush1.msra.mxu0 %v6553
      %6804 = vmatprep.subr.mxu0 %v6562
      %6805 = vmatpush1.msra.mxu0 %v6561
      %6806 = vmatprep.subr.mxu0 0.0
      %6807 = vmatpush1.msra.mxu0 0.0
      %6808 = vmatprep.subr.mxu0 0.0
      %6809 = vmatpush1.msra.mxu0 0.0
      %6810 = vmatprep.subr.mxu0 0.0
      %6811 = vmatpush1.msra.mxu0 0.0
      %6812 = vmatprep.subr.mxu0 0.0
      %6813 = vmatpush1.msra.mxu0 0.0
      %6814 = vmatprep.subr.mxu0 0.0
      %6815 = vmatpush1.msra.mxu0 0.0
      %6816 = vmatprep.subr.mxu0 0.0
      %6817 = vmatpush1.msra.mxu0 0.0
      %6818 = vmatprep.subr.mxu0 0.0
      %6819 = vmatpush1.msra.mxu0 0.0
      %6820 = vmatprep.mubr.f32.mxu0 %v6567
      %6821 = vmatmul.mubr.f32.gmra.mrb[0].mxu0 %v6357
      %v6822 = vpop.f32.mrb[0].mxu0
      %v6823 = vadd.f32 0.0, %v6822
      %v6824 = vpop.f32.mrb[0].mxu0
      %v6825 = vadd.f32 0.0, %v6824
      %6826 = vmatprep.mubr.f32.mxu0 %v6570
      %6827 = vmatmul.mubr.f32.gmra.mrb[0].mxu0 %v6359
      %v6828 = vpop.f32.mrb[0].mxu0
      %v6829 = vadd.f32 0.0, %v6828
      %v6830 = vpop.f32.mrb[0].mxu0
      %v6831 = vadd.f32 0.0, %v6830
      %6832 = vmatprep.mubr.f32.mxu0 %v6573
      %6833 = vmatmul.mubr.f32.gmra.mrb[0].mxu0 %v6361
      %v6834 = vpop.f32.mrb[0].mxu0
      %v6835 = vadd.f32 0.0, %v6834
      %v6836 = vpop.f32.mrb[0].mxu0
      %v6837 = vadd.f32 0.0, %v6836
      %6838 = vmatprep.mubr.f32.mxu0 %v6576
      %6839 = vmatmul.mubr.f32.gmra.mrb[0].mxu0 %v6363
      %v6840 = vpop.f32.mrb[0].mxu0
      %v6841 = vadd.f32 0.0, %v6840
      %v6842 = vpop.f32.mrb[0].mxu0
      %v6843 = vadd.f32 0.0, %v6842
      %6844 = vdwg.mxu0
      %6845 = vmatprep.subr.mxu0 %v6372
      %6846 = vmatpush1.msra.mxu0 %v6371
      %6847 = vmatprep.subr.mxu0 %v6380
      %6848 = vmatpush1.msra.mxu0 %v6379
      %6849 = vmatprep.subr.mxu0 %v6388
      %6850 = vmatpush1.msra.mxu0 %v6387
      %6851 = vmatprep.subr.mxu0 %v6396
      %6852 = vmatpush1.msra.mxu0 %v6395
      %6853 = vmatprep.subr.mxu0 %v6404
      %6854 = vmatpush1.msra.mxu0 %v6403
      %6855 = vmatprep.subr.mxu0 %v6412
      %6856 = vmatpush1.msra.mxu0 %v6411
      %6857 = vmatprep.subr.mxu0 %v6420
      %6858 = vmatpush1.msra.mxu0 %v6419
      %6859 = vmatprep.subr.mxu0 %v6428
      %6860 = vmatpush1.msra.mxu0 %v6427
      %6861 = vmatprep.subr.mxu0 %v6436
      %6862 = vmatpush1.msra.mxu0 %v6435
      %6863 = vmatprep.subr.mxu0 %v6444
      %6864 = vmatpush1.msra.mxu0 %v6443
      %6865 = vmatprep.subr.mxu0 %v6452
      %6866 = vmatpush1.msra.mxu0 %v6451
      %6867 = vmatprep.subr.mxu0 %v6460
      %6868 = vmatpush1.msra.mxu0 %v6459
      %6869 = vmatprep.subr.mxu0 %v6468
      %6870 = vmatpush1.msra.mxu0 %v6467
      %6871 = vmatprep.subr.mxu0 %v6476
      %6872 = vmatpush1.msra.mxu0 %v6475
      %6873 = vmatprep.subr.mxu0 %v6484
      %6874 = vmatpush1.msra.mxu0 %v6483
      %6875 = vmatprep.subr.mxu0 %v6492
      %6876 = vmatpush1.msra.mxu0 %v6491
      %6877 = vmatprep.subr.mxu0 %v6500
      %6878 = vmatpush1.msra.mxu0 %v6499
      %6879 = vmatprep.subr.mxu0 %v6508
      %6880 = vmatpush1.msra.mxu0 %v6507
      %6881 = vmatprep.subr.mxu0 %v6516
      %6882 = vmatpush1.msra.mxu0 %v6515
      %6883 = vmatprep.subr.mxu0 %v6524
      %6884 = vmatpush1.msra.mxu0 %v6523
      %6885 = vmatprep.subr.mxu0 %v6532
      %6886 = vmatpush1.msra.mxu0 %v6531
      %6887 = vmatprep.subr.mxu0 %v6540
      %6888 = vmatpush1.msra.mxu0 %v6539
      %6889 = vmatprep.subr.mxu0 %v6548
      %6890 = vmatpush1.msra.mxu0 %v6547
      %6891 = vmatprep.subr.mxu0 %v6556
      %6892 = vmatpush1.msra.mxu0 %v6555
      %6893 = vmatprep.subr.mxu0 %v6564
      %6894 = vmatpush1.msra.mxu0 %v6563
      %6895 = vmatprep.subr.mxu0 0.0
      %6896 = vmatpush1.msra.mxu0 0.0
      %6897 = vmatprep.subr.mxu0 0.0
      %6898 = vmatpush1.msra.mxu0 0.0
      %6899 = vmatprep.subr.mxu0 0.0
      %6900 = vmatpush1.msra.mxu0 0.0
      %6901 = vmatprep.subr.mxu0 0.0
      %6902 = vmatpush1.msra.mxu0 0.0
      %6903 = vmatprep.subr.mxu0 0.0
      %6904 = vmatpush1.msra.mxu0 0.0
      %6905 = vmatprep.subr.mxu0 0.0
      %6906 = vmatpush1.msra.mxu0 0.0
      %6907 = vmatprep.subr.mxu0 0.0
      %6908 = vmatpush1.msra.mxu0 0.0
      %6909 = vmatprep.mubr.f32.mxu0 %v6567
      %6910 = vmatmul.mubr.f32.gmra.mrb[0].mxu0 %v6357
      %v6911 = vpop.f32.mrb[0].mxu0
      %v6912 = vadd.f32 0.0, %v6911
      %v6913 = vpop.f32.mrb[0].mxu0
      %v6914 = vadd.f32 0.0, %v6913
      %6915 = vmatprep.mubr.f32.mxu0 %v6570
      %6916 = vmatmul.mubr.f32.gmra.mrb[0].mxu0 %v6359
      %v6917 = vpop.f32.mrb[0].mxu0
      %v6918 = vadd.f32 0.0, %v6917
      %v6919 = vpop.f32.mrb[0].mxu0
      %v6920 = vadd.f32 0.0, %v6919
      %6921 = vmatprep.mubr.f32.mxu0 %v6573
      %6922 = vmatmul.mubr.f32.gmra.mrb[0].mxu0 %v6361
      %v6923 = vpop.f32.mrb[0].mxu0
      %v6924 = vadd.f32 0.0, %v6923
      %v6925 = vpop.f32.mrb[0].mxu0
      %v6926 = vadd.f32 0.0, %v6925
      %6927 = vmatprep.mubr.f32.mxu0 %v6576
      %6928 = vmatmul.mubr.f32.gmra.mrb[0].mxu0 %v6363
      %v6929 = vpop.f32.mrb[0].mxu0
      %v6930 = vadd.f32 0.0, %v6929
      %v6931 = vpop.f32.mrb[0].mxu0
      %v6932 = vadd.f32 0.0, %v6931
      %6933 = vdwg.mxu0
      %v6942 = vrot.slane %v6645, 3
      %v6943 = vrot.slane %v6647, 3
      %v6944 = vrot.slane %v6734, 3
      %v6945 = vrot.slane %v6736, 3
      %v6946 = vrot.slane %v6823, 3
      %v6947 = vrot.slane %v6825, 3
      %v6948 = vrot.slane %v6912, 3
      %v6949 = vrot.slane %v6914, 3
      %6958 = vrot.lane.b32.xlu0 %v6942, 96
      %v6959 = vpop.permute.xlu0 %6958
      %6960 = vrot.lane.b32.xlu0 %v6943, 96
      %v6961 = vpop.permute.xlu0 %6960
      %6962 = vrot.lane.b32.xlu0 %v6944, 96
      %v6963 = vpop.permute.xlu0 %6962
      %6964 = vrot.lane.b32.xlu0 %v6945, 96
      %v6965 = vpop.permute.xlu0 %6964
      %6966 = vrot.lane.b32.xlu0 %v6946, 96
      %v6967 = vpop.permute.xlu0 %6966
      %6968 = vrot.lane.b32.xlu0 %v6947, 96
      %v6969 = vpop.permute.xlu0 %6968
      %6970 = vrot.lane.b32.xlu0 %v6948, 96
      %v6971 = vpop.permute.xlu0 %6970
      %6972 = vrot.lane.b32.xlu0 %v6949, 96
      %v6973 = vpop.permute.xlu0 %6972
      %v6974 = vsel %vm1210, %v6971, %v6973
      %v6975 = vsel %vm1210, %v6969, %v6971
      %v6976 = vsel %vm1210, %v6967, %v6969
      %v6977 = vsel %vm1210, %v6965, %v6967
      %v6978 = vsel %vm1210, %v6963, %v6965
      %v6979 = vsel %vm1210, %v6961, %v6963
      %v6980 = vsel %vm1210, %v6959, %v6961
      %v6981 = vsel %vm1210, %v6973, %v6959
      %v6982 = vadd.f32 %v6645, %v6980
      %v6983 = vadd.f32 %v6647, %v6979
      %v6984 = vadd.f32 %v6734, %v6978
      %v6985 = vadd.f32 %v6736, %v6977
      %v6986 = vadd.f32 %v6823, %v6976
      %v6987 = vadd.f32 %v6825, %v6975
      %v6988 = vadd.f32 %v6912, %v6974
      %v6989 = vadd.f32 %v6914, %v6981
      %vm6998 = vcmask 1041408
      %v6999 = vrot.slane %v6645, 6
      %v7000 = vrot.slane %v6651, 6
      %v7001 = vsel %vm6998, %v6999, %v7000
      %v7002 = vrot.slane %v6647, 6
      %v7003 = vrot.slane %v6653, 6
      %v7004 = vsel %vm6998, %v7002, %v7003
      %v7005 = vrot.slane %v6734, 6
      %v7006 = vrot.slane %v6740, 6
      %v7007 = vsel %vm6998, %v7005, %v7006
      %v7008 = vrot.slane %v6736, 6
      %v7009 = vrot.slane %v6742, 6
      %v7010 = vsel %vm6998, %v7008, %v7009
      %v7011 = vrot.slane %v6823, 6
      %v7012 = vrot.slane %v6829, 6
      %v7013 = vsel %vm6998, %v7011, %v7012
      %v7014 = vrot.slane %v6825, 6
      %v7015 = vrot.slane %v6831, 6
      %v7016 = vsel %vm6998, %v7014, %v7015
      %v7017 = vrot.slane %v6912, 6
      %v7018 = vrot.slane %v6918, 6
      %v7019 = vsel %vm6998, %v7017, %v7018
      %v7020 = vrot.slane %v6914, 6
      %v7021 = vrot.slane %v6920, 6
      %v7022 = vsel %vm6998, %v7020, %v7021
      %7031 = vrot.lane.b32.xlu0 %v7001, 64
      %v7032 = vpop.permute.xlu0 %7031
      %7033 = vrot.lane.b32.xlu0 %v7004, 64
      %v7034 = vpop.permute.xlu0 %7033
      %7035 = vrot.lane.b32.xlu0 %v7007, 64
      %v7036 = vpop.permute.xlu0 %7035
      %7037 = vrot.lane.b32.xlu0 %v7010, 64
      %v7038 = vpop.permute.xlu0 %7037
      %7039 = vrot.lane.b32.xlu0 %v7013, 64
      %v7040 = vpop.permute.xlu0 %7039
      %7041 = vrot.lane.b32.xlu0 %v7016, 64
      %v7042 = vpop.permute.xlu0 %7041
      %7043 = vrot.lane.b32.xlu0 %v7019, 64
      %v7044 = vpop.permute.xlu0 %7043
      %7045 = vrot.lane.b32.xlu0 %v7022, 64
      %v7046 = vpop.permute.xlu0 %7045
      %v7047 = vsel %vm1969, %v7044, %v7046
      %v7048 = vsel %vm1969, %v7042, %v7044
      %v7049 = vsel %vm1969, %v7040, %v7042
      %v7050 = vsel %vm1969, %v7038, %v7040
      %v7051 = vsel %vm1969, %v7036, %v7038
      %v7052 = vsel %vm1969, %v7034, %v7036
      %v7053 = vsel %vm1969, %v7032, %v7034
      %v7054 = vsel %vm1969, %v7046, %v7032
      %v7055 = vadd.f32 %v6982, %v7053
      %v7056 = vadd.f32 %v6983, %v7052
      %v7057 = vadd.f32 %v6984, %v7051
      %v7058 = vadd.f32 %v6985, %v7050
      %v7059 = vadd.f32 %v6986, %v7049
      %v7060 = vadd.f32 %v6987, %v7048
      %v7061 = vadd.f32 %v6988, %v7047
      %v7062 = vadd.f32 %v6989, %v7054
      %v7063 = vrot.slane %v6651, 1
      %v7064 = vrot.slane %v6653, 1
      %v7065 = vrot.slane %v6740, 1
      %v7066 = vrot.slane %v6742, 1
      %v7067 = vrot.slane %v6829, 1
      %v7068 = vrot.slane %v6831, 1
      %v7069 = vrot.slane %v6918, 1
      %v7070 = vrot.slane %v6920, 1
      %7079 = vrot.lane.b32.xlu0 %v7063, 32
      %v7080 = vpop.permute.xlu0 %7079
      %7081 = vrot.lane.b32.xlu0 %v7064, 32
      %v7082 = vpop.permute.xlu0 %7081
      %7083 = vrot.lane.b32.xlu0 %v7065, 32
      %v7084 = vpop.permute.xlu0 %7083
      %7085 = vrot.lane.b32.xlu0 %v7066, 32
      %v7086 = vpop.permute.xlu0 %7085
      %7087 = vrot.lane.b32.xlu0 %v7067, 32
      %v7088 = vpop.permute.xlu0 %7087
      %7089 = vrot.lane.b32.xlu0 %v7068, 32
      %v7090 = vpop.permute.xlu0 %7089
      %7091 = vrot.lane.b32.xlu0 %v7069, 32
      %v7092 = vpop.permute.xlu0 %7091
      %7093 = vrot.lane.b32.xlu0 %v7070, 32
      %v7094 = vpop.permute.xlu0 %7093
      %v7095 = vsel %vm2411, %v7092, %v7094
      %v7096 = vsel %vm2411, %v7090, %v7092
      %v7097 = vsel %vm2411, %v7088, %v7090
      %v7098 = vsel %vm2411, %v7086, %v7088
      %v7099 = vsel %vm2411, %v7084, %v7086
      %v7100 = vsel %vm2411, %v7082, %v7084
      %v7101 = vsel %vm2411, %v7080, %v7082
      %v7102 = vsel %vm2411, %v7094, %v7080
      %v7103 = vadd.f32 %v7055, %v7101
      %v7104 = vadd.f32 %v7056, %v7100
      %v7105 = vadd.f32 %v7057, %v7099
      %v7106 = vadd.f32 %v7058, %v7098
      %v7107 = vadd.f32 %v7059, %v7097
      %v7108 = vadd.f32 %v7060, %v7096
      %v7109 = vadd.f32 %v7061, %v7095
      %v7110 = vadd.f32 %v7062, %v7102
      %v7111 = vrot.slane %v6651, 4
      %v7112 = vrot.slane %v6653, 4
      %v7113 = vrot.slane %v6740, 4
      %v7114 = vrot.slane %v6742, 4
      %v7115 = vrot.slane %v6829, 4
      %v7116 = vrot.slane %v6831, 4
      %v7117 = vrot.slane %v6918, 4
      %v7118 = vrot.slane %v6920, 4
      %v7127 = vadd.f32 %v7103, %v7112
      %v7128 = vadd.f32 %v7104, %v7113
      %v7129 = vadd.f32 %v7105, %v7114
      %v7130 = vadd.f32 %v7106, %v7115
      %v7131 = vadd.f32 %v7107, %v7116
      %v7132 = vadd.f32 %v7108, %v7117
      %v7133 = vadd.f32 %v7109, %v7118
      %v7134 = vadd.f32 %v7110, %v7111
      %vm7143 = vcmask 1040384
      %v7144 = vrot.slane %v6651, 7
      %v7145 = vrot.slane %v6657, 7
      %v7146 = vsel %vm7143, %v7144, %v7145
      %v7147 = vrot.slane %v6653, 7
      %v7148 = vrot.slane %v6659, 7
      %v7149 = vsel %vm7143, %v7147, %v7148
      %v7150 = vrot.slane %v6740, 7
      %v7151 = vrot.slane %v6746, 7
      %v7152 = vsel %vm7143, %v7150, %v7151
      %v7153 = vrot.slane %v6742, 7
      %v7154 = vrot.slane %v6748, 7
      %v7155 = vsel %vm7143, %v7153, %v7154
      %v7156 = vrot.slane %v6829, 7
      %v7157 = vrot.slane %v6835, 7
      %v7158 = vsel %vm7143, %v7156, %v7157
      %v7159 = vrot.slane %v6831, 7
      %v7160 = vrot.slane %v6837, 7
      %v7161 = vsel %vm7143, %v7159, %v7160
      %v7162 = vrot.slane %v6918, 7
      %v7163 = vrot.slane %v6924, 7
      %v7164 = vsel %vm7143, %v7162, %v7163
      %v7165 = vrot.slane %v6920, 7
      %v7166 = vrot.slane %v6926, 7
      %v7167 = vsel %vm7143, %v7165, %v7166
      %7176 = vrot.lane.b32.xlu0 %v7146, 96
      %v7177 = vpop.permute.xlu0 %7176
      %7178 = vrot.lane.b32.xlu0 %v7149, 96
      %v7179 = vpop.permute.xlu0 %7178
      %7180 = vrot.lane.b32.xlu0 %v7152, 96
      %v7181 = vpop.permute.xlu0 %7180
      %7182 = vrot.lane.b32.xlu0 %v7155, 96
      %v7183 = vpop.permute.xlu0 %7182
      %7184 = vrot.lane.b32.xlu0 %v7158, 96
      %v7185 = vpop.permute.xlu0 %7184
      %7186 = vrot.lane.b32.xlu0 %v7161, 96
      %v7187 = vpop.permute.xlu0 %7186
      %7188 = vrot.lane.b32.xlu0 %v7164, 96
      %v7189 = vpop.permute.xlu0 %7188
      %7190 = vrot.lane.b32.xlu0 %v7167, 96
      %v7191 = vpop.permute.xlu0 %7190
      %v7192 = vsel %vm1210, %v7189, %v7191
      %v7193 = vsel %vm1210, %v7187, %v7189
      %v7194 = vsel %vm1210, %v7185, %v7187
      %v7195 = vsel %vm1210, %v7183, %v7185
      %v7196 = vsel %vm1210, %v7181, %v7183
      %v7197 = vsel %vm1210, %v7179, %v7181
      %v7198 = vsel %vm1210, %v7177, %v7179
      %v7199 = vsel %vm1210, %v7191, %v7177
      %v7200 = vadd.f32 %v7127, %v7197
      %v7201 = vadd.f32 %v7128, %v7196
      %v7202 = vadd.f32 %v7129, %v7195
      %v7203 = vadd.f32 %v7130, %v7194
      %v7204 = vadd.f32 %v7131, %v7193
      %v7205 = vadd.f32 %v7132, %v7192
      %v7206 = vadd.f32 %v7133, %v7199
      %v7207 = vadd.f32 %v7134, %v7198
      %v7208 = vrot.slane %v6657, 2
      %v7209 = vrot.slane %v6659, 2
      %v7210 = vrot.slane %v6746, 2
      %v7211 = vrot.slane %v6748, 2
      %v7212 = vrot.slane %v6835, 2
      %v7213 = vrot.slane %v6837, 2
      %v7214 = vrot.slane %v6924, 2
      %v7215 = vrot.slane %v6926, 2
      %7224 = vrot.lane.b32.xlu0 %v7208, 64
      %v7225 = vpop.permute.xlu0 %7224
      %7226 = vrot.lane.b32.xlu0 %v7209, 64
      %v7227 = vpop.permute.xlu0 %7226
      %7228 = vrot.lane.b32.xlu0 %v7210, 64
      %v7229 = vpop.permute.xlu0 %7228
      %7230 = vrot.lane.b32.xlu0 %v7211, 64
      %v7231 = vpop.permute.xlu0 %7230
      %7232 = vrot.lane.b32.xlu0 %v7212, 64
      %v7233 = vpop.permute.xlu0 %7232
      %7234 = vrot.lane.b32.xlu0 %v7213, 64
      %v7235 = vpop.permute.xlu0 %7234
      %7236 = vrot.lane.b32.xlu0 %v7214, 64
      %v7237 = vpop.permute.xlu0 %7236
      %7238 = vrot.lane.b32.xlu0 %v7215, 64
      %v7239 = vpop.permute.xlu0 %7238
      %v7240 = vsel %vm1969, %v7237, %v7239
      %v7241 = vsel %vm1969, %v7235, %v7237
      %v7242 = vsel %vm1969, %v7233, %v7235
      %v7243 = vsel %vm1969, %v7231, %v7233
      %v7244 = vsel %vm1969, %v7229, %v7231
      %v7245 = vsel %vm1969, %v7227, %v7229
      %v7246 = vsel %vm1969, %v7225, %v7227
      %v7247 = vsel %vm1969, %v7239, %v7225
      %v7248 = vadd.f32 %v7200, %v7245
      %v7249 = vadd.f32 %v7201, %v7244
      %v7250 = vadd.f32 %v7202, %v7243
      %v7251 = vadd.f32 %v7203, %v7242
      %v7252 = vadd.f32 %v7204, %v7241
      %v7253 = vadd.f32 %v7205, %v7240
      %v7254 = vadd.f32 %v7206, %v7247
      %v7255 = vadd.f32 %v7207, %v7246
      %v7256 = vrot.slane %v6657, 5
      %v7257 = vrot.slane %v6659, 5
      %v7258 = vrot.slane %v6746, 5
      %v7259 = vrot.slane %v6748, 5
      %v7260 = vrot.slane %v6835, 5
      %v7261 = vrot.slane %v6837, 5
      %v7262 = vrot.slane %v6924, 5
      %v7263 = vrot.slane %v6926, 5
      %7272 = vrot.lane.b32.xlu0 %v7256, 32
      %v7273 = vpop.permute.xlu0 %7272
      %7274 = vrot.lane.b32.xlu0 %v7257, 32
      %v7275 = vpop.permute.xlu0 %7274
      %7276 = vrot.lane.b32.xlu0 %v7258, 32
      %v7277 = vpop.permute.xlu0 %7276
      %7278 = vrot.lane.b32.xlu0 %v7259, 32
      %v7279 = vpop.permute.xlu0 %7278
      %7280 = vrot.lane.b32.xlu0 %v7260, 32
      %v7281 = vpop.permute.xlu0 %7280
      %7282 = vrot.lane.b32.xlu0 %v7261, 32
      %v7283 = vpop.permute.xlu0 %7282
      %7284 = vrot.lane.b32.xlu0 %v7262, 32
      %v7285 = vpop.permute.xlu0 %7284
      %7286 = vrot.lane.b32.xlu0 %v7263, 32
      %v7287 = vpop.permute.xlu0 %7286
      %v7288 = vsel %vm2411, %v7285, %v7287
      %v7289 = vsel %vm2411, %v7283, %v7285
      %v7290 = vsel %vm2411, %v7281, %v7283
      %v7291 = vsel %vm2411, %v7279, %v7281
      %v7292 = vsel %vm2411, %v7277, %v7279
      %v7293 = vsel %vm2411, %v7275, %v7277
      %v7294 = vsel %vm2411, %v7273, %v7275
      %v7295 = vsel %vm2411, %v7287, %v7273
      %v7296 = vadd.f32 %v7248, %v7293
      %v7297 = vadd.f32 %v7249, %v7292
      %v7298 = vadd.f32 %v7250, %v7291
      %v7299 = vadd.f32 %v7251, %v7290
      %v7300 = vadd.f32 %v7252, %v7289
      %v7301 = vadd.f32 %v7253, %v7288
      %v7302 = vadd.f32 %v7254, %v7295
      %v7303 = vadd.f32 %v7255, %v7294
      %v7304 = vadd.f32 %v7296, %v6752
      %v7305 = vadd.f32 %v7297, %v6754
      %v7306 = vadd.f32 %v7298, %v6841
      %v7307 = vadd.f32 %v7299, %v6843
      %v7308 = vadd.f32 %v7300, %v6930
      %v7309 = vadd.f32 %v7301, %v6932
      %v7310 = vadd.f32 %v7302, %v6663
      %v7311 = vadd.f32 %v7303, %v6665
      %v7320 = vrot.slane %v6663, 3
      %v7321 = vrot.slane %v6665, 3
      %v7322 = vrot.slane %v6752, 3
      %v7323 = vrot.slane %v6754, 3
      %v7324 = vrot.slane %v6841, 3
      %v7325 = vrot.slane %v6843, 3
      %v7326 = vrot.slane %v6930, 3
      %v7327 = vrot.slane %v6932, 3
      %7336 = vrot.lane.b32.xlu0 %v7320, 96
      %v7337 = vpop.permute.xlu0 %7336
      %7338 = vrot.lane.b32.xlu0 %v7321, 96
      %v7339 = vpop.permute.xlu0 %7338
      %7340 = vrot.lane.b32.xlu0 %v7322, 96
      %v7341 = vpop.permute.xlu0 %7340
      %7342 = vrot.lane.b32.xlu0 %v7323, 96
      %v7343 = vpop.permute.xlu0 %7342
      %7344 = vrot.lane.b32.xlu0 %v7324, 96
      %v7345 = vpop.permute.xlu0 %7344
      %7346 = vrot.lane.b32.xlu0 %v7325, 96
      %v7347 = vpop.permute.xlu0 %7346
      %7348 = vrot.lane.b32.xlu0 %v7326, 96
      %v7349 = vpop.permute.xlu0 %7348
      %7350 = vrot.lane.b32.xlu0 %v7327, 96
      %v7351 = vpop.permute.xlu0 %7350
      %v7352 = vsel %vm1210, %v7349, %v7351
      %v7353 = vsel %vm1210, %v7347, %v7349
      %v7354 = vsel %vm1210, %v7345, %v7347
      %v7355 = vsel %vm1210, %v7343, %v7345
      %v7356 = vsel %vm1210, %v7341, %v7343
      %v7357 = vsel %vm1210, %v7339, %v7341
      %v7358 = vsel %vm1210, %v7337, %v7339
      %v7359 = vsel %vm1210, %v7351, %v7337
      %v7360 = vadd.f32 %v7304, %v7356
      %v7361 = vadd.f32 %v7305, %v7355
      %v7362 = vadd.f32 %v7306, %v7354
      %v7363 = vadd.f32 %v7307, %v7353
      %v7364 = vadd.f32 %v7308, %v7352
      %v7365 = vadd.f32 %v7309, %v7359
      %v7366 = vadd.f32 %v7310, %v7358
      %v7367 = vadd.f32 %v7311, %v7357
      %v7368 = vld [vmem:[%s4] sm:$0x7]
      %7370 = vset.pattern.permute.xlu0 0
      %7371 = vperm.xlu0 %7370, %v7368
      %v7372 = vpop.permute.xlu0 %7371
      %v7374 = vadd.f32 %v7360, %v7372
      %v7375 = vadd.f32 %v7361, %v7372
      %v7376 = vadd.f32 %v7362, %v7372
      %v7377 = vadd.f32 %v7363, %v7372
      %v7378 = vadd.f32 %v7364, %v7372
      %v7379 = vadd.f32 %v7365, %v7372
      %v7380 = vadd.f32 %v7366, %v7372
      %v7381 = vadd.f32 %v7367, %v7372
      %v7390 = vrot.slane %v7374, 1
      %v7391 = vrot.slane %v7375, 1
      %v7392 = vrot.slane %v7376, 1
      %v7393 = vrot.slane %v7377, 1
      %v7394 = vrot.slane %v7378, 1
      %v7395 = vrot.slane %v7379, 1
      %v7396 = vrot.slane %v7380, 1
      %v7397 = vrot.slane %v7381, 1
      %v7406 = vmax.f32 %v7374, %v7390
      %v7407 = vmax.f32 %v7375, %v7391
      %v7408 = vmax.f32 %v7376, %v7392
      %v7409 = vmax.f32 %v7377, %v7393
      %v7410 = vmax.f32 %v7378, %v7394
      %v7411 = vmax.f32 %v7379, %v7395
      %v7412 = vmax.f32 %v7380, %v7396
      %v7413 = vmax.f32 %v7381, %v7397
      %v7414 = vrot.slane %v7374, 2
      %v7415 = vrot.slane %v7375, 2
      %v7416 = vrot.slane %v7376, 2
      %v7417 = vrot.slane %v7377, 2
      %v7418 = vrot.slane %v7378, 2
      %v7419 = vrot.slane %v7379, 2
      %v7420 = vrot.slane %v7380, 2
      %v7421 = vrot.slane %v7381, 2
      %v7430 = vmax.f32 %v7406, %v7414
      %v7431 = vmax.f32 %v7407, %v7415
      %v7432 = vmax.f32 %v7408, %v7416
      %v7433 = vmax.f32 %v7409, %v7417
      %v7434 = vmax.f32 %v7410, %v7418
      %v7435 = vmax.f32 %v7411, %v7419
      %v7436 = vmax.f32 %v7412, %v7420
      %v7437 = vmax.f32 %v7413, %v7421
      %v7438 = vlaneseq
      %v7439 = vshrl.u32 %v7438, 7
      %v7440 = vsub.s32 0, %v7439
      %v7441 = vrot.slane %v7430, %v7440
      %v7442 = vlaneseq
      %v7443 = vshrl.u32 %v7442, 7
      %v7444 = vsub.s32 0, %v7443
      %v7445 = vrot.slane %v7431, %v7444
      %v7446 = vlaneseq
      %v7447 = vshrl.u32 %v7446, 7
      %v7448 = vsub.s32 0, %v7447
      %v7449 = vrot.slane %v7432, %v7448
      %v7450 = vlaneseq
      %v7451 = vshrl.u32 %v7450, 7
      %v7452 = vsub.s32 0, %v7451
      %v7453 = vrot.slane %v7433, %v7452
      %v7454 = vlaneseq
      %v7455 = vshrl.u32 %v7454, 7
      %v7456 = vsub.s32 0, %v7455
      %v7457 = vrot.slane %v7434, %v7456
      %v7458 = vlaneseq
      %v7459 = vshrl.u32 %v7458, 7
      %v7460 = vsub.s32 0, %v7459
      %v7461 = vrot.slane %v7435, %v7460
      %v7462 = vlaneseq
      %v7463 = vshrl.u32 %v7462, 7
      %v7464 = vsub.s32 0, %v7463
      %v7465 = vrot.slane %v7436, %v7464
      %v7466 = vlaneseq
      %v7467 = vshrl.u32 %v7466, 7
      %v7468 = vsub.s32 0, %v7467
      %v7469 = vrot.slane %v7437, %v7468
      %v7470 = vsub.f32 %v7374, %v7441
      %v7471 = vsub.f32 %v7375, %v7445
      %v7472 = vsub.f32 %v7376, %v7449
      %v7473 = vsub.f32 %v7377, %v7453
      %v7474 = vsub.f32 %v7378, %v7457
      %v7475 = vsub.f32 %v7379, %v7461
      %v7476 = vsub.f32 %v7380, %v7465
      %v7477 = vsub.f32 %v7381, %v7469
      %v7478 = vmul.f32 %v7470, 1.442695
      %v7479 = vpow.pop %v7478
      %v7480 = vmul.f32 %v7471, 1.442695
      %v7481 = vpow.pop %v7480
      %v7482 = vmul.f32 %v7472, 1.442695
      %v7483 = vpow.pop %v7482
      %v7484 = vmul.f32 %v7473, 1.442695
      %v7485 = vpow.pop %v7484
      %v7486 = vmul.f32 %v7474, 1.442695
      %v7487 = vpow.pop %v7486
      %v7488 = vmul.f32 %v7475, 1.442695
      %v7489 = vpow.pop %v7488
      %v7490 = vmul.f32 %v7476, 1.442695
      %v7491 = vpow.pop %v7490
      %v7492 = vmul.f32 %v7477, 1.442695
      %v7493 = vpow.pop %v7492
      %v7502 = vrot.slane %v7479, 1
      %v7503 = vrot.slane %v7481, 1
      %v7504 = vrot.slane %v7483, 1
      %v7505 = vrot.slane %v7485, 1
      %v7506 = vrot.slane %v7487, 1
      %v7507 = vrot.slane %v7489, 1
      %v7508 = vrot.slane %v7491, 1
      %v7509 = vrot.slane %v7493, 1
      %v7518 = vadd.f32 %v7479, %v7502
      %v7519 = vadd.f32 %v7481, %v7503
      %v7520 = vadd.f32 %v7483, %v7504
      %v7521 = vadd.f32 %v7485, %v7505
      %v7522 = vadd.f32 %v7487, %v7506
      %v7523 = vadd.f32 %v7489, %v7507
      %v7524 = vadd.f32 %v7491, %v7508
      %v7525 = vadd.f32 %v7493, %v7509
      %v7526 = vrot.slane %v7479, 2
      %v7527 = vrot.slane %v7481, 2
      %v7528 = vrot.slane %v7483, 2
      %v7529 = vrot.slane %v7485, 2
      %v7530 = vrot.slane %v7487, 2
      %v7531 = vrot.slane %v7489, 2
      %v7532 = vrot.slane %v7491, 2
      %v7533 = vrot.slane %v7493, 2
      %v7542 = vadd.f32 %v7518, %v7526
      %v7543 = vadd.f32 %v7519, %v7527
      %v7544 = vadd.f32 %v7520, %v7528
      %v7545 = vadd.f32 %v7521, %v7529
      %v7546 = vadd.f32 %v7522, %v7530
      %v7547 = vadd.f32 %v7523, %v7531
      %v7548 = vadd.f32 %v7524, %v7532
      %v7549 = vadd.f32 %v7525, %v7533
      %v7550 = vlaneseq
      %v7551 = vshrl.u32 %v7550, 7
      %v7552 = vsub.s32 0, %v7551
      %v7553 = vrot.slane %v7542, %v7552
      %v7554 = vlaneseq
      %v7555 = vshrl.u32 %v7554, 7
      %v7556 = vsub.s32 0, %v7555
      %v7557 = vrot.slane %v7543, %v7556
      %v7558 = vlaneseq
      %v7559 = vshrl.u32 %v7558, 7
      %v7560 = vsub.s32 0, %v7559
      %v7561 = vrot.slane %v7544, %v7560
      %v7562 = vlaneseq
      %v7563 = vshrl.u32 %v7562, 7
      %v7564 = vsub.s32 0, %v7563
      %v7565 = vrot.slane %v7545, %v7564
      %v7566 = vlaneseq
      %v7567 = vshrl.u32 %v7566, 7
      %v7568 = vsub.s32 0, %v7567
      %v7569 = vrot.slane %v7546, %v7568
      %v7570 = vlaneseq
      %v7571 = vshrl.u32 %v7570, 7
      %v7572 = vsub.s32 0, %v7571
      %v7573 = vrot.slane %v7547, %v7572
      %v7574 = vlaneseq
      %v7575 = vshrl.u32 %v7574, 7
      %v7576 = vsub.s32 0, %v7575
      %v7577 = vrot.slane %v7548, %v7576
      %v7578 = vlaneseq
      %v7579 = vshrl.u32 %v7578, 7
      %v7580 = vsub.s32 0, %v7579
      %v7581 = vrot.slane %v7549, %v7580
      %v7582 = vrcp.pop %v7553
      %v7583 = vmul.f32 %v7479, %v7582
      %v7584 = vrcp.pop %v7557
      %v7585 = vmul.f32 %v7481, %v7584
      %v7586 = vrcp.pop %v7561
      %v7587 = vmul.f32 %v7483, %v7586
      %v7588 = vrcp.pop %v7565
      %v7589 = vmul.f32 %v7485, %v7588
      %v7590 = vrcp.pop %v7569
      %v7591 = vmul.f32 %v7487, %v7590
      %v7592 = vrcp.pop %v7573
      %v7593 = vmul.f32 %v7489, %v7592
      %v7594 = vrcp.pop %v7577
      %v7595 = vmul.f32 %v7491, %v7594
      %v7596 = vrcp.pop %v7581
      %v7597 = vmul.f32 %v7493, %v7596
      %v7606 = vcombine.low %v7583, %v7585
      %v7607 = vcombine.low %v7587, %v7589
      %v7608 = vcombine.low %v7591, %v7593
      %v7609 = vcombine.low %v7595, %v7597
      %7614 = vst [vmem:[%s224] sm:$0x77] %v7606
      %7615 = vst [vmem:[%s224 + $0x8] sm:$0x77] %v7607
      %7616 = vst [vmem:[%s224 + $0x10] sm:$0x77] %v7608
      %7617 = vst [vmem:[%s224 + $0x18] sm:$0x77] %v7609
      %p7618 = scmp.lt.s32.totalorder %s16, 1
      %s7619 = scalar_select %p7618, %s16, 1
      %s7620 = smul.addr %s7619, 8
      %s7621 = smul.addr %s7620, 4
      %s7622 = scalar_lea.vmem %s5, %s7621
      // Predicated region
      $region41: #{neuralnet_forward.1} parent=39 // pred_check
        %p7623 = pneg %p144
      $region42: #{neuralnet_forward.1} parent=39 // pred_check_branch
        %7625 = sbr.rel (%p7623) target = $region44
      $region43: #{neuralnet_forward.1} parent=39 // pred_region
        _
      $region44: #{neuralnet_forward.1} parent=39 // pred_fallthru
        _
    $region40: #{neuralnet_forward.1} parent=5 // pred_fallthru
      _
    %p7626 = scmp.le.s32.totalorder 2, %s11
    // Predicated region
    $region45: #{neuralnet_forward.1} parent=5 // pred_check
      %p7627 = pneg %p7626
    $region46: #{neuralnet_forward.1} parent=5 // pred_check_branch
      %7629 = sbr.rel (%p7627) target = $region48
    $region47: #{neuralnet_forward.1} parent=5 // pred_region
      %s7630 = ssub.s32 %s11, 2
      // Predicated region
      $region49: #{neuralnet_forward.1} parent=47 // pred_check
        %p7631 = pneg %p150
      $region50: #{neuralnet_forward.1} parent=47 // pred_check_branch
        %7633 = sbr.rel (%p7631) target = $region52
      $region51: #{neuralnet_forward.1} parent=47 // pred_region
        %p7634 = scmp.lt.s32.totalorder %s17, 1
        %s7635 = scalar_select %p7634, %s17, 1
        %s7636 = smul.addr %s7635, 8
        %s7637 = smul.addr %s7636, 4
        %s7638 = scalar_lea.vmem %s5, %s7637
      $region52: #{neuralnet_forward.1} parent=47 // pred_fallthru
        _
    $region48: #{neuralnet_forward.1} parent=5 // pred_fallthru
      _
  $region6: #{neuralnet_forward.1} parent=0 // loop_footer
    %s15 = sadd.s32 1, %s11
  $region7: #{neuralnet_forward.1} parent=0 // loop_footer_branch
    %10 = sbr.rel target = $region3
  $region8: #{neuralnet_forward.1} parent=0 // loop_exit
    _

</llo_original>
